<compile_context>
chip_gen: v7x
topology: tpu7x:2x2x1
jax: 0.10.0
libtpu: 0.0.40
codegen_flags: <defaults>
</compile_context>

<pallas_src>
import jax
import jax.numpy as jnp
from jax.experimental import pallas as pl
from jax.experimental.pallas import tpu as pltpu

EPS = 1e-5
LANES = 128


def _round_up(x, m):
    return (x + m - 1) // m * m


def _resblock_kernel(xp_ref, w1_ref, g1_ref, b1_ref, w2_ref, g2_ref, b2_ref,
                     out_ref, mid_ref):
    """Fused ResBlock.

    xp_ref : (B, H+2, W+2, Cp) f32   spatially zero-padded, channel-padded NHWC input
    w1_ref : (9*Cp, Cp)        bf16  conv1 weights as im2col slab (tap-major, Cin-minor)
    g1/b1  : (1, Cp)           f32   BN1 gamma / beta (padded channels = 0)
    w2_ref : (9*Cp, Cp)        bf16  conv2 weight slab
    g2/b2  : (1, Cp)           f32   BN2 gamma / beta
    out_ref: (B, H, W, Cp)     f32   output (lane-dense, Cp % 128 == 0)
    mid_ref: (B, H+2, W+2, Cp) f32   scratch: zero-padded relu(bn1(conv1))
    """
    B, Hp, Wp, Cp = xp_ref.shape
    H, W = Hp - 2, Wp - 2
    inv_n = 1.0 / float(B * H * W)

    def im2col(src_ref):
        # Lay the 9 shifted taps along the lane axis so the whole conv is a
        # single (B*H*W, 9*Cp) x (9*Cp, Cp) MXU matmul.
        taps = []
        for dy in range(3):
            for dx in range(3):
                patch = src_ref[:, pl.ds(dy, H), pl.ds(dx, W), :]   # (B,H,W,Cp) f32
                taps.append(patch.reshape(B * H * W, Cp).astype(jnp.bfloat16))
        return jnp.concatenate(taps, axis=-1)                       # (B*H*W, 9*Cp) bf16

    def bn_scale_shift(acc, g, b):
        # Single reduction pass (sum + sum-of-squares), then fold gamma/beta
        # into per-channel scale/shift: y = acc * scale + shift.
        s = jnp.sum(acc, axis=0, keepdims=True)
        ss = jnp.sum(acc * acc, axis=0, keepdims=True)
        m = s * inv_n
        v = ss * inv_n - m * m
        scale = g * jax.lax.rsqrt(v + EPS)
        shift = b - m * scale
        return scale, shift

    # ---- conv1 (one matmul) + BN1 + ReLU ----
    acc1 = jnp.dot(im2col(xp_ref), w1_ref[...],
                   preferred_element_type=jnp.float32)              # (B*H*W, Cp) f32
    sc1, sh1 = bn_scale_shift(acc1, g1_ref[...], b1_ref[...])
    y = jnp.maximum(acc1 * sc1 + sh1, 0.0)

    # ---- stage relu(bn1(conv1)) into the padded scratch for conv2's taps.
    # Only the 1-pixel halo strips are zeroed; the interior is written once.
    mid_ref[:, pl.ds(0, 1), :, :] = jnp.zeros((B, 1, Wp, Cp), jnp.float32)
    mid_ref[:, pl.ds(H + 1, 1), :, :] = jnp.zeros((B, 1, Wp, Cp), jnp.float32)
    mid_ref[:, pl.ds(1, H), pl.ds(0, 1), :] = jnp.zeros((B, H, 1, Cp), jnp.float32)
    mid_ref[:, pl.ds(1, H), pl.ds(W + 1, 1), :] = jnp.zeros((B, H, 1, Cp), jnp.float32)
    mid_ref[:, pl.ds(1, H), pl.ds(1, W), :] = y.reshape(B, H, W, Cp)

    # ---- conv2 (one matmul) + BN2 ----
    acc2 = jnp.dot(im2col(mid_ref), w2_ref[...],
                   preferred_element_type=jnp.float32)              # (B*H*W, Cp) f32
    sc2, sh2 = bn_scale_shift(acc2, g2_ref[...], b2_ref[...])
    z = acc2 * sc2 + sh2

    # ---- residual add (identity re-read here, keeps xp's live range short) + ReLU
    ident = xp_ref[:, pl.ds(1, H), pl.ds(1, W), :].reshape(B * H * W, Cp)
    out = jnp.maximum(z + ident, 0.0)
    out_ref[...] = out.reshape(B, H, W, Cp).astype(out_ref.dtype)


@jax.jit
def resblock_pallas(x_nchw, w1_oihw, g1, b1, w2_oihw, g2, b2):
    """x_nchw: (B, C, H, W) float32. Returns (B, C, H, W) float32."""
    B, C, H, W = x_nchw.shape
    Cp = _round_up(C, LANES)
    pc = Cp - C

    # NCHW -> NHWC with 1-px spatial halo and lane-dense channel padding
    # (single fused pad/transpose on the XLA side).
    x_nhwc = jnp.transpose(x_nchw, (0, 2, 3, 1))
    xp = jnp.pad(x_nhwc, ((0, 0), (1, 1), (1, 1), (0, pc)))         # (B,H+2,W+2,Cp)

    def weight_slab(w_oihw):
        # OIHW -> (kh, kw, Cin, Cout) -> padded -> (9*Cp, Cp) bf16 im2col slab.
        w = jnp.transpose(w_oihw, (2, 3, 1, 0))
        w = jnp.pad(w, ((0, 0), (0, 0), (0, pc), (0, pc)))
        return w.reshape(9 * Cp, Cp).astype(jnp.bfloat16)

    def bn_vec(p):
        return jnp.pad(p, (0, pc)).reshape(1, Cp).astype(jnp.float32)

    out_nhwc = pl.pallas_call(
        _resblock_kernel,
        out_shape=jax.ShapeDtypeStruct((B, H, W, Cp), jnp.float32),
        in_specs=[pl.BlockSpec(memory_space=pltpu.MemorySpace.VMEM)] * 7,
        out_specs=pl.BlockSpec(memory_space=pltpu.MemorySpace.VMEM),
        scratch_shapes=[pltpu.VMEM((B, H + 2, W + 2, Cp), jnp.float32)],
        compiler_params=pltpu.CompilerParams(
            vmem_limit_bytes=64 * 1024 * 1024),
    )(xp, weight_slab(w1_oihw), bn_vec(g1), bn_vec(b1),
      weight_slab(w2_oihw), bn_vec(g2), bn_vec(b2))

    # Drop channel padding, back to NCHW.
    return jnp.transpose(out_nhwc[..., :C], (0, 3, 1, 2))


def resblock_ref(x_nchw, w1, g1, b1, w2, g2, b2):
    """Pure-JAX f32 reference mirroring PyTorch training-mode forward."""
    def conv(x, w):
        return jax.lax.conv_general_dilated(
            x, w, window_strides=(1, 1), padding=((1, 1), (1, 1)),
            dimension_numbers=("NCHW", "OIHW", "NCHW"))

    def bn(x, g, b):
        m = jnp.mean(x, axis=(0, 2, 3), keepdims=True)
        v = jnp.mean((x - m) ** 2, axis=(0, 2, 3), keepdims=True)
        return ((x - m) * jax.lax.rsqrt(v + EPS) * g.reshape(1, -1, 1, 1)
                + b.reshape(1, -1, 1, 1))

    out = jax.nn.relu(bn(conv(x_nchw, w1), g1, b1))
    out = bn(conv(out, w2), g2, b2)
    return jax.nn.relu(out + x_nchw)


if __name__ == "__main__":
    B, C, H, W = 2, 8, 16, 16   # in_channels == out_channels, stride=1, no downsample

    key = jax.random.PRNGKey(0)
    kx, kw1, kw2, kg1, kb1, kg2, kb2 = jax.random.split(key, 7)

    x = jax.random.normal(kx, (B, C, H, W), jnp.float32)
    w1 = jax.random.normal(kw1, (C, C, 3, 3), jnp.float32) * 0.1   # conv1, bias=False
    w2 = jax.random.normal(kw2, (C, C, 3, 3), jnp.float32) * 0.1   # conv2, bias=False
    g1 = 1.0 + 0.1 * jax.random.normal(kg1, (C,), jnp.float32)     # bn1 gamma
    b1 = 0.1 * jax.random.normal(kb1, (C,), jnp.float32)           # bn1 beta
    g2 = 1.0 + 0.1 * jax.random.normal(kg2, (C,), jnp.float32)     # bn2 gamma
    b2 = 0.1 * jax.random.normal(kb2, (C,), jnp.float32)           # bn2 beta

    out = resblock_pallas(x, w1, g1, b1, w2, g2, b2)
    out = jax.block_until_ready(out)

    ref = resblock_ref(x, w1, g1, b1, w2, g2, b2)
    assert out.shape == (B, C, H, W)
    # bf16 MXU inputs (f32 accumulation) -> loosened tolerance vs. the f32 ref.
    max_err = float(jnp.max(jnp.abs(out - ref)))
    assert jnp.allclose(out, ref, rtol=5e-2, atol=5e-2), max_err

    print("KERNEL_OK")
</pallas_src>

<mosaic_0001>
module attributes {stable_mosaic.version = 11 : i64} {
  func.func @_resblock_kernel(%arg0: memref<2x18x18x128xf32, #tpu.memory_space<vmem>>, %arg1: memref<1152x128xbf16, #tpu.memory_space<vmem>>, %arg2: memref<1x128xf32, #tpu.memory_space<vmem>>, %arg3: memref<1x128xf32, #tpu.memory_space<vmem>>, %arg4: memref<1152x128xbf16, #tpu.memory_space<vmem>>, %arg5: memref<1x128xf32, #tpu.memory_space<vmem>>, %arg6: memref<1x128xf32, #tpu.memory_space<vmem>>, %arg7: memref<2x16x16x128xf32, #tpu.memory_space<vmem>>, %arg8: memref<2x18x18x128xf32, #tpu.memory_space<vmem>>) attributes {dimension_semantics = [], scalar_prefetch = 0 : i64, scratch_operands = 1 : i64, tpu.core_type = #tpu.core_type<tc>} {
    %c0 = arith.constant 0 : index
    %c0_0 = arith.constant 0 : index
    %c0_1 = arith.constant 0 : index
    %c0_2 = arith.constant 0 : index
    %0 = vector.load %arg0[%c0, %c0_0, %c0_1, %c0_2] : memref<2x18x18x128xf32, #tpu.memory_space<vmem>>, vector<2x16x16x128xf32>
    %1 = vector.shape_cast %0 : vector<2x16x16x128xf32> to vector<512x128xf32>
    %2 = arith.truncf %1 : vector<512x128xf32> to vector<512x128xbf16>
    %c0_3 = arith.constant 0 : index
    %c0_4 = arith.constant 0 : index
    %c1 = arith.constant 1 : index
    %c0_5 = arith.constant 0 : index
    %3 = vector.load %arg0[%c0_3, %c0_4, %c1, %c0_5] : memref<2x18x18x128xf32, #tpu.memory_space<vmem>>, vector<2x16x16x128xf32>
    %4 = vector.shape_cast %3 : vector<2x16x16x128xf32> to vector<512x128xf32>
    %5 = arith.truncf %4 : vector<512x128xf32> to vector<512x128xbf16>
    %c0_6 = arith.constant 0 : index
    %c0_7 = arith.constant 0 : index
    %c2 = arith.constant 2 : index
    %c0_8 = arith.constant 0 : index
    %6 = vector.load %arg0[%c0_6, %c0_7, %c2, %c0_8] : memref<2x18x18x128xf32, #tpu.memory_space<vmem>>, vector<2x16x16x128xf32>
    %7 = vector.shape_cast %6 : vector<2x16x16x128xf32> to vector<512x128xf32>
    %8 = arith.truncf %7 : vector<512x128xf32> to vector<512x128xbf16>
    %c0_9 = arith.constant 0 : index
    %c1_10 = arith.constant 1 : index
    %c0_11 = arith.constant 0 : index
    %c0_12 = arith.constant 0 : index
    %9 = vector.load %arg0[%c0_9, %c1_10, %c0_11, %c0_12] : memref<2x18x18x128xf32, #tpu.memory_space<vmem>>, vector<2x16x16x128xf32>
    %10 = vector.shape_cast %9 : vector<2x16x16x128xf32> to vector<512x128xf32>
    %11 = arith.truncf %10 : vector<512x128xf32> to vector<512x128xbf16>
    %c0_13 = arith.constant 0 : index
    %c1_14 = arith.constant 1 : index
    %c1_15 = arith.constant 1 : index
    %c0_16 = arith.constant 0 : index
    %12 = vector.load %arg0[%c0_13, %c1_14, %c1_15, %c0_16] : memref<2x18x18x128xf32, #tpu.memory_space<vmem>>, vector<2x16x16x128xf32>
    %13 = vector.shape_cast %12 : vector<2x16x16x128xf32> to vector<512x128xf32>
    %14 = arith.truncf %13 : vector<512x128xf32> to vector<512x128xbf16>
    %c0_17 = arith.constant 0 : index
    %c1_18 = arith.constant 1 : index
    %c2_19 = arith.constant 2 : index
    %c0_20 = arith.constant 0 : index
    %15 = vector.load %arg0[%c0_17, %c1_18, %c2_19, %c0_20] : memref<2x18x18x128xf32, #tpu.memory_space<vmem>>, vector<2x16x16x128xf32>
    %16 = vector.shape_cast %15 : vector<2x16x16x128xf32> to vector<512x128xf32>
    %17 = arith.truncf %16 : vector<512x128xf32> to vector<512x128xbf16>
    %c0_21 = arith.constant 0 : index
    %c2_22 = arith.constant 2 : index
    %c0_23 = arith.constant 0 : index
    %c0_24 = arith.constant 0 : index
    %18 = vector.load %arg0[%c0_21, %c2_22, %c0_23, %c0_24] : memref<2x18x18x128xf32, #tpu.memory_space<vmem>>, vector<2x16x16x128xf32>
    %19 = vector.shape_cast %18 : vector<2x16x16x128xf32> to vector<512x128xf32>
    %20 = arith.truncf %19 : vector<512x128xf32> to vector<512x128xbf16>
    %c0_25 = arith.constant 0 : index
    %c2_26 = arith.constant 2 : index
    %c1_27 = arith.constant 1 : index
    %c0_28 = arith.constant 0 : index
    %21 = vector.load %arg0[%c0_25, %c2_26, %c1_27, %c0_28] : memref<2x18x18x128xf32, #tpu.memory_space<vmem>>, vector<2x16x16x128xf32>
    %22 = vector.shape_cast %21 : vector<2x16x16x128xf32> to vector<512x128xf32>
    %23 = arith.truncf %22 : vector<512x128xf32> to vector<512x128xbf16>
    %c0_29 = arith.constant 0 : index
    %c2_30 = arith.constant 2 : index
    %c2_31 = arith.constant 2 : index
    %c0_32 = arith.constant 0 : index
    %24 = vector.load %arg0[%c0_29, %c2_30, %c2_31, %c0_32] : memref<2x18x18x128xf32, #tpu.memory_space<vmem>>, vector<2x16x16x128xf32>
    %25 = vector.shape_cast %24 : vector<2x16x16x128xf32> to vector<512x128xf32>
    %26 = arith.truncf %25 : vector<512x128xf32> to vector<512x128xbf16>
    %27 = tpu.concatenate %2, %5, %8, %11, %14, %17, %20, %23, %26 in 1 : vector<512x128xbf16>, vector<512x128xbf16>, vector<512x128xbf16>, vector<512x128xbf16>, vector<512x128xbf16>, vector<512x128xbf16>, vector<512x128xbf16>, vector<512x128xbf16>, vector<512x128xbf16> -> vector<512x1152xbf16>
    %c0_33 = arith.constant 0 : index
    %c0_34 = arith.constant 0 : index
    %28 = vector.load %arg1[%c0_33, %c0_34] : memref<1152x128xbf16, #tpu.memory_space<vmem>>, vector<1152x128xbf16>
    %cst = arith.constant dense<0.000000e+00> : vector<512x128xf32>
    %29 = tpu.matmul %27, %28, %cst {dimension_numbers = #tpu.dot_dimension_numbers<[1], [0], [0], [1], [0, 0, 1, 1], [], []>} : vector<512x1152xbf16>, vector<1152x128xbf16>, vector<512x128xf32> -> vector<512x128xf32>
    %c0_35 = arith.constant 0 : index
    %c0_36 = arith.constant 0 : index
    %30 = vector.load %arg2[%c0_35, %c0_36] : memref<1x128xf32, #tpu.memory_space<vmem>>, vector<1x128xf32>
    %c0_37 = arith.constant 0 : index
    %c0_38 = arith.constant 0 : index
    %31 = vector.load %arg3[%c0_37, %c0_38] : memref<1x128xf32, #tpu.memory_space<vmem>>, vector<1x128xf32>
    %cst_39 = arith.constant dense<0.000000e+00> : vector<128xf32>
    %32 = vector.multi_reduction <add>, %29, %cst_39 [0] : vector<512x128xf32> to vector<128xf32>
    %33 = vector.shape_cast %32 : vector<128xf32> to vector<1x128xf32>
    %34 = arith.mulf %29, %29 : vector<512x128xf32>
    %cst_40 = arith.constant dense<0.000000e+00> : vector<128xf32>
    %35 = vector.multi_reduction <add>, %34, %cst_40 [0] : vector<512x128xf32> to vector<128xf32>
    %36 = vector.shape_cast %35 : vector<128xf32> to vector<1x128xf32>
    %cst_41 = arith.constant 0.001953125 : f32
    %37 = vector.broadcast %cst_41 : f32 to vector<1x128xf32>
    %38 = arith.mulf %33, %37 : vector<1x128xf32>
    %cst_42 = arith.constant 0.001953125 : f32
    %39 = vector.broadcast %cst_42 : f32 to vector<1x128xf32>
    %40 = arith.mulf %36, %39 : vector<1x128xf32>
    %41 = arith.mulf %38, %38 : vector<1x128xf32>
    %42 = arith.subf %40, %41 : vector<1x128xf32>
    %cst_43 = arith.constant 9.99999974E-6 : f32
    %43 = vector.broadcast %cst_43 : f32 to vector<1x128xf32>
    %44 = arith.addf %42, %43 : vector<1x128xf32>
    %45 = math.rsqrt %44 : vector<1x128xf32>
    %46 = arith.mulf %30, %45 : vector<1x128xf32>
    %47 = arith.mulf %38, %46 : vector<1x128xf32>
    %48 = arith.subf %31, %47 : vector<1x128xf32>
    %49 = vector.broadcast %46 : vector<1x128xf32> to vector<512x128xf32>
    %50 = arith.mulf %29, %49 : vector<512x128xf32>
    %51 = vector.broadcast %48 : vector<1x128xf32> to vector<512x128xf32>
    %52 = arith.addf %50, %51 : vector<512x128xf32>
    %cst_44 = arith.constant 0.000000e+00 : f32
    %53 = vector.broadcast %cst_44 : f32 to vector<512x128xf32>
    %54 = arith.maximumf %52, %53 : vector<512x128xf32>
    %cst_45 = arith.constant 0.000000e+00 : f32
    %55 = vector.broadcast %cst_45 : f32 to vector<2x1x18x128xf32>
    %c0_46 = arith.constant 0 : index
    %c0_47 = arith.constant 0 : index
    %c0_48 = arith.constant 0 : index
    %c0_49 = arith.constant 0 : index
    %56 = vector.load %arg8[%c0_46, %c0_47, %c0_48, %c0_49] : memref<2x18x18x128xf32, #tpu.memory_space<vmem>>, vector<2x1x18x128xf32>
    tpu.vector_store %arg8[%c0_46, %c0_47, %c0_48, %c0_49], %55 {strides = array<i32>} : memref<2x18x18x128xf32, #tpu.memory_space<vmem>>, vector<2x1x18x128xf32>,
    %cst_50 = arith.constant 0.000000e+00 : f32
    %57 = vector.broadcast %cst_50 : f32 to vector<2x1x18x128xf32>
    %c0_51 = arith.constant 0 : index
    %c17 = arith.constant 17 : index
    %c0_52 = arith.constant 0 : index
    %c0_53 = arith.constant 0 : index
    %58 = vector.load %arg8[%c0_51, %c17, %c0_52, %c0_53] : memref<2x18x18x128xf32, #tpu.memory_space<vmem>>, vector<2x1x18x128xf32>
    tpu.vector_store %arg8[%c0_51, %c17, %c0_52, %c0_53], %57 {strides = array<i32>} : memref<2x18x18x128xf32, #tpu.memory_space<vmem>>, vector<2x1x18x128xf32>,
    %cst_54 = arith.constant 0.000000e+00 : f32
    %59 = vector.broadcast %cst_54 : f32 to vector<2x16x1x128xf32>
    %c0_55 = arith.constant 0 : index
    %c1_56 = arith.constant 1 : index
    %c0_57 = arith.constant 0 : index
    %c0_58 = arith.constant 0 : index
    %60 = vector.load %arg8[%c0_55, %c1_56, %c0_57, %c0_58] : memref<2x18x18x128xf32, #tpu.memory_space<vmem>>, vector<2x16x1x128xf32>
    tpu.vector_store %arg8[%c0_55, %c1_56, %c0_57, %c0_58], %59 {strides = array<i32>} : memref<2x18x18x128xf32, #tpu.memory_space<vmem>>, vector<2x16x1x128xf32>,
    %cst_59 = arith.constant 0.000000e+00 : f32
    %61 = vector.broadcast %cst_59 : f32 to vector<2x16x1x128xf32>
    %c0_60 = arith.constant 0 : index
    %c1_61 = arith.constant 1 : index
    %c17_62 = arith.constant 17 : index
    %c0_63 = arith.constant 0 : index
    %62 = vector.load %arg8[%c0_60, %c1_61, %c17_62, %c0_63] : memref<2x18x18x128xf32, #tpu.memory_space<vmem>>, vector<2x16x1x128xf32>
    tpu.vector_store %arg8[%c0_60, %c1_61, %c17_62, %c0_63], %61 {strides = array<i32>} : memref<2x18x18x128xf32, #tpu.memory_space<vmem>>, vector<2x16x1x128xf32>,
    %63 = vector.shape_cast %54 : vector<512x128xf32> to vector<2x16x16x128xf32>
    %c0_64 = arith.constant 0 : index
    %c1_65 = arith.constant 1 : index
    %c1_66 = arith.constant 1 : index
    %c0_67 = arith.constant 0 : index
    %64 = vector.load %arg8[%c0_64, %c1_65, %c1_66, %c0_67] : memref<2x18x18x128xf32, #tpu.memory_space<vmem>>, vector<2x16x16x128xf32>
    tpu.vector_store %arg8[%c0_64, %c1_65, %c1_66, %c0_67], %63 {strides = array<i32>} : memref<2x18x18x128xf32, #tpu.memory_space<vmem>>, vector<2x16x16x128xf32>,
    %c0_68 = arith.constant 0 : index
    %c0_69 = arith.constant 0 : index
    %c0_70 = arith.constant 0 : index
    %c0_71 = arith.constant 0 : index
    %65 = vector.load %arg8[%c0_68, %c0_69, %c0_70, %c0_71] : memref<2x18x18x128xf32, #tpu.memory_space<vmem>>, vector<2x16x16x128xf32>
    %66 = vector.shape_cast %65 : vector<2x16x16x128xf32> to vector<512x128xf32>
    %67 = arith.truncf %66 : vector<512x128xf32> to vector<512x128xbf16>
    %c0_72 = arith.constant 0 : index
    %c0_73 = arith.constant 0 : index
    %c1_74 = arith.constant 1 : index
    %c0_75 = arith.constant 0 : index
    %68 = vector.load %arg8[%c0_72, %c0_73, %c1_74, %c0_75] : memref<2x18x18x128xf32, #tpu.memory_space<vmem>>, vector<2x16x16x128xf32>
    %69 = vector.shape_cast %68 : vector<2x16x16x128xf32> to vector<512x128xf32>
    %70 = arith.truncf %69 : vector<512x128xf32> to vector<512x128xbf16>
    %c0_76 = arith.constant 0 : index
    %c0_77 = arith.constant 0 : index
    %c2_78 = arith.constant 2 : index
    %c0_79 = arith.constant 0 : index
    %71 = vector.load %arg8[%c0_76, %c0_77, %c2_78, %c0_79] : memref<2x18x18x128xf32, #tpu.memory_space<vmem>>, vector<2x16x16x128xf32>
    %72 = vector.shape_cast %71 : vector<2x16x16x128xf32> to vector<512x128xf32>
    %73 = arith.truncf %72 : vector<512x128xf32> to vector<512x128xbf16>
    %c0_80 = arith.constant 0 : index
    %c1_81 = arith.constant 1 : index
    %c0_82 = arith.constant 0 : index
    %c0_83 = arith.constant 0 : index
    %74 = vector.load %arg8[%c0_80, %c1_81, %c0_82, %c0_83] : memref<2x18x18x128xf32, #tpu.memory_space<vmem>>, vector<2x16x16x128xf32>
    %75 = vector.shape_cast %74 : vector<2x16x16x128xf32> to vector<512x128xf32>
    %76 = arith.truncf %75 : vector<512x128xf32> to vector<512x128xbf16>
    %c0_84 = arith.constant 0 : index
    %c1_85 = arith.constant 1 : index
    %c1_86 = arith.constant 1 : index
    %c0_87 = arith.constant 0 : index
    %77 = vector.load %arg8[%c0_84, %c1_85, %c1_86, %c0_87] : memref<2x18x18x128xf32, #tpu.memory_space<vmem>>, vector<2x16x16x128xf32>
    %78 = vector.shape_cast %77 : vector<2x16x16x128xf32> to vector<512x128xf32>
    %79 = arith.truncf %78 : vector<512x128xf32> to vector<512x128xbf16>
    %c0_88 = arith.constant 0 : index
    %c1_89 = arith.constant 1 : index
    %c2_90 = arith.constant 2 : index
    %c0_91 = arith.constant 0 : index
    %80 = vector.load %arg8[%c0_88, %c1_89, %c2_90, %c0_91] : memref<2x18x18x128xf32, #tpu.memory_space<vmem>>, vector<2x16x16x128xf32>
    %81 = vector.shape_cast %80 : vector<2x16x16x128xf32> to vector<512x128xf32>
    %82 = arith.truncf %81 : vector<512x128xf32> to vector<512x128xbf16>
    %c0_92 = arith.constant 0 : index
    %c2_93 = arith.constant 2 : index
    %c0_94 = arith.constant 0 : index
    %c0_95 = arith.constant 0 : index
    %83 = vector.load %arg8[%c0_92, %c2_93, %c0_94, %c0_95] : memref<2x18x18x128xf32, #tpu.memory_space<vmem>>, vector<2x16x16x128xf32>
    %84 = vector.shape_cast %83 : vector<2x16x16x128xf32> to vector<512x128xf32>
    %85 = arith.truncf %84 : vector<512x128xf32> to vector<512x128xbf16>
    %c0_96 = arith.constant 0 : index
    %c2_97 = arith.constant 2 : index
    %c1_98 = arith.constant 1 : index
    %c0_99 = arith.constant 0 : index
    %86 = vector.load %arg8[%c0_96, %c2_97, %c1_98, %c0_99] : memref<2x18x18x128xf32, #tpu.memory_space<vmem>>, vector<2x16x16x128xf32>
    %87 = vector.shape_cast %86 : vector<2x16x16x128xf32> to vector<512x128xf32>
    %88 = arith.truncf %87 : vector<512x128xf32> to vector<512x128xbf16>
    %c0_100 = arith.constant 0 : index
    %c2_101 = arith.constant 2 : index
    %c2_102 = arith.constant 2 : index
    %c0_103 = arith.constant 0 : index
    %89 = vector.load %arg8[%c0_100, %c2_101, %c2_102, %c0_103] : memref<2x18x18x128xf32, #tpu.memory_space<vmem>>, vector<2x16x16x128xf32>
    %90 = vector.shape_cast %89 : vector<2x16x16x128xf32> to vector<512x128xf32>
    %91 = arith.truncf %90 : vector<512x128xf32> to vector<512x128xbf16>
    %92 = tpu.concatenate %67, %70, %73, %76, %79, %82, %85, %88, %91 in 1 : vector<512x128xbf16>, vector<512x128xbf16>, vector<512x128xbf16>, vector<512x128xbf16>, vector<512x128xbf16>, vector<512x128xbf16>, vector<512x128xbf16>, vector<512x128xbf16>, vector<512x128xbf16> -> vector<512x1152xbf16>
    %c0_104 = arith.constant 0 : index
    %c0_105 = arith.constant 0 : index
    %93 = vector.load %arg4[%c0_104, %c0_105] : memref<1152x128xbf16, #tpu.memory_space<vmem>>, vector<1152x128xbf16>
    %cst_106 = arith.constant dense<0.000000e+00> : vector<512x128xf32>
    %94 = tpu.matmul %92, %93, %cst_106 {dimension_numbers = #tpu.dot_dimension_numbers<[1], [0], [0], [1], [0, 0, 1, 1], [], []>} : vector<512x1152xbf16>, vector<1152x128xbf16>, vector<512x128xf32> -> vector<512x128xf32>
    %c0_107 = arith.constant 0 : index
    %c0_108 = arith.constant 0 : index
    %95 = vector.load %arg5[%c0_107, %c0_108] : memref<1x128xf32, #tpu.memory_space<vmem>>, vector<1x128xf32>
    %c0_109 = arith.constant 0 : index
    %c0_110 = arith.constant 0 : index
    %96 = vector.load %arg6[%c0_109, %c0_110] : memref<1x128xf32, #tpu.memory_space<vmem>>, vector<1x128xf32>
    %cst_111 = arith.constant dense<0.000000e+00> : vector<128xf32>
    %97 = vector.multi_reduction <add>, %94, %cst_111 [0] : vector<512x128xf32> to vector<128xf32>
    %98 = vector.shape_cast %97 : vector<128xf32> to vector<1x128xf32>
    %99 = arith.mulf %94, %94 : vector<512x128xf32>
    %cst_112 = arith.constant dense<0.000000e+00> : vector<128xf32>
    %100 = vector.multi_reduction <add>, %99, %cst_112 [0] : vector<512x128xf32> to vector<128xf32>
    %101 = vector.shape_cast %100 : vector<128xf32> to vector<1x128xf32>
    %cst_113 = arith.constant 0.001953125 : f32
    %102 = vector.broadcast %cst_113 : f32 to vector<1x128xf32>
    %103 = arith.mulf %98, %102 : vector<1x128xf32>
    %cst_114 = arith.constant 0.001953125 : f32
    %104 = vector.broadcast %cst_114 : f32 to vector<1x128xf32>
    %105 = arith.mulf %101, %104 : vector<1x128xf32>
    %106 = arith.mulf %103, %103 : vector<1x128xf32>
    %107 = arith.subf %105, %106 : vector<1x128xf32>
    %cst_115 = arith.constant 9.99999974E-6 : f32
    %108 = vector.broadcast %cst_115 : f32 to vector<1x128xf32>
    %109 = arith.addf %107, %108 : vector<1x128xf32>
    %110 = math.rsqrt %109 : vector<1x128xf32>
    %111 = arith.mulf %95, %110 : vector<1x128xf32>
    %112 = arith.mulf %103, %111 : vector<1x128xf32>
    %113 = arith.subf %96, %112 : vector<1x128xf32>
    %114 = vector.broadcast %111 : vector<1x128xf32> to vector<512x128xf32>
    %115 = arith.mulf %94, %114 : vector<512x128xf32>
    %116 = vector.broadcast %113 : vector<1x128xf32> to vector<512x128xf32>
    %117 = arith.addf %115, %116 : vector<512x128xf32>
    %c0_116 = arith.constant 0 : index
    %c1_117 = arith.constant 1 : index
    %c1_118 = arith.constant 1 : index
    %c0_119 = arith.constant 0 : index
    %118 = vector.load %arg0[%c0_116, %c1_117, %c1_118, %c0_119] : memref<2x18x18x128xf32, #tpu.memory_space<vmem>>, vector<2x16x16x128xf32>
    %119 = vector.shape_cast %118 : vector<2x16x16x128xf32> to vector<512x128xf32>
    %120 = arith.addf %117, %119 : vector<512x128xf32>
    %cst_120 = arith.constant 0.000000e+00 : f32
    %121 = vector.broadcast %cst_120 : f32 to vector<512x128xf32>
    %122 = arith.maximumf %120, %121 : vector<512x128xf32>
    %123 = vector.shape_cast %122 : vector<512x128xf32> to vector<2x16x16x128xf32>
    %c0_121 = arith.constant 0 : index
    %c0_122 = arith.constant 0 : index
    %c0_123 = arith.constant 0 : index
    %c0_124 = arith.constant 0 : index
    %124 = vector.load %arg7[%c0_121, %c0_122, %c0_123, %c0_124] : memref<2x16x16x128xf32, #tpu.memory_space<vmem>>, vector<2x16x16x128xf32>
    tpu.vector_store %arg7[%c0_121, %c0_122, %c0_123, %c0_124], %123 {strides = array<i32>} : memref<2x16x16x128xf32, #tpu.memory_space<vmem>>, vector<2x16x16x128xf32>,
    return
  }
}

</mosaic_0001>

<llo_original>
// kernel: resblock_pallas.1
$region0: #{resblock_pallas.1}
  #allocation0 [shape = 'u32[]', space=smem, size = 0x4, offset = 0x4, fixed_abs, tag = 'smem constant byte address 0x4 - core index']
  #allocation1 [shape = 'u32[144,128]{1,0:T(1,128)}', space=vmem, size = 0x12000, scoped, tag = 'internal scratch']
  #allocation2 [shape = 'f32[2,18,18,128]{3,2,1,0:T(8,128)}', space=vmem, size = 0x6c000, scoped, tag = 'scratch operand']
  %s0 = inlined_call_operand.hbm [shape: f32[2,18,18,128], index: 0, kind: input, shape index: {}]
  %s1 = inlined_call_operand.hbm [shape: bf16[1152,128], index: 1, kind: input, shape index: {}]
  %s2 = inlined_call_operand.hbm [shape: f32[1,128], index: 2, kind: input, shape index: {}]
  %s3 = inlined_call_operand.hbm [shape: f32[1,128], index: 3, kind: input, shape index: {}]
  %s4 = inlined_call_operand.hbm [shape: bf16[1152,128], index: 4, kind: input, shape index: {}]
  %s5 = inlined_call_operand.hbm [shape: f32[1,128], index: 5, kind: input, shape index: {}]
  %s6 = inlined_call_operand.hbm [shape: f32[1,128], index: 6, kind: input, shape index: {}]
  %s7 = inlined_call_operand.hbm [shape: f32[2,16,16,128], index: 7, kind: output, shape index: {}]
  %s8 = sld [smem:[#allocation0]]
  $region66: #{resblock_pallas.1} parent=0
    _
  %s10 = ssub.s32 1, %s8
  %s11 = scalar_select 0, %s10, %s8
  $region1: #{resblock_pallas.1} parent=0
    #allocation3 [shape = 'u8[442368]{0}', space=vmem, size = 0x6c000, scoped, tag = 'input window, operand 0, single buffered']
    #allocation4 [shape = 's32[1]{0}', space=sflag, size = 0x4, scoped, tag = 'scoped memory for resblock_pallas.1']
    #allocation5 [shape = 's32[1]{0}', space=sflag, size = 0x4, scoped, tag = 'scoped memory for resblock_pallas.1']
    #allocation6 [shape = 'u8[294912]{0}', space=vmem, size = 0x48000, scoped, tag = 'input window, operand 1, single buffered']
    #allocation7 [shape = 's32[1]{0}', space=sflag, size = 0x4, scoped, tag = 'scoped memory for resblock_pallas.1']
    #allocation8 [shape = 'u8[512]{0}', space=vmem, size = 0x400, scoped, tag = 'input window, operand 2, single buffered']
    #allocation9 [shape = 'u8[512]{0}', space=vmem, size = 0x400, scoped, tag = 'input window, operand 3, single buffered']
    #allocation10 [shape = 's32[1]{0}', space=sflag, size = 0x4, scoped, tag = 'scoped memory for resblock_pallas.1']
    #allocation11 [shape = 'u8[294912]{0}', space=vmem, size = 0x48000, scoped, tag = 'input window, operand 4, single buffered']
    #allocation12 [shape = 'u8[512]{0}', space=vmem, size = 0x400, scoped, tag = 'input window, operand 5, single buffered']
    #allocation13 [shape = 's32[1]{0}', space=sflag, size = 0x4, scoped, tag = 'scoped memory for resblock_pallas.1']
    #allocation14 [shape = 'u8[512]{0}', space=vmem, size = 0x400, scoped, tag = 'input window, operand 6, single buffered']
    #allocation15 [shape = 'u8[262144]{0}', space=vmem, size = 0x40000, scoped, tag = 'output window, operand 0, single buffered']
    %12 = vsyncpa [#allocation4], 0
    %13 = vsyncpa [#allocation7], 0
    %14 = vsyncpa [#allocation10], 0
    %15 = vsyncpa [#allocation13], 0
    %16 = vsyncpa [#allocation5], 0
    // Predicated region
    $region2: #{resblock_pallas.1} parent=1 // pred_check
      _
    $region3: #{resblock_pallas.1} parent=1 // pred_check_branch
      %18 = sbr.rel (0) target = $region5
    $region4: #{resblock_pallas.1} parent=1 // pred_region
      %s20 = ssub.s32 13824, 13824
      %21 = vsyncadd [#allocation4], %s20
      %s22 = sshll.u32 [#allocation3], 4
      %s23 = int_to_ptr.vmem [resolvable:$true] %s22
      %28 = dma.hbm_to_vmem [thread:$0]  %s0, 13824, %s23, [#allocation4], 128, 128, 8
    $region5: #{resblock_pallas.1} parent=1 // pred_fallthru
      _
    // Predicated region
    $region6: #{resblock_pallas.1} parent=1 // pred_check
      _
    $region7: #{resblock_pallas.1} parent=1 // pred_check_branch
      %30 = sbr.rel (0) target = $region9
    $region8: #{resblock_pallas.1} parent=1 // pred_region
      %s32 = ssub.s32 9216, 9216
      %33 = vsyncadd [#allocation7], %s32
      %s34 = sshll.u32 [#allocation6], 4
      %s35 = int_to_ptr.vmem [resolvable:$true] %s34
      %40 = dma.hbm_to_vmem [thread:$0]  %s1, 9216, %s35, [#allocation7], 64, 64, 4
    $region9: #{resblock_pallas.1} parent=1 // pred_fallthru
      _
    // Predicated region
    $region10: #{resblock_pallas.1} parent=1 // pred_check
      _
    $region11: #{resblock_pallas.1} parent=1 // pred_check_branch
      %42 = sbr.rel (0) target = $region13
    $region12: #{resblock_pallas.1} parent=1 // pred_region
      %s44 = ssub.s32 16, 16
      %45 = vsyncadd [#allocation7], %s44
      %s47 = sshll.u32 [#allocation8], 4
      %s48 = int_to_ptr.vmem [resolvable:$true] %s47
      %50 = dma.hbm_to_vmem [thread:$0]  %s2, 16, %s48, [#allocation7]
    $region13: #{resblock_pallas.1} parent=1 // pred_fallthru
      _
    // Predicated region
    $region14: #{resblock_pallas.1} parent=1 // pred_check
      _
    $region15: #{resblock_pallas.1} parent=1 // pred_check_branch
      %52 = sbr.rel (0) target = $region17
    $region16: #{resblock_pallas.1} parent=1 // pred_region
      %s54 = ssub.s32 16, 16
      %55 = vsyncadd [#allocation10], %s54
      %s57 = sshll.u32 [#allocation9], 4
      %s58 = int_to_ptr.vmem [resolvable:$true] %s57
      %60 = dma.hbm_to_vmem [thread:$0]  %s3, 16, %s58, [#allocation10]
    $region17: #{resblock_pallas.1} parent=1 // pred_fallthru
      _
    // Predicated region
    $region18: #{resblock_pallas.1} parent=1 // pred_check
      _
    $region19: #{resblock_pallas.1} parent=1 // pred_check_branch
      %62 = sbr.rel (0) target = $region21
    $region20: #{resblock_pallas.1} parent=1 // pred_region
      %s64 = ssub.s32 9216, 9216
      %65 = vsyncadd [#allocation10], %s64
      %s66 = sshll.u32 [#allocation11], 4
      %s67 = int_to_ptr.vmem [resolvable:$true] %s66
      %72 = dma.hbm_to_vmem [thread:$0]  %s4, 9216, %s67, [#allocation10], 64, 64, 4
    $region21: #{resblock_pallas.1} parent=1 // pred_fallthru
      _
    // Predicated region
    $region22: #{resblock_pallas.1} parent=1 // pred_check
      _
    $region23: #{resblock_pallas.1} parent=1 // pred_check_branch
      %74 = sbr.rel (0) target = $region25
    $region24: #{resblock_pallas.1} parent=1 // pred_region
      %s76 = ssub.s32 16, 16
      %77 = vsyncadd [#allocation13], %s76
      %s79 = sshll.u32 [#allocation12], 4
      %s80 = int_to_ptr.vmem [resolvable:$true] %s79
      %82 = dma.hbm_to_vmem [thread:$0]  %s5, 16, %s80, [#allocation13]
    $region25: #{resblock_pallas.1} parent=1 // pred_fallthru
      _
    // Predicated region
    $region26: #{resblock_pallas.1} parent=1 // pred_check
      _
    $region27: #{resblock_pallas.1} parent=1 // pred_check_branch
      %84 = sbr.rel (0) target = $region29
    $region28: #{resblock_pallas.1} parent=1 // pred_region
      %s86 = ssub.s32 16, 16
      %87 = vsyncadd [#allocation13], %s86
      %s89 = sshll.u32 [#allocation14], 4
      %s90 = int_to_ptr.vmem [resolvable:$true] %s89
      %92 = dma.hbm_to_vmem [thread:$0]  %s6, 16, %s90, [#allocation13]
    $region29: #{resblock_pallas.1} parent=1 // pred_fallthru
      _
    // Predicated region
    $region30: #{resblock_pallas.1} parent=1 // pred_check
      _
    $region31: #{resblock_pallas.1} parent=1 // pred_check_branch
      %94 = sbr.rel (0) target = $region33
    $region32: #{resblock_pallas.1} parent=1 // pred_region
      %95 = dma.done [#allocation4], 13824
    $region33: #{resblock_pallas.1} parent=1 // pred_fallthru
      _
    // Predicated region
    $region34: #{resblock_pallas.1} parent=1 // pred_check
      _
    $region35: #{resblock_pallas.1} parent=1 // pred_check_branch
      %97 = sbr.rel (0) target = $region37
    $region36: #{resblock_pallas.1} parent=1 // pred_region
      %98 = dma.done [#allocation7], 9216
    $region37: #{resblock_pallas.1} parent=1 // pred_fallthru
      _
    // Predicated region
    $region38: #{resblock_pallas.1} parent=1 // pred_check
      _
    $region39: #{resblock_pallas.1} parent=1 // pred_check_branch
      %100 = sbr.rel (0) target = $region41
    $region40: #{resblock_pallas.1} parent=1 // pred_region
      %101 = dma.done [#allocation7], 16
    $region41: #{resblock_pallas.1} parent=1 // pred_fallthru
      _
    // Predicated region
    $region42: #{resblock_pallas.1} parent=1 // pred_check
      _
    $region43: #{resblock_pallas.1} parent=1 // pred_check_branch
      %103 = sbr.rel (0) target = $region45
    $region44: #{resblock_pallas.1} parent=1 // pred_region
      %104 = dma.done [#allocation10], 16
    $region45: #{resblock_pallas.1} parent=1 // pred_fallthru
      _
    // Predicated region
    $region46: #{resblock_pallas.1} parent=1 // pred_check
      _
    $region47: #{resblock_pallas.1} parent=1 // pred_check_branch
      %106 = sbr.rel (0) target = $region49
    $region48: #{resblock_pallas.1} parent=1 // pred_region
      %107 = dma.done [#allocation10], 9216
    $region49: #{resblock_pallas.1} parent=1 // pred_fallthru
      _
    // Predicated region
    $region50: #{resblock_pallas.1} parent=1 // pred_check
      _
    $region51: #{resblock_pallas.1} parent=1 // pred_check_branch
      %109 = sbr.rel (0) target = $region53
    $region52: #{resblock_pallas.1} parent=1 // pred_region
      %110 = dma.done [#allocation13], 16
    $region53: #{resblock_pallas.1} parent=1 // pred_fallthru
      _
    // Predicated region
    $region54: #{resblock_pallas.1} parent=1 // pred_check
      _
    $region55: #{resblock_pallas.1} parent=1 // pred_check_branch
      %112 = sbr.rel (0) target = $region57
    $region56: #{resblock_pallas.1} parent=1 // pred_region
      %113 = dma.done [#allocation13], 16
    $region57: #{resblock_pallas.1} parent=1 // pred_fallthru
      _
    %v115 = vld [vmem:[#allocation3] sm:$0xff]
    %v116 = vld [vmem:[#allocation3 + $0x8] sm:$0xff]
    %v117 = vld [vmem:[#allocation3 + $0x18] sm:$0xff]
    %v118 = vld [vmem:[#allocation3 + $0x20] sm:$0xff]
    %v119 = vld [vmem:[#allocation3 + $0x30] sm:$0xff]
    %v120 = vld [vmem:[#allocation3 + $0x38] sm:$0xff]
    %v121 = vld [vmem:[#allocation3 + $0x48] sm:$0xff]
    %v122 = vld [vmem:[#allocation3 + $0x50] sm:$0xff]
    %v123 = vld [vmem:[#allocation3 + $0x60] sm:$0xff]
    %v124 = vld [vmem:[#allocation3 + $0x68] sm:$0xff]
    %v125 = vld [vmem:[#allocation3 + $0x78] sm:$0xff]
    %v126 = vld [vmem:[#allocation3 + $0x80] sm:$0xff]
    %v127 = vld [vmem:[#allocation3 + $0x90] sm:$0xff]
    %v128 = vld [vmem:[#allocation3 + $0x98] sm:$0xff]
    %v129 = vld [vmem:[#allocation3 + $0xa8] sm:$0xff]
    %v130 = vld [vmem:[#allocation3 + $0xb0] sm:$0xff]
    %v131 = vld [vmem:[#allocation3 + $0xc0] sm:$0xff]
    %v132 = vld [vmem:[#allocation3 + $0xc8] sm:$0xff]
    %v133 = vld [vmem:[#allocation3 + $0xd8] sm:$0xff]
    %v134 = vld [vmem:[#allocation3 + $0xe0] sm:$0xff]
    %v135 = vld [vmem:[#allocation3 + $0xf0] sm:$0xff]
    %v136 = vld [vmem:[#allocation3 + $0xf8] sm:$0xff]
    %v137 = vld [vmem:[#allocation3 + $0x108] sm:$0xff]
    %v138 = vld [vmem:[#allocation3 + $0x110] sm:$0xff]
    %v139 = vld [vmem:[#allocation3 + $0x120] sm:$0xff]
    %v140 = vld [vmem:[#allocation3 + $0x128] sm:$0xff]
    %v141 = vld [vmem:[#allocation3 + $0x138] sm:$0xff]
    %v142 = vld [vmem:[#allocation3 + $0x140] sm:$0xff]
    %v143 = vld [vmem:[#allocation3 + $0x150] sm:$0xff]
    %v144 = vld [vmem:[#allocation3 + $0x158] sm:$0xff]
    %v145 = vld [vmem:[#allocation3 + $0x168] sm:$0xff]
    %v146 = vld [vmem:[#allocation3 + $0x170] sm:$0xff]
    %v147 = vld [vmem:[#allocation3 + $0x1b0] sm:$0xff]
    %v148 = vld [vmem:[#allocation3 + $0x1b8] sm:$0xff]
    %v149 = vld [vmem:[#allocation3 + $0x1c8] sm:$0xff]
    %v150 = vld [vmem:[#allocation3 + $0x1d0] sm:$0xff]
    %v151 = vld [vmem:[#allocation3 + $0x1e0] sm:$0xff]
    %v152 = vld [vmem:[#allocation3 + $0x1e8] sm:$0xff]
    %v153 = vld [vmem:[#allocation3 + $0x1f8] sm:$0xff]
    %v154 = vld [vmem:[#allocation3 + $0x200] sm:$0xff]
    %v155 = vld [vmem:[#allocation3 + $0x210] sm:$0xff]
    %v156 = vld [vmem:[#allocation3 + $0x218] sm:$0xff]
    %v157 = vld [vmem:[#allocation3 + $0x228] sm:$0xff]
    %v158 = vld [vmem:[#allocation3 + $0x230] sm:$0xff]
    %v159 = vld [vmem:[#allocation3 + $0x240] sm:$0xff]
    %v160 = vld [vmem:[#allocation3 + $0x248] sm:$0xff]
    %v161 = vld [vmem:[#allocation3 + $0x258] sm:$0xff]
    %v162 = vld [vmem:[#allocation3 + $0x260] sm:$0xff]
    %v163 = vld [vmem:[#allocation3 + $0x270] sm:$0xff]
    %v164 = vld [vmem:[#allocation3 + $0x278] sm:$0xff]
    %v165 = vld [vmem:[#allocation3 + $0x288] sm:$0xff]
    %v166 = vld [vmem:[#allocation3 + $0x290] sm:$0xff]
    %v167 = vld [vmem:[#allocation3 + $0x2a0] sm:$0xff]
    %v168 = vld [vmem:[#allocation3 + $0x2a8] sm:$0xff]
    %v169 = vld [vmem:[#allocation3 + $0x2b8] sm:$0xff]
    %v170 = vld [vmem:[#allocation3 + $0x2c0] sm:$0xff]
    %v171 = vld [vmem:[#allocation3 + $0x2d0] sm:$0xff]
    %v172 = vld [vmem:[#allocation3 + $0x2d8] sm:$0xff]
    %v173 = vld [vmem:[#allocation3 + $0x2e8] sm:$0xff]
    %v174 = vld [vmem:[#allocation3 + $0x2f0] sm:$0xff]
    %v175 = vld [vmem:[#allocation3 + $0x300] sm:$0xff]
    %v176 = vld [vmem:[#allocation3 + $0x308] sm:$0xff]
    %v177 = vld [vmem:[#allocation3 + $0x318] sm:$0xff]
    %v178 = vld [vmem:[#allocation3 + $0x320] sm:$0xff]
    %v179 = vpack.c.bf16 %v116, %v115
    %v180 = vpack.c.bf16 %v118, %v117
    %v181 = vpack.c.bf16 %v120, %v119
    %v182 = vpack.c.bf16 %v122, %v121
    %v183 = vpack.c.bf16 %v124, %v123
    %v184 = vpack.c.bf16 %v126, %v125
    %v185 = vpack.c.bf16 %v128, %v127
    %v186 = vpack.c.bf16 %v130, %v129
    %v187 = vpack.c.bf16 %v132, %v131
    %v188 = vpack.c.bf16 %v134, %v133
    %v189 = vpack.c.bf16 %v136, %v135
    %v190 = vpack.c.bf16 %v138, %v137
    %v191 = vpack.c.bf16 %v140, %v139
    %v192 = vpack.c.bf16 %v142, %v141
    %v193 = vpack.c.bf16 %v144, %v143
    %v194 = vpack.c.bf16 %v146, %v145
    %v195 = vpack.c.bf16 %v148, %v147
    %v196 = vpack.c.bf16 %v150, %v149
    %v197 = vpack.c.bf16 %v152, %v151
    %v198 = vpack.c.bf16 %v154, %v153
    %v199 = vpack.c.bf16 %v156, %v155
    %v200 = vpack.c.bf16 %v158, %v157
    %v201 = vpack.c.bf16 %v160, %v159
    %v202 = vpack.c.bf16 %v162, %v161
    %v203 = vpack.c.bf16 %v164, %v163
    %v204 = vpack.c.bf16 %v166, %v165
    %v205 = vpack.c.bf16 %v168, %v167
    %v206 = vpack.c.bf16 %v170, %v169
    %v207 = vpack.c.bf16 %v172, %v171
    %v208 = vpack.c.bf16 %v174, %v173
    %v209 = vpack.c.bf16 %v176, %v175
    %v210 = vpack.c.bf16 %v178, %v177
    %v211 = vld [vmem:[#allocation3 + $0x1] sm:$0xff]
    %v212 = vld [vmem:[#allocation3 + $0x9] sm:$0xff]
    %v213 = vld [vmem:[#allocation3 + $0x19] sm:$0xff]
    %v214 = vld [vmem:[#allocation3 + $0x21] sm:$0xff]
    %v215 = vld [vmem:[#allocation3 + $0x31] sm:$0xff]
    %v216 = vld [vmem:[#allocation3 + $0x39] sm:$0xff]
    %v217 = vld [vmem:[#allocation3 + $0x49] sm:$0xff]
    %v218 = vld [vmem:[#allocation3 + $0x51] sm:$0xff]
    %v219 = vld [vmem:[#allocation3 + $0x61] sm:$0xff]
    %v220 = vld [vmem:[#allocation3 + $0x69] sm:$0xff]
    %v221 = vld [vmem:[#allocation3 + $0x79] sm:$0xff]
    %v222 = vld [vmem:[#allocation3 + $0x81] sm:$0xff]
    %v223 = vld [vmem:[#allocation3 + $0x91] sm:$0xff]
    %v224 = vld [vmem:[#allocation3 + $0x99] sm:$0xff]
    %v225 = vld [vmem:[#allocation3 + $0xa9] sm:$0xff]
    %v226 = vld [vmem:[#allocation3 + $0xb1] sm:$0xff]
    %v227 = vld [vmem:[#allocation3 + $0xc1] sm:$0xff]
    %v228 = vld [vmem:[#allocation3 + $0xc9] sm:$0xff]
    %v229 = vld [vmem:[#allocation3 + $0xd9] sm:$0xff]
    %v230 = vld [vmem:[#allocation3 + $0xe1] sm:$0xff]
    %v231 = vld [vmem:[#allocation3 + $0xf1] sm:$0xff]
    %v232 = vld [vmem:[#allocation3 + $0xf9] sm:$0xff]
    %v233 = vld [vmem:[#allocation3 + $0x109] sm:$0xff]
    %v234 = vld [vmem:[#allocation3 + $0x111] sm:$0xff]
    %v235 = vld [vmem:[#allocation3 + $0x121] sm:$0xff]
    %v236 = vld [vmem:[#allocation3 + $0x129] sm:$0xff]
    %v237 = vld [vmem:[#allocation3 + $0x139] sm:$0xff]
    %v238 = vld [vmem:[#allocation3 + $0x141] sm:$0xff]
    %v239 = vld [vmem:[#allocation3 + $0x151] sm:$0xff]
    %v240 = vld [vmem:[#allocation3 + $0x159] sm:$0xff]
    %v241 = vld [vmem:[#allocation3 + $0x169] sm:$0xff]
    %v242 = vld [vmem:[#allocation3 + $0x171] sm:$0xff]
    %v243 = vld [vmem:[#allocation3 + $0x1b1] sm:$0xff]
    %v244 = vld [vmem:[#allocation3 + $0x1b9] sm:$0xff]
    %v245 = vld [vmem:[#allocation3 + $0x1c9] sm:$0xff]
    %v246 = vld [vmem:[#allocation3 + $0x1d1] sm:$0xff]
    %v247 = vld [vmem:[#allocation3 + $0x1e1] sm:$0xff]
    %v248 = vld [vmem:[#allocation3 + $0x1e9] sm:$0xff]
    %v249 = vld [vmem:[#allocation3 + $0x1f9] sm:$0xff]
    %v250 = vld [vmem:[#allocation3 + $0x201] sm:$0xff]
    %v251 = vld [vmem:[#allocation3 + $0x211] sm:$0xff]
    %v252 = vld [vmem:[#allocation3 + $0x219] sm:$0xff]
    %v253 = vld [vmem:[#allocation3 + $0x229] sm:$0xff]
    %v254 = vld [vmem:[#allocation3 + $0x231] sm:$0xff]
    %v255 = vld [vmem:[#allocation3 + $0x241] sm:$0xff]
    %v256 = vld [vmem:[#allocation3 + $0x249] sm:$0xff]
    %v257 = vld [vmem:[#allocation3 + $0x259] sm:$0xff]
    %v258 = vld [vmem:[#allocation3 + $0x261] sm:$0xff]
    %v259 = vld [vmem:[#allocation3 + $0x271] sm:$0xff]
    %v260 = vld [vmem:[#allocation3 + $0x279] sm:$0xff]
    %v261 = vld [vmem:[#allocation3 + $0x289] sm:$0xff]
    %v262 = vld [vmem:[#allocation3 + $0x291] sm:$0xff]
    %v263 = vld [vmem:[#allocation3 + $0x2a1] sm:$0xff]
    %v264 = vld [vmem:[#allocation3 + $0x2a9] sm:$0xff]
    %v265 = vld [vmem:[#allocation3 + $0x2b9] sm:$0xff]
    %v266 = vld [vmem:[#allocation3 + $0x2c1] sm:$0xff]
    %v267 = vld [vmem:[#allocation3 + $0x2d1] sm:$0xff]
    %v268 = vld [vmem:[#allocation3 + $0x2d9] sm:$0xff]
    %v269 = vld [vmem:[#allocation3 + $0x2e9] sm:$0xff]
    %v270 = vld [vmem:[#allocation3 + $0x2f1] sm:$0xff]
    %v271 = vld [vmem:[#allocation3 + $0x301] sm:$0xff]
    %v272 = vld [vmem:[#allocation3 + $0x309] sm:$0xff]
    %v273 = vld [vmem:[#allocation3 + $0x319] sm:$0xff]
    %v274 = vld [vmem:[#allocation3 + $0x321] sm:$0xff]
    %v275 = vpack.c.bf16 %v212, %v211
    %v276 = vpack.c.bf16 %v214, %v213
    %v277 = vpack.c.bf16 %v216, %v215
    %v278 = vpack.c.bf16 %v218, %v217
    %v279 = vpack.c.bf16 %v220, %v219
    %v280 = vpack.c.bf16 %v222, %v221
    %v281 = vpack.c.bf16 %v224, %v223
    %v282 = vpack.c.bf16 %v226, %v225
    %v283 = vpack.c.bf16 %v228, %v227
    %v284 = vpack.c.bf16 %v230, %v229
    %v285 = vpack.c.bf16 %v232, %v231
    %v286 = vpack.c.bf16 %v234, %v233
    %v287 = vpack.c.bf16 %v236, %v235
    %v288 = vpack.c.bf16 %v238, %v237
    %v289 = vpack.c.bf16 %v240, %v239
    %v290 = vpack.c.bf16 %v242, %v241
    %v291 = vpack.c.bf16 %v244, %v243
    %v292 = vpack.c.bf16 %v246, %v245
    %v293 = vpack.c.bf16 %v248, %v247
    %v294 = vpack.c.bf16 %v250, %v249
    %v295 = vpack.c.bf16 %v252, %v251
    %v296 = vpack.c.bf16 %v254, %v253
    %v297 = vpack.c.bf16 %v256, %v255
    %v298 = vpack.c.bf16 %v258, %v257
    %v299 = vpack.c.bf16 %v260, %v259
    %v300 = vpack.c.bf16 %v262, %v261
    %v301 = vpack.c.bf16 %v264, %v263
    %v302 = vpack.c.bf16 %v266, %v265
    %v303 = vpack.c.bf16 %v268, %v267
    %v304 = vpack.c.bf16 %v270, %v269
    %v305 = vpack.c.bf16 %v272, %v271
    %v306 = vpack.c.bf16 %v274, %v273
    %v307 = vld [vmem:[#allocation3 + $0x2] sm:$0xff]
    %v308 = vld [vmem:[#allocation3 + $0xa] sm:$0xff]
    %v309 = vld [vmem:[#allocation3 + $0x1a] sm:$0xff]
    %v310 = vld [vmem:[#allocation3 + $0x22] sm:$0xff]
    %v311 = vld [vmem:[#allocation3 + $0x32] sm:$0xff]
    %v312 = vld [vmem:[#allocation3 + $0x3a] sm:$0xff]
    %v313 = vld [vmem:[#allocation3 + $0x4a] sm:$0xff]
    %v314 = vld [vmem:[#allocation3 + $0x52] sm:$0xff]
    %v315 = vld [vmem:[#allocation3 + $0x62] sm:$0xff]
    %v316 = vld [vmem:[#allocation3 + $0x6a] sm:$0xff]
    %v317 = vld [vmem:[#allocation3 + $0x7a] sm:$0xff]
    %v318 = vld [vmem:[#allocation3 + $0x82] sm:$0xff]
    %v319 = vld [vmem:[#allocation3 + $0x92] sm:$0xff]
    %v320 = vld [vmem:[#allocation3 + $0x9a] sm:$0xff]
    %v321 = vld [vmem:[#allocation3 + $0xaa] sm:$0xff]
    %v322 = vld [vmem:[#allocation3 + $0xb2] sm:$0xff]
    %v323 = vld [vmem:[#allocation3 + $0xc2] sm:$0xff]
    %v324 = vld [vmem:[#allocation3 + $0xca] sm:$0xff]
    %v325 = vld [vmem:[#allocation3 + $0xda] sm:$0xff]
    %v326 = vld [vmem:[#allocation3 + $0xe2] sm:$0xff]
    %v327 = vld [vmem:[#allocation3 + $0xf2] sm:$0xff]
    %v328 = vld [vmem:[#allocation3 + $0xfa] sm:$0xff]
    %v329 = vld [vmem:[#allocation3 + $0x10a] sm:$0xff]
    %v330 = vld [vmem:[#allocation3 + $0x112] sm:$0xff]
    %v331 = vld [vmem:[#allocation3 + $0x122] sm:$0xff]
    %v332 = vld [vmem:[#allocation3 + $0x12a] sm:$0xff]
    %v333 = vld [vmem:[#allocation3 + $0x13a] sm:$0xff]
    %v334 = vld [vmem:[#allocation3 + $0x142] sm:$0xff]
    %v335 = vld [vmem:[#allocation3 + $0x152] sm:$0xff]
    %v336 = vld [vmem:[#allocation3 + $0x15a] sm:$0xff]
    %v337 = vld [vmem:[#allocation3 + $0x16a] sm:$0xff]
    %v338 = vld [vmem:[#allocation3 + $0x172] sm:$0xff]
    %v339 = vld [vmem:[#allocation3 + $0x1b2] sm:$0xff]
    %v340 = vld [vmem:[#allocation3 + $0x1ba] sm:$0xff]
    %v341 = vld [vmem:[#allocation3 + $0x1ca] sm:$0xff]
    %v342 = vld [vmem:[#allocation3 + $0x1d2] sm:$0xff]
    %v343 = vld [vmem:[#allocation3 + $0x1e2] sm:$0xff]
    %v344 = vld [vmem:[#allocation3 + $0x1ea] sm:$0xff]
    %v345 = vld [vmem:[#allocation3 + $0x1fa] sm:$0xff]
    %v346 = vld [vmem:[#allocation3 + $0x202] sm:$0xff]
    %v347 = vld [vmem:[#allocation3 + $0x212] sm:$0xff]
    %v348 = vld [vmem:[#allocation3 + $0x21a] sm:$0xff]
    %v349 = vld [vmem:[#allocation3 + $0x22a] sm:$0xff]
    %v350 = vld [vmem:[#allocation3 + $0x232] sm:$0xff]
    %v351 = vld [vmem:[#allocation3 + $0x242] sm:$0xff]
    %v352 = vld [vmem:[#allocation3 + $0x24a] sm:$0xff]
    %v353 = vld [vmem:[#allocation3 + $0x25a] sm:$0xff]
    %v354 = vld [vmem:[#allocation3 + $0x262] sm:$0xff]
    %v355 = vld [vmem:[#allocation3 + $0x272] sm:$0xff]
    %v356 = vld [vmem:[#allocation3 + $0x27a] sm:$0xff]
    %v357 = vld [vmem:[#allocation3 + $0x28a] sm:$0xff]
    %v358 = vld [vmem:[#allocation3 + $0x292] sm:$0xff]
    %v359 = vld [vmem:[#allocation3 + $0x2a2] sm:$0xff]
    %v360 = vld [vmem:[#allocation3 + $0x2aa] sm:$0xff]
    %v361 = vld [vmem:[#allocation3 + $0x2ba] sm:$0xff]
    %v362 = vld [vmem:[#allocation3 + $0x2c2] sm:$0xff]
    %v363 = vld [vmem:[#allocation3 + $0x2d2] sm:$0xff]
    %v364 = vld [vmem:[#allocation3 + $0x2da] sm:$0xff]
    %v365 = vld [vmem:[#allocation3 + $0x2ea] sm:$0xff]
    %v366 = vld [vmem:[#allocation3 + $0x2f2] sm:$0xff]
    %v367 = vld [vmem:[#allocation3 + $0x302] sm:$0xff]
    %v368 = vld [vmem:[#allocation3 + $0x30a] sm:$0xff]
    %v369 = vld [vmem:[#allocation3 + $0x31a] sm:$0xff]
    %v370 = vld [vmem:[#allocation3 + $0x322] sm:$0xff]
    %v371 = vpack.c.bf16 %v308, %v307
    %v372 = vpack.c.bf16 %v310, %v309
    %v373 = vpack.c.bf16 %v312, %v311
    %v374 = vpack.c.bf16 %v314, %v313
    %v375 = vpack.c.bf16 %v316, %v315
    %v376 = vpack.c.bf16 %v318, %v317
    %v377 = vpack.c.bf16 %v320, %v319
    %v378 = vpack.c.bf16 %v322, %v321
    %v379 = vpack.c.bf16 %v324, %v323
    %v380 = vpack.c.bf16 %v326, %v325
    %v381 = vpack.c.bf16 %v328, %v327
    %v382 = vpack.c.bf16 %v330, %v329
    %v383 = vpack.c.bf16 %v332, %v331
    %v384 = vpack.c.bf16 %v334, %v333
    %v385 = vpack.c.bf16 %v336, %v335
    %v386 = vpack.c.bf16 %v338, %v337
    %v387 = vpack.c.bf16 %v340, %v339
    %v388 = vpack.c.bf16 %v342, %v341
    %v389 = vpack.c.bf16 %v344, %v343
    %v390 = vpack.c.bf16 %v346, %v345
    %v391 = vpack.c.bf16 %v348, %v347
    %v392 = vpack.c.bf16 %v350, %v349
    %v393 = vpack.c.bf16 %v352, %v351
    %v394 = vpack.c.bf16 %v354, %v353
    %v395 = vpack.c.bf16 %v356, %v355
    %v396 = vpack.c.bf16 %v358, %v357
    %v397 = vpack.c.bf16 %v360, %v359
    %v398 = vpack.c.bf16 %v362, %v361
    %v399 = vpack.c.bf16 %v364, %v363
    %v400 = vpack.c.bf16 %v366, %v365
    %v401 = vpack.c.bf16 %v368, %v367
    %v402 = vpack.c.bf16 %v370, %v369
    %s403 = scalar_lea.vmem [#allocation3], 24
    %v404 = vld [vmem:[%s403] sm:$0xff]
    %v405 = vld [vmem:[%s403 + $0x8] sm:$0xff]
    %v406 = vld [vmem:[%s403 + $0x18] sm:$0xff]
    %v407 = vld [vmem:[%s403 + $0x20] sm:$0xff]
    %v408 = vld [vmem:[%s403 + $0x30] sm:$0xff]
    %v409 = vld [vmem:[%s403 + $0x38] sm:$0xff]
    %v410 = vld [vmem:[%s403 + $0x48] sm:$0xff]
    %v411 = vld [vmem:[%s403 + $0x50] sm:$0xff]
    %v412 = vld [vmem:[%s403 + $0x60] sm:$0xff]
    %v413 = vld [vmem:[%s403 + $0x68] sm:$0xff]
    %v414 = vld [vmem:[%s403 + $0x78] sm:$0xff]
    %v415 = vld [vmem:[%s403 + $0x80] sm:$0xff]
    %v416 = vld [vmem:[%s403 + $0x90] sm:$0xff]
    %v417 = vld [vmem:[%s403 + $0x98] sm:$0xff]
    %v418 = vld [vmem:[%s403 + $0xa8] sm:$0xff]
    %v419 = vld [vmem:[%s403 + $0xb0] sm:$0xff]
    %v420 = vld [vmem:[%s403 + $0xc0] sm:$0xff]
    %v421 = vld [vmem:[%s403 + $0xc8] sm:$0xff]
    %v422 = vld [vmem:[%s403 + $0xd8] sm:$0xff]
    %v423 = vld [vmem:[%s403 + $0xe0] sm:$0xff]
    %v424 = vld [vmem:[%s403 + $0xf0] sm:$0xff]
    %v425 = vld [vmem:[%s403 + $0xf8] sm:$0xff]
    %v426 = vld [vmem:[%s403 + $0x108] sm:$0xff]
    %v427 = vld [vmem:[%s403 + $0x110] sm:$0xff]
    %v428 = vld [vmem:[%s403 + $0x120] sm:$0xff]
    %v429 = vld [vmem:[%s403 + $0x128] sm:$0xff]
    %v430 = vld [vmem:[%s403 + $0x138] sm:$0xff]
    %v431 = vld [vmem:[%s403 + $0x140] sm:$0xff]
    %v432 = vld [vmem:[%s403 + $0x150] sm:$0xff]
    %v433 = vld [vmem:[%s403 + $0x158] sm:$0xff]
    %v434 = vld [vmem:[%s403 + $0x168] sm:$0xff]
    %v435 = vld [vmem:[%s403 + $0x170] sm:$0xff]
    %v436 = vld [vmem:[%s403 + $0x1b0] sm:$0xff]
    %v437 = vld [vmem:[%s403 + $0x1b8] sm:$0xff]
    %v438 = vld [vmem:[%s403 + $0x1c8] sm:$0xff]
    %v439 = vld [vmem:[%s403 + $0x1d0] sm:$0xff]
    %v440 = vld [vmem:[%s403 + $0x1e0] sm:$0xff]
    %v441 = vld [vmem:[%s403 + $0x1e8] sm:$0xff]
    %v442 = vld [vmem:[%s403 + $0x1f8] sm:$0xff]
    %v443 = vld [vmem:[%s403 + $0x200] sm:$0xff]
    %v444 = vld [vmem:[%s403 + $0x210] sm:$0xff]
    %v445 = vld [vmem:[%s403 + $0x218] sm:$0xff]
    %v446 = vld [vmem:[%s403 + $0x228] sm:$0xff]
    %v447 = vld [vmem:[%s403 + $0x230] sm:$0xff]
    %v448 = vld [vmem:[%s403 + $0x240] sm:$0xff]
    %v449 = vld [vmem:[%s403 + $0x248] sm:$0xff]
    %v450 = vld [vmem:[%s403 + $0x258] sm:$0xff]
    %v451 = vld [vmem:[%s403 + $0x260] sm:$0xff]
    %v452 = vld [vmem:[%s403 + $0x270] sm:$0xff]
    %v453 = vld [vmem:[%s403 + $0x278] sm:$0xff]
    %v454 = vld [vmem:[%s403 + $0x288] sm:$0xff]
    %v455 = vld [vmem:[%s403 + $0x290] sm:$0xff]
    %v456 = vld [vmem:[%s403 + $0x2a0] sm:$0xff]
    %v457 = vld [vmem:[%s403 + $0x2a8] sm:$0xff]
    %v458 = vld [vmem:[%s403 + $0x2b8] sm:$0xff]
    %v459 = vld [vmem:[%s403 + $0x2c0] sm:$0xff]
    %v460 = vld [vmem:[%s403 + $0x2d0] sm:$0xff]
    %v461 = vld [vmem:[%s403 + $0x2d8] sm:$0xff]
    %v462 = vld [vmem:[%s403 + $0x2e8] sm:$0xff]
    %v463 = vld [vmem:[%s403 + $0x2f0] sm:$0xff]
    %v464 = vld [vmem:[%s403 + $0x300] sm:$0xff]
    %v465 = vld [vmem:[%s403 + $0x308] sm:$0xff]
    %v466 = vld [vmem:[%s403 + $0x318] sm:$0xff]
    %v467 = vld [vmem:[%s403 + $0x320] sm:$0xff]
    %v468 = vpack.c.bf16 %v405, %v404
    %v469 = vpack.c.bf16 %v407, %v406
    %v470 = vpack.c.bf16 %v409, %v408
    %v471 = vpack.c.bf16 %v411, %v410
    %v472 = vpack.c.bf16 %v413, %v412
    %v473 = vpack.c.bf16 %v415, %v414
    %v474 = vpack.c.bf16 %v417, %v416
    %v475 = vpack.c.bf16 %v419, %v418
    %v476 = vpack.c.bf16 %v421, %v420
    %v477 = vpack.c.bf16 %v423, %v422
    %v478 = vpack.c.bf16 %v425, %v424
    %v479 = vpack.c.bf16 %v427, %v426
    %v480 = vpack.c.bf16 %v429, %v428
    %v481 = vpack.c.bf16 %v431, %v430
    %v482 = vpack.c.bf16 %v433, %v432
    %v483 = vpack.c.bf16 %v435, %v434
    %v484 = vpack.c.bf16 %v437, %v436
    %v485 = vpack.c.bf16 %v439, %v438
    %v486 = vpack.c.bf16 %v441, %v440
    %v487 = vpack.c.bf16 %v443, %v442
    %v488 = vpack.c.bf16 %v445, %v444
    %v489 = vpack.c.bf16 %v447, %v446
    %v490 = vpack.c.bf16 %v449, %v448
    %v491 = vpack.c.bf16 %v451, %v450
    %v492 = vpack.c.bf16 %v453, %v452
    %v493 = vpack.c.bf16 %v455, %v454
    %v494 = vpack.c.bf16 %v457, %v456
    %v495 = vpack.c.bf16 %v459, %v458
    %v496 = vpack.c.bf16 %v461, %v460
    %v497 = vpack.c.bf16 %v463, %v462
    %v498 = vpack.c.bf16 %v465, %v464
    %v499 = vpack.c.bf16 %v467, %v466
    %v500 = vld [vmem:[%s403 + $0x1] sm:$0xff]
    %v501 = vld [vmem:[%s403 + $0x9] sm:$0xff]
    %v502 = vld [vmem:[%s403 + $0x19] sm:$0xff]
    %v503 = vld [vmem:[%s403 + $0x21] sm:$0xff]
    %v504 = vld [vmem:[%s403 + $0x31] sm:$0xff]
    %v505 = vld [vmem:[%s403 + $0x39] sm:$0xff]
    %v506 = vld [vmem:[%s403 + $0x49] sm:$0xff]
    %v507 = vld [vmem:[%s403 + $0x51] sm:$0xff]
    %v508 = vld [vmem:[%s403 + $0x61] sm:$0xff]
    %v509 = vld [vmem:[%s403 + $0x69] sm:$0xff]
    %v510 = vld [vmem:[%s403 + $0x79] sm:$0xff]
    %v511 = vld [vmem:[%s403 + $0x81] sm:$0xff]
    %v512 = vld [vmem:[%s403 + $0x91] sm:$0xff]
    %v513 = vld [vmem:[%s403 + $0x99] sm:$0xff]
    %v514 = vld [vmem:[%s403 + $0xa9] sm:$0xff]
    %v515 = vld [vmem:[%s403 + $0xb1] sm:$0xff]
    %v516 = vld [vmem:[%s403 + $0xc1] sm:$0xff]
    %v517 = vld [vmem:[%s403 + $0xc9] sm:$0xff]
    %v518 = vld [vmem:[%s403 + $0xd9] sm:$0xff]
    %v519 = vld [vmem:[%s403 + $0xe1] sm:$0xff]
    %v520 = vld [vmem:[%s403 + $0xf1] sm:$0xff]
    %v521 = vld [vmem:[%s403 + $0xf9] sm:$0xff]
    %v522 = vld [vmem:[%s403 + $0x109] sm:$0xff]
    %v523 = vld [vmem:[%s403 + $0x111] sm:$0xff]
    %v524 = vld [vmem:[%s403 + $0x121] sm:$0xff]
    %v525 = vld [vmem:[%s403 + $0x129] sm:$0xff]
    %v526 = vld [vmem:[%s403 + $0x139] sm:$0xff]
    %v527 = vld [vmem:[%s403 + $0x141] sm:$0xff]
    %v528 = vld [vmem:[%s403 + $0x151] sm:$0xff]
    %v529 = vld [vmem:[%s403 + $0x159] sm:$0xff]
    %v530 = vld [vmem:[%s403 + $0x169] sm:$0xff]
    %v531 = vld [vmem:[%s403 + $0x171] sm:$0xff]
    %v532 = vld [vmem:[%s403 + $0x1b1] sm:$0xff]
    %v533 = vld [vmem:[%s403 + $0x1b9] sm:$0xff]
    %v534 = vld [vmem:[%s403 + $0x1c9] sm:$0xff]
    %v535 = vld [vmem:[%s403 + $0x1d1] sm:$0xff]
    %v536 = vld [vmem:[%s403 + $0x1e1] sm:$0xff]
    %v537 = vld [vmem:[%s403 + $0x1e9] sm:$0xff]
    %v538 = vld [vmem:[%s403 + $0x1f9] sm:$0xff]
    %v539 = vld [vmem:[%s403 + $0x201] sm:$0xff]
    %v540 = vld [vmem:[%s403 + $0x211] sm:$0xff]
    %v541 = vld [vmem:[%s403 + $0x219] sm:$0xff]
    %v542 = vld [vmem:[%s403 + $0x229] sm:$0xff]
    %v543 = vld [vmem:[%s403 + $0x231] sm:$0xff]
    %v544 = vld [vmem:[%s403 + $0x241] sm:$0xff]
    %v545 = vld [vmem:[%s403 + $0x249] sm:$0xff]
    %v546 = vld [vmem:[%s403 + $0x259] sm:$0xff]
    %v547 = vld [vmem:[%s403 + $0x261] sm:$0xff]
    %v548 = vld [vmem:[%s403 + $0x271] sm:$0xff]
    %v549 = vld [vmem:[%s403 + $0x279] sm:$0xff]
    %v550 = vld [vmem:[%s403 + $0x289] sm:$0xff]
    %v551 = vld [vmem:[%s403 + $0x291] sm:$0xff]
    %v552 = vld [vmem:[%s403 + $0x2a1] sm:$0xff]
    %v553 = vld [vmem:[%s403 + $0x2a9] sm:$0xff]
    %v554 = vld [vmem:[%s403 + $0x2b9] sm:$0xff]
    %v555 = vld [vmem:[%s403 + $0x2c1] sm:$0xff]
    %v556 = vld [vmem:[%s403 + $0x2d1] sm:$0xff]
    %v557 = vld [vmem:[%s403 + $0x2d9] sm:$0xff]
    %v558 = vld [vmem:[%s403 + $0x2e9] sm:$0xff]
    %v559 = vld [vmem:[%s403 + $0x2f1] sm:$0xff]
    %v560 = vld [vmem:[%s403 + $0x301] sm:$0xff]
    %v561 = vld [vmem:[%s403 + $0x309] sm:$0xff]
    %v562 = vld [vmem:[%s403 + $0x319] sm:$0xff]
    %v563 = vld [vmem:[%s403 + $0x321] sm:$0xff]
    %v564 = vpack.c.bf16 %v501, %v500
    %v565 = vpack.c.bf16 %v503, %v502
    %v566 = vpack.c.bf16 %v505, %v504
    %v567 = vpack.c.bf16 %v507, %v506
    %v568 = vpack.c.bf16 %v509, %v508
    %v569 = vpack.c.bf16 %v511, %v510
    %v570 = vpack.c.bf16 %v513, %v512
    %v571 = vpack.c.bf16 %v515, %v514
    %v572 = vpack.c.bf16 %v517, %v516
    %v573 = vpack.c.bf16 %v519, %v518
    %v574 = vpack.c.bf16 %v521, %v520
    %v575 = vpack.c.bf16 %v523, %v522
    %v576 = vpack.c.bf16 %v525, %v524
    %v577 = vpack.c.bf16 %v527, %v526
    %v578 = vpack.c.bf16 %v529, %v528
    %v579 = vpack.c.bf16 %v531, %v530
    %v580 = vpack.c.bf16 %v533, %v532
    %v581 = vpack.c.bf16 %v535, %v534
    %v582 = vpack.c.bf16 %v537, %v536
    %v583 = vpack.c.bf16 %v539, %v538
    %v584 = vpack.c.bf16 %v541, %v540
    %v585 = vpack.c.bf16 %v543, %v542
    %v586 = vpack.c.bf16 %v545, %v544
    %v587 = vpack.c.bf16 %v547, %v546
    %v588 = vpack.c.bf16 %v549, %v548
    %v589 = vpack.c.bf16 %v551, %v550
    %v590 = vpack.c.bf16 %v553, %v552
    %v591 = vpack.c.bf16 %v555, %v554
    %v592 = vpack.c.bf16 %v557, %v556
    %v593 = vpack.c.bf16 %v559, %v558
    %v594 = vpack.c.bf16 %v561, %v560
    %v595 = vpack.c.bf16 %v563, %v562
    %v596 = vld [vmem:[%s403 + $0x2] sm:$0xff]
    %v597 = vld [vmem:[%s403 + $0xa] sm:$0xff]
    %v598 = vld [vmem:[%s403 + $0x1a] sm:$0xff]
    %v599 = vld [vmem:[%s403 + $0x22] sm:$0xff]
    %v600 = vld [vmem:[%s403 + $0x32] sm:$0xff]
    %v601 = vld [vmem:[%s403 + $0x3a] sm:$0xff]
    %v602 = vld [vmem:[%s403 + $0x4a] sm:$0xff]
    %v603 = vld [vmem:[%s403 + $0x52] sm:$0xff]
    %v604 = vld [vmem:[%s403 + $0x62] sm:$0xff]
    %v605 = vld [vmem:[%s403 + $0x6a] sm:$0xff]
    %v606 = vld [vmem:[%s403 + $0x7a] sm:$0xff]
    %v607 = vld [vmem:[%s403 + $0x82] sm:$0xff]
    %v608 = vld [vmem:[%s403 + $0x92] sm:$0xff]
    %v609 = vld [vmem:[%s403 + $0x9a] sm:$0xff]
    %v610 = vld [vmem:[%s403 + $0xaa] sm:$0xff]
    %v611 = vld [vmem:[%s403 + $0xb2] sm:$0xff]
    %v612 = vld [vmem:[%s403 + $0xc2] sm:$0xff]
    %v613 = vld [vmem:[%s403 + $0xca] sm:$0xff]
    %v614 = vld [vmem:[%s403 + $0xda] sm:$0xff]
    %v615 = vld [vmem:[%s403 + $0xe2] sm:$0xff]
    %v616 = vld [vmem:[%s403 + $0xf2] sm:$0xff]
    %v617 = vld [vmem:[%s403 + $0xfa] sm:$0xff]
    %v618 = vld [vmem:[%s403 + $0x10a] sm:$0xff]
    %v619 = vld [vmem:[%s403 + $0x112] sm:$0xff]
    %v620 = vld [vmem:[%s403 + $0x122] sm:$0xff]
    %v621 = vld [vmem:[%s403 + $0x12a] sm:$0xff]
    %v622 = vld [vmem:[%s403 + $0x13a] sm:$0xff]
    %v623 = vld [vmem:[%s403 + $0x142] sm:$0xff]
    %v624 = vld [vmem:[%s403 + $0x152] sm:$0xff]
    %v625 = vld [vmem:[%s403 + $0x15a] sm:$0xff]
    %v626 = vld [vmem:[%s403 + $0x16a] sm:$0xff]
    %v627 = vld [vmem:[%s403 + $0x172] sm:$0xff]
    %v628 = vld [vmem:[%s403 + $0x1b2] sm:$0xff]
    %v629 = vld [vmem:[%s403 + $0x1ba] sm:$0xff]
    %v630 = vld [vmem:[%s403 + $0x1ca] sm:$0xff]
    %v631 = vld [vmem:[%s403 + $0x1d2] sm:$0xff]
    %v632 = vld [vmem:[%s403 + $0x1e2] sm:$0xff]
    %v633 = vld [vmem:[%s403 + $0x1ea] sm:$0xff]
    %v634 = vld [vmem:[%s403 + $0x1fa] sm:$0xff]
    %v635 = vld [vmem:[%s403 + $0x202] sm:$0xff]
    %v636 = vld [vmem:[%s403 + $0x212] sm:$0xff]
    %v637 = vld [vmem:[%s403 + $0x21a] sm:$0xff]
    %v638 = vld [vmem:[%s403 + $0x22a] sm:$0xff]
    %v639 = vld [vmem:[%s403 + $0x232] sm:$0xff]
    %v640 = vld [vmem:[%s403 + $0x242] sm:$0xff]
    %v641 = vld [vmem:[%s403 + $0x24a] sm:$0xff]
    %v642 = vld [vmem:[%s403 + $0x25a] sm:$0xff]
    %v643 = vld [vmem:[%s403 + $0x262] sm:$0xff]
    %v644 = vld [vmem:[%s403 + $0x272] sm:$0xff]
    %v645 = vld [vmem:[%s403 + $0x27a] sm:$0xff]
    %v646 = vld [vmem:[%s403 + $0x28a] sm:$0xff]
    %v647 = vld [vmem:[%s403 + $0x292] sm:$0xff]
    %v648 = vld [vmem:[%s403 + $0x2a2] sm:$0xff]
    %v649 = vld [vmem:[%s403 + $0x2aa] sm:$0xff]
    %v650 = vld [vmem:[%s403 + $0x2ba] sm:$0xff]
    %v651 = vld [vmem:[%s403 + $0x2c2] sm:$0xff]
    %v652 = vld [vmem:[%s403 + $0x2d2] sm:$0xff]
    %v653 = vld [vmem:[%s403 + $0x2da] sm:$0xff]
    %v654 = vld [vmem:[%s403 + $0x2ea] sm:$0xff]
    %v655 = vld [vmem:[%s403 + $0x2f2] sm:$0xff]
    %v656 = vld [vmem:[%s403 + $0x302] sm:$0xff]
    %v657 = vld [vmem:[%s403 + $0x30a] sm:$0xff]
    %v658 = vld [vmem:[%s403 + $0x31a] sm:$0xff]
    %v659 = vld [vmem:[%s403 + $0x322] sm:$0xff]
    %v660 = vpack.c.bf16 %v597, %v596
    %v661 = vpack.c.bf16 %v599, %v598
    %v662 = vpack.c.bf16 %v601, %v600
    %v663 = vpack.c.bf16 %v603, %v602
    %v664 = vpack.c.bf16 %v605, %v604
    %v665 = vpack.c.bf16 %v607, %v606
    %v666 = vpack.c.bf16 %v609, %v608
    %v667 = vpack.c.bf16 %v611, %v610
    %v668 = vpack.c.bf16 %v613, %v612
    %v669 = vpack.c.bf16 %v615, %v614
    %v670 = vpack.c.bf16 %v617, %v616
    %v671 = vpack.c.bf16 %v619, %v618
    %v672 = vpack.c.bf16 %v621, %v620
    %v673 = vpack.c.bf16 %v623, %v622
    %v674 = vpack.c.bf16 %v625, %v624
    %v675 = vpack.c.bf16 %v627, %v626
    %v676 = vpack.c.bf16 %v629, %v628
    %v677 = vpack.c.bf16 %v631, %v630
    %v678 = vpack.c.bf16 %v633, %v632
    %v679 = vpack.c.bf16 %v635, %v634
    %v680 = vpack.c.bf16 %v637, %v636
    %v681 = vpack.c.bf16 %v639, %v638
    %v682 = vpack.c.bf16 %v641, %v640
    %v683 = vpack.c.bf16 %v643, %v642
    %v684 = vpack.c.bf16 %v645, %v644
    %v685 = vpack.c.bf16 %v647, %v646
    %v686 = vpack.c.bf16 %v649, %v648
    %v687 = vpack.c.bf16 %v651, %v650
    %v688 = vpack.c.bf16 %v653, %v652
    %v689 = vpack.c.bf16 %v655, %v654
    %v690 = vpack.c.bf16 %v657, %v656
    %v691 = vpack.c.bf16 %v659, %v658
    %s692 = scalar_lea.vmem [#allocation3], 48
    %v693 = vld [vmem:[%s692] sm:$0xff]
    %v694 = vld [vmem:[%s692 + $0x8] sm:$0xff]
    %v695 = vld [vmem:[%s692 + $0x18] sm:$0xff]
    %v696 = vld [vmem:[%s692 + $0x20] sm:$0xff]
    %v697 = vld [vmem:[%s692 + $0x30] sm:$0xff]
    %v698 = vld [vmem:[%s692 + $0x38] sm:$0xff]
    %v699 = vld [vmem:[%s692 + $0x48] sm:$0xff]
    %v700 = vld [vmem:[%s692 + $0x50] sm:$0xff]
    %v701 = vld [vmem:[%s692 + $0x60] sm:$0xff]
    %v702 = vld [vmem:[%s692 + $0x68] sm:$0xff]
    %v703 = vld [vmem:[%s692 + $0x78] sm:$0xff]
    %v704 = vld [vmem:[%s692 + $0x80] sm:$0xff]
    %v705 = vld [vmem:[%s692 + $0x90] sm:$0xff]
    %v706 = vld [vmem:[%s692 + $0x98] sm:$0xff]
    %v707 = vld [vmem:[%s692 + $0xa8] sm:$0xff]
    %v708 = vld [vmem:[%s692 + $0xb0] sm:$0xff]
    %v709 = vld [vmem:[%s692 + $0xc0] sm:$0xff]
    %v710 = vld [vmem:[%s692 + $0xc8] sm:$0xff]
    %v711 = vld [vmem:[%s692 + $0xd8] sm:$0xff]
    %v712 = vld [vmem:[%s692 + $0xe0] sm:$0xff]
    %v713 = vld [vmem:[%s692 + $0xf0] sm:$0xff]
    %v714 = vld [vmem:[%s692 + $0xf8] sm:$0xff]
    %v715 = vld [vmem:[%s692 + $0x108] sm:$0xff]
    %v716 = vld [vmem:[%s692 + $0x110] sm:$0xff]
    %v717 = vld [vmem:[%s692 + $0x120] sm:$0xff]
    %v718 = vld [vmem:[%s692 + $0x128] sm:$0xff]
    %v719 = vld [vmem:[%s692 + $0x138] sm:$0xff]
    %v720 = vld [vmem:[%s692 + $0x140] sm:$0xff]
    %v721 = vld [vmem:[%s692 + $0x150] sm:$0xff]
    %v722 = vld [vmem:[%s692 + $0x158] sm:$0xff]
    %v723 = vld [vmem:[%s692 + $0x168] sm:$0xff]
    %v724 = vld [vmem:[%s692 + $0x170] sm:$0xff]
    %v725 = vld [vmem:[%s692 + $0x1b0] sm:$0xff]
    %v726 = vld [vmem:[%s692 + $0x1b8] sm:$0xff]
    %v727 = vld [vmem:[%s692 + $0x1c8] sm:$0xff]
    %v728 = vld [vmem:[%s692 + $0x1d0] sm:$0xff]
    %v729 = vld [vmem:[%s692 + $0x1e0] sm:$0xff]
    %v730 = vld [vmem:[%s692 + $0x1e8] sm:$0xff]
    %v731 = vld [vmem:[%s692 + $0x1f8] sm:$0xff]
    %v732 = vld [vmem:[%s692 + $0x200] sm:$0xff]
    %v733 = vld [vmem:[%s692 + $0x210] sm:$0xff]
    %v734 = vld [vmem:[%s692 + $0x218] sm:$0xff]
    %v735 = vld [vmem:[%s692 + $0x228] sm:$0xff]
    %v736 = vld [vmem:[%s692 + $0x230] sm:$0xff]
    %v737 = vld [vmem:[%s692 + $0x240] sm:$0xff]
    %v738 = vld [vmem:[%s692 + $0x248] sm:$0xff]
    %v739 = vld [vmem:[%s692 + $0x258] sm:$0xff]
    %v740 = vld [vmem:[%s692 + $0x260] sm:$0xff]
    %v741 = vld [vmem:[%s692 + $0x270] sm:$0xff]
    %v742 = vld [vmem:[%s692 + $0x278] sm:$0xff]
    %v743 = vld [vmem:[%s692 + $0x288] sm:$0xff]
    %v744 = vld [vmem:[%s692 + $0x290] sm:$0xff]
    %v745 = vld [vmem:[%s692 + $0x2a0] sm:$0xff]
    %v746 = vld [vmem:[%s692 + $0x2a8] sm:$0xff]
    %v747 = vld [vmem:[%s692 + $0x2b8] sm:$0xff]
    %v748 = vld [vmem:[%s692 + $0x2c0] sm:$0xff]
    %v749 = vld [vmem:[%s692 + $0x2d0] sm:$0xff]
    %v750 = vld [vmem:[%s692 + $0x2d8] sm:$0xff]
    %v751 = vld [vmem:[%s692 + $0x2e8] sm:$0xff]
    %v752 = vld [vmem:[%s692 + $0x2f0] sm:$0xff]
    %v753 = vld [vmem:[%s692 + $0x300] sm:$0xff]
    %v754 = vld [vmem:[%s692 + $0x308] sm:$0xff]
    %v755 = vld [vmem:[%s692 + $0x318] sm:$0xff]
    %v756 = vld [vmem:[%s692 + $0x320] sm:$0xff]
    %v757 = vpack.c.bf16 %v694, %v693
    %v758 = vpack.c.bf16 %v696, %v695
    %v759 = vpack.c.bf16 %v698, %v697
    %v760 = vpack.c.bf16 %v700, %v699
    %v761 = vpack.c.bf16 %v702, %v701
    %v762 = vpack.c.bf16 %v704, %v703
    %v763 = vpack.c.bf16 %v706, %v705
    %v764 = vpack.c.bf16 %v708, %v707
    %v765 = vpack.c.bf16 %v710, %v709
    %v766 = vpack.c.bf16 %v712, %v711
    %v767 = vpack.c.bf16 %v714, %v713
    %v768 = vpack.c.bf16 %v716, %v715
    %v769 = vpack.c.bf16 %v718, %v717
    %v770 = vpack.c.bf16 %v720, %v719
    %v771 = vpack.c.bf16 %v722, %v721
    %v772 = vpack.c.bf16 %v724, %v723
    %v773 = vpack.c.bf16 %v726, %v725
    %v774 = vpack.c.bf16 %v728, %v727
    %v775 = vpack.c.bf16 %v730, %v729
    %v776 = vpack.c.bf16 %v732, %v731
    %v777 = vpack.c.bf16 %v734, %v733
    %v778 = vpack.c.bf16 %v736, %v735
    %v779 = vpack.c.bf16 %v738, %v737
    %v780 = vpack.c.bf16 %v740, %v739
    %v781 = vpack.c.bf16 %v742, %v741
    %v782 = vpack.c.bf16 %v744, %v743
    %v783 = vpack.c.bf16 %v746, %v745
    %v784 = vpack.c.bf16 %v748, %v747
    %v785 = vpack.c.bf16 %v750, %v749
    %v786 = vpack.c.bf16 %v752, %v751
    %v787 = vpack.c.bf16 %v754, %v753
    %v788 = vpack.c.bf16 %v756, %v755
    %v789 = vld [vmem:[%s692 + $0x1] sm:$0xff]
    %v790 = vld [vmem:[%s692 + $0x9] sm:$0xff]
    %v791 = vld [vmem:[%s692 + $0x19] sm:$0xff]
    %v792 = vld [vmem:[%s692 + $0x21] sm:$0xff]
    %v793 = vld [vmem:[%s692 + $0x31] sm:$0xff]
    %v794 = vld [vmem:[%s692 + $0x39] sm:$0xff]
    %v795 = vld [vmem:[%s692 + $0x49] sm:$0xff]
    %v796 = vld [vmem:[%s692 + $0x51] sm:$0xff]
    %v797 = vld [vmem:[%s692 + $0x61] sm:$0xff]
    %v798 = vld [vmem:[%s692 + $0x69] sm:$0xff]
    %v799 = vld [vmem:[%s692 + $0x79] sm:$0xff]
    %v800 = vld [vmem:[%s692 + $0x81] sm:$0xff]
    %v801 = vld [vmem:[%s692 + $0x91] sm:$0xff]
    %v802 = vld [vmem:[%s692 + $0x99] sm:$0xff]
    %v803 = vld [vmem:[%s692 + $0xa9] sm:$0xff]
    %v804 = vld [vmem:[%s692 + $0xb1] sm:$0xff]
    %v805 = vld [vmem:[%s692 + $0xc1] sm:$0xff]
    %v806 = vld [vmem:[%s692 + $0xc9] sm:$0xff]
    %v807 = vld [vmem:[%s692 + $0xd9] sm:$0xff]
    %v808 = vld [vmem:[%s692 + $0xe1] sm:$0xff]
    %v809 = vld [vmem:[%s692 + $0xf1] sm:$0xff]
    %v810 = vld [vmem:[%s692 + $0xf9] sm:$0xff]
    %v811 = vld [vmem:[%s692 + $0x109] sm:$0xff]
    %v812 = vld [vmem:[%s692 + $0x111] sm:$0xff]
    %v813 = vld [vmem:[%s692 + $0x121] sm:$0xff]
    %v814 = vld [vmem:[%s692 + $0x129] sm:$0xff]
    %v815 = vld [vmem:[%s692 + $0x139] sm:$0xff]
    %v816 = vld [vmem:[%s692 + $0x141] sm:$0xff]
    %v817 = vld [vmem:[%s692 + $0x151] sm:$0xff]
    %v818 = vld [vmem:[%s692 + $0x159] sm:$0xff]
    %v819 = vld [vmem:[%s692 + $0x169] sm:$0xff]
    %v820 = vld [vmem:[%s692 + $0x171] sm:$0xff]
    %v821 = vld [vmem:[%s692 + $0x1b1] sm:$0xff]
    %v822 = vld [vmem:[%s692 + $0x1b9] sm:$0xff]
    %v823 = vld [vmem:[%s692 + $0x1c9] sm:$0xff]
    %v824 = vld [vmem:[%s692 + $0x1d1] sm:$0xff]
    %v825 = vld [vmem:[%s692 + $0x1e1] sm:$0xff]
    %v826 = vld [vmem:[%s692 + $0x1e9] sm:$0xff]
    %v827 = vld [vmem:[%s692 + $0x1f9] sm:$0xff]
    %v828 = vld [vmem:[%s692 + $0x201] sm:$0xff]
    %v829 = vld [vmem:[%s692 + $0x211] sm:$0xff]
    %v830 = vld [vmem:[%s692 + $0x219] sm:$0xff]
    %v831 = vld [vmem:[%s692 + $0x229] sm:$0xff]
    %v832 = vld [vmem:[%s692 + $0x231] sm:$0xff]
    %v833 = vld [vmem:[%s692 + $0x241] sm:$0xff]
    %v834 = vld [vmem:[%s692 + $0x249] sm:$0xff]
    %v835 = vld [vmem:[%s692 + $0x259] sm:$0xff]
    %v836 = vld [vmem:[%s692 + $0x261] sm:$0xff]
    %v837 = vld [vmem:[%s692 + $0x271] sm:$0xff]
    %v838 = vld [vmem:[%s692 + $0x279] sm:$0xff]
    %v839 = vld [vmem:[%s692 + $0x289] sm:$0xff]
    %v840 = vld [vmem:[%s692 + $0x291] sm:$0xff]
    %v841 = vld [vmem:[%s692 + $0x2a1] sm:$0xff]
    %v842 = vld [vmem:[%s692 + $0x2a9] sm:$0xff]
    %v843 = vld [vmem:[%s692 + $0x2b9] sm:$0xff]
    %v844 = vld [vmem:[%s692 + $0x2c1] sm:$0xff]
    %v845 = vld [vmem:[%s692 + $0x2d1] sm:$0xff]
    %v846 = vld [vmem:[%s692 + $0x2d9] sm:$0xff]
    %v847 = vld [vmem:[%s692 + $0x2e9] sm:$0xff]
    %v848 = vld [vmem:[%s692 + $0x2f1] sm:$0xff]
    %v849 = vld [vmem:[%s692 + $0x301] sm:$0xff]
    %v850 = vld [vmem:[%s692 + $0x309] sm:$0xff]
    %v851 = vld [vmem:[%s692 + $0x319] sm:$0xff]
    %v852 = vld [vmem:[%s692 + $0x321] sm:$0xff]
    %v853 = vpack.c.bf16 %v790, %v789
    %v854 = vpack.c.bf16 %v792, %v791
    %v855 = vpack.c.bf16 %v794, %v793
    %v856 = vpack.c.bf16 %v796, %v795
    %v857 = vpack.c.bf16 %v798, %v797
    %v858 = vpack.c.bf16 %v800, %v799
    %v859 = vpack.c.bf16 %v802, %v801
    %v860 = vpack.c.bf16 %v804, %v803
    %v861 = vpack.c.bf16 %v806, %v805
    %v862 = vpack.c.bf16 %v808, %v807
    %v863 = vpack.c.bf16 %v810, %v809
    %v864 = vpack.c.bf16 %v812, %v811
    %v865 = vpack.c.bf16 %v814, %v813
    %v866 = vpack.c.bf16 %v816, %v815
    %v867 = vpack.c.bf16 %v818, %v817
    %v868 = vpack.c.bf16 %v820, %v819
    %v869 = vpack.c.bf16 %v822, %v821
    %v870 = vpack.c.bf16 %v824, %v823
    %v871 = vpack.c.bf16 %v826, %v825
    %v872 = vpack.c.bf16 %v828, %v827
    %v873 = vpack.c.bf16 %v830, %v829
    %v874 = vpack.c.bf16 %v832, %v831
    %v875 = vpack.c.bf16 %v834, %v833
    %v876 = vpack.c.bf16 %v836, %v835
    %v877 = vpack.c.bf16 %v838, %v837
    %v878 = vpack.c.bf16 %v840, %v839
    %v879 = vpack.c.bf16 %v842, %v841
    %v880 = vpack.c.bf16 %v844, %v843
    %v881 = vpack.c.bf16 %v846, %v845
    %v882 = vpack.c.bf16 %v848, %v847
    %v883 = vpack.c.bf16 %v850, %v849
    %v884 = vpack.c.bf16 %v852, %v851
    %v885 = vld [vmem:[%s692 + $0x2] sm:$0xff]
    %v886 = vld [vmem:[%s692 + $0xa] sm:$0xff]
    %v887 = vld [vmem:[%s692 + $0x1a] sm:$0xff]
    %v888 = vld [vmem:[%s692 + $0x22] sm:$0xff]
    %v889 = vld [vmem:[%s692 + $0x32] sm:$0xff]
    %v890 = vld [vmem:[%s692 + $0x3a] sm:$0xff]
    %v891 = vld [vmem:[%s692 + $0x4a] sm:$0xff]
    %v892 = vld [vmem:[%s692 + $0x52] sm:$0xff]
    %v893 = vld [vmem:[%s692 + $0x62] sm:$0xff]
    %v894 = vld [vmem:[%s692 + $0x6a] sm:$0xff]
    %v895 = vld [vmem:[%s692 + $0x7a] sm:$0xff]
    %v896 = vld [vmem:[%s692 + $0x82] sm:$0xff]
    %v897 = vld [vmem:[%s692 + $0x92] sm:$0xff]
    %v898 = vld [vmem:[%s692 + $0x9a] sm:$0xff]
    %v899 = vld [vmem:[%s692 + $0xaa] sm:$0xff]
    %v900 = vld [vmem:[%s692 + $0xb2] sm:$0xff]
    %v901 = vld [vmem:[%s692 + $0xc2] sm:$0xff]
    %v902 = vld [vmem:[%s692 + $0xca] sm:$0xff]
    %v903 = vld [vmem:[%s692 + $0xda] sm:$0xff]
    %v904 = vld [vmem:[%s692 + $0xe2] sm:$0xff]
    %v905 = vld [vmem:[%s692 + $0xf2] sm:$0xff]
    %v906 = vld [vmem:[%s692 + $0xfa] sm:$0xff]
    %v907 = vld [vmem:[%s692 + $0x10a] sm:$0xff]
    %v908 = vld [vmem:[%s692 + $0x112] sm:$0xff]
    %v909 = vld [vmem:[%s692 + $0x122] sm:$0xff]
    %v910 = vld [vmem:[%s692 + $0x12a] sm:$0xff]
    %v911 = vld [vmem:[%s692 + $0x13a] sm:$0xff]
    %v912 = vld [vmem:[%s692 + $0x142] sm:$0xff]
    %v913 = vld [vmem:[%s692 + $0x152] sm:$0xff]
    %v914 = vld [vmem:[%s692 + $0x15a] sm:$0xff]
    %v915 = vld [vmem:[%s692 + $0x16a] sm:$0xff]
    %v916 = vld [vmem:[%s692 + $0x172] sm:$0xff]
    %v917 = vld [vmem:[%s692 + $0x1b2] sm:$0xff]
    %v918 = vld [vmem:[%s692 + $0x1ba] sm:$0xff]
    %v919 = vld [vmem:[%s692 + $0x1ca] sm:$0xff]
    %v920 = vld [vmem:[%s692 + $0x1d2] sm:$0xff]
    %v921 = vld [vmem:[%s692 + $0x1e2] sm:$0xff]
    %v922 = vld [vmem:[%s692 + $0x1ea] sm:$0xff]
    %v923 = vld [vmem:[%s692 + $0x1fa] sm:$0xff]
    %v924 = vld [vmem:[%s692 + $0x202] sm:$0xff]
    %v925 = vld [vmem:[%s692 + $0x212] sm:$0xff]
    %v926 = vld [vmem:[%s692 + $0x21a] sm:$0xff]
    %v927 = vld [vmem:[%s692 + $0x22a] sm:$0xff]
    %v928 = vld [vmem:[%s692 + $0x232] sm:$0xff]
    %v929 = vld [vmem:[%s692 + $0x242] sm:$0xff]
    %v930 = vld [vmem:[%s692 + $0x24a] sm:$0xff]
    %v931 = vld [vmem:[%s692 + $0x25a] sm:$0xff]
    %v932 = vld [vmem:[%s692 + $0x262] sm:$0xff]
    %v933 = vld [vmem:[%s692 + $0x272] sm:$0xff]
    %v934 = vld [vmem:[%s692 + $0x27a] sm:$0xff]
    %v935 = vld [vmem:[%s692 + $0x28a] sm:$0xff]
    %v936 = vld [vmem:[%s692 + $0x292] sm:$0xff]
    %v937 = vld [vmem:[%s692 + $0x2a2] sm:$0xff]
    %v938 = vld [vmem:[%s692 + $0x2aa] sm:$0xff]
    %v939 = vld [vmem:[%s692 + $0x2ba] sm:$0xff]
    %v940 = vld [vmem:[%s692 + $0x2c2] sm:$0xff]
    %v941 = vld [vmem:[%s692 + $0x2d2] sm:$0xff]
    %v942 = vld [vmem:[%s692 + $0x2da] sm:$0xff]
    %v943 = vld [vmem:[%s692 + $0x2ea] sm:$0xff]
    %v944 = vld [vmem:[%s692 + $0x2f2] sm:$0xff]
    %v945 = vld [vmem:[%s692 + $0x302] sm:$0xff]
    %v946 = vld [vmem:[%s692 + $0x30a] sm:$0xff]
    %v947 = vld [vmem:[%s692 + $0x31a] sm:$0xff]
    %v948 = vld [vmem:[%s692 + $0x322] sm:$0xff]
    %v949 = vpack.c.bf16 %v886, %v885
    %v950 = vpack.c.bf16 %v888, %v887
    %v951 = vpack.c.bf16 %v890, %v889
    %v952 = vpack.c.bf16 %v892, %v891
    %v953 = vpack.c.bf16 %v894, %v893
    %v954 = vpack.c.bf16 %v896, %v895
    %v955 = vpack.c.bf16 %v898, %v897
    %v956 = vpack.c.bf16 %v900, %v899
    %v957 = vpack.c.bf16 %v902, %v901
    %v958 = vpack.c.bf16 %v904, %v903
    %v959 = vpack.c.bf16 %v906, %v905
    %v960 = vpack.c.bf16 %v908, %v907
    %v961 = vpack.c.bf16 %v910, %v909
    %v962 = vpack.c.bf16 %v912, %v911
    %v963 = vpack.c.bf16 %v914, %v913
    %v964 = vpack.c.bf16 %v916, %v915
    %v965 = vpack.c.bf16 %v918, %v917
    %v966 = vpack.c.bf16 %v920, %v919
    %v967 = vpack.c.bf16 %v922, %v921
    %v968 = vpack.c.bf16 %v924, %v923
    %v969 = vpack.c.bf16 %v926, %v925
    %v970 = vpack.c.bf16 %v928, %v927
    %v971 = vpack.c.bf16 %v930, %v929
    %v972 = vpack.c.bf16 %v932, %v931
    %v973 = vpack.c.bf16 %v934, %v933
    %v974 = vpack.c.bf16 %v936, %v935
    %v975 = vpack.c.bf16 %v938, %v937
    %v976 = vpack.c.bf16 %v940, %v939
    %v977 = vpack.c.bf16 %v942, %v941
    %v978 = vpack.c.bf16 %v944, %v943
    %v979 = vpack.c.bf16 %v946, %v945
    %v980 = vpack.c.bf16 %v948, %v947
    %v981 = vld [vmem:[#allocation6] sm:$0xf]
    %v982 = vld [vmem:[#allocation6 + $0x4] sm:$0xf]
    %v983 = vld [vmem:[#allocation6 + $0x8] sm:$0xf]
    %v984 = vld [vmem:[#allocation6 + $0xc] sm:$0xf]
    %v985 = vld [vmem:[#allocation6 + $0x10] sm:$0xf]
    %v986 = vld [vmem:[#allocation6 + $0x14] sm:$0xf]
    %v987 = vld [vmem:[#allocation6 + $0x18] sm:$0xf]
    %v988 = vld [vmem:[#allocation6 + $0x1c] sm:$0xf]
    %v989 = vld [vmem:[#allocation6 + $0x20] sm:$0xf]
    %v990 = vld [vmem:[#allocation6 + $0x24] sm:$0xf]
    %v991 = vld [vmem:[#allocation6 + $0x28] sm:$0xf]
    %v992 = vld [vmem:[#allocation6 + $0x2c] sm:$0xf]
    %v993 = vld [vmem:[#allocation6 + $0x30] sm:$0xf]
    %v994 = vld [vmem:[#allocation6 + $0x34] sm:$0xf]
    %v995 = vld [vmem:[#allocation6 + $0x38] sm:$0xf]
    %v996 = vld [vmem:[#allocation6 + $0x3c] sm:$0xf]
    %v997 = vld [vmem:[#allocation6 + $0x40] sm:$0xf]
    %v998 = vld [vmem:[#allocation6 + $0x44] sm:$0xf]
    %v999 = vld [vmem:[#allocation6 + $0x48] sm:$0xf]
    %v1000 = vld [vmem:[#allocation6 + $0x4c] sm:$0xf]
    %v1001 = vld [vmem:[#allocation6 + $0x50] sm:$0xf]
    %v1002 = vld [vmem:[#allocation6 + $0x54] sm:$0xf]
    %v1003 = vld [vmem:[#allocation6 + $0x58] sm:$0xf]
    %v1004 = vld [vmem:[#allocation6 + $0x5c] sm:$0xf]
    %v1005 = vld [vmem:[#allocation6 + $0x60] sm:$0xf]
    %v1006 = vld [vmem:[#allocation6 + $0x64] sm:$0xf]
    %v1007 = vld [vmem:[#allocation6 + $0x68] sm:$0xf]
    %v1008 = vld [vmem:[#allocation6 + $0x6c] sm:$0xf]
    %v1009 = vld [vmem:[#allocation6 + $0x70] sm:$0xf]
    %v1010 = vld [vmem:[#allocation6 + $0x74] sm:$0xf]
    %v1011 = vld [vmem:[#allocation6 + $0x78] sm:$0xf]
    %v1012 = vld [vmem:[#allocation6 + $0x7c] sm:$0xf]
    %v1013 = vld [vmem:[#allocation6 + $0x80] sm:$0xf]
    %v1014 = vld [vmem:[#allocation6 + $0x84] sm:$0xf]
    %v1015 = vld [vmem:[#allocation6 + $0x88] sm:$0xf]
    %v1016 = vld [vmem:[#allocation6 + $0x8c] sm:$0xf]
    %v1017 = vld [vmem:[#allocation6 + $0x90] sm:$0xf]
    %v1018 = vld [vmem:[#allocation6 + $0x94] sm:$0xf]
    %v1019 = vld [vmem:[#allocation6 + $0x98] sm:$0xf]
    %v1020 = vld [vmem:[#allocation6 + $0x9c] sm:$0xf]
    %v1021 = vld [vmem:[#allocation6 + $0xa0] sm:$0xf]
    %v1022 = vld [vmem:[#allocation6 + $0xa4] sm:$0xf]
    %v1023 = vld [vmem:[#allocation6 + $0xa8] sm:$0xf]
    %v1024 = vld [vmem:[#allocation6 + $0xac] sm:$0xf]
    %v1025 = vld [vmem:[#allocation6 + $0xb0] sm:$0xf]
    %v1026 = vld [vmem:[#allocation6 + $0xb4] sm:$0xf]
    %v1027 = vld [vmem:[#allocation6 + $0xb8] sm:$0xf]
    %v1028 = vld [vmem:[#allocation6 + $0xbc] sm:$0xf]
    %v1029 = vld [vmem:[#allocation6 + $0xc0] sm:$0xf]
    %v1030 = vld [vmem:[#allocation6 + $0xc4] sm:$0xf]
    %v1031 = vld [vmem:[#allocation6 + $0xc8] sm:$0xf]
    %v1032 = vld [vmem:[#allocation6 + $0xcc] sm:$0xf]
    %v1033 = vld [vmem:[#allocation6 + $0xd0] sm:$0xf]
    %v1034 = vld [vmem:[#allocation6 + $0xd4] sm:$0xf]
    %v1035 = vld [vmem:[#allocation6 + $0xd8] sm:$0xf]
    %v1036 = vld [vmem:[#allocation6 + $0xdc] sm:$0xf]
    %v1037 = vld [vmem:[#allocation6 + $0xe0] sm:$0xf]
    %v1038 = vld [vmem:[#allocation6 + $0xe4] sm:$0xf]
    %v1039 = vld [vmem:[#allocation6 + $0xe8] sm:$0xf]
    %v1040 = vld [vmem:[#allocation6 + $0xec] sm:$0xf]
    %v1041 = vld [vmem:[#allocation6 + $0xf0] sm:$0xf]
    %v1042 = vld [vmem:[#allocation6 + $0xf4] sm:$0xf]
    %v1043 = vld [vmem:[#allocation6 + $0xf8] sm:$0xf]
    %v1044 = vld [vmem:[#allocation6 + $0xfc] sm:$0xf]
    %v1045 = vld [vmem:[#allocation6 + $0x100] sm:$0xf]
    %v1046 = vld [vmem:[#allocation6 + $0x104] sm:$0xf]
    %v1047 = vld [vmem:[#allocation6 + $0x108] sm:$0xf]
    %v1048 = vld [vmem:[#allocation6 + $0x10c] sm:$0xf]
    %v1049 = vld [vmem:[#allocation6 + $0x110] sm:$0xf]
    %v1050 = vld [vmem:[#allocation6 + $0x114] sm:$0xf]
    %v1051 = vld [vmem:[#allocation6 + $0x118] sm:$0xf]
    %v1052 = vld [vmem:[#allocation6 + $0x11c] sm:$0xf]
    %v1053 = vld [vmem:[#allocation6 + $0x120] sm:$0xf]
    %v1054 = vld [vmem:[#allocation6 + $0x124] sm:$0xf]
    %v1055 = vld [vmem:[#allocation6 + $0x128] sm:$0xf]
    %v1056 = vld [vmem:[#allocation6 + $0x12c] sm:$0xf]
    %v1057 = vld [vmem:[#allocation6 + $0x130] sm:$0xf]
    %v1058 = vld [vmem:[#allocation6 + $0x134] sm:$0xf]
    %v1059 = vld [vmem:[#allocation6 + $0x138] sm:$0xf]
    %v1060 = vld [vmem:[#allocation6 + $0x13c] sm:$0xf]
    %v1061 = vld [vmem:[#allocation6 + $0x140] sm:$0xf]
    %v1062 = vld [vmem:[#allocation6 + $0x144] sm:$0xf]
    %v1063 = vld [vmem:[#allocation6 + $0x148] sm:$0xf]
    %v1064 = vld [vmem:[#allocation6 + $0x14c] sm:$0xf]
    %v1065 = vld [vmem:[#allocation6 + $0x150] sm:$0xf]
    %v1066 = vld [vmem:[#allocation6 + $0x154] sm:$0xf]
    %v1067 = vld [vmem:[#allocation6 + $0x158] sm:$0xf]
    %v1068 = vld [vmem:[#allocation6 + $0x15c] sm:$0xf]
    %v1069 = vld [vmem:[#allocation6 + $0x160] sm:$0xf]
    %v1070 = vld [vmem:[#allocation6 + $0x164] sm:$0xf]
    %v1071 = vld [vmem:[#allocation6 + $0x168] sm:$0xf]
    %v1072 = vld [vmem:[#allocation6 + $0x16c] sm:$0xf]
    %v1073 = vld [vmem:[#allocation6 + $0x170] sm:$0xf]
    %v1074 = vld [vmem:[#allocation6 + $0x174] sm:$0xf]
    %v1075 = vld [vmem:[#allocation6 + $0x178] sm:$0xf]
    %v1076 = vld [vmem:[#allocation6 + $0x17c] sm:$0xf]
    %v1077 = vld [vmem:[#allocation6 + $0x180] sm:$0xf]
    %v1078 = vld [vmem:[#allocation6 + $0x184] sm:$0xf]
    %v1079 = vld [vmem:[#allocation6 + $0x188] sm:$0xf]
    %v1080 = vld [vmem:[#allocation6 + $0x18c] sm:$0xf]
    %v1081 = vld [vmem:[#allocation6 + $0x190] sm:$0xf]
    %v1082 = vld [vmem:[#allocation6 + $0x194] sm:$0xf]
    %v1083 = vld [vmem:[#allocation6 + $0x198] sm:$0xf]
    %v1084 = vld [vmem:[#allocation6 + $0x19c] sm:$0xf]
    %v1085 = vld [vmem:[#allocation6 + $0x1a0] sm:$0xf]
    %v1086 = vld [vmem:[#allocation6 + $0x1a4] sm:$0xf]
    %v1087 = vld [vmem:[#allocation6 + $0x1a8] sm:$0xf]
    %v1088 = vld [vmem:[#allocation6 + $0x1ac] sm:$0xf]
    %v1089 = vld [vmem:[#allocation6 + $0x1b0] sm:$0xf]
    %v1090 = vld [vmem:[#allocation6 + $0x1b4] sm:$0xf]
    %v1091 = vld [vmem:[#allocation6 + $0x1b8] sm:$0xf]
    %v1092 = vld [vmem:[#allocation6 + $0x1bc] sm:$0xf]
    %v1093 = vld [vmem:[#allocation6 + $0x1c0] sm:$0xf]
    %v1094 = vld [vmem:[#allocation6 + $0x1c4] sm:$0xf]
    %v1095 = vld [vmem:[#allocation6 + $0x1c8] sm:$0xf]
    %v1096 = vld [vmem:[#allocation6 + $0x1cc] sm:$0xf]
    %v1097 = vld [vmem:[#allocation6 + $0x1d0] sm:$0xf]
    %v1098 = vld [vmem:[#allocation6 + $0x1d4] sm:$0xf]
    %v1099 = vld [vmem:[#allocation6 + $0x1d8] sm:$0xf]
    %v1100 = vld [vmem:[#allocation6 + $0x1dc] sm:$0xf]
    %v1101 = vld [vmem:[#allocation6 + $0x1e0] sm:$0xf]
    %v1102 = vld [vmem:[#allocation6 + $0x1e4] sm:$0xf]
    %v1103 = vld [vmem:[#allocation6 + $0x1e8] sm:$0xf]
    %v1104 = vld [vmem:[#allocation6 + $0x1ec] sm:$0xf]
    %v1105 = vld [vmem:[#allocation6 + $0x1f0] sm:$0xf]
    %v1106 = vld [vmem:[#allocation6 + $0x1f4] sm:$0xf]
    %v1107 = vld [vmem:[#allocation6 + $0x1f8] sm:$0xf]
    %v1108 = vld [vmem:[#allocation6 + $0x1fc] sm:$0xf]
    %v1109 = vld [vmem:[#allocation6 + $0x200] sm:$0xf]
    %v1110 = vld [vmem:[#allocation6 + $0x204] sm:$0xf]
    %v1111 = vld [vmem:[#allocation6 + $0x208] sm:$0xf]
    %v1112 = vld [vmem:[#allocation6 + $0x20c] sm:$0xf]
    %v1113 = vld [vmem:[#allocation6 + $0x210] sm:$0xf]
    %v1114 = vld [vmem:[#allocation6 + $0x214] sm:$0xf]
    %v1115 = vld [vmem:[#allocation6 + $0x218] sm:$0xf]
    %v1116 = vld [vmem:[#allocation6 + $0x21c] sm:$0xf]
    %v1117 = vld [vmem:[#allocation6 + $0x220] sm:$0xf]
    %v1118 = vld [vmem:[#allocation6 + $0x224] sm:$0xf]
    %v1119 = vld [vmem:[#allocation6 + $0x228] sm:$0xf]
    %v1120 = vld [vmem:[#allocation6 + $0x22c] sm:$0xf]
    %v1121 = vld [vmem:[#allocation6 + $0x230] sm:$0xf]
    %v1122 = vld [vmem:[#allocation6 + $0x234] sm:$0xf]
    %v1123 = vld [vmem:[#allocation6 + $0x238] sm:$0xf]
    %v1124 = vld [vmem:[#allocation6 + $0x23c] sm:$0xf]
    %v1269 = vunpack.c.l.b16 %v981
    %v1270 = vunpack.c.l.b16 %v982
    %v1271 = vunpack.c.l.b16 %v983
    %v1272 = vunpack.c.l.b16 %v984
    %v1273 = vunpack.c.l.b16 %v985
    %v1274 = vunpack.c.l.b16 %v986
    %v1275 = vunpack.c.l.b16 %v987
    %v1276 = vunpack.c.l.b16 %v988
    %v1277 = vunpack.c.l.b16 %v989
    %v1278 = vunpack.c.l.b16 %v990
    %v1279 = vunpack.c.l.b16 %v991
    %v1280 = vunpack.c.l.b16 %v992
    %v1281 = vunpack.c.l.b16 %v993
    %v1282 = vunpack.c.l.b16 %v994
    %v1283 = vunpack.c.l.b16 %v995
    %v1284 = vunpack.c.l.b16 %v996
    %v1285 = vunpack.c.l.b16 %v997
    %v1286 = vunpack.c.l.b16 %v998
    %v1287 = vunpack.c.l.b16 %v999
    %v1288 = vunpack.c.l.b16 %v1000
    %v1289 = vunpack.c.l.b16 %v1001
    %v1290 = vunpack.c.l.b16 %v1002
    %v1291 = vunpack.c.l.b16 %v1003
    %v1292 = vunpack.c.l.b16 %v1004
    %v1293 = vunpack.c.l.b16 %v1005
    %v1294 = vunpack.c.l.b16 %v1006
    %v1295 = vunpack.c.l.b16 %v1007
    %v1296 = vunpack.c.l.b16 %v1008
    %v1297 = vunpack.c.l.b16 %v1009
    %v1298 = vunpack.c.l.b16 %v1010
    %v1299 = vunpack.c.l.b16 %v1011
    %v1300 = vunpack.c.l.b16 %v1012
    %v1301 = vunpack.c.l.b16 %v1013
    %v1302 = vunpack.c.l.b16 %v1014
    %v1303 = vunpack.c.l.b16 %v1015
    %v1304 = vunpack.c.l.b16 %v1016
    %v1305 = vunpack.c.l.b16 %v1017
    %v1306 = vunpack.c.l.b16 %v1018
    %v1307 = vunpack.c.l.b16 %v1019
    %v1308 = vunpack.c.l.b16 %v1020
    %v1309 = vunpack.c.l.b16 %v1021
    %v1310 = vunpack.c.l.b16 %v1022
    %v1311 = vunpack.c.l.b16 %v1023
    %v1312 = vunpack.c.l.b16 %v1024
    %v1313 = vunpack.c.l.b16 %v1025
    %v1314 = vunpack.c.l.b16 %v1026
    %v1315 = vunpack.c.l.b16 %v1027
    %v1316 = vunpack.c.l.b16 %v1028
    %v1317 = vunpack.c.l.b16 %v1029
    %v1318 = vunpack.c.l.b16 %v1030
    %v1319 = vunpack.c.l.b16 %v1031
    %v1320 = vunpack.c.l.b16 %v1032
    %v1321 = vunpack.c.l.b16 %v1033
    %v1322 = vunpack.c.l.b16 %v1034
    %v1323 = vunpack.c.l.b16 %v1035
    %v1324 = vunpack.c.l.b16 %v1036
    %v1325 = vunpack.c.l.b16 %v1037
    %v1326 = vunpack.c.l.b16 %v1038
    %v1327 = vunpack.c.l.b16 %v1039
    %v1328 = vunpack.c.l.b16 %v1040
    %v1329 = vunpack.c.l.b16 %v1041
    %v1330 = vunpack.c.l.b16 %v1042
    %v1331 = vunpack.c.l.b16 %v1043
    %v1332 = vunpack.c.l.b16 %v1044
    %v1333 = vunpack.c.l.b16 %v1045
    %v1334 = vunpack.c.l.b16 %v1046
    %v1335 = vunpack.c.l.b16 %v1047
    %v1336 = vunpack.c.l.b16 %v1048
    %v1337 = vunpack.c.l.b16 %v1049
    %v1338 = vunpack.c.l.b16 %v1050
    %v1339 = vunpack.c.l.b16 %v1051
    %v1340 = vunpack.c.l.b16 %v1052
    %v1341 = vunpack.c.l.b16 %v1053
    %v1342 = vunpack.c.l.b16 %v1054
    %v1343 = vunpack.c.l.b16 %v1055
    %v1344 = vunpack.c.l.b16 %v1056
    %v1345 = vunpack.c.l.b16 %v1057
    %v1346 = vunpack.c.l.b16 %v1058
    %v1347 = vunpack.c.l.b16 %v1059
    %v1348 = vunpack.c.l.b16 %v1060
    %v1349 = vunpack.c.l.b16 %v1061
    %v1350 = vunpack.c.l.b16 %v1062
    %v1351 = vunpack.c.l.b16 %v1063
    %v1352 = vunpack.c.l.b16 %v1064
    %v1353 = vunpack.c.l.b16 %v1065
    %v1354 = vunpack.c.l.b16 %v1066
    %v1355 = vunpack.c.l.b16 %v1067
    %v1356 = vunpack.c.l.b16 %v1068
    %v1357 = vunpack.c.l.b16 %v1069
    %v1358 = vunpack.c.l.b16 %v1070
    %v1359 = vunpack.c.l.b16 %v1071
    %v1360 = vunpack.c.l.b16 %v1072
    %v1361 = vunpack.c.l.b16 %v1073
    %v1362 = vunpack.c.l.b16 %v1074
    %v1363 = vunpack.c.l.b16 %v1075
    %v1364 = vunpack.c.l.b16 %v1076
    %v1365 = vunpack.c.l.b16 %v1077
    %v1366 = vunpack.c.l.b16 %v1078
    %v1367 = vunpack.c.l.b16 %v1079
    %v1368 = vunpack.c.l.b16 %v1080
    %v1369 = vunpack.c.l.b16 %v1081
    %v1370 = vunpack.c.l.b16 %v1082
    %v1371 = vunpack.c.l.b16 %v1083
    %v1372 = vunpack.c.l.b16 %v1084
    %v1373 = vunpack.c.l.b16 %v1085
    %v1374 = vunpack.c.l.b16 %v1086
    %v1375 = vunpack.c.l.b16 %v1087
    %v1376 = vunpack.c.l.b16 %v1088
    %v1377 = vunpack.c.l.b16 %v1089
    %v1378 = vunpack.c.l.b16 %v1090
    %v1379 = vunpack.c.l.b16 %v1091
    %v1380 = vunpack.c.l.b16 %v1092
    %v1381 = vunpack.c.l.b16 %v1093
    %v1382 = vunpack.c.l.b16 %v1094
    %v1383 = vunpack.c.l.b16 %v1095
    %v1384 = vunpack.c.l.b16 %v1096
    %v1385 = vunpack.c.l.b16 %v1097
    %v1386 = vunpack.c.l.b16 %v1098
    %v1387 = vunpack.c.l.b16 %v1099
    %v1388 = vunpack.c.l.b16 %v1100
    %v1389 = vunpack.c.l.b16 %v1101
    %v1390 = vunpack.c.l.b16 %v1102
    %v1391 = vunpack.c.l.b16 %v1103
    %v1392 = vunpack.c.l.b16 %v1104
    %v1393 = vunpack.c.l.b16 %v1105
    %v1394 = vunpack.c.l.b16 %v1106
    %v1395 = vunpack.c.l.b16 %v1107
    %v1396 = vunpack.c.l.b16 %v1108
    %v1397 = vunpack.c.l.b16 %v1109
    %v1398 = vunpack.c.l.b16 %v1110
    %v1399 = vunpack.c.l.b16 %v1111
    %v1400 = vunpack.c.l.b16 %v1112
    %v1401 = vunpack.c.l.b16 %v1113
    %v1402 = vunpack.c.l.b16 %v1114
    %v1403 = vunpack.c.l.b16 %v1115
    %v1404 = vunpack.c.l.b16 %v1116
    %v1405 = vunpack.c.l.b16 %v1117
    %v1406 = vunpack.c.l.b16 %v1118
    %v1407 = vunpack.c.l.b16 %v1119
    %v1408 = vunpack.c.l.b16 %v1120
    %v1409 = vunpack.c.l.b16 %v1121
    %v1410 = vunpack.c.l.b16 %v1122
    %v1411 = vunpack.c.l.b16 %v1123
    %v1412 = vunpack.c.l.b16 %v1124
    %v1413 = vpack.c.b16 %v1270, %v1269
    %v1414 = vpack.c.b16 %v1272, %v1271
    %v1415 = vpack.c.b16 %v1274, %v1273
    %v1416 = vpack.c.b16 %v1276, %v1275
    %v1417 = vpack.c.b16 %v1278, %v1277
    %v1418 = vpack.c.b16 %v1280, %v1279
    %v1419 = vpack.c.b16 %v1282, %v1281
    %v1420 = vpack.c.b16 %v1284, %v1283
    %v1421 = vpack.c.b16 %v1286, %v1285
    %v1422 = vpack.c.b16 %v1288, %v1287
    %v1423 = vpack.c.b16 %v1290, %v1289
    %v1424 = vpack.c.b16 %v1292, %v1291
    %v1425 = vpack.c.b16 %v1294, %v1293
    %v1426 = vpack.c.b16 %v1296, %v1295
    %v1427 = vpack.c.b16 %v1298, %v1297
    %v1428 = vpack.c.b16 %v1300, %v1299
    %v1429 = vpack.c.b16 %v1302, %v1301
    %v1430 = vpack.c.b16 %v1304, %v1303
    %v1431 = vpack.c.b16 %v1306, %v1305
    %v1432 = vpack.c.b16 %v1308, %v1307
    %v1433 = vpack.c.b16 %v1310, %v1309
    %v1434 = vpack.c.b16 %v1312, %v1311
    %v1435 = vpack.c.b16 %v1314, %v1313
    %v1436 = vpack.c.b16 %v1316, %v1315
    %v1437 = vpack.c.b16 %v1318, %v1317
    %v1438 = vpack.c.b16 %v1320, %v1319
    %v1439 = vpack.c.b16 %v1322, %v1321
    %v1440 = vpack.c.b16 %v1324, %v1323
    %v1441 = vpack.c.b16 %v1326, %v1325
    %v1442 = vpack.c.b16 %v1328, %v1327
    %v1443 = vpack.c.b16 %v1330, %v1329
    %v1444 = vpack.c.b16 %v1332, %v1331
    %v1445 = vpack.c.b16 %v1334, %v1333
    %v1446 = vpack.c.b16 %v1336, %v1335
    %v1447 = vpack.c.b16 %v1338, %v1337
    %v1448 = vpack.c.b16 %v1340, %v1339
    %v1449 = vpack.c.b16 %v1342, %v1341
    %v1450 = vpack.c.b16 %v1344, %v1343
    %v1451 = vpack.c.b16 %v1346, %v1345
    %v1452 = vpack.c.b16 %v1348, %v1347
    %v1453 = vpack.c.b16 %v1350, %v1349
    %v1454 = vpack.c.b16 %v1352, %v1351
    %v1455 = vpack.c.b16 %v1354, %v1353
    %v1456 = vpack.c.b16 %v1356, %v1355
    %v1457 = vpack.c.b16 %v1358, %v1357
    %v1458 = vpack.c.b16 %v1360, %v1359
    %v1459 = vpack.c.b16 %v1362, %v1361
    %v1460 = vpack.c.b16 %v1364, %v1363
    %v1461 = vpack.c.b16 %v1366, %v1365
    %v1462 = vpack.c.b16 %v1368, %v1367
    %v1463 = vpack.c.b16 %v1370, %v1369
    %v1464 = vpack.c.b16 %v1372, %v1371
    %v1465 = vpack.c.b16 %v1374, %v1373
    %v1466 = vpack.c.b16 %v1376, %v1375
    %v1467 = vpack.c.b16 %v1378, %v1377
    %v1468 = vpack.c.b16 %v1380, %v1379
    %v1469 = vpack.c.b16 %v1382, %v1381
    %v1470 = vpack.c.b16 %v1384, %v1383
    %v1471 = vpack.c.b16 %v1386, %v1385
    %v1472 = vpack.c.b16 %v1388, %v1387
    %v1473 = vpack.c.b16 %v1390, %v1389
    %v1474 = vpack.c.b16 %v1392, %v1391
    %v1475 = vpack.c.b16 %v1394, %v1393
    %v1476 = vpack.c.b16 %v1396, %v1395
    %v1477 = vpack.c.b16 %v1398, %v1397
    %v1478 = vpack.c.b16 %v1400, %v1399
    %v1479 = vpack.c.b16 %v1402, %v1401
    %v1480 = vpack.c.b16 %v1404, %v1403
    %v1481 = vpack.c.b16 %v1406, %v1405
    %v1482 = vpack.c.b16 %v1408, %v1407
    %v1483 = vpack.c.b16 %v1410, %v1409
    %v1484 = vpack.c.b16 %v1412, %v1411
    %1557 = vmatprep.subr.bf16.mxu0 0
    %1558 = vmatpush1.bf16.msra.mxu0 %v1413
    %1559 = vmatprep.subr.bf16.mxu0 0
    %1560 = vmatpush1.bf16.msra.mxu0 %v1414
    %1561 = vmatprep.subr.bf16.mxu0 0
    %1562 = vmatpush1.bf16.msra.mxu0 %v1415
    %1563 = vmatprep.subr.bf16.mxu0 0
    %1564 = vmatpush1.bf16.msra.mxu0 %v1416
    %1565 = vmatprep.subr.bf16.mxu0 0
    %1566 = vmatpush1.bf16.msra.mxu0 %v1417
    %1567 = vmatprep.subr.bf16.mxu0 0
    %1568 = vmatpush1.bf16.msra.mxu0 %v1418
    %1569 = vmatprep.subr.bf16.mxu0 0
    %1570 = vmatpush1.bf16.msra.mxu0 %v1419
    %1571 = vmatprep.subr.bf16.mxu0 0
    %1572 = vmatpush1.bf16.msra.mxu0 %v1420
    %1573 = vmatprep.subr.bf16.mxu0 0
    %1574 = vmatpush1.bf16.msra.mxu0 %v1421
    %1575 = vmatprep.subr.bf16.mxu0 0
    %1576 = vmatpush1.bf16.msra.mxu0 %v1422
    %1577 = vmatprep.subr.bf16.mxu0 0
    %1578 = vmatpush1.bf16.msra.mxu0 %v1423
    %1579 = vmatprep.subr.bf16.mxu0 0
    %1580 = vmatpush1.bf16.msra.mxu0 %v1424
    %1581 = vmatprep.subr.bf16.mxu0 0
    %1582 = vmatpush1.bf16.msra.mxu0 %v1425
    %1583 = vmatprep.subr.bf16.mxu0 0
    %1584 = vmatpush1.bf16.msra.mxu0 %v1426
    %1585 = vmatprep.subr.bf16.mxu0 0
    %1586 = vmatpush1.bf16.msra.mxu0 %v1427
    %1587 = vmatprep.subr.bf16.mxu0 0
    %1588 = vmatpush1.bf16.msra.mxu0 %v1428
    %1589 = vmatprep.mubr.bf16.mxu0 %v275
    %1590 = vmatmul.mubr.bf16.gmra.mrb[0].mxu0 %v179
    %v1591 = vpop.f32.mrb[0].mxu0
    %v1592 = vadd.f32 0.0, %v1591
    %v1593 = vpop.f32.mrb[0].mxu0
    %v1594 = vpop.f32.mrb[0].mxu0
    %v1595 = vadd.f32 0.0, %v1594
    %v1596 = vpop.f32.mrb[0].mxu0
    %1597 = vmatprep.mubr.bf16.mxu0 %v276
    %1598 = vmatmul.mubr.bf16.gmra.mrb[0].mxu0 %v180
    %v1599 = vpop.f32.mrb[0].mxu0
    %v1600 = vadd.f32 0.0, %v1599
    %v1601 = vpop.f32.mrb[0].mxu0
    %v1602 = vpop.f32.mrb[0].mxu0
    %v1603 = vadd.f32 0.0, %v1602
    %v1604 = vpop.f32.mrb[0].mxu0
    %1605 = vmatprep.mubr.bf16.mxu0 %v277
    %1606 = vmatmul.mubr.bf16.gmra.mrb[0].mxu0 %v181
    %v1607 = vpop.f32.mrb[0].mxu0
    %v1608 = vadd.f32 0.0, %v1607
    %v1609 = vpop.f32.mrb[0].mxu0
    %v1610 = vpop.f32.mrb[0].mxu0
    %v1611 = vadd.f32 0.0, %v1610
    %v1612 = vpop.f32.mrb[0].mxu0
    %1613 = vmatprep.mubr.bf16.mxu0 %v278
    %1614 = vmatmul.mubr.bf16.gmra.mrb[0].mxu0 %v182
    %v1615 = vpop.f32.mrb[0].mxu0
    %v1616 = vadd.f32 0.0, %v1615
    %v1617 = vpop.f32.mrb[0].mxu0
    %v1618 = vpop.f32.mrb[0].mxu0
    %v1619 = vadd.f32 0.0, %v1618
    %v1620 = vpop.f32.mrb[0].mxu0
    %1621 = vmatprep.mubr.bf16.mxu0 %v279
    %1622 = vmatmul.mubr.bf16.gmra.mrb[0].mxu0 %v183
    %v1623 = vpop.f32.mrb[0].mxu0
    %v1624 = vadd.f32 0.0, %v1623
    %v1625 = vpop.f32.mrb[0].mxu0
    %v1626 = vpop.f32.mrb[0].mxu0
    %v1627 = vadd.f32 0.0, %v1626
    %v1628 = vpop.f32.mrb[0].mxu0
    %1629 = vmatprep.mubr.bf16.mxu0 %v280
    %1630 = vmatmul.mubr.bf16.gmra.mrb[0].mxu0 %v184
    %v1631 = vpop.f32.mrb[0].mxu0
    %v1632 = vadd.f32 0.0, %v1631
    %v1633 = vpop.f32.mrb[0].mxu0
    %v1634 = vpop.f32.mrb[0].mxu0
    %v1635 = vadd.f32 0.0, %v1634
    %v1636 = vpop.f32.mrb[0].mxu0
    %1637 = vmatprep.mubr.bf16.mxu0 %v281
    %1638 = vmatmul.mubr.bf16.gmra.mrb[0].mxu0 %v185
    %v1639 = vpop.f32.mrb[0].mxu0
    %v1640 = vadd.f32 0.0, %v1639
    %v1641 = vpop.f32.mrb[0].mxu0
    %v1642 = vpop.f32.mrb[0].mxu0
    %v1643 = vadd.f32 0.0, %v1642
    %v1644 = vpop.f32.mrb[0].mxu0
    %1645 = vmatprep.mubr.bf16.mxu0 %v282
    %1646 = vmatmul.mubr.bf16.gmra.mrb[0].mxu0 %v186
    %v1647 = vpop.f32.mrb[0].mxu0
    %v1648 = vadd.f32 0.0, %v1647
    %v1649 = vpop.f32.mrb[0].mxu0
    %v1650 = vpop.f32.mrb[0].mxu0
    %v1651 = vadd.f32 0.0, %v1650
    %v1652 = vpop.f32.mrb[0].mxu0
    %1653 = vmatprep.mubr.bf16.mxu0 %v283
    %1654 = vmatmul.mubr.bf16.gmra.mrb[0].mxu0 %v187
    %v1655 = vpop.f32.mrb[0].mxu0
    %v1656 = vadd.f32 0.0, %v1655
    %v1657 = vpop.f32.mrb[0].mxu0
    %v1658 = vpop.f32.mrb[0].mxu0
    %v1659 = vadd.f32 0.0, %v1658
    %v1660 = vpop.f32.mrb[0].mxu0
    %1661 = vmatprep.mubr.bf16.mxu0 %v284
    %1662 = vmatmul.mubr.bf16.gmra.mrb[0].mxu0 %v188
    %v1663 = vpop.f32.mrb[0].mxu0
    %v1664 = vadd.f32 0.0, %v1663
    %v1665 = vpop.f32.mrb[0].mxu0
    %v1666 = vpop.f32.mrb[0].mxu0
    %v1667 = vadd.f32 0.0, %v1666
    %v1668 = vpop.f32.mrb[0].mxu0
    %1669 = vmatprep.mubr.bf16.mxu0 %v285
    %1670 = vmatmul.mubr.bf16.gmra.mrb[0].mxu0 %v189
    %v1671 = vpop.f32.mrb[0].mxu0
    %v1672 = vadd.f32 0.0, %v1671
    %v1673 = vpop.f32.mrb[0].mxu0
    %v1674 = vpop.f32.mrb[0].mxu0
    %v1675 = vadd.f32 0.0, %v1674
    %v1676 = vpop.f32.mrb[0].mxu0
    %1677 = vmatprep.mubr.bf16.mxu0 %v286
    %1678 = vmatmul.mubr.bf16.gmra.mrb[0].mxu0 %v190
    %v1679 = vpop.f32.mrb[0].mxu0
    %v1680 = vadd.f32 0.0, %v1679
    %v1681 = vpop.f32.mrb[0].mxu0
    %v1682 = vpop.f32.mrb[0].mxu0
    %v1683 = vadd.f32 0.0, %v1682
    %v1684 = vpop.f32.mrb[0].mxu0
    %1685 = vmatprep.mubr.bf16.mxu0 %v287
    %1686 = vmatmul.mubr.bf16.gmra.mrb[0].mxu0 %v191
    %v1687 = vpop.f32.mrb[0].mxu0
    %v1688 = vadd.f32 0.0, %v1687
    %v1689 = vpop.f32.mrb[0].mxu0
    %v1690 = vpop.f32.mrb[0].mxu0
    %v1691 = vadd.f32 0.0, %v1690
    %v1692 = vpop.f32.mrb[0].mxu0
    %1693 = vmatprep.mubr.bf16.mxu0 %v288
    %1694 = vmatmul.mubr.bf16.gmra.mrb[0].mxu0 %v192
    %v1695 = vpop.f32.mrb[0].mxu0
    %v1696 = vadd.f32 0.0, %v1695
    %v1697 = vpop.f32.mrb[0].mxu0
    %v1698 = vpop.f32.mrb[0].mxu0
    %v1699 = vadd.f32 0.0, %v1698
    %v1700 = vpop.f32.mrb[0].mxu0
    %1701 = vmatprep.mubr.bf16.mxu0 %v289
    %1702 = vmatmul.mubr.bf16.gmra.mrb[0].mxu0 %v193
    %v1703 = vpop.f32.mrb[0].mxu0
    %v1704 = vadd.f32 0.0, %v1703
    %v1705 = vpop.f32.mrb[0].mxu0
    %v1706 = vpop.f32.mrb[0].mxu0
    %v1707 = vadd.f32 0.0, %v1706
    %v1708 = vpop.f32.mrb[0].mxu0
    %1709 = vmatprep.mubr.bf16.mxu0 %v290
    %1710 = vmatmul.mubr.bf16.gmra.mrb[0].mxu0 %v194
    %v1711 = vpop.f32.mrb[0].mxu0
    %v1712 = vadd.f32 0.0, %v1711
    %v1713 = vpop.f32.mrb[0].mxu0
    %v1714 = vpop.f32.mrb[0].mxu0
    %v1715 = vadd.f32 0.0, %v1714
    %v1716 = vpop.f32.mrb[0].mxu0
    %1717 = vmatprep.mubr.bf16.mxu0 %v291
    %1718 = vmatmul.mubr.bf16.gmra.mrb[0].mxu0 %v195
    %v1719 = vpop.f32.mrb[0].mxu0
    %v1720 = vadd.f32 0.0, %v1719
    %v1721 = vpop.f32.mrb[0].mxu0
    %v1722 = vpop.f32.mrb[0].mxu0
    %v1723 = vadd.f32 0.0, %v1722
    %v1724 = vpop.f32.mrb[0].mxu0
    %1725 = vmatprep.mubr.bf16.mxu0 %v292
    %1726 = vmatmul.mubr.bf16.gmra.mrb[0].mxu0 %v196
    %v1727 = vpop.f32.mrb[0].mxu0
    %v1728 = vadd.f32 0.0, %v1727
    %v1729 = vpop.f32.mrb[0].mxu0
    %v1730 = vpop.f32.mrb[0].mxu0
    %v1731 = vadd.f32 0.0, %v1730
    %v1732 = vpop.f32.mrb[0].mxu0
    %1733 = vmatprep.mubr.bf16.mxu0 %v293
    %1734 = vmatmul.mubr.bf16.gmra.mrb[0].mxu0 %v197
    %v1735 = vpop.f32.mrb[0].mxu0
    %v1736 = vadd.f32 0.0, %v1735
    %v1737 = vpop.f32.mrb[0].mxu0
    %v1738 = vpop.f32.mrb[0].mxu0
    %v1739 = vadd.f32 0.0, %v1738
    %v1740 = vpop.f32.mrb[0].mxu0
    %1741 = vmatprep.mubr.bf16.mxu0 %v294
    %1742 = vmatmul.mubr.bf16.gmra.mrb[0].mxu0 %v198
    %v1743 = vpop.f32.mrb[0].mxu0
    %v1744 = vadd.f32 0.0, %v1743
    %v1745 = vpop.f32.mrb[0].mxu0
    %v1746 = vpop.f32.mrb[0].mxu0
    %v1747 = vadd.f32 0.0, %v1746
    %v1748 = vpop.f32.mrb[0].mxu0
    %1749 = vmatprep.mubr.bf16.mxu0 %v295
    %1750 = vmatmul.mubr.bf16.gmra.mrb[0].mxu0 %v199
    %v1751 = vpop.f32.mrb[0].mxu0
    %v1752 = vadd.f32 0.0, %v1751
    %v1753 = vpop.f32.mrb[0].mxu0
    %v1754 = vpop.f32.mrb[0].mxu0
    %v1755 = vadd.f32 0.0, %v1754
    %v1756 = vpop.f32.mrb[0].mxu0
    %1757 = vmatprep.mubr.bf16.mxu0 %v296
    %1758 = vmatmul.mubr.bf16.gmra.mrb[0].mxu0 %v200
    %v1759 = vpop.f32.mrb[0].mxu0
    %v1760 = vadd.f32 0.0, %v1759
    %v1761 = vpop.f32.mrb[0].mxu0
    %v1762 = vpop.f32.mrb[0].mxu0
    %v1763 = vadd.f32 0.0, %v1762
    %v1764 = vpop.f32.mrb[0].mxu0
    %1765 = vmatprep.mubr.bf16.mxu0 %v297
    %1766 = vmatmul.mubr.bf16.gmra.mrb[0].mxu0 %v201
    %v1767 = vpop.f32.mrb[0].mxu0
    %v1768 = vadd.f32 0.0, %v1767
    %v1769 = vpop.f32.mrb[0].mxu0
    %v1770 = vpop.f32.mrb[0].mxu0
    %v1771 = vadd.f32 0.0, %v1770
    %v1772 = vpop.f32.mrb[0].mxu0
    %1773 = vmatprep.mubr.bf16.mxu0 %v298
    %1774 = vmatmul.mubr.bf16.gmra.mrb[0].mxu0 %v202
    %v1775 = vpop.f32.mrb[0].mxu0
    %v1776 = vadd.f32 0.0, %v1775
    %v1777 = vpop.f32.mrb[0].mxu0
    %v1778 = vpop.f32.mrb[0].mxu0
    %v1779 = vadd.f32 0.0, %v1778
    %v1780 = vpop.f32.mrb[0].mxu0
    %1781 = vmatprep.mubr.bf16.mxu0 %v299
    %1782 = vmatmul.mubr.bf16.gmra.mrb[0].mxu0 %v203
    %v1783 = vpop.f32.mrb[0].mxu0
    %v1784 = vadd.f32 0.0, %v1783
    %v1785 = vpop.f32.mrb[0].mxu0
    %v1786 = vpop.f32.mrb[0].mxu0
    %v1787 = vadd.f32 0.0, %v1786
    %v1788 = vpop.f32.mrb[0].mxu0
    %1789 = vmatprep.mubr.bf16.mxu0 %v300
    %1790 = vmatmul.mubr.bf16.gmra.mrb[0].mxu0 %v204
    %v1791 = vpop.f32.mrb[0].mxu0
    %v1792 = vadd.f32 0.0, %v1791
    %v1793 = vpop.f32.mrb[0].mxu0
    %v1794 = vpop.f32.mrb[0].mxu0
    %v1795 = vadd.f32 0.0, %v1794
    %v1796 = vpop.f32.mrb[0].mxu0
    %1797 = vmatprep.mubr.bf16.mxu0 %v301
    %1798 = vmatmul.mubr.bf16.gmra.mrb[0].mxu0 %v205
    %v1799 = vpop.f32.mrb[0].mxu0
    %v1800 = vadd.f32 0.0, %v1799
    %v1801 = vpop.f32.mrb[0].mxu0
    %v1802 = vpop.f32.mrb[0].mxu0
    %v1803 = vadd.f32 0.0, %v1802
    %v1804 = vpop.f32.mrb[0].mxu0
    %1805 = vmatprep.mubr.bf16.mxu0 %v302
    %1806 = vmatmul.mubr.bf16.gmra.mrb[0].mxu0 %v206
    %v1807 = vpop.f32.mrb[0].mxu0
    %v1808 = vadd.f32 0.0, %v1807
    %v1809 = vpop.f32.mrb[0].mxu0
    %v1810 = vpop.f32.mrb[0].mxu0
    %v1811 = vadd.f32 0.0, %v1810
    %v1812 = vpop.f32.mrb[0].mxu0
    %1813 = vmatprep.mubr.bf16.mxu0 %v303
    %1814 = vmatmul.mubr.bf16.gmra.mrb[0].mxu0 %v207
    %v1815 = vpop.f32.mrb[0].mxu0
    %v1816 = vadd.f32 0.0, %v1815
    %v1817 = vpop.f32.mrb[0].mxu0
    %v1818 = vpop.f32.mrb[0].mxu0
    %v1819 = vadd.f32 0.0, %v1818
    %v1820 = vpop.f32.mrb[0].mxu0
    %1821 = vmatprep.mubr.bf16.mxu0 %v304
    %1822 = vmatmul.mubr.bf16.gmra.mrb[0].mxu0 %v208
    %v1823 = vpop.f32.mrb[0].mxu0
    %v1824 = vadd.f32 0.0, %v1823
    %v1825 = vpop.f32.mrb[0].mxu0
    %v1826 = vpop.f32.mrb[0].mxu0
    %v1827 = vadd.f32 0.0, %v1826
    %v1828 = vpop.f32.mrb[0].mxu0
    %1829 = vmatprep.mubr.bf16.mxu0 %v305
    %1830 = vmatmul.mubr.bf16.gmra.mrb[0].mxu0 %v209
    %v1831 = vpop.f32.mrb[0].mxu0
    %v1832 = vadd.f32 0.0, %v1831
    %v1833 = vpop.f32.mrb[0].mxu0
    %v1834 = vpop.f32.mrb[0].mxu0
    %v1835 = vadd.f32 0.0, %v1834
    %v1836 = vpop.f32.mrb[0].mxu0
    %1837 = vmatprep.mubr.bf16.mxu0 %v306
    %1838 = vmatmul.mubr.bf16.gmra.mrb[0].mxu0 %v210
    %v1839 = vpop.f32.mrb[0].mxu0
    %v1840 = vadd.f32 0.0, %v1839
    %v1841 = vpop.f32.mrb[0].mxu0
    %v1842 = vpop.f32.mrb[0].mxu0
    %v1843 = vadd.f32 0.0, %v1842
    %v1844 = vpop.f32.mrb[0].mxu0
    %1845 = vdwg.mxu0
    %1846 = vmatprep.subr.bf16.mxu0 0
    %1847 = vmatpush1.bf16.msra.mxu0 %v1429
    %1848 = vmatprep.subr.bf16.mxu0 0
    %1849 = vmatpush1.bf16.msra.mxu0 %v1430
    %1850 = vmatprep.subr.bf16.mxu0 0
    %1851 = vmatpush1.bf16.msra.mxu0 %v1431
    %1852 = vmatprep.subr.bf16.mxu0 0
    %1853 = vmatpush1.bf16.msra.mxu0 %v1432
    %1854 = vmatprep.subr.bf16.mxu0 0
    %1855 = vmatpush1.bf16.msra.mxu0 %v1433
    %1856 = vmatprep.subr.bf16.mxu0 0
    %1857 = vmatpush1.bf16.msra.mxu0 %v1434
    %1858 = vmatprep.subr.bf16.mxu0 0
    %1859 = vmatpush1.bf16.msra.mxu0 %v1435
    %1860 = vmatprep.subr.bf16.mxu0 0
    %1861 = vmatpush1.bf16.msra.mxu0 %v1436
    %1862 = vmatprep.subr.bf16.mxu0 0
    %1863 = vmatpush1.bf16.msra.mxu0 %v1437
    %1864 = vmatprep.subr.bf16.mxu0 0
    %1865 = vmatpush1.bf16.msra.mxu0 %v1438
    %1866 = vmatprep.subr.bf16.mxu0 0
    %1867 = vmatpush1.bf16.msra.mxu0 %v1439
    %1868 = vmatprep.subr.bf16.mxu0 0
    %1869 = vmatpush1.bf16.msra.mxu0 %v1440
    %1870 = vmatprep.subr.bf16.mxu0 0
    %1871 = vmatpush1.bf16.msra.mxu0 %v1441
    %1872 = vmatprep.subr.bf16.mxu0 0
    %1873 = vmatpush1.bf16.msra.mxu0 %v1442
    %1874 = vmatprep.subr.bf16.mxu0 0
    %1875 = vmatpush1.bf16.msra.mxu0 %v1443
    %1876 = vmatprep.subr.bf16.mxu0 0
    %1877 = vmatpush1.bf16.msra.mxu0 %v1444
    %1878 = vmatprep.mubr.bf16.mxu0 %v468
    %1879 = vmatmul.mubr.bf16.gmra.mrb[0].mxu0 %v371
    %v1880 = vpop.f32.mrb[0].mxu0
    %v1881 = vadd.f32 %v1592, %v1880
    %v1882 = vpop.f32.mrb[0].mxu0
    %v1883 = vpop.f32.mrb[0].mxu0
    %v1884 = vadd.f32 %v1595, %v1883
    %v1885 = vpop.f32.mrb[0].mxu0
    %1886 = vmatprep.mubr.bf16.mxu0 %v469
    %1887 = vmatmul.mubr.bf16.gmra.mrb[0].mxu0 %v372
    %v1888 = vpop.f32.mrb[0].mxu0
    %v1889 = vadd.f32 %v1600, %v1888
    %v1890 = vpop.f32.mrb[0].mxu0
    %v1891 = vpop.f32.mrb[0].mxu0
    %v1892 = vadd.f32 %v1603, %v1891
    %v1893 = vpop.f32.mrb[0].mxu0
    %1894 = vmatprep.mubr.bf16.mxu0 %v470
    %1895 = vmatmul.mubr.bf16.gmra.mrb[0].mxu0 %v373
    %v1896 = vpop.f32.mrb[0].mxu0
    %v1897 = vadd.f32 %v1608, %v1896
    %v1898 = vpop.f32.mrb[0].mxu0
    %v1899 = vpop.f32.mrb[0].mxu0
    %v1900 = vadd.f32 %v1611, %v1899
    %v1901 = vpop.f32.mrb[0].mxu0
    %1902 = vmatprep.mubr.bf16.mxu0 %v471
    %1903 = vmatmul.mubr.bf16.gmra.mrb[0].mxu0 %v374
    %v1904 = vpop.f32.mrb[0].mxu0
    %v1905 = vadd.f32 %v1616, %v1904
    %v1906 = vpop.f32.mrb[0].mxu0
    %v1907 = vpop.f32.mrb[0].mxu0
    %v1908 = vadd.f32 %v1619, %v1907
    %v1909 = vpop.f32.mrb[0].mxu0
    %1910 = vmatprep.mubr.bf16.mxu0 %v472
    %1911 = vmatmul.mubr.bf16.gmra.mrb[0].mxu0 %v375
    %v1912 = vpop.f32.mrb[0].mxu0
    %v1913 = vadd.f32 %v1624, %v1912
    %v1914 = vpop.f32.mrb[0].mxu0
    %v1915 = vpop.f32.mrb[0].mxu0
    %v1916 = vadd.f32 %v1627, %v1915
    %v1917 = vpop.f32.mrb[0].mxu0
    %1918 = vmatprep.mubr.bf16.mxu0 %v473
    %1919 = vmatmul.mubr.bf16.gmra.mrb[0].mxu0 %v376
    %v1920 = vpop.f32.mrb[0].mxu0
    %v1921 = vadd.f32 %v1632, %v1920
    %v1922 = vpop.f32.mrb[0].mxu0
    %v1923 = vpop.f32.mrb[0].mxu0
    %v1924 = vadd.f32 %v1635, %v1923
    %v1925 = vpop.f32.mrb[0].mxu0
    %1926 = vmatprep.mubr.bf16.mxu0 %v474
    %1927 = vmatmul.mubr.bf16.gmra.mrb[0].mxu0 %v377
    %v1928 = vpop.f32.mrb[0].mxu0
    %v1929 = vadd.f32 %v1640, %v1928
    %v1930 = vpop.f32.mrb[0].mxu0
    %v1931 = vpop.f32.mrb[0].mxu0
    %v1932 = vadd.f32 %v1643, %v1931
    %v1933 = vpop.f32.mrb[0].mxu0
    %1934 = vmatprep.mubr.bf16.mxu0 %v475
    %1935 = vmatmul.mubr.bf16.gmra.mrb[0].mxu0 %v378
    %v1936 = vpop.f32.mrb[0].mxu0
    %v1937 = vadd.f32 %v1648, %v1936
    %v1938 = vpop.f32.mrb[0].mxu0
    %v1939 = vpop.f32.mrb[0].mxu0
    %v1940 = vadd.f32 %v1651, %v1939
    %v1941 = vpop.f32.mrb[0].mxu0
    %1942 = vmatprep.mubr.bf16.mxu0 %v476
    %1943 = vmatmul.mubr.bf16.gmra.mrb[0].mxu0 %v379
    %v1944 = vpop.f32.mrb[0].mxu0
    %v1945 = vadd.f32 %v1656, %v1944
    %v1946 = vpop.f32.mrb[0].mxu0
    %v1947 = vpop.f32.mrb[0].mxu0
    %v1948 = vadd.f32 %v1659, %v1947
    %v1949 = vpop.f32.mrb[0].mxu0
    %1950 = vmatprep.mubr.bf16.mxu0 %v477
    %1951 = vmatmul.mubr.bf16.gmra.mrb[0].mxu0 %v380
    %v1952 = vpop.f32.mrb[0].mxu0
    %v1953 = vadd.f32 %v1664, %v1952
    %v1954 = vpop.f32.mrb[0].mxu0
    %v1955 = vpop.f32.mrb[0].mxu0
    %v1956 = vadd.f32 %v1667, %v1955
    %v1957 = vpop.f32.mrb[0].mxu0
    %1958 = vmatprep.mubr.bf16.mxu0 %v478
    %1959 = vmatmul.mubr.bf16.gmra.mrb[0].mxu0 %v381
    %v1960 = vpop.f32.mrb[0].mxu0
    %v1961 = vadd.f32 %v1672, %v1960
    %v1962 = vpop.f32.mrb[0].mxu0
    %v1963 = vpop.f32.mrb[0].mxu0
    %v1964 = vadd.f32 %v1675, %v1963
    %v1965 = vpop.f32.mrb[0].mxu0
    %1966 = vmatprep.mubr.bf16.mxu0 %v479
    %1967 = vmatmul.mubr.bf16.gmra.mrb[0].mxu0 %v382
    %v1968 = vpop.f32.mrb[0].mxu0
    %v1969 = vadd.f32 %v1680, %v1968
    %v1970 = vpop.f32.mrb[0].mxu0
    %v1971 = vpop.f32.mrb[0].mxu0
    %v1972 = vadd.f32 %v1683, %v1971
    %v1973 = vpop.f32.mrb[0].mxu0
    %1974 = vmatprep.mubr.bf16.mxu0 %v480
    %1975 = vmatmul.mubr.bf16.gmra.mrb[0].mxu0 %v383
    %v1976 = vpop.f32.mrb[0].mxu0
    %v1977 = vadd.f32 %v1688, %v1976
    %v1978 = vpop.f32.mrb[0].mxu0
    %v1979 = vpop.f32.mrb[0].mxu0
    %v1980 = vadd.f32 %v1691, %v1979
    %v1981 = vpop.f32.mrb[0].mxu0
    %1982 = vmatprep.mubr.bf16.mxu0 %v481
    %1983 = vmatmul.mubr.bf16.gmra.mrb[0].mxu0 %v384
    %v1984 = vpop.f32.mrb[0].mxu0
    %v1985 = vadd.f32 %v1696, %v1984
    %v1986 = vpop.f32.mrb[0].mxu0
    %v1987 = vpop.f32.mrb[0].mxu0
    %v1988 = vadd.f32 %v1699, %v1987
    %v1989 = vpop.f32.mrb[0].mxu0
    %1990 = vmatprep.mubr.bf16.mxu0 %v482
    %1991 = vmatmul.mubr.bf16.gmra.mrb[0].mxu0 %v385
    %v1992 = vpop.f32.mrb[0].mxu0
    %v1993 = vadd.f32 %v1704, %v1992
    %v1994 = vpop.f32.mrb[0].mxu0
    %v1995 = vpop.f32.mrb[0].mxu0
    %v1996 = vadd.f32 %v1707, %v1995
    %v1997 = vpop.f32.mrb[0].mxu0
    %1998 = vmatprep.mubr.bf16.mxu0 %v483
    %1999 = vmatmul.mubr.bf16.gmra.mrb[0].mxu0 %v386
    %v2000 = vpop.f32.mrb[0].mxu0
    %v2001 = vadd.f32 %v1712, %v2000
    %v2002 = vpop.f32.mrb[0].mxu0
    %v2003 = vpop.f32.mrb[0].mxu0
    %v2004 = vadd.f32 %v1715, %v2003
    %v2005 = vpop.f32.mrb[0].mxu0
    %2006 = vmatprep.mubr.bf16.mxu0 %v484
    %2007 = vmatmul.mubr.bf16.gmra.mrb[0].mxu0 %v387
    %v2008 = vpop.f32.mrb[0].mxu0
    %v2009 = vadd.f32 %v1720, %v2008
    %v2010 = vpop.f32.mrb[0].mxu0
    %v2011 = vpop.f32.mrb[0].mxu0
    %v2012 = vadd.f32 %v1723, %v2011
    %v2013 = vpop.f32.mrb[0].mxu0
    %2014 = vmatprep.mubr.bf16.mxu0 %v485
    %2015 = vmatmul.mubr.bf16.gmra.mrb[0].mxu0 %v388
    %v2016 = vpop.f32.mrb[0].mxu0
    %v2017 = vadd.f32 %v1728, %v2016
    %v2018 = vpop.f32.mrb[0].mxu0
    %v2019 = vpop.f32.mrb[0].mxu0
    %v2020 = vadd.f32 %v1731, %v2019
    %v2021 = vpop.f32.mrb[0].mxu0
    %2022 = vmatprep.mubr.bf16.mxu0 %v486
    %2023 = vmatmul.mubr.bf16.gmra.mrb[0].mxu0 %v389
    %v2024 = vpop.f32.mrb[0].mxu0
    %v2025 = vadd.f32 %v1736, %v2024
    %v2026 = vpop.f32.mrb[0].mxu0
    %v2027 = vpop.f32.mrb[0].mxu0
    %v2028 = vadd.f32 %v1739, %v2027
    %v2029 = vpop.f32.mrb[0].mxu0
    %2030 = vmatprep.mubr.bf16.mxu0 %v487
    %2031 = vmatmul.mubr.bf16.gmra.mrb[0].mxu0 %v390
    %v2032 = vpop.f32.mrb[0].mxu0
    %v2033 = vadd.f32 %v1744, %v2032
    %v2034 = vpop.f32.mrb[0].mxu0
    %v2035 = vpop.f32.mrb[0].mxu0
    %v2036 = vadd.f32 %v1747, %v2035
    %v2037 = vpop.f32.mrb[0].mxu0
    %2038 = vmatprep.mubr.bf16.mxu0 %v488
    %2039 = vmatmul.mubr.bf16.gmra.mrb[0].mxu0 %v391
    %v2040 = vpop.f32.mrb[0].mxu0
    %v2041 = vadd.f32 %v1752, %v2040
    %v2042 = vpop.f32.mrb[0].mxu0
    %v2043 = vpop.f32.mrb[0].mxu0
    %v2044 = vadd.f32 %v1755, %v2043
    %v2045 = vpop.f32.mrb[0].mxu0
    %2046 = vmatprep.mubr.bf16.mxu0 %v489
    %2047 = vmatmul.mubr.bf16.gmra.mrb[0].mxu0 %v392
    %v2048 = vpop.f32.mrb[0].mxu0
    %v2049 = vadd.f32 %v1760, %v2048
    %v2050 = vpop.f32.mrb[0].mxu0
    %v2051 = vpop.f32.mrb[0].mxu0
    %v2052 = vadd.f32 %v1763, %v2051
    %v2053 = vpop.f32.mrb[0].mxu0
    %2054 = vmatprep.mubr.bf16.mxu0 %v490
    %2055 = vmatmul.mubr.bf16.gmra.mrb[0].mxu0 %v393
    %v2056 = vpop.f32.mrb[0].mxu0
    %v2057 = vadd.f32 %v1768, %v2056
    %v2058 = vpop.f32.mrb[0].mxu0
    %v2059 = vpop.f32.mrb[0].mxu0
    %v2060 = vadd.f32 %v1771, %v2059
    %v2061 = vpop.f32.mrb[0].mxu0
    %2062 = vmatprep.mubr.bf16.mxu0 %v491
    %2063 = vmatmul.mubr.bf16.gmra.mrb[0].mxu0 %v394
    %v2064 = vpop.f32.mrb[0].mxu0
    %v2065 = vadd.f32 %v1776, %v2064
    %v2066 = vpop.f32.mrb[0].mxu0
    %v2067 = vpop.f32.mrb[0].mxu0
    %v2068 = vadd.f32 %v1779, %v2067
    %v2069 = vpop.f32.mrb[0].mxu0
    %2070 = vmatprep.mubr.bf16.mxu0 %v492
    %2071 = vmatmul.mubr.bf16.gmra.mrb[0].mxu0 %v395
    %v2072 = vpop.f32.mrb[0].mxu0
    %v2073 = vadd.f32 %v1784, %v2072
    %v2074 = vpop.f32.mrb[0].mxu0
    %v2075 = vpop.f32.mrb[0].mxu0
    %v2076 = vadd.f32 %v1787, %v2075
    %v2077 = vpop.f32.mrb[0].mxu0
    %2078 = vmatprep.mubr.bf16.mxu0 %v493
    %2079 = vmatmul.mubr.bf16.gmra.mrb[0].mxu0 %v396
    %v2080 = vpop.f32.mrb[0].mxu0
    %v2081 = vadd.f32 %v1792, %v2080
    %v2082 = vpop.f32.mrb[0].mxu0
    %v2083 = vpop.f32.mrb[0].mxu0
    %v2084 = vadd.f32 %v1795, %v2083
    %v2085 = vpop.f32.mrb[0].mxu0
    %2086 = vmatprep.mubr.bf16.mxu0 %v494
    %2087 = vmatmul.mubr.bf16.gmra.mrb[0].mxu0 %v397
    %v2088 = vpop.f32.mrb[0].mxu0
    %v2089 = vadd.f32 %v1800, %v2088
    %v2090 = vpop.f32.mrb[0].mxu0
    %v2091 = vpop.f32.mrb[0].mxu0
    %v2092 = vadd.f32 %v1803, %v2091
    %v2093 = vpop.f32.mrb[0].mxu0
    %2094 = vmatprep.mubr.bf16.mxu0 %v495
    %2095 = vmatmul.mubr.bf16.gmra.mrb[0].mxu0 %v398
    %v2096 = vpop.f32.mrb[0].mxu0
    %v2097 = vadd.f32 %v1808, %v2096
    %v2098 = vpop.f32.mrb[0].mxu0
    %v2099 = vpop.f32.mrb[0].mxu0
    %v2100 = vadd.f32 %v1811, %v2099
    %v2101 = vpop.f32.mrb[0].mxu0
    %2102 = vmatprep.mubr.bf16.mxu0 %v496
    %2103 = vmatmul.mubr.bf16.gmra.mrb[0].mxu0 %v399
    %v2104 = vpop.f32.mrb[0].mxu0
    %v2105 = vadd.f32 %v1816, %v2104
    %v2106 = vpop.f32.mrb[0].mxu0
    %v2107 = vpop.f32.mrb[0].mxu0
    %v2108 = vadd.f32 %v1819, %v2107
    %v2109 = vpop.f32.mrb[0].mxu0
    %2110 = vmatprep.mubr.bf16.mxu0 %v497
    %2111 = vmatmul.mubr.bf16.gmra.mrb[0].mxu0 %v400
    %v2112 = vpop.f32.mrb[0].mxu0
    %v2113 = vadd.f32 %v1824, %v2112
    %v2114 = vpop.f32.mrb[0].mxu0
    %v2115 = vpop.f32.mrb[0].mxu0
    %v2116 = vadd.f32 %v1827, %v2115
    %v2117 = vpop.f32.mrb[0].mxu0
    %2118 = vmatprep.mubr.bf16.mxu0 %v498
    %2119 = vmatmul.mubr.bf16.gmra.mrb[0].mxu0 %v401
    %v2120 = vpop.f32.mrb[0].mxu0
    %v2121 = vadd.f32 %v1832, %v2120
    %v2122 = vpop.f32.mrb[0].mxu0
    %v2123 = vpop.f32.mrb[0].mxu0
    %v2124 = vadd.f32 %v1835, %v2123
    %v2125 = vpop.f32.mrb[0].mxu0
    %2126 = vmatprep.mubr.bf16.mxu0 %v499
    %2127 = vmatmul.mubr.bf16.gmra.mrb[0].mxu0 %v402
    %v2128 = vpop.f32.mrb[0].mxu0
    %v2129 = vadd.f32 %v1840, %v2128
    %v2130 = vpop.f32.mrb[0].mxu0
    %v2131 = vpop.f32.mrb[0].mxu0
    %v2132 = vadd.f32 %v1843, %v2131
    %v2133 = vpop.f32.mrb[0].mxu0
    %2134 = vdwg.mxu0
    %2135 = vmatprep.subr.bf16.mxu0 0
    %2136 = vmatpush1.bf16.msra.mxu0 %v1445
    %2137 = vmatprep.subr.bf16.mxu0 0
    %2138 = vmatpush1.bf16.msra.mxu0 %v1446
    %2139 = vmatprep.subr.bf16.mxu0 0
    %2140 = vmatpush1.bf16.msra.mxu0 %v1447
    %2141 = vmatprep.subr.bf16.mxu0 0
    %2142 = vmatpush1.bf16.msra.mxu0 %v1448
    %2143 = vmatprep.subr.bf16.mxu0 0
    %2144 = vmatpush1.bf16.msra.mxu0 %v1449
    %2145 = vmatprep.subr.bf16.mxu0 0
    %2146 = vmatpush1.bf16.msra.mxu0 %v1450
    %2147 = vmatprep.subr.bf16.mxu0 0
    %2148 = vmatpush1.bf16.msra.mxu0 %v1451
    %2149 = vmatprep.subr.bf16.mxu0 0
    %2150 = vmatpush1.bf16.msra.mxu0 %v1452
    %2151 = vmatprep.subr.bf16.mxu0 0
    %2152 = vmatpush1.bf16.msra.mxu0 %v1453
    %2153 = vmatprep.subr.bf16.mxu0 0
    %2154 = vmatpush1.bf16.msra.mxu0 %v1454
    %2155 = vmatprep.subr.bf16.mxu0 0
    %2156 = vmatpush1.bf16.msra.mxu0 %v1455
    %2157 = vmatprep.subr.bf16.mxu0 0
    %2158 = vmatpush1.bf16.msra.mxu0 %v1456
    %2159 = vmatprep.subr.bf16.mxu0 0
    %2160 = vmatpush1.bf16.msra.mxu0 %v1457
    %2161 = vmatprep.subr.bf16.mxu0 0
    %2162 = vmatpush1.bf16.msra.mxu0 %v1458
    %2163 = vmatprep.subr.bf16.mxu0 0
    %2164 = vmatpush1.bf16.msra.mxu0 %v1459
    %2165 = vmatprep.subr.bf16.mxu0 0
    %2166 = vmatpush1.bf16.msra.mxu0 %v1460
    %2167 = vmatprep.mubr.bf16.mxu0 %v660
    %2168 = vmatmul.mubr.bf16.gmra.mrb[0].mxu0 %v564
    %v2169 = vpop.f32.mrb[0].mxu0
    %v2170 = vadd.f32 %v1881, %v2169
    %v2171 = vpop.f32.mrb[0].mxu0
    %v2172 = vpop.f32.mrb[0].mxu0
    %v2173 = vadd.f32 %v1884, %v2172
    %v2174 = vpop.f32.mrb[0].mxu0
    %2175 = vmatprep.mubr.bf16.mxu0 %v661
    %2176 = vmatmul.mubr.bf16.gmra.mrb[0].mxu0 %v565
    %v2177 = vpop.f32.mrb[0].mxu0
    %v2178 = vadd.f32 %v1889, %v2177
    %v2179 = vpop.f32.mrb[0].mxu0
    %v2180 = vpop.f32.mrb[0].mxu0
    %v2181 = vadd.f32 %v1892, %v2180
    %v2182 = vpop.f32.mrb[0].mxu0
    %2183 = vmatprep.mubr.bf16.mxu0 %v662
    %2184 = vmatmul.mubr.bf16.gmra.mrb[0].mxu0 %v566
    %v2185 = vpop.f32.mrb[0].mxu0
    %v2186 = vadd.f32 %v1897, %v2185
    %v2187 = vpop.f32.mrb[0].mxu0
    %v2188 = vpop.f32.mrb[0].mxu0
    %v2189 = vadd.f32 %v1900, %v2188
    %v2190 = vpop.f32.mrb[0].mxu0
    %2191 = vmatprep.mubr.bf16.mxu0 %v663
    %2192 = vmatmul.mubr.bf16.gmra.mrb[0].mxu0 %v567
    %v2193 = vpop.f32.mrb[0].mxu0
    %v2194 = vadd.f32 %v1905, %v2193
    %v2195 = vpop.f32.mrb[0].mxu0
    %v2196 = vpop.f32.mrb[0].mxu0
    %v2197 = vadd.f32 %v1908, %v2196
    %v2198 = vpop.f32.mrb[0].mxu0
    %2199 = vmatprep.mubr.bf16.mxu0 %v664
    %2200 = vmatmul.mubr.bf16.gmra.mrb[0].mxu0 %v568
    %v2201 = vpop.f32.mrb[0].mxu0
    %v2202 = vadd.f32 %v1913, %v2201
    %v2203 = vpop.f32.mrb[0].mxu0
    %v2204 = vpop.f32.mrb[0].mxu0
    %v2205 = vadd.f32 %v1916, %v2204
    %v2206 = vpop.f32.mrb[0].mxu0
    %2207 = vmatprep.mubr.bf16.mxu0 %v665
    %2208 = vmatmul.mubr.bf16.gmra.mrb[0].mxu0 %v569
    %v2209 = vpop.f32.mrb[0].mxu0
    %v2210 = vadd.f32 %v1921, %v2209
    %v2211 = vpop.f32.mrb[0].mxu0
    %v2212 = vpop.f32.mrb[0].mxu0
    %v2213 = vadd.f32 %v1924, %v2212
    %v2214 = vpop.f32.mrb[0].mxu0
    %2215 = vmatprep.mubr.bf16.mxu0 %v666
    %2216 = vmatmul.mubr.bf16.gmra.mrb[0].mxu0 %v570
    %v2217 = vpop.f32.mrb[0].mxu0
    %v2218 = vadd.f32 %v1929, %v2217
    %v2219 = vpop.f32.mrb[0].mxu0
    %v2220 = vpop.f32.mrb[0].mxu0
    %v2221 = vadd.f32 %v1932, %v2220
    %v2222 = vpop.f32.mrb[0].mxu0
    %2223 = vmatprep.mubr.bf16.mxu0 %v667
    %2224 = vmatmul.mubr.bf16.gmra.mrb[0].mxu0 %v571
    %v2225 = vpop.f32.mrb[0].mxu0
    %v2226 = vadd.f32 %v1937, %v2225
    %v2227 = vpop.f32.mrb[0].mxu0
    %v2228 = vpop.f32.mrb[0].mxu0
    %v2229 = vadd.f32 %v1940, %v2228
    %v2230 = vpop.f32.mrb[0].mxu0
    %2231 = vmatprep.mubr.bf16.mxu0 %v668
    %2232 = vmatmul.mubr.bf16.gmra.mrb[0].mxu0 %v572
    %v2233 = vpop.f32.mrb[0].mxu0
    %v2234 = vadd.f32 %v1945, %v2233
    %v2235 = vpop.f32.mrb[0].mxu0
    %v2236 = vpop.f32.mrb[0].mxu0
    %v2237 = vadd.f32 %v1948, %v2236
    %v2238 = vpop.f32.mrb[0].mxu0
    %2239 = vmatprep.mubr.bf16.mxu0 %v669
    %2240 = vmatmul.mubr.bf16.gmra.mrb[0].mxu0 %v573
    %v2241 = vpop.f32.mrb[0].mxu0
    %v2242 = vadd.f32 %v1953, %v2241
    %v2243 = vpop.f32.mrb[0].mxu0
    %v2244 = vpop.f32.mrb[0].mxu0
    %v2245 = vadd.f32 %v1956, %v2244
    %v2246 = vpop.f32.mrb[0].mxu0
    %2247 = vmatprep.mubr.bf16.mxu0 %v670
    %2248 = vmatmul.mubr.bf16.gmra.mrb[0].mxu0 %v574
    %v2249 = vpop.f32.mrb[0].mxu0
    %v2250 = vadd.f32 %v1961, %v2249
    %v2251 = vpop.f32.mrb[0].mxu0
    %v2252 = vpop.f32.mrb[0].mxu0
    %v2253 = vadd.f32 %v1964, %v2252
    %v2254 = vpop.f32.mrb[0].mxu0
    %2255 = vmatprep.mubr.bf16.mxu0 %v671
    %2256 = vmatmul.mubr.bf16.gmra.mrb[0].mxu0 %v575
    %v2257 = vpop.f32.mrb[0].mxu0
    %v2258 = vadd.f32 %v1969, %v2257
    %v2259 = vpop.f32.mrb[0].mxu0
    %v2260 = vpop.f32.mrb[0].mxu0
    %v2261 = vadd.f32 %v1972, %v2260
    %v2262 = vpop.f32.mrb[0].mxu0
    %2263 = vmatprep.mubr.bf16.mxu0 %v672
    %2264 = vmatmul.mubr.bf16.gmra.mrb[0].mxu0 %v576
    %v2265 = vpop.f32.mrb[0].mxu0
    %v2266 = vadd.f32 %v1977, %v2265
    %v2267 = vpop.f32.mrb[0].mxu0
    %v2268 = vpop.f32.mrb[0].mxu0
    %v2269 = vadd.f32 %v1980, %v2268
    %v2270 = vpop.f32.mrb[0].mxu0
    %2271 = vmatprep.mubr.bf16.mxu0 %v673
    %2272 = vmatmul.mubr.bf16.gmra.mrb[0].mxu0 %v577
    %v2273 = vpop.f32.mrb[0].mxu0
    %v2274 = vadd.f32 %v1985, %v2273
    %v2275 = vpop.f32.mrb[0].mxu0
    %v2276 = vpop.f32.mrb[0].mxu0
    %v2277 = vadd.f32 %v1988, %v2276
    %v2278 = vpop.f32.mrb[0].mxu0
    %2279 = vmatprep.mubr.bf16.mxu0 %v674
    %2280 = vmatmul.mubr.bf16.gmra.mrb[0].mxu0 %v578
    %v2281 = vpop.f32.mrb[0].mxu0
    %v2282 = vadd.f32 %v1993, %v2281
    %v2283 = vpop.f32.mrb[0].mxu0
    %v2284 = vpop.f32.mrb[0].mxu0
    %v2285 = vadd.f32 %v1996, %v2284
    %v2286 = vpop.f32.mrb[0].mxu0
    %2287 = vmatprep.mubr.bf16.mxu0 %v675
    %2288 = vmatmul.mubr.bf16.gmra.mrb[0].mxu0 %v579
    %v2289 = vpop.f32.mrb[0].mxu0
    %v2290 = vadd.f32 %v2001, %v2289
    %v2291 = vpop.f32.mrb[0].mxu0
    %v2292 = vpop.f32.mrb[0].mxu0
    %v2293 = vadd.f32 %v2004, %v2292
    %v2294 = vpop.f32.mrb[0].mxu0
    %2295 = vmatprep.mubr.bf16.mxu0 %v676
    %2296 = vmatmul.mubr.bf16.gmra.mrb[0].mxu0 %v580
    %v2297 = vpop.f32.mrb[0].mxu0
    %v2298 = vadd.f32 %v2009, %v2297
    %v2299 = vpop.f32.mrb[0].mxu0
    %v2300 = vpop.f32.mrb[0].mxu0
    %v2301 = vadd.f32 %v2012, %v2300
    %v2302 = vpop.f32.mrb[0].mxu0
    %2303 = vmatprep.mubr.bf16.mxu0 %v677
    %2304 = vmatmul.mubr.bf16.gmra.mrb[0].mxu0 %v581
    %v2305 = vpop.f32.mrb[0].mxu0
    %v2306 = vadd.f32 %v2017, %v2305
    %v2307 = vpop.f32.mrb[0].mxu0
    %v2308 = vpop.f32.mrb[0].mxu0
    %v2309 = vadd.f32 %v2020, %v2308
    %v2310 = vpop.f32.mrb[0].mxu0
    %2311 = vmatprep.mubr.bf16.mxu0 %v678
    %2312 = vmatmul.mubr.bf16.gmra.mrb[0].mxu0 %v582
    %v2313 = vpop.f32.mrb[0].mxu0
    %v2314 = vadd.f32 %v2025, %v2313
    %v2315 = vpop.f32.mrb[0].mxu0
    %v2316 = vpop.f32.mrb[0].mxu0
    %v2317 = vadd.f32 %v2028, %v2316
    %v2318 = vpop.f32.mrb[0].mxu0
    %2319 = vmatprep.mubr.bf16.mxu0 %v679
    %2320 = vmatmul.mubr.bf16.gmra.mrb[0].mxu0 %v583
    %v2321 = vpop.f32.mrb[0].mxu0
    %v2322 = vadd.f32 %v2033, %v2321
    %v2323 = vpop.f32.mrb[0].mxu0
    %v2324 = vpop.f32.mrb[0].mxu0
    %v2325 = vadd.f32 %v2036, %v2324
    %v2326 = vpop.f32.mrb[0].mxu0
    %2327 = vmatprep.mubr.bf16.mxu0 %v680
    %2328 = vmatmul.mubr.bf16.gmra.mrb[0].mxu0 %v584
    %v2329 = vpop.f32.mrb[0].mxu0
    %v2330 = vadd.f32 %v2041, %v2329
    %v2331 = vpop.f32.mrb[0].mxu0
    %v2332 = vpop.f32.mrb[0].mxu0
    %v2333 = vadd.f32 %v2044, %v2332
    %v2334 = vpop.f32.mrb[0].mxu0
    %2335 = vmatprep.mubr.bf16.mxu0 %v681
    %2336 = vmatmul.mubr.bf16.gmra.mrb[0].mxu0 %v585
    %v2337 = vpop.f32.mrb[0].mxu0
    %v2338 = vadd.f32 %v2049, %v2337
    %v2339 = vpop.f32.mrb[0].mxu0
    %v2340 = vpop.f32.mrb[0].mxu0
    %v2341 = vadd.f32 %v2052, %v2340
    %v2342 = vpop.f32.mrb[0].mxu0
    %2343 = vmatprep.mubr.bf16.mxu0 %v682
    %2344 = vmatmul.mubr.bf16.gmra.mrb[0].mxu0 %v586
    %v2345 = vpop.f32.mrb[0].mxu0
    %v2346 = vadd.f32 %v2057, %v2345
    %v2347 = vpop.f32.mrb[0].mxu0
    %v2348 = vpop.f32.mrb[0].mxu0
    %v2349 = vadd.f32 %v2060, %v2348
    %v2350 = vpop.f32.mrb[0].mxu0
    %2351 = vmatprep.mubr.bf16.mxu0 %v683
    %2352 = vmatmul.mubr.bf16.gmra.mrb[0].mxu0 %v587
    %v2353 = vpop.f32.mrb[0].mxu0
    %v2354 = vadd.f32 %v2065, %v2353
    %v2355 = vpop.f32.mrb[0].mxu0
    %v2356 = vpop.f32.mrb[0].mxu0
    %v2357 = vadd.f32 %v2068, %v2356
    %v2358 = vpop.f32.mrb[0].mxu0
    %2359 = vmatprep.mubr.bf16.mxu0 %v684
    %2360 = vmatmul.mubr.bf16.gmra.mrb[0].mxu0 %v588
    %v2361 = vpop.f32.mrb[0].mxu0
    %v2362 = vadd.f32 %v2073, %v2361
    %v2363 = vpop.f32.mrb[0].mxu0
    %v2364 = vpop.f32.mrb[0].mxu0
    %v2365 = vadd.f32 %v2076, %v2364
    %v2366 = vpop.f32.mrb[0].mxu0
    %2367 = vmatprep.mubr.bf16.mxu0 %v685
    %2368 = vmatmul.mubr.bf16.gmra.mrb[0].mxu0 %v589
    %v2369 = vpop.f32.mrb[0].mxu0
    %v2370 = vadd.f32 %v2081, %v2369
    %v2371 = vpop.f32.mrb[0].mxu0
    %v2372 = vpop.f32.mrb[0].mxu0
    %v2373 = vadd.f32 %v2084, %v2372
    %v2374 = vpop.f32.mrb[0].mxu0
    %2375 = vmatprep.mubr.bf16.mxu0 %v686
    %2376 = vmatmul.mubr.bf16.gmra.mrb[0].mxu0 %v590
    %v2377 = vpop.f32.mrb[0].mxu0
    %v2378 = vadd.f32 %v2089, %v2377
    %v2379 = vpop.f32.mrb[0].mxu0
    %v2380 = vpop.f32.mrb[0].mxu0
    %v2381 = vadd.f32 %v2092, %v2380
    %v2382 = vpop.f32.mrb[0].mxu0
    %2383 = vmatprep.mubr.bf16.mxu0 %v687
    %2384 = vmatmul.mubr.bf16.gmra.mrb[0].mxu0 %v591
    %v2385 = vpop.f32.mrb[0].mxu0
    %v2386 = vadd.f32 %v2097, %v2385
    %v2387 = vpop.f32.mrb[0].mxu0
    %v2388 = vpop.f32.mrb[0].mxu0
    %v2389 = vadd.f32 %v2100, %v2388
    %v2390 = vpop.f32.mrb[0].mxu0
    %2391 = vmatprep.mubr.bf16.mxu0 %v688
    %2392 = vmatmul.mubr.bf16.gmra.mrb[0].mxu0 %v592
    %v2393 = vpop.f32.mrb[0].mxu0
    %v2394 = vadd.f32 %v2105, %v2393
    %v2395 = vpop.f32.mrb[0].mxu0
    %v2396 = vpop.f32.mrb[0].mxu0
    %v2397 = vadd.f32 %v2108, %v2396
    %v2398 = vpop.f32.mrb[0].mxu0
    %2399 = vmatprep.mubr.bf16.mxu0 %v689
    %2400 = vmatmul.mubr.bf16.gmra.mrb[0].mxu0 %v593
    %v2401 = vpop.f32.mrb[0].mxu0
    %v2402 = vadd.f32 %v2113, %v2401
    %v2403 = vpop.f32.mrb[0].mxu0
    %v2404 = vpop.f32.mrb[0].mxu0
    %v2405 = vadd.f32 %v2116, %v2404
    %v2406 = vpop.f32.mrb[0].mxu0
    %2407 = vmatprep.mubr.bf16.mxu0 %v690
    %2408 = vmatmul.mubr.bf16.gmra.mrb[0].mxu0 %v594
    %v2409 = vpop.f32.mrb[0].mxu0
    %v2410 = vadd.f32 %v2121, %v2409
    %v2411 = vpop.f32.mrb[0].mxu0
    %v2412 = vpop.f32.mrb[0].mxu0
    %v2413 = vadd.f32 %v2124, %v2412
    %v2414 = vpop.f32.mrb[0].mxu0
    %2415 = vmatprep.mubr.bf16.mxu0 %v691
    %2416 = vmatmul.mubr.bf16.gmra.mrb[0].mxu0 %v595
    %v2417 = vpop.f32.mrb[0].mxu0
    %v2418 = vadd.f32 %v2129, %v2417
    %v2419 = vpop.f32.mrb[0].mxu0
    %v2420 = vpop.f32.mrb[0].mxu0
    %v2421 = vadd.f32 %v2132, %v2420
    %v2422 = vpop.f32.mrb[0].mxu0
    %2423 = vdwg.mxu0
    %2424 = vmatprep.subr.bf16.mxu0 0
    %2425 = vmatpush1.bf16.msra.mxu0 %v1461
    %2426 = vmatprep.subr.bf16.mxu0 0
    %2427 = vmatpush1.bf16.msra.mxu0 %v1462
    %2428 = vmatprep.subr.bf16.mxu0 0
    %2429 = vmatpush1.bf16.msra.mxu0 %v1463
    %2430 = vmatprep.subr.bf16.mxu0 0
    %2431 = vmatpush1.bf16.msra.mxu0 %v1464
    %2432 = vmatprep.subr.bf16.mxu0 0
    %2433 = vmatpush1.bf16.msra.mxu0 %v1465
    %2434 = vmatprep.subr.bf16.mxu0 0
    %2435 = vmatpush1.bf16.msra.mxu0 %v1466
    %2436 = vmatprep.subr.bf16.mxu0 0
    %2437 = vmatpush1.bf16.msra.mxu0 %v1467
    %2438 = vmatprep.subr.bf16.mxu0 0
    %2439 = vmatpush1.bf16.msra.mxu0 %v1468
    %2440 = vmatprep.subr.bf16.mxu0 0
    %2441 = vmatpush1.bf16.msra.mxu0 %v1469
    %2442 = vmatprep.subr.bf16.mxu0 0
    %2443 = vmatpush1.bf16.msra.mxu0 %v1470
    %2444 = vmatprep.subr.bf16.mxu0 0
    %2445 = vmatpush1.bf16.msra.mxu0 %v1471
    %2446 = vmatprep.subr.bf16.mxu0 0
    %2447 = vmatpush1.bf16.msra.mxu0 %v1472
    %2448 = vmatprep.subr.bf16.mxu0 0
    %2449 = vmatpush1.bf16.msra.mxu0 %v1473
    %2450 = vmatprep.subr.bf16.mxu0 0
    %2451 = vmatpush1.bf16.msra.mxu0 %v1474
    %2452 = vmatprep.subr.bf16.mxu0 0
    %2453 = vmatpush1.bf16.msra.mxu0 %v1475
    %2454 = vmatprep.subr.bf16.mxu0 0
    %2455 = vmatpush1.bf16.msra.mxu0 %v1476
    %2456 = vmatprep.mubr.bf16.mxu0 %v853
    %2457 = vmatmul.mubr.bf16.gmra.mrb[0].mxu0 %v757
    %v2458 = vpop.f32.mrb[0].mxu0
    %v2459 = vadd.f32 %v2170, %v2458
    %v2460 = vpop.f32.mrb[0].mxu0
    %v2461 = vpop.f32.mrb[0].mxu0
    %v2462 = vadd.f32 %v2173, %v2461
    %v2463 = vpop.f32.mrb[0].mxu0
    %2464 = vmatprep.mubr.bf16.mxu0 %v854
    %2465 = vmatmul.mubr.bf16.gmra.mrb[0].mxu0 %v758
    %v2466 = vpop.f32.mrb[0].mxu0
    %v2467 = vadd.f32 %v2178, %v2466
    %v2468 = vpop.f32.mrb[0].mxu0
    %v2469 = vpop.f32.mrb[0].mxu0
    %v2470 = vadd.f32 %v2181, %v2469
    %v2471 = vpop.f32.mrb[0].mxu0
    %2472 = vmatprep.mubr.bf16.mxu0 %v855
    %2473 = vmatmul.mubr.bf16.gmra.mrb[0].mxu0 %v759
    %v2474 = vpop.f32.mrb[0].mxu0
    %v2475 = vadd.f32 %v2186, %v2474
    %v2476 = vpop.f32.mrb[0].mxu0
    %v2477 = vpop.f32.mrb[0].mxu0
    %v2478 = vadd.f32 %v2189, %v2477
    %v2479 = vpop.f32.mrb[0].mxu0
    %2480 = vmatprep.mubr.bf16.mxu0 %v856
    %2481 = vmatmul.mubr.bf16.gmra.mrb[0].mxu0 %v760
    %v2482 = vpop.f32.mrb[0].mxu0
    %v2483 = vadd.f32 %v2194, %v2482
    %v2484 = vpop.f32.mrb[0].mxu0
    %v2485 = vpop.f32.mrb[0].mxu0
    %v2486 = vadd.f32 %v2197, %v2485
    %v2487 = vpop.f32.mrb[0].mxu0
    %2488 = vmatprep.mubr.bf16.mxu0 %v857
    %2489 = vmatmul.mubr.bf16.gmra.mrb[0].mxu0 %v761
    %v2490 = vpop.f32.mrb[0].mxu0
    %v2491 = vadd.f32 %v2202, %v2490
    %v2492 = vpop.f32.mrb[0].mxu0
    %v2493 = vpop.f32.mrb[0].mxu0
    %v2494 = vadd.f32 %v2205, %v2493
    %v2495 = vpop.f32.mrb[0].mxu0
    %2496 = vmatprep.mubr.bf16.mxu0 %v858
    %2497 = vmatmul.mubr.bf16.gmra.mrb[0].mxu0 %v762
    %v2498 = vpop.f32.mrb[0].mxu0
    %v2499 = vadd.f32 %v2210, %v2498
    %v2500 = vpop.f32.mrb[0].mxu0
    %v2501 = vpop.f32.mrb[0].mxu0
    %v2502 = vadd.f32 %v2213, %v2501
    %v2503 = vpop.f32.mrb[0].mxu0
    %2504 = vmatprep.mubr.bf16.mxu0 %v859
    %2505 = vmatmul.mubr.bf16.gmra.mrb[0].mxu0 %v763
    %v2506 = vpop.f32.mrb[0].mxu0
    %v2507 = vadd.f32 %v2218, %v2506
    %v2508 = vpop.f32.mrb[0].mxu0
    %v2509 = vpop.f32.mrb[0].mxu0
    %v2510 = vadd.f32 %v2221, %v2509
    %v2511 = vpop.f32.mrb[0].mxu0
    %2512 = vmatprep.mubr.bf16.mxu0 %v860
    %2513 = vmatmul.mubr.bf16.gmra.mrb[0].mxu0 %v764
    %v2514 = vpop.f32.mrb[0].mxu0
    %v2515 = vadd.f32 %v2226, %v2514
    %v2516 = vpop.f32.mrb[0].mxu0
    %v2517 = vpop.f32.mrb[0].mxu0
    %v2518 = vadd.f32 %v2229, %v2517
    %v2519 = vpop.f32.mrb[0].mxu0
    %2520 = vmatprep.mubr.bf16.mxu0 %v861
    %2521 = vmatmul.mubr.bf16.gmra.mrb[0].mxu0 %v765
    %v2522 = vpop.f32.mrb[0].mxu0
    %v2523 = vadd.f32 %v2234, %v2522
    %v2524 = vpop.f32.mrb[0].mxu0
    %v2525 = vpop.f32.mrb[0].mxu0
    %v2526 = vadd.f32 %v2237, %v2525
    %v2527 = vpop.f32.mrb[0].mxu0
    %2528 = vmatprep.mubr.bf16.mxu0 %v862
    %2529 = vmatmul.mubr.bf16.gmra.mrb[0].mxu0 %v766
    %v2530 = vpop.f32.mrb[0].mxu0
    %v2531 = vadd.f32 %v2242, %v2530
    %v2532 = vpop.f32.mrb[0].mxu0
    %v2533 = vpop.f32.mrb[0].mxu0
    %v2534 = vadd.f32 %v2245, %v2533
    %v2535 = vpop.f32.mrb[0].mxu0
    %2536 = vmatprep.mubr.bf16.mxu0 %v863
    %2537 = vmatmul.mubr.bf16.gmra.mrb[0].mxu0 %v767
    %v2538 = vpop.f32.mrb[0].mxu0
    %v2539 = vadd.f32 %v2250, %v2538
    %v2540 = vpop.f32.mrb[0].mxu0
    %v2541 = vpop.f32.mrb[0].mxu0
    %v2542 = vadd.f32 %v2253, %v2541
    %v2543 = vpop.f32.mrb[0].mxu0
    %2544 = vmatprep.mubr.bf16.mxu0 %v864
    %2545 = vmatmul.mubr.bf16.gmra.mrb[0].mxu0 %v768
    %v2546 = vpop.f32.mrb[0].mxu0
    %v2547 = vadd.f32 %v2258, %v2546
    %v2548 = vpop.f32.mrb[0].mxu0
    %v2549 = vpop.f32.mrb[0].mxu0
    %v2550 = vadd.f32 %v2261, %v2549
    %v2551 = vpop.f32.mrb[0].mxu0
    %2552 = vmatprep.mubr.bf16.mxu0 %v865
    %2553 = vmatmul.mubr.bf16.gmra.mrb[0].mxu0 %v769
    %v2554 = vpop.f32.mrb[0].mxu0
    %v2555 = vadd.f32 %v2266, %v2554
    %v2556 = vpop.f32.mrb[0].mxu0
    %v2557 = vpop.f32.mrb[0].mxu0
    %v2558 = vadd.f32 %v2269, %v2557
    %v2559 = vpop.f32.mrb[0].mxu0
    %2560 = vmatprep.mubr.bf16.mxu0 %v866
    %2561 = vmatmul.mubr.bf16.gmra.mrb[0].mxu0 %v770
    %v2562 = vpop.f32.mrb[0].mxu0
    %v2563 = vadd.f32 %v2274, %v2562
    %v2564 = vpop.f32.mrb[0].mxu0
    %v2565 = vpop.f32.mrb[0].mxu0
    %v2566 = vadd.f32 %v2277, %v2565
    %v2567 = vpop.f32.mrb[0].mxu0
    %2568 = vmatprep.mubr.bf16.mxu0 %v867
    %2569 = vmatmul.mubr.bf16.gmra.mrb[0].mxu0 %v771
    %v2570 = vpop.f32.mrb[0].mxu0
    %v2571 = vadd.f32 %v2282, %v2570
    %v2572 = vpop.f32.mrb[0].mxu0
    %v2573 = vpop.f32.mrb[0].mxu0
    %v2574 = vadd.f32 %v2285, %v2573
    %v2575 = vpop.f32.mrb[0].mxu0
    %2576 = vmatprep.mubr.bf16.mxu0 %v868
    %2577 = vmatmul.mubr.bf16.gmra.mrb[0].mxu0 %v772
    %v2578 = vpop.f32.mrb[0].mxu0
    %v2579 = vadd.f32 %v2290, %v2578
    %v2580 = vpop.f32.mrb[0].mxu0
    %v2581 = vpop.f32.mrb[0].mxu0
    %v2582 = vadd.f32 %v2293, %v2581
    %v2583 = vpop.f32.mrb[0].mxu0
    %2584 = vmatprep.mubr.bf16.mxu0 %v869
    %2585 = vmatmul.mubr.bf16.gmra.mrb[0].mxu0 %v773
    %v2586 = vpop.f32.mrb[0].mxu0
    %v2587 = vadd.f32 %v2298, %v2586
    %v2588 = vpop.f32.mrb[0].mxu0
    %v2589 = vpop.f32.mrb[0].mxu0
    %v2590 = vadd.f32 %v2301, %v2589
    %v2591 = vpop.f32.mrb[0].mxu0
    %2592 = vmatprep.mubr.bf16.mxu0 %v870
    %2593 = vmatmul.mubr.bf16.gmra.mrb[0].mxu0 %v774
    %v2594 = vpop.f32.mrb[0].mxu0
    %v2595 = vadd.f32 %v2306, %v2594
    %v2596 = vpop.f32.mrb[0].mxu0
    %v2597 = vpop.f32.mrb[0].mxu0
    %v2598 = vadd.f32 %v2309, %v2597
    %v2599 = vpop.f32.mrb[0].mxu0
    %2600 = vmatprep.mubr.bf16.mxu0 %v871
    %2601 = vmatmul.mubr.bf16.gmra.mrb[0].mxu0 %v775
    %v2602 = vpop.f32.mrb[0].mxu0
    %v2603 = vadd.f32 %v2314, %v2602
    %v2604 = vpop.f32.mrb[0].mxu0
    %v2605 = vpop.f32.mrb[0].mxu0
    %v2606 = vadd.f32 %v2317, %v2605
    %v2607 = vpop.f32.mrb[0].mxu0
    %2608 = vmatprep.mubr.bf16.mxu0 %v872
    %2609 = vmatmul.mubr.bf16.gmra.mrb[0].mxu0 %v776
    %v2610 = vpop.f32.mrb[0].mxu0
    %v2611 = vadd.f32 %v2322, %v2610
    %v2612 = vpop.f32.mrb[0].mxu0
    %v2613 = vpop.f32.mrb[0].mxu0
    %v2614 = vadd.f32 %v2325, %v2613
    %v2615 = vpop.f32.mrb[0].mxu0
    %2616 = vmatprep.mubr.bf16.mxu0 %v873
    %2617 = vmatmul.mubr.bf16.gmra.mrb[0].mxu0 %v777
    %v2618 = vpop.f32.mrb[0].mxu0
    %v2619 = vadd.f32 %v2330, %v2618
    %v2620 = vpop.f32.mrb[0].mxu0
    %v2621 = vpop.f32.mrb[0].mxu0
    %v2622 = vadd.f32 %v2333, %v2621
    %v2623 = vpop.f32.mrb[0].mxu0
    %2624 = vmatprep.mubr.bf16.mxu0 %v874
    %2625 = vmatmul.mubr.bf16.gmra.mrb[0].mxu0 %v778
    %v2626 = vpop.f32.mrb[0].mxu0
    %v2627 = vadd.f32 %v2338, %v2626
    %v2628 = vpop.f32.mrb[0].mxu0
    %v2629 = vpop.f32.mrb[0].mxu0
    %v2630 = vadd.f32 %v2341, %v2629
    %v2631 = vpop.f32.mrb[0].mxu0
    %2632 = vmatprep.mubr.bf16.mxu0 %v875
    %2633 = vmatmul.mubr.bf16.gmra.mrb[0].mxu0 %v779
    %v2634 = vpop.f32.mrb[0].mxu0
    %v2635 = vadd.f32 %v2346, %v2634
    %v2636 = vpop.f32.mrb[0].mxu0
    %v2637 = vpop.f32.mrb[0].mxu0
    %v2638 = vadd.f32 %v2349, %v2637
    %v2639 = vpop.f32.mrb[0].mxu0
    %2640 = vmatprep.mubr.bf16.mxu0 %v876
    %2641 = vmatmul.mubr.bf16.gmra.mrb[0].mxu0 %v780
    %v2642 = vpop.f32.mrb[0].mxu0
    %v2643 = vadd.f32 %v2354, %v2642
    %v2644 = vpop.f32.mrb[0].mxu0
    %v2645 = vpop.f32.mrb[0].mxu0
    %v2646 = vadd.f32 %v2357, %v2645
    %v2647 = vpop.f32.mrb[0].mxu0
    %2648 = vmatprep.mubr.bf16.mxu0 %v877
    %2649 = vmatmul.mubr.bf16.gmra.mrb[0].mxu0 %v781
    %v2650 = vpop.f32.mrb[0].mxu0
    %v2651 = vadd.f32 %v2362, %v2650
    %v2652 = vpop.f32.mrb[0].mxu0
    %v2653 = vpop.f32.mrb[0].mxu0
    %v2654 = vadd.f32 %v2365, %v2653
    %v2655 = vpop.f32.mrb[0].mxu0
    %2656 = vmatprep.mubr.bf16.mxu0 %v878
    %2657 = vmatmul.mubr.bf16.gmra.mrb[0].mxu0 %v782
    %v2658 = vpop.f32.mrb[0].mxu0
    %v2659 = vadd.f32 %v2370, %v2658
    %v2660 = vpop.f32.mrb[0].mxu0
    %v2661 = vpop.f32.mrb[0].mxu0
    %v2662 = vadd.f32 %v2373, %v2661
    %v2663 = vpop.f32.mrb[0].mxu0
    %2664 = vmatprep.mubr.bf16.mxu0 %v879
    %2665 = vmatmul.mubr.bf16.gmra.mrb[0].mxu0 %v783
    %v2666 = vpop.f32.mrb[0].mxu0
    %v2667 = vadd.f32 %v2378, %v2666
    %v2668 = vpop.f32.mrb[0].mxu0
    %v2669 = vpop.f32.mrb[0].mxu0
    %v2670 = vadd.f32 %v2381, %v2669
    %v2671 = vpop.f32.mrb[0].mxu0
    %2672 = vmatprep.mubr.bf16.mxu0 %v880
    %2673 = vmatmul.mubr.bf16.gmra.mrb[0].mxu0 %v784
    %v2674 = vpop.f32.mrb[0].mxu0
    %v2675 = vadd.f32 %v2386, %v2674
    %v2676 = vpop.f32.mrb[0].mxu0
    %v2677 = vpop.f32.mrb[0].mxu0
    %v2678 = vadd.f32 %v2389, %v2677
    %v2679 = vpop.f32.mrb[0].mxu0
    %2680 = vmatprep.mubr.bf16.mxu0 %v881
    %2681 = vmatmul.mubr.bf16.gmra.mrb[0].mxu0 %v785
    %v2682 = vpop.f32.mrb[0].mxu0
    %v2683 = vadd.f32 %v2394, %v2682
    %v2684 = vpop.f32.mrb[0].mxu0
    %v2685 = vpop.f32.mrb[0].mxu0
    %v2686 = vadd.f32 %v2397, %v2685
    %v2687 = vpop.f32.mrb[0].mxu0
    %2688 = vmatprep.mubr.bf16.mxu0 %v882
    %2689 = vmatmul.mubr.bf16.gmra.mrb[0].mxu0 %v786
    %v2690 = vpop.f32.mrb[0].mxu0
    %v2691 = vadd.f32 %v2402, %v2690
    %v2692 = vpop.f32.mrb[0].mxu0
    %v2693 = vpop.f32.mrb[0].mxu0
    %v2694 = vadd.f32 %v2405, %v2693
    %v2695 = vpop.f32.mrb[0].mxu0
    %2696 = vmatprep.mubr.bf16.mxu0 %v883
    %2697 = vmatmul.mubr.bf16.gmra.mrb[0].mxu0 %v787
    %v2698 = vpop.f32.mrb[0].mxu0
    %v2699 = vadd.f32 %v2410, %v2698
    %v2700 = vpop.f32.mrb[0].mxu0
    %v2701 = vpop.f32.mrb[0].mxu0
    %v2702 = vadd.f32 %v2413, %v2701
    %v2703 = vpop.f32.mrb[0].mxu0
    %2704 = vmatprep.mubr.bf16.mxu0 %v884
    %2705 = vmatmul.mubr.bf16.gmra.mrb[0].mxu0 %v788
    %v2706 = vpop.f32.mrb[0].mxu0
    %v2707 = vadd.f32 %v2418, %v2706
    %v2708 = vpop.f32.mrb[0].mxu0
    %v2709 = vpop.f32.mrb[0].mxu0
    %v2710 = vadd.f32 %v2421, %v2709
    %v2711 = vpop.f32.mrb[0].mxu0
    %2712 = vdwg.mxu0
    %2713 = vmatprep.subr.bf16.mxu0 0
    %2714 = vmatpush1.bf16.msra.mxu0 %v1477
    %2715 = vmatprep.subr.bf16.mxu0 0
    %2716 = vmatpush1.bf16.msra.mxu0 %v1478
    %2717 = vmatprep.subr.bf16.mxu0 0
    %2718 = vmatpush1.bf16.msra.mxu0 %v1479
    %2719 = vmatprep.subr.bf16.mxu0 0
    %2720 = vmatpush1.bf16.msra.mxu0 %v1480
    %2721 = vmatprep.subr.bf16.mxu0 0
    %2722 = vmatpush1.bf16.msra.mxu0 %v1481
    %2723 = vmatprep.subr.bf16.mxu0 0
    %2724 = vmatpush1.bf16.msra.mxu0 %v1482
    %2725 = vmatprep.subr.bf16.mxu0 0
    %2726 = vmatpush1.bf16.msra.mxu0 %v1483
    %2727 = vmatprep.subr.bf16.mxu0 0
    %2728 = vmatpush1.bf16.msra.mxu0 %v1484
    %2729 = vmatprep.subr.bf16.mxu0 0
    %2730 = vmatpush1.bf16.msra.mxu0 0
    %2731 = vmatprep.subr.bf16.mxu0 0
    %2732 = vmatpush1.bf16.msra.mxu0 0
    %2733 = vmatprep.subr.bf16.mxu0 0
    %2734 = vmatpush1.bf16.msra.mxu0 0
    %2735 = vmatprep.subr.bf16.mxu0 0
    %2736 = vmatpush1.bf16.msra.mxu0 0
    %2737 = vmatprep.subr.bf16.mxu0 0
    %2738 = vmatpush1.bf16.msra.mxu0 0
    %2739 = vmatprep.subr.bf16.mxu0 0
    %2740 = vmatpush1.bf16.msra.mxu0 0
    %2741 = vmatprep.subr.bf16.mxu0 0
    %2742 = vmatpush1.bf16.msra.mxu0 0
    %2743 = vmatprep.subr.bf16.mxu0 0
    %2744 = vmatpush1.bf16.msra.mxu0 0
    %2745 = vmatprep.mubr.bf16.mxu0 0
    %2746 = vmatmul.mubr.bf16.gmra.mrb[0].mxu0 %v949
    %v2747 = vpop.f32.mrb[0].mxu0
    %v2748 = vadd.f32 %v2459, %v2747
    %v2749 = vpop.f32.mrb[0].mxu0
    %v2750 = vpop.f32.mrb[0].mxu0
    %v2751 = vadd.f32 %v2462, %v2750
    %v2752 = vpop.f32.mrb[0].mxu0
    %2753 = vmatprep.mubr.bf16.mxu0 0
    %2754 = vmatmul.mubr.bf16.gmra.mrb[0].mxu0 %v950
    %v2755 = vpop.f32.mrb[0].mxu0
    %v2756 = vadd.f32 %v2467, %v2755
    %v2757 = vpop.f32.mrb[0].mxu0
    %v2758 = vpop.f32.mrb[0].mxu0
    %v2759 = vadd.f32 %v2470, %v2758
    %v2760 = vpop.f32.mrb[0].mxu0
    %2761 = vmatprep.mubr.bf16.mxu0 0
    %2762 = vmatmul.mubr.bf16.gmra.mrb[0].mxu0 %v951
    %v2763 = vpop.f32.mrb[0].mxu0
    %v2764 = vadd.f32 %v2475, %v2763
    %v2765 = vpop.f32.mrb[0].mxu0
    %v2766 = vpop.f32.mrb[0].mxu0
    %v2767 = vadd.f32 %v2478, %v2766
    %v2768 = vpop.f32.mrb[0].mxu0
    %2769 = vmatprep.mubr.bf16.mxu0 0
    %2770 = vmatmul.mubr.bf16.gmra.mrb[0].mxu0 %v952
    %v2771 = vpop.f32.mrb[0].mxu0
    %v2772 = vadd.f32 %v2483, %v2771
    %v2773 = vpop.f32.mrb[0].mxu0
    %v2774 = vpop.f32.mrb[0].mxu0
    %v2775 = vadd.f32 %v2486, %v2774
    %v2776 = vpop.f32.mrb[0].mxu0
    %2777 = vmatprep.mubr.bf16.mxu0 0
    %2778 = vmatmul.mubr.bf16.gmra.mrb[0].mxu0 %v953
    %v2779 = vpop.f32.mrb[0].mxu0
    %v2780 = vadd.f32 %v2491, %v2779
    %v2781 = vpop.f32.mrb[0].mxu0
    %v2782 = vpop.f32.mrb[0].mxu0
    %v2783 = vadd.f32 %v2494, %v2782
    %v2784 = vpop.f32.mrb[0].mxu0
    %2785 = vmatprep.mubr.bf16.mxu0 0
    %2786 = vmatmul.mubr.bf16.gmra.mrb[0].mxu0 %v954
    %v2787 = vpop.f32.mrb[0].mxu0
    %v2788 = vadd.f32 %v2499, %v2787
    %v2789 = vpop.f32.mrb[0].mxu0
    %v2790 = vpop.f32.mrb[0].mxu0
    %v2791 = vadd.f32 %v2502, %v2790
    %v2792 = vpop.f32.mrb[0].mxu0
    %2793 = vmatprep.mubr.bf16.mxu0 0
    %2794 = vmatmul.mubr.bf16.gmra.mrb[0].mxu0 %v955
    %v2795 = vpop.f32.mrb[0].mxu0
    %v2796 = vadd.f32 %v2507, %v2795
    %v2797 = vpop.f32.mrb[0].mxu0
    %v2798 = vpop.f32.mrb[0].mxu0
    %v2799 = vadd.f32 %v2510, %v2798
    %v2800 = vpop.f32.mrb[0].mxu0
    %2801 = vmatprep.mubr.bf16.mxu0 0
    %2802 = vmatmul.mubr.bf16.gmra.mrb[0].mxu0 %v956
    %v2803 = vpop.f32.mrb[0].mxu0
    %v2804 = vadd.f32 %v2515, %v2803
    %v2805 = vpop.f32.mrb[0].mxu0
    %v2806 = vpop.f32.mrb[0].mxu0
    %v2807 = vadd.f32 %v2518, %v2806
    %v2808 = vpop.f32.mrb[0].mxu0
    %2809 = vmatprep.mubr.bf16.mxu0 0
    %2810 = vmatmul.mubr.bf16.gmra.mrb[0].mxu0 %v957
    %v2811 = vpop.f32.mrb[0].mxu0
    %v2812 = vadd.f32 %v2523, %v2811
    %v2813 = vpop.f32.mrb[0].mxu0
    %v2814 = vpop.f32.mrb[0].mxu0
    %v2815 = vadd.f32 %v2526, %v2814
    %v2816 = vpop.f32.mrb[0].mxu0
    %2817 = vmatprep.mubr.bf16.mxu0 0
    %2818 = vmatmul.mubr.bf16.gmra.mrb[0].mxu0 %v958
    %v2819 = vpop.f32.mrb[0].mxu0
    %v2820 = vadd.f32 %v2531, %v2819
    %v2821 = vpop.f32.mrb[0].mxu0
    %v2822 = vpop.f32.mrb[0].mxu0
    %v2823 = vadd.f32 %v2534, %v2822
    %v2824 = vpop.f32.mrb[0].mxu0
    %2825 = vmatprep.mubr.bf16.mxu0 0
    %2826 = vmatmul.mubr.bf16.gmra.mrb[0].mxu0 %v959
    %v2827 = vpop.f32.mrb[0].mxu0
    %v2828 = vadd.f32 %v2539, %v2827
    %v2829 = vpop.f32.mrb[0].mxu0
    %v2830 = vpop.f32.mrb[0].mxu0
    %v2831 = vadd.f32 %v2542, %v2830
    %v2832 = vpop.f32.mrb[0].mxu0
    %2833 = vmatprep.mubr.bf16.mxu0 0
    %2834 = vmatmul.mubr.bf16.gmra.mrb[0].mxu0 %v960
    %v2835 = vpop.f32.mrb[0].mxu0
    %v2836 = vadd.f32 %v2547, %v2835
    %v2837 = vpop.f32.mrb[0].mxu0
    %v2838 = vpop.f32.mrb[0].mxu0
    %v2839 = vadd.f32 %v2550, %v2838
    %v2840 = vpop.f32.mrb[0].mxu0
    %2841 = vmatprep.mubr.bf16.mxu0 0
    %2842 = vmatmul.mubr.bf16.gmra.mrb[0].mxu0 %v961
    %v2843 = vpop.f32.mrb[0].mxu0
    %v2844 = vadd.f32 %v2555, %v2843
    %v2845 = vpop.f32.mrb[0].mxu0
    %v2846 = vpop.f32.mrb[0].mxu0
    %v2847 = vadd.f32 %v2558, %v2846
    %v2848 = vpop.f32.mrb[0].mxu0
    %2849 = vmatprep.mubr.bf16.mxu0 0
    %2850 = vmatmul.mubr.bf16.gmra.mrb[0].mxu0 %v962
    %v2851 = vpop.f32.mrb[0].mxu0
    %v2852 = vadd.f32 %v2563, %v2851
    %v2853 = vpop.f32.mrb[0].mxu0
    %v2854 = vpop.f32.mrb[0].mxu0
    %v2855 = vadd.f32 %v2566, %v2854
    %v2856 = vpop.f32.mrb[0].mxu0
    %2857 = vmatprep.mubr.bf16.mxu0 0
    %2858 = vmatmul.mubr.bf16.gmra.mrb[0].mxu0 %v963
    %v2859 = vpop.f32.mrb[0].mxu0
    %v2860 = vadd.f32 %v2571, %v2859
    %v2861 = vpop.f32.mrb[0].mxu0
    %v2862 = vpop.f32.mrb[0].mxu0
    %v2863 = vadd.f32 %v2574, %v2862
    %v2864 = vpop.f32.mrb[0].mxu0
    %2865 = vmatprep.mubr.bf16.mxu0 0
    %2866 = vmatmul.mubr.bf16.gmra.mrb[0].mxu0 %v964
    %v2867 = vpop.f32.mrb[0].mxu0
    %v2868 = vadd.f32 %v2579, %v2867
    %v2869 = vpop.f32.mrb[0].mxu0
    %v2870 = vpop.f32.mrb[0].mxu0
    %v2871 = vadd.f32 %v2582, %v2870
    %v2872 = vpop.f32.mrb[0].mxu0
    %2873 = vmatprep.mubr.bf16.mxu0 0
    %2874 = vmatmul.mubr.bf16.gmra.mrb[0].mxu0 %v965
    %v2875 = vpop.f32.mrb[0].mxu0
    %v2876 = vadd.f32 %v2587, %v2875
    %v2877 = vpop.f32.mrb[0].mxu0
    %v2878 = vpop.f32.mrb[0].mxu0
    %v2879 = vadd.f32 %v2590, %v2878
    %v2880 = vpop.f32.mrb[0].mxu0
    %2881 = vmatprep.mubr.bf16.mxu0 0
    %2882 = vmatmul.mubr.bf16.gmra.mrb[0].mxu0 %v966
    %v2883 = vpop.f32.mrb[0].mxu0
    %v2884 = vadd.f32 %v2595, %v2883
    %v2885 = vpop.f32.mrb[0].mxu0
    %v2886 = vpop.f32.mrb[0].mxu0
    %v2887 = vadd.f32 %v2598, %v2886
    %v2888 = vpop.f32.mrb[0].mxu0
    %2889 = vmatprep.mubr.bf16.mxu0 0
    %2890 = vmatmul.mubr.bf16.gmra.mrb[0].mxu0 %v967
    %v2891 = vpop.f32.mrb[0].mxu0
    %v2892 = vadd.f32 %v2603, %v2891
    %v2893 = vpop.f32.mrb[0].mxu0
    %v2894 = vpop.f32.mrb[0].mxu0
    %v2895 = vadd.f32 %v2606, %v2894
    %v2896 = vpop.f32.mrb[0].mxu0
    %2897 = vmatprep.mubr.bf16.mxu0 0
    %2898 = vmatmul.mubr.bf16.gmra.mrb[0].mxu0 %v968
    %v2899 = vpop.f32.mrb[0].mxu0
    %v2900 = vadd.f32 %v2611, %v2899
    %v2901 = vpop.f32.mrb[0].mxu0
    %v2902 = vpop.f32.mrb[0].mxu0
    %v2903 = vadd.f32 %v2614, %v2902
    %v2904 = vpop.f32.mrb[0].mxu0
    %2905 = vmatprep.mubr.bf16.mxu0 0
    %2906 = vmatmul.mubr.bf16.gmra.mrb[0].mxu0 %v969
    %v2907 = vpop.f32.mrb[0].mxu0
    %v2908 = vadd.f32 %v2619, %v2907
    %v2909 = vpop.f32.mrb[0].mxu0
    %v2910 = vpop.f32.mrb[0].mxu0
    %v2911 = vadd.f32 %v2622, %v2910
    %v2912 = vpop.f32.mrb[0].mxu0
    %2913 = vmatprep.mubr.bf16.mxu0 0
    %2914 = vmatmul.mubr.bf16.gmra.mrb[0].mxu0 %v970
    %v2915 = vpop.f32.mrb[0].mxu0
    %v2916 = vadd.f32 %v2627, %v2915
    %v2917 = vpop.f32.mrb[0].mxu0
    %v2918 = vpop.f32.mrb[0].mxu0
    %v2919 = vadd.f32 %v2630, %v2918
    %v2920 = vpop.f32.mrb[0].mxu0
    %2921 = vmatprep.mubr.bf16.mxu0 0
    %2922 = vmatmul.mubr.bf16.gmra.mrb[0].mxu0 %v971
    %v2923 = vpop.f32.mrb[0].mxu0
    %v2924 = vadd.f32 %v2635, %v2923
    %v2925 = vpop.f32.mrb[0].mxu0
    %v2926 = vpop.f32.mrb[0].mxu0
    %v2927 = vadd.f32 %v2638, %v2926
    %v2928 = vpop.f32.mrb[0].mxu0
    %2929 = vmatprep.mubr.bf16.mxu0 0
    %2930 = vmatmul.mubr.bf16.gmra.mrb[0].mxu0 %v972
    %v2931 = vpop.f32.mrb[0].mxu0
    %v2932 = vadd.f32 %v2643, %v2931
    %v2933 = vpop.f32.mrb[0].mxu0
    %v2934 = vpop.f32.mrb[0].mxu0
    %v2935 = vadd.f32 %v2646, %v2934
    %v2936 = vpop.f32.mrb[0].mxu0
    %2937 = vmatprep.mubr.bf16.mxu0 0
    %2938 = vmatmul.mubr.bf16.gmra.mrb[0].mxu0 %v973
    %v2939 = vpop.f32.mrb[0].mxu0
    %v2940 = vadd.f32 %v2651, %v2939
    %v2941 = vpop.f32.mrb[0].mxu0
    %v2942 = vpop.f32.mrb[0].mxu0
    %v2943 = vadd.f32 %v2654, %v2942
    %v2944 = vpop.f32.mrb[0].mxu0
    %2945 = vmatprep.mubr.bf16.mxu0 0
    %2946 = vmatmul.mubr.bf16.gmra.mrb[0].mxu0 %v974
    %v2947 = vpop.f32.mrb[0].mxu0
    %v2948 = vadd.f32 %v2659, %v2947
    %v2949 = vpop.f32.mrb[0].mxu0
    %v2950 = vpop.f32.mrb[0].mxu0
    %v2951 = vadd.f32 %v2662, %v2950
    %v2952 = vpop.f32.mrb[0].mxu0
    %2953 = vmatprep.mubr.bf16.mxu0 0
    %2954 = vmatmul.mubr.bf16.gmra.mrb[0].mxu0 %v975
    %v2955 = vpop.f32.mrb[0].mxu0
    %v2956 = vadd.f32 %v2667, %v2955
    %v2957 = vpop.f32.mrb[0].mxu0
    %v2958 = vpop.f32.mrb[0].mxu0
    %v2959 = vadd.f32 %v2670, %v2958
    %v2960 = vpop.f32.mrb[0].mxu0
    %2961 = vmatprep.mubr.bf16.mxu0 0
    %2962 = vmatmul.mubr.bf16.gmra.mrb[0].mxu0 %v976
    %v2963 = vpop.f32.mrb[0].mxu0
    %v2964 = vadd.f32 %v2675, %v2963
    %v2965 = vpop.f32.mrb[0].mxu0
    %v2966 = vpop.f32.mrb[0].mxu0
    %v2967 = vadd.f32 %v2678, %v2966
    %v2968 = vpop.f32.mrb[0].mxu0
    %2969 = vmatprep.mubr.bf16.mxu0 0
    %2970 = vmatmul.mubr.bf16.gmra.mrb[0].mxu0 %v977
    %v2971 = vpop.f32.mrb[0].mxu0
    %v2972 = vadd.f32 %v2683, %v2971
    %v2973 = vpop.f32.mrb[0].mxu0
    %v2974 = vpop.f32.mrb[0].mxu0
    %v2975 = vadd.f32 %v2686, %v2974
    %v2976 = vpop.f32.mrb[0].mxu0
    %2977 = vmatprep.mubr.bf16.mxu0 0
    %2978 = vmatmul.mubr.bf16.gmra.mrb[0].mxu0 %v978
    %v2979 = vpop.f32.mrb[0].mxu0
    %v2980 = vadd.f32 %v2691, %v2979
    %v2981 = vpop.f32.mrb[0].mxu0
    %v2982 = vpop.f32.mrb[0].mxu0
    %v2983 = vadd.f32 %v2694, %v2982
    %v2984 = vpop.f32.mrb[0].mxu0
    %2985 = vmatprep.mubr.bf16.mxu0 0
    %2986 = vmatmul.mubr.bf16.gmra.mrb[0].mxu0 %v979
    %v2987 = vpop.f32.mrb[0].mxu0
    %v2988 = vadd.f32 %v2699, %v2987
    %v2989 = vpop.f32.mrb[0].mxu0
    %v2990 = vpop.f32.mrb[0].mxu0
    %v2991 = vadd.f32 %v2702, %v2990
    %v2992 = vpop.f32.mrb[0].mxu0
    %2993 = vmatprep.mubr.bf16.mxu0 0
    %2994 = vmatmul.mubr.bf16.gmra.mrb[0].mxu0 %v980
    %v2995 = vpop.f32.mrb[0].mxu0
    %v2996 = vadd.f32 %v2707, %v2995
    %v2997 = vpop.f32.mrb[0].mxu0
    %v2998 = vpop.f32.mrb[0].mxu0
    %v2999 = vadd.f32 %v2710, %v2998
    %v3000 = vpop.f32.mrb[0].mxu0
    %3001 = vdwg.mxu0
    %v3002 = vld [vmem:[#allocation8] sm:$0x1]
    %v3003 = vld [vmem:[#allocation9] sm:$0x1]
    %v3004 = vadd.f32 %v2748, %v2751
    %v3005 = vadd.f32 %v3004, %v2756
    %v3006 = vadd.f32 %v3005, %v2759
    %v3007 = vadd.f32 %v3006, %v2764
    %v3008 = vadd.f32 %v3007, %v2767
    %v3009 = vadd.f32 %v3008, %v2772
    %v3010 = vadd.f32 %v3009, %v2775
    %v3011 = vadd.f32 %v3010, %v2780
    %v3012 = vadd.f32 %v3011, %v2783
    %v3013 = vadd.f32 %v3012, %v2788
    %v3014 = vadd.f32 %v3013, %v2791
    %v3015 = vadd.f32 %v3014, %v2796
    %v3016 = vadd.f32 %v3015, %v2799
    %v3017 = vadd.f32 %v3016, %v2804
    %v3018 = vadd.f32 %v3017, %v2807
    %v3019 = vadd.f32 %v3018, %v2812
    %v3020 = vadd.f32 %v3019, %v2815
    %v3021 = vadd.f32 %v3020, %v2820
    %v3022 = vadd.f32 %v3021, %v2823
    %v3023 = vadd.f32 %v3022, %v2828
    %v3024 = vadd.f32 %v3023, %v2831
    %v3025 = vadd.f32 %v3024, %v2836
    %v3026 = vadd.f32 %v3025, %v2839
    %v3027 = vadd.f32 %v3026, %v2844
    %v3028 = vadd.f32 %v3027, %v2847
    %v3029 = vadd.f32 %v3028, %v2852
    %v3030 = vadd.f32 %v3029, %v2855
    %v3031 = vadd.f32 %v3030, %v2860
    %v3032 = vadd.f32 %v3031, %v2863
    %v3033 = vadd.f32 %v3032, %v2868
    %v3034 = vadd.f32 %v3033, %v2871
    %v3035 = vadd.f32 %v3034, %v2876
    %v3036 = vadd.f32 %v3035, %v2879
    %v3037 = vadd.f32 %v3036, %v2884
    %v3038 = vadd.f32 %v3037, %v2887
    %v3039 = vadd.f32 %v3038, %v2892
    %v3040 = vadd.f32 %v3039, %v2895
    %v3041 = vadd.f32 %v3040, %v2900
    %v3042 = vadd.f32 %v3041, %v2903
    %v3043 = vadd.f32 %v3042, %v2908
    %v3044 = vadd.f32 %v3043, %v2911
    %v3045 = vadd.f32 %v3044, %v2916
    %v3046 = vadd.f32 %v3045, %v2919
    %v3047 = vadd.f32 %v3046, %v2924
    %v3048 = vadd.f32 %v3047, %v2927
    %v3049 = vadd.f32 %v3048, %v2932
    %v3050 = vadd.f32 %v3049, %v2935
    %v3051 = vadd.f32 %v3050, %v2940
    %v3052 = vadd.f32 %v3051, %v2943
    %v3053 = vadd.f32 %v3052, %v2948
    %v3054 = vadd.f32 %v3053, %v2951
    %v3055 = vadd.f32 %v3054, %v2956
    %v3056 = vadd.f32 %v3055, %v2959
    %v3057 = vadd.f32 %v3056, %v2964
    %v3058 = vadd.f32 %v3057, %v2967
    %v3059 = vadd.f32 %v3058, %v2972
    %v3060 = vadd.f32 %v3059, %v2975
    %v3061 = vadd.f32 %v3060, %v2980
    %v3062 = vadd.f32 %v3061, %v2983
    %v3063 = vadd.f32 %v3062, %v2988
    %v3064 = vadd.f32 %v3063, %v2991
    %v3065 = vadd.f32 %v3064, %v2996
    %v3066 = vadd.f32 %v3065, %v2999
    %v3067 = vrot.slane %v3066, 4
    %v3068 = vadd.f32 %v3066, %v3067
    %v3069 = vrot.slane %v3068, 2
    %v3070 = vadd.f32 %v3068, %v3069
    %v3071 = vrot.slane %v3070, 1
    %v3072 = vadd.f32 %v3070, %v3071
    %v3073 = vmul.f32 %v2748, %v2748
    %v3074 = vmul.f32 %v2751, %v2751
    %v3075 = vmul.f32 %v2756, %v2756
    %v3076 = vmul.f32 %v2759, %v2759
    %v3077 = vmul.f32 %v2764, %v2764
    %v3078 = vmul.f32 %v2767, %v2767
    %v3079 = vmul.f32 %v2772, %v2772
    %v3080 = vmul.f32 %v2775, %v2775
    %v3081 = vmul.f32 %v2780, %v2780
    %v3082 = vmul.f32 %v2783, %v2783
    %v3083 = vmul.f32 %v2788, %v2788
    %v3084 = vmul.f32 %v2791, %v2791
    %v3085 = vmul.f32 %v2796, %v2796
    %v3086 = vmul.f32 %v2799, %v2799
    %v3087 = vmul.f32 %v2804, %v2804
    %v3088 = vmul.f32 %v2807, %v2807
    %v3089 = vmul.f32 %v2812, %v2812
    %v3090 = vmul.f32 %v2815, %v2815
    %v3091 = vmul.f32 %v2820, %v2820
    %v3092 = vmul.f32 %v2823, %v2823
    %v3093 = vmul.f32 %v2828, %v2828
    %v3094 = vmul.f32 %v2831, %v2831
    %v3095 = vmul.f32 %v2836, %v2836
    %v3096 = vmul.f32 %v2839, %v2839
    %v3097 = vmul.f32 %v2844, %v2844
    %v3098 = vmul.f32 %v2847, %v2847
    %v3099 = vmul.f32 %v2852, %v2852
    %v3100 = vmul.f32 %v2855, %v2855
    %v3101 = vmul.f32 %v2860, %v2860
    %v3102 = vmul.f32 %v2863, %v2863
    %v3103 = vmul.f32 %v2868, %v2868
    %v3104 = vmul.f32 %v2871, %v2871
    %v3105 = vmul.f32 %v2876, %v2876
    %v3106 = vmul.f32 %v2879, %v2879
    %v3107 = vmul.f32 %v2884, %v2884
    %v3108 = vmul.f32 %v2887, %v2887
    %v3109 = vmul.f32 %v2892, %v2892
    %v3110 = vmul.f32 %v2895, %v2895
    %v3111 = vmul.f32 %v2900, %v2900
    %v3112 = vmul.f32 %v2903, %v2903
    %v3113 = vmul.f32 %v2908, %v2908
    %v3114 = vmul.f32 %v2911, %v2911
    %v3115 = vmul.f32 %v2916, %v2916
    %v3116 = vmul.f32 %v2919, %v2919
    %v3117 = vmul.f32 %v2924, %v2924
    %v3118 = vmul.f32 %v2927, %v2927
    %v3119 = vmul.f32 %v2932, %v2932
    %v3120 = vmul.f32 %v2935, %v2935
    %v3121 = vmul.f32 %v2940, %v2940
    %v3122 = vmul.f32 %v2943, %v2943
    %v3123 = vmul.f32 %v2948, %v2948
    %v3124 = vmul.f32 %v2951, %v2951
    %v3125 = vmul.f32 %v2956, %v2956
    %v3126 = vmul.f32 %v2959, %v2959
    %v3127 = vmul.f32 %v2964, %v2964
    %v3128 = vmul.f32 %v2967, %v2967
    %v3129 = vmul.f32 %v2972, %v2972
    %v3130 = vmul.f32 %v2975, %v2975
    %v3131 = vmul.f32 %v2980, %v2980
    %v3132 = vmul.f32 %v2983, %v2983
    %v3133 = vmul.f32 %v2988, %v2988
    %v3134 = vmul.f32 %v2991, %v2991
    %v3135 = vmul.f32 %v2996, %v2996
    %v3136 = vmul.f32 %v2999, %v2999
    %v3137 = vadd.f32 %v3073, %v3074
    %v3138 = vadd.f32 %v3137, %v3075
    %v3139 = vadd.f32 %v3138, %v3076
    %v3140 = vadd.f32 %v3139, %v3077
    %v3141 = vadd.f32 %v3140, %v3078
    %v3142 = vadd.f32 %v3141, %v3079
    %v3143 = vadd.f32 %v3142, %v3080
    %v3144 = vadd.f32 %v3143, %v3081
    %v3145 = vadd.f32 %v3144, %v3082
    %v3146 = vadd.f32 %v3145, %v3083
    %v3147 = vadd.f32 %v3146, %v3084
    %v3148 = vadd.f32 %v3147, %v3085
    %v3149 = vadd.f32 %v3148, %v3086
    %v3150 = vadd.f32 %v3149, %v3087
    %v3151 = vadd.f32 %v3150, %v3088
    %v3152 = vadd.f32 %v3151, %v3089
    %v3153 = vadd.f32 %v3152, %v3090
    %v3154 = vadd.f32 %v3153, %v3091
    %v3155 = vadd.f32 %v3154, %v3092
    %v3156 = vadd.f32 %v3155, %v3093
    %v3157 = vadd.f32 %v3156, %v3094
    %v3158 = vadd.f32 %v3157, %v3095
    %v3159 = vadd.f32 %v3158, %v3096
    %v3160 = vadd.f32 %v3159, %v3097
    %v3161 = vadd.f32 %v3160, %v3098
    %v3162 = vadd.f32 %v3161, %v3099
    %v3163 = vadd.f32 %v3162, %v3100
    %v3164 = vadd.f32 %v3163, %v3101
    %v3165 = vadd.f32 %v3164, %v3102
    %v3166 = vadd.f32 %v3165, %v3103
    %v3167 = vadd.f32 %v3166, %v3104
    %v3168 = vadd.f32 %v3167, %v3105
    %v3169 = vadd.f32 %v3168, %v3106
    %v3170 = vadd.f32 %v3169, %v3107
    %v3171 = vadd.f32 %v3170, %v3108
    %v3172 = vadd.f32 %v3171, %v3109
    %v3173 = vadd.f32 %v3172, %v3110
    %v3174 = vadd.f32 %v3173, %v3111
    %v3175 = vadd.f32 %v3174, %v3112
    %v3176 = vadd.f32 %v3175, %v3113
    %v3177 = vadd.f32 %v3176, %v3114
    %v3178 = vadd.f32 %v3177, %v3115
    %v3179 = vadd.f32 %v3178, %v3116
    %v3180 = vadd.f32 %v3179, %v3117
    %v3181 = vadd.f32 %v3180, %v3118
    %v3182 = vadd.f32 %v3181, %v3119
    %v3183 = vadd.f32 %v3182, %v3120
    %v3184 = vadd.f32 %v3183, %v3121
    %v3185 = vadd.f32 %v3184, %v3122
    %v3186 = vadd.f32 %v3185, %v3123
    %v3187 = vadd.f32 %v3186, %v3124
    %v3188 = vadd.f32 %v3187, %v3125
    %v3189 = vadd.f32 %v3188, %v3126
    %v3190 = vadd.f32 %v3189, %v3127
    %v3191 = vadd.f32 %v3190, %v3128
    %v3192 = vadd.f32 %v3191, %v3129
    %v3193 = vadd.f32 %v3192, %v3130
    %v3194 = vadd.f32 %v3193, %v3131
    %v3195 = vadd.f32 %v3194, %v3132
    %v3196 = vadd.f32 %v3195, %v3133
    %v3197 = vadd.f32 %v3196, %v3134
    %v3198 = vadd.f32 %v3197, %v3135
    %v3199 = vadd.f32 %v3198, %v3136
    %v3200 = vrot.slane %v3199, 4
    %v3201 = vadd.f32 %v3199, %v3200
    %v3202 = vrot.slane %v3201, 2
    %v3203 = vadd.f32 %v3201, %v3202
    %v3204 = vrot.slane %v3203, 1
    %v3205 = vadd.f32 %v3203, %v3204
    %v3206 = vmul.f32 %v3072, 0.001953125
    %v3207 = vmul.f32 %v3205, 0.001953125
    %v3208 = vmul.f32 %v3206, %v3206
    %v3209 = vsub.f32 %v3207, %v3208
    %v3210 = vadd.f32 %v3209, 1e-05
    %v3211 = vrsqrt.pop %v3210
    %v3212 = vmul.f32 %v3002, %v3211
    %v3213 = vmul.f32 %v3206, %v3212
    %v3214 = vsub.f32 %v3003, %v3213
    %v3216 = vlaneseq
    %v3217 = vshrl.u32 %v3216, 7
    %v3218 = vsub.s32 0, %v3217
    %v3219 = vrot.slane %v3212, %v3218
    %v3221 = vmul.f32 %v2748, %v3219
    %v3222 = vmul.f32 %v2751, %v3219
    %v3223 = vmul.f32 %v2756, %v3219
    %v3224 = vmul.f32 %v2759, %v3219
    %v3225 = vmul.f32 %v2764, %v3219
    %v3226 = vmul.f32 %v2767, %v3219
    %v3227 = vmul.f32 %v2772, %v3219
    %v3228 = vmul.f32 %v2775, %v3219
    %v3229 = vmul.f32 %v2780, %v3219
    %v3230 = vmul.f32 %v2783, %v3219
    %v3231 = vmul.f32 %v2788, %v3219
    %v3232 = vmul.f32 %v2791, %v3219
    %v3233 = vmul.f32 %v2796, %v3219
    %v3234 = vmul.f32 %v2799, %v3219
    %v3235 = vmul.f32 %v2804, %v3219
    %v3236 = vmul.f32 %v2807, %v3219
    %v3237 = vmul.f32 %v2812, %v3219
    %v3238 = vmul.f32 %v2815, %v3219
    %v3239 = vmul.f32 %v2820, %v3219
    %v3240 = vmul.f32 %v2823, %v3219
    %v3241 = vmul.f32 %v2828, %v3219
    %v3242 = vmul.f32 %v2831, %v3219
    %v3243 = vmul.f32 %v2836, %v3219
    %v3244 = vmul.f32 %v2839, %v3219
    %v3245 = vmul.f32 %v2844, %v3219
    %v3246 = vmul.f32 %v2847, %v3219
    %v3247 = vmul.f32 %v2852, %v3219
    %v3248 = vmul.f32 %v2855, %v3219
    %v3249 = vmul.f32 %v2860, %v3219
    %v3250 = vmul.f32 %v2863, %v3219
    %v3251 = vmul.f32 %v2868, %v3219
    %v3252 = vmul.f32 %v2871, %v3219
    %v3253 = vmul.f32 %v2876, %v3219
    %v3254 = vmul.f32 %v2879, %v3219
    %v3255 = vmul.f32 %v2884, %v3219
    %v3256 = vmul.f32 %v2887, %v3219
    %v3257 = vmul.f32 %v2892, %v3219
    %v3258 = vmul.f32 %v2895, %v3219
    %v3259 = vmul.f32 %v2900, %v3219
    %v3260 = vmul.f32 %v2903, %v3219
    %v3261 = vmul.f32 %v2908, %v3219
    %v3262 = vmul.f32 %v2911, %v3219
    %v3263 = vmul.f32 %v2916, %v3219
    %v3264 = vmul.f32 %v2919, %v3219
    %v3265 = vmul.f32 %v2924, %v3219
    %v3266 = vmul.f32 %v2927, %v3219
    %v3267 = vmul.f32 %v2932, %v3219
    %v3268 = vmul.f32 %v2935, %v3219
    %v3269 = vmul.f32 %v2940, %v3219
    %v3270 = vmul.f32 %v2943, %v3219
    %v3271 = vmul.f32 %v2948, %v3219
    %v3272 = vmul.f32 %v2951, %v3219
    %v3273 = vmul.f32 %v2956, %v3219
    %v3274 = vmul.f32 %v2959, %v3219
    %v3275 = vmul.f32 %v2964, %v3219
    %v3276 = vmul.f32 %v2967, %v3219
    %v3277 = vmul.f32 %v2972, %v3219
    %v3278 = vmul.f32 %v2975, %v3219
    %v3279 = vmul.f32 %v2980, %v3219
    %v3280 = vmul.f32 %v2983, %v3219
    %v3281 = vmul.f32 %v2988, %v3219
    %v3282 = vmul.f32 %v2991, %v3219
    %v3283 = vmul.f32 %v2996, %v3219
    %v3284 = vmul.f32 %v2999, %v3219
    %v3286 = vlaneseq
    %v3287 = vshrl.u32 %v3286, 7
    %v3288 = vsub.s32 0, %v3287
    %v3289 = vrot.slane %v3214, %v3288
    %v3291 = vadd.f32 %v3221, %v3289
    %v3292 = vadd.f32 %v3222, %v3289
    %v3293 = vadd.f32 %v3223, %v3289
    %v3294 = vadd.f32 %v3224, %v3289
    %v3295 = vadd.f32 %v3225, %v3289
    %v3296 = vadd.f32 %v3226, %v3289
    %v3297 = vadd.f32 %v3227, %v3289
    %v3298 = vadd.f32 %v3228, %v3289
    %v3299 = vadd.f32 %v3229, %v3289
    %v3300 = vadd.f32 %v3230, %v3289
    %v3301 = vadd.f32 %v3231, %v3289
    %v3302 = vadd.f32 %v3232, %v3289
    %v3303 = vadd.f32 %v3233, %v3289
    %v3304 = vadd.f32 %v3234, %v3289
    %v3305 = vadd.f32 %v3235, %v3289
    %v3306 = vadd.f32 %v3236, %v3289
    %v3307 = vadd.f32 %v3237, %v3289
    %v3308 = vadd.f32 %v3238, %v3289
    %v3309 = vadd.f32 %v3239, %v3289
    %v3310 = vadd.f32 %v3240, %v3289
    %v3311 = vadd.f32 %v3241, %v3289
    %v3312 = vadd.f32 %v3242, %v3289
    %v3313 = vadd.f32 %v3243, %v3289
    %v3314 = vadd.f32 %v3244, %v3289
    %v3315 = vadd.f32 %v3245, %v3289
    %v3316 = vadd.f32 %v3246, %v3289
    %v3317 = vadd.f32 %v3247, %v3289
    %v3318 = vadd.f32 %v3248, %v3289
    %v3319 = vadd.f32 %v3249, %v3289
    %v3320 = vadd.f32 %v3250, %v3289
    %v3321 = vadd.f32 %v3251, %v3289
    %v3322 = vadd.f32 %v3252, %v3289
    %v3323 = vadd.f32 %v3253, %v3289
    %v3324 = vadd.f32 %v3254, %v3289
    %v3325 = vadd.f32 %v3255, %v3289
    %v3326 = vadd.f32 %v3256, %v3289
    %v3327 = vadd.f32 %v3257, %v3289
    %v3328 = vadd.f32 %v3258, %v3289
    %v3329 = vadd.f32 %v3259, %v3289
    %v3330 = vadd.f32 %v3260, %v3289
    %v3331 = vadd.f32 %v3261, %v3289
    %v3332 = vadd.f32 %v3262, %v3289
    %v3333 = vadd.f32 %v3263, %v3289
    %v3334 = vadd.f32 %v3264, %v3289
    %v3335 = vadd.f32 %v3265, %v3289
    %v3336 = vadd.f32 %v3266, %v3289
    %v3337 = vadd.f32 %v3267, %v3289
    %v3338 = vadd.f32 %v3268, %v3289
    %v3339 = vadd.f32 %v3269, %v3289
    %v3340 = vadd.f32 %v3270, %v3289
    %v3341 = vadd.f32 %v3271, %v3289
    %v3342 = vadd.f32 %v3272, %v3289
    %v3343 = vadd.f32 %v3273, %v3289
    %v3344 = vadd.f32 %v3274, %v3289
    %v3345 = vadd.f32 %v3275, %v3289
    %v3346 = vadd.f32 %v3276, %v3289
    %v3347 = vadd.f32 %v3277, %v3289
    %v3348 = vadd.f32 %v3278, %v3289
    %v3349 = vadd.f32 %v3279, %v3289
    %v3350 = vadd.f32 %v3280, %v3289
    %v3351 = vadd.f32 %v3281, %v3289
    %v3352 = vadd.f32 %v3282, %v3289
    %v3353 = vadd.f32 %v3283, %v3289
    %v3354 = vadd.f32 %v3284, %v3289
    %v3355 = vmax.f32 %v3291, 0.0
    %v3356 = vmax.f32 %v3292, 0.0
    %v3357 = vmax.f32 %v3293, 0.0
    %v3358 = vmax.f32 %v3294, 0.0
    %v3359 = vmax.f32 %v3295, 0.0
    %v3360 = vmax.f32 %v3296, 0.0
    %v3361 = vmax.f32 %v3297, 0.0
    %v3362 = vmax.f32 %v3298, 0.0
    %v3363 = vmax.f32 %v3299, 0.0
    %v3364 = vmax.f32 %v3300, 0.0
    %v3365 = vmax.f32 %v3301, 0.0
    %v3366 = vmax.f32 %v3302, 0.0
    %v3367 = vmax.f32 %v3303, 0.0
    %v3368 = vmax.f32 %v3304, 0.0
    %v3369 = vmax.f32 %v3305, 0.0
    %v3370 = vmax.f32 %v3306, 0.0
    %v3371 = vmax.f32 %v3307, 0.0
    %v3372 = vmax.f32 %v3308, 0.0
    %v3373 = vmax.f32 %v3309, 0.0
    %v3374 = vmax.f32 %v3310, 0.0
    %v3375 = vmax.f32 %v3311, 0.0
    %v3376 = vmax.f32 %v3312, 0.0
    %v3377 = vmax.f32 %v3313, 0.0
    %v3378 = vmax.f32 %v3314, 0.0
    %v3379 = vmax.f32 %v3315, 0.0
    %v3380 = vmax.f32 %v3316, 0.0
    %v3381 = vmax.f32 %v3317, 0.0
    %v3382 = vmax.f32 %v3318, 0.0
    %v3383 = vmax.f32 %v3319, 0.0
    %v3384 = vmax.f32 %v3320, 0.0
    %v3385 = vmax.f32 %v3321, 0.0
    %v3386 = vmax.f32 %v3322, 0.0
    %v3387 = vmax.f32 %v3323, 0.0
    %v3388 = vmax.f32 %v3324, 0.0
    %v3389 = vmax.f32 %v3325, 0.0
    %v3390 = vmax.f32 %v3326, 0.0
    %v3391 = vmax.f32 %v3327, 0.0
    %v3392 = vmax.f32 %v3328, 0.0
    %v3393 = vmax.f32 %v3329, 0.0
    %v3394 = vmax.f32 %v3330, 0.0
    %v3395 = vmax.f32 %v3331, 0.0
    %v3396 = vmax.f32 %v3332, 0.0
    %v3397 = vmax.f32 %v3333, 0.0
    %v3398 = vmax.f32 %v3334, 0.0
    %v3399 = vmax.f32 %v3335, 0.0
    %v3400 = vmax.f32 %v3336, 0.0
    %v3401 = vmax.f32 %v3337, 0.0
    %v3402 = vmax.f32 %v3338, 0.0
    %v3403 = vmax.f32 %v3339, 0.0
    %v3404 = vmax.f32 %v3340, 0.0
    %v3405 = vmax.f32 %v3341, 0.0
    %v3406 = vmax.f32 %v3342, 0.0
    %v3407 = vmax.f32 %v3343, 0.0
    %v3408 = vmax.f32 %v3344, 0.0
    %v3409 = vmax.f32 %v3345, 0.0
    %v3410 = vmax.f32 %v3346, 0.0
    %v3411 = vmax.f32 %v3347, 0.0
    %v3412 = vmax.f32 %v3348, 0.0
    %v3413 = vmax.f32 %v3349, 0.0
    %v3414 = vmax.f32 %v3350, 0.0
    %v3415 = vmax.f32 %v3351, 0.0
    %v3416 = vmax.f32 %v3352, 0.0
    %v3417 = vmax.f32 %v3353, 0.0
    %v3418 = vmax.f32 %v3354, 0.0
    %3419 = vst [vmem:[#allocation2] sm:$0xff] 0.0
    %3420 = vst [vmem:[#allocation2 + $0x8] sm:$0xff] 0.0
    %3421 = vst [vmem:[#allocation2 + $0x10] sm:$0x3] 0.0
    %3422 = vst [vmem:[#allocation2 + $0x1b0] sm:$0xff] 0.0
    %3423 = vst [vmem:[#allocation2 + $0x1b8] sm:$0xff] 0.0
    %3424 = vst [vmem:[#allocation2 + $0x1c0] sm:$0x3] 0.0
    %s3425 = scalar_lea.vmem [#allocation2], 408
    %3426 = vst [vmem:[%s3425] sm:$0xff] 0.0
    %3427 = vst [vmem:[%s3425 + $0x8] sm:$0xff] 0.0
    %3428 = vst [vmem:[%s3425 + $0x10] sm:$0x3] 0.0
    %3429 = vst [vmem:[%s3425 + $0x1b0] sm:$0xff] 0.0
    %3430 = vst [vmem:[%s3425 + $0x1b8] sm:$0xff] 0.0
    %3431 = vst [vmem:[%s3425 + $0x1c0] sm:$0x3] 0.0
    %s3432 = scalar_lea.vmem [#allocation2], 24
    %3433 = vst [vmem:[%s3432] sm:$0x1] 0.0
    %3434 = vst [vmem:[%s3432 + $0x18] sm:$0x1] 0.0
    %3435 = vst [vmem:[%s3432 + $0x30] sm:$0x1] 0.0
    %3436 = vst [vmem:[%s3432 + $0x48] sm:$0x1] 0.0
    %3437 = vst [vmem:[%s3432 + $0x60] sm:$0x1] 0.0
    %3438 = vst [vmem:[%s3432 + $0x78] sm:$0x1] 0.0
    %3439 = vst [vmem:[%s3432 + $0x90] sm:$0x1] 0.0
    %3440 = vst [vmem:[%s3432 + $0xa8] sm:$0x1] 0.0
    %3441 = vst [vmem:[%s3432 + $0xc0] sm:$0x1] 0.0
    %3442 = vst [vmem:[%s3432 + $0xd8] sm:$0x1] 0.0
    %3443 = vst [vmem:[%s3432 + $0xf0] sm:$0x1] 0.0
    %3444 = vst [vmem:[%s3432 + $0x108] sm:$0x1] 0.0
    %3445 = vst [vmem:[%s3432 + $0x120] sm:$0x1] 0.0
    %3446 = vst [vmem:[%s3432 + $0x138] sm:$0x1] 0.0
    %3447 = vst [vmem:[%s3432 + $0x150] sm:$0x1] 0.0
    %3448 = vst [vmem:[%s3432 + $0x168] sm:$0x1] 0.0
    %3449 = vst [vmem:[%s3432 + $0x1b0] sm:$0x1] 0.0
    %3450 = vst [vmem:[%s3432 + $0x1c8] sm:$0x1] 0.0
    %3451 = vst [vmem:[%s3432 + $0x1e0] sm:$0x1] 0.0
    %3452 = vst [vmem:[%s3432 + $0x1f8] sm:$0x1] 0.0
    %3453 = vst [vmem:[%s3432 + $0x210] sm:$0x1] 0.0
    %3454 = vst [vmem:[%s3432 + $0x228] sm:$0x1] 0.0
    %3455 = vst [vmem:[%s3432 + $0x240] sm:$0x1] 0.0
    %3456 = vst [vmem:[%s3432 + $0x258] sm:$0x1] 0.0
    %3457 = vst [vmem:[%s3432 + $0x270] sm:$0x1] 0.0
    %3458 = vst [vmem:[%s3432 + $0x288] sm:$0x1] 0.0
    %3459 = vst [vmem:[%s3432 + $0x2a0] sm:$0x1] 0.0
    %3460 = vst [vmem:[%s3432 + $0x2b8] sm:$0x1] 0.0
    %3461 = vst [vmem:[%s3432 + $0x2d0] sm:$0x1] 0.0
    %3462 = vst [vmem:[%s3432 + $0x2e8] sm:$0x1] 0.0
    %3463 = vst [vmem:[%s3432 + $0x300] sm:$0x1] 0.0
    %3464 = vst [vmem:[%s3432 + $0x318] sm:$0x1] 0.0
    %3465 = vst [vmem:[%s3432 + $0x11] sm:$0x1] 0.0
    %3466 = vst [vmem:[%s3432 + $0x29] sm:$0x1] 0.0
    %3467 = vst [vmem:[%s3432 + $0x41] sm:$0x1] 0.0
    %3468 = vst [vmem:[%s3432 + $0x59] sm:$0x1] 0.0
    %3469 = vst [vmem:[%s3432 + $0x71] sm:$0x1] 0.0
    %3470 = vst [vmem:[%s3432 + $0x89] sm:$0x1] 0.0
    %3471 = vst [vmem:[%s3432 + $0xa1] sm:$0x1] 0.0
    %3472 = vst [vmem:[%s3432 + $0xb9] sm:$0x1] 0.0
    %3473 = vst [vmem:[%s3432 + $0xd1] sm:$0x1] 0.0
    %3474 = vst [vmem:[%s3432 + $0xe9] sm:$0x1] 0.0
    %3475 = vst [vmem:[%s3432 + $0x101] sm:$0x1] 0.0
    %3476 = vst [vmem:[%s3432 + $0x119] sm:$0x1] 0.0
    %3477 = vst [vmem:[%s3432 + $0x131] sm:$0x1] 0.0
    %3478 = vst [vmem:[%s3432 + $0x149] sm:$0x1] 0.0
    %3479 = vst [vmem:[%s3432 + $0x161] sm:$0x1] 0.0
    %3480 = vst [vmem:[%s3432 + $0x179] sm:$0x1] 0.0
    %3481 = vst [vmem:[%s3432 + $0x1c1] sm:$0x1] 0.0
    %3482 = vst [vmem:[%s3432 + $0x1d9] sm:$0x1] 0.0
    %3483 = vst [vmem:[%s3432 + $0x1f1] sm:$0x1] 0.0
    %3484 = vst [vmem:[%s3432 + $0x209] sm:$0x1] 0.0
    %3485 = vst [vmem:[%s3432 + $0x221] sm:$0x1] 0.0
    %3486 = vst [vmem:[%s3432 + $0x239] sm:$0x1] 0.0
    %3487 = vst [vmem:[%s3432 + $0x251] sm:$0x1] 0.0
    %3488 = vst [vmem:[%s3432 + $0x269] sm:$0x1] 0.0
    %3489 = vst [vmem:[%s3432 + $0x281] sm:$0x1] 0.0
    %3490 = vst [vmem:[%s3432 + $0x299] sm:$0x1] 0.0
    %3491 = vst [vmem:[%s3432 + $0x2b1] sm:$0x1] 0.0
    %3492 = vst [vmem:[%s3432 + $0x2c9] sm:$0x1] 0.0
    %3493 = vst [vmem:[%s3432 + $0x2e1] sm:$0x1] 0.0
    %3494 = vst [vmem:[%s3432 + $0x2f9] sm:$0x1] 0.0
    %3495 = vst [vmem:[%s3432 + $0x311] sm:$0x1] 0.0
    %3496 = vst [vmem:[%s3432 + $0x329] sm:$0x1] 0.0
    %3497 = vst [vmem:[%s3432 + $0x1] sm:$0xff] %v3355
    %3498 = vst [vmem:[%s3432 + $0x9] sm:$0xff] %v3356
    %3499 = vst [vmem:[%s3432 + $0x19] sm:$0xff] %v3357
    %3500 = vst [vmem:[%s3432 + $0x21] sm:$0xff] %v3358
    %3501 = vst [vmem:[%s3432 + $0x31] sm:$0xff] %v3359
    %3502 = vst [vmem:[%s3432 + $0x39] sm:$0xff] %v3360
    %3503 = vst [vmem:[%s3432 + $0x49] sm:$0xff] %v3361
    %3504 = vst [vmem:[%s3432 + $0x51] sm:$0xff] %v3362
    %3505 = vst [vmem:[%s3432 + $0x61] sm:$0xff] %v3363
    %3506 = vst [vmem:[%s3432 + $0x69] sm:$0xff] %v3364
    %3507 = vst [vmem:[%s3432 + $0x79] sm:$0xff] %v3365
    %3508 = vst [vmem:[%s3432 + $0x81] sm:$0xff] %v3366
    %3509 = vst [vmem:[%s3432 + $0x91] sm:$0xff] %v3367
    %3510 = vst [vmem:[%s3432 + $0x99] sm:$0xff] %v3368
    %3511 = vst [vmem:[%s3432 + $0xa9] sm:$0xff] %v3369
    %3512 = vst [vmem:[%s3432 + $0xb1] sm:$0xff] %v3370
    %3513 = vst [vmem:[%s3432 + $0xc1] sm:$0xff] %v3371
    %3514 = vst [vmem:[%s3432 + $0xc9] sm:$0xff] %v3372
    %3515 = vst [vmem:[%s3432 + $0xd9] sm:$0xff] %v3373
    %3516 = vst [vmem:[%s3432 + $0xe1] sm:$0xff] %v3374
    %3517 = vst [vmem:[%s3432 + $0xf1] sm:$0xff] %v3375
    %3518 = vst [vmem:[%s3432 + $0xf9] sm:$0xff] %v3376
    %3519 = vst [vmem:[%s3432 + $0x109] sm:$0xff] %v3377
    %3520 = vst [vmem:[%s3432 + $0x111] sm:$0xff] %v3378
    %3521 = vst [vmem:[%s3432 + $0x121] sm:$0xff] %v3379
    %3522 = vst [vmem:[%s3432 + $0x129] sm:$0xff] %v3380
    %3523 = vst [vmem:[%s3432 + $0x139] sm:$0xff] %v3381
    %3524 = vst [vmem:[%s3432 + $0x141] sm:$0xff] %v3382
    %3525 = vst [vmem:[%s3432 + $0x151] sm:$0xff] %v3383
    %3526 = vst [vmem:[%s3432 + $0x159] sm:$0xff] %v3384
    %3527 = vst [vmem:[%s3432 + $0x169] sm:$0xff] %v3385
    %3528 = vst [vmem:[%s3432 + $0x171] sm:$0xff] %v3386
    %3529 = vst [vmem:[%s3432 + $0x1b1] sm:$0xff] %v3387
    %3530 = vst [vmem:[%s3432 + $0x1b9] sm:$0xff] %v3388
    %3531 = vst [vmem:[%s3432 + $0x1c9] sm:$0xff] %v3389
    %3532 = vst [vmem:[%s3432 + $0x1d1] sm:$0xff] %v3390
    %3533 = vst [vmem:[%s3432 + $0x1e1] sm:$0xff] %v3391
    %3534 = vst [vmem:[%s3432 + $0x1e9] sm:$0xff] %v3392
    %3535 = vst [vmem:[%s3432 + $0x1f9] sm:$0xff] %v3393
    %3536 = vst [vmem:[%s3432 + $0x201] sm:$0xff] %v3394
    %3537 = vst [vmem:[%s3432 + $0x211] sm:$0xff] %v3395
    %3538 = vst [vmem:[%s3432 + $0x219] sm:$0xff] %v3396
    %3539 = vst [vmem:[%s3432 + $0x229] sm:$0xff] %v3397
    %3540 = vst [vmem:[%s3432 + $0x231] sm:$0xff] %v3398
    %3541 = vst [vmem:[%s3432 + $0x241] sm:$0xff] %v3399
    %3542 = vst [vmem:[%s3432 + $0x249] sm:$0xff] %v3400
    %3543 = vst [vmem:[%s3432 + $0x259] sm:$0xff] %v3401
    %3544 = vst [vmem:[%s3432 + $0x261] sm:$0xff] %v3402
    %3545 = vst [vmem:[%s3432 + $0x271] sm:$0xff] %v3403
    %3546 = vst [vmem:[%s3432 + $0x279] sm:$0xff] %v3404
    %3547 = vst [vmem:[%s3432 + $0x289] sm:$0xff] %v3405
    %3548 = vst [vmem:[%s3432 + $0x291] sm:$0xff] %v3406
    %3549 = vst [vmem:[%s3432 + $0x2a1] sm:$0xff] %v3407
    %3550 = vst [vmem:[%s3432 + $0x2a9] sm:$0xff] %v3408
    %3551 = vst [vmem:[%s3432 + $0x2b9] sm:$0xff] %v3409
    %3552 = vst [vmem:[%s3432 + $0x2c1] sm:$0xff] %v3410
    %3553 = vst [vmem:[%s3432 + $0x2d1] sm:$0xff] %v3411
    %3554 = vst [vmem:[%s3432 + $0x2d9] sm:$0xff] %v3412
    %3555 = vst [vmem:[%s3432 + $0x2e9] sm:$0xff] %v3413
    %3556 = vst [vmem:[%s3432 + $0x2f1] sm:$0xff] %v3414
    %3557 = vst [vmem:[%s3432 + $0x301] sm:$0xff] %v3415
    %3558 = vst [vmem:[%s3432 + $0x309] sm:$0xff] %v3416
    %3559 = vst [vmem:[%s3432 + $0x319] sm:$0xff] %v3417
    %3560 = vst [vmem:[%s3432 + $0x321] sm:$0xff] %v3418
    %v3561 = vld [vmem:[#allocation2] sm:$0xff]
    %v3562 = vld [vmem:[#allocation2 + $0x8] sm:$0xff]
    %v3563 = vld [vmem:[#allocation2 + $0x18] sm:$0xff]
    %v3564 = vld [vmem:[#allocation2 + $0x20] sm:$0xff]
    %v3565 = vld [vmem:[#allocation2 + $0x30] sm:$0xff]
    %v3566 = vld [vmem:[#allocation2 + $0x38] sm:$0xff]
    %v3567 = vld [vmem:[#allocation2 + $0x48] sm:$0xff]
    %v3568 = vld [vmem:[#allocation2 + $0x50] sm:$0xff]
    %v3569 = vld [vmem:[#allocation2 + $0x60] sm:$0xff]
    %v3570 = vld [vmem:[#allocation2 + $0x68] sm:$0xff]
    %v3571 = vld [vmem:[#allocation2 + $0x78] sm:$0xff]
    %v3572 = vld [vmem:[#allocation2 + $0x80] sm:$0xff]
    %v3573 = vld [vmem:[#allocation2 + $0x90] sm:$0xff]
    %v3574 = vld [vmem:[#allocation2 + $0x98] sm:$0xff]
    %v3575 = vld [vmem:[#allocation2 + $0xa8] sm:$0xff]
    %v3576 = vld [vmem:[#allocation2 + $0xb0] sm:$0xff]
    %v3577 = vld [vmem:[#allocation2 + $0xc0] sm:$0xff]
    %v3578 = vld [vmem:[#allocation2 + $0xc8] sm:$0xff]
    %v3579 = vld [vmem:[#allocation2 + $0xd8] sm:$0xff]
    %v3580 = vld [vmem:[#allocation2 + $0xe0] sm:$0xff]
    %v3581 = vld [vmem:[#allocation2 + $0xf0] sm:$0xff]
    %v3582 = vld [vmem:[#allocation2 + $0xf8] sm:$0xff]
    %v3583 = vld [vmem:[#allocation2 + $0x108] sm:$0xff]
    %v3584 = vld [vmem:[#allocation2 + $0x110] sm:$0xff]
    %v3585 = vld [vmem:[#allocation2 + $0x120] sm:$0xff]
    %v3586 = vld [vmem:[#allocation2 + $0x128] sm:$0xff]
    %v3587 = vld [vmem:[#allocation2 + $0x138] sm:$0xff]
    %v3588 = vld [vmem:[#allocation2 + $0x140] sm:$0xff]
    %v3589 = vld [vmem:[#allocation2 + $0x150] sm:$0xff]
    %v3590 = vld [vmem:[#allocation2 + $0x158] sm:$0xff]
    %v3591 = vld [vmem:[#allocation2 + $0x168] sm:$0xff]
    %v3592 = vld [vmem:[#allocation2 + $0x170] sm:$0xff]
    %v3593 = vld [vmem:[#allocation2 + $0x1b0] sm:$0xff]
    %v3594 = vld [vmem:[#allocation2 + $0x1b8] sm:$0xff]
    %v3595 = vld [vmem:[#allocation2 + $0x1c8] sm:$0xff]
    %v3596 = vld [vmem:[#allocation2 + $0x1d0] sm:$0xff]
    %v3597 = vld [vmem:[#allocation2 + $0x1e0] sm:$0xff]
    %v3598 = vld [vmem:[#allocation2 + $0x1e8] sm:$0xff]
    %v3599 = vld [vmem:[#allocation2 + $0x1f8] sm:$0xff]
    %v3600 = vld [vmem:[#allocation2 + $0x200] sm:$0xff]
    %v3601 = vld [vmem:[#allocation2 + $0x210] sm:$0xff]
    %v3602 = vld [vmem:[#allocation2 + $0x218] sm:$0xff]
    %v3603 = vld [vmem:[#allocation2 + $0x228] sm:$0xff]
    %v3604 = vld [vmem:[#allocation2 + $0x230] sm:$0xff]
    %v3605 = vld [vmem:[#allocation2 + $0x240] sm:$0xff]
    %v3606 = vld [vmem:[#allocation2 + $0x248] sm:$0xff]
    %v3607 = vld [vmem:[#allocation2 + $0x258] sm:$0xff]
    %v3608 = vld [vmem:[#allocation2 + $0x260] sm:$0xff]
    %v3609 = vld [vmem:[#allocation2 + $0x270] sm:$0xff]
    %v3610 = vld [vmem:[#allocation2 + $0x278] sm:$0xff]
    %v3611 = vld [vmem:[#allocation2 + $0x288] sm:$0xff]
    %v3612 = vld [vmem:[#allocation2 + $0x290] sm:$0xff]
    %v3613 = vld [vmem:[#allocation2 + $0x2a0] sm:$0xff]
    %v3614 = vld [vmem:[#allocation2 + $0x2a8] sm:$0xff]
    %v3615 = vld [vmem:[#allocation2 + $0x2b8] sm:$0xff]
    %v3616 = vld [vmem:[#allocation2 + $0x2c0] sm:$0xff]
    %v3617 = vld [vmem:[#allocation2 + $0x2d0] sm:$0xff]
    %v3618 = vld [vmem:[#allocation2 + $0x2d8] sm:$0xff]
    %v3619 = vld [vmem:[#allocation2 + $0x2e8] sm:$0xff]
    %v3620 = vld [vmem:[#allocation2 + $0x2f0] sm:$0xff]
    %v3621 = vld [vmem:[#allocation2 + $0x300] sm:$0xff]
    %v3622 = vld [vmem:[#allocation2 + $0x308] sm:$0xff]
    %v3623 = vld [vmem:[#allocation2 + $0x318] sm:$0xff]
    %v3624 = vld [vmem:[#allocation2 + $0x320] sm:$0xff]
    %v3625 = vpack.c.bf16 %v3562, %v3561
    %v3626 = vpack.c.bf16 %v3564, %v3563
    %v3627 = vpack.c.bf16 %v3566, %v3565
    %v3628 = vpack.c.bf16 %v3568, %v3567
    %v3629 = vpack.c.bf16 %v3570, %v3569
    %v3630 = vpack.c.bf16 %v3572, %v3571
    %v3631 = vpack.c.bf16 %v3574, %v3573
    %v3632 = vpack.c.bf16 %v3576, %v3575
    %v3633 = vpack.c.bf16 %v3578, %v3577
    %v3634 = vpack.c.bf16 %v3580, %v3579
    %v3635 = vpack.c.bf16 %v3582, %v3581
    %v3636 = vpack.c.bf16 %v3584, %v3583
    %v3637 = vpack.c.bf16 %v3586, %v3585
    %v3638 = vpack.c.bf16 %v3588, %v3587
    %v3639 = vpack.c.bf16 %v3590, %v3589
    %v3640 = vpack.c.bf16 %v3592, %v3591
    %v3641 = vpack.c.bf16 %v3594, %v3593
    %v3642 = vpack.c.bf16 %v3596, %v3595
    %v3643 = vpack.c.bf16 %v3598, %v3597
    %v3644 = vpack.c.bf16 %v3600, %v3599
    %v3645 = vpack.c.bf16 %v3602, %v3601
    %v3646 = vpack.c.bf16 %v3604, %v3603
    %v3647 = vpack.c.bf16 %v3606, %v3605
    %v3648 = vpack.c.bf16 %v3608, %v3607
    %v3649 = vpack.c.bf16 %v3610, %v3609
    %v3650 = vpack.c.bf16 %v3612, %v3611
    %v3651 = vpack.c.bf16 %v3614, %v3613
    %v3652 = vpack.c.bf16 %v3616, %v3615
    %v3653 = vpack.c.bf16 %v3618, %v3617
    %v3654 = vpack.c.bf16 %v3620, %v3619
    %v3655 = vpack.c.bf16 %v3622, %v3621
    %v3656 = vpack.c.bf16 %v3624, %v3623
    %v3657 = vld [vmem:[#allocation2 + $0x1] sm:$0xff]
    %v3658 = vld [vmem:[#allocation2 + $0x9] sm:$0xff]
    %v3659 = vld [vmem:[#allocation2 + $0x19] sm:$0xff]
    %v3660 = vld [vmem:[#allocation2 + $0x21] sm:$0xff]
    %v3661 = vld [vmem:[#allocation2 + $0x31] sm:$0xff]
    %v3662 = vld [vmem:[#allocation2 + $0x39] sm:$0xff]
    %v3663 = vld [vmem:[#allocation2 + $0x49] sm:$0xff]
    %v3664 = vld [vmem:[#allocation2 + $0x51] sm:$0xff]
    %v3665 = vld [vmem:[#allocation2 + $0x61] sm:$0xff]
    %v3666 = vld [vmem:[#allocation2 + $0x69] sm:$0xff]
    %v3667 = vld [vmem:[#allocation2 + $0x79] sm:$0xff]
    %v3668 = vld [vmem:[#allocation2 + $0x81] sm:$0xff]
    %v3669 = vld [vmem:[#allocation2 + $0x91] sm:$0xff]
    %v3670 = vld [vmem:[#allocation2 + $0x99] sm:$0xff]
    %v3671 = vld [vmem:[#allocation2 + $0xa9] sm:$0xff]
    %v3672 = vld [vmem:[#allocation2 + $0xb1] sm:$0xff]
    %v3673 = vld [vmem:[#allocation2 + $0xc1] sm:$0xff]
    %v3674 = vld [vmem:[#allocation2 + $0xc9] sm:$0xff]
    %v3675 = vld [vmem:[#allocation2 + $0xd9] sm:$0xff]
    %v3676 = vld [vmem:[#allocation2 + $0xe1] sm:$0xff]
    %v3677 = vld [vmem:[#allocation2 + $0xf1] sm:$0xff]
    %v3678 = vld [vmem:[#allocation2 + $0xf9] sm:$0xff]
    %v3679 = vld [vmem:[#allocation2 + $0x109] sm:$0xff]
    %v3680 = vld [vmem:[#allocation2 + $0x111] sm:$0xff]
    %v3681 = vld [vmem:[#allocation2 + $0x121] sm:$0xff]
    %v3682 = vld [vmem:[#allocation2 + $0x129] sm:$0xff]
    %v3683 = vld [vmem:[#allocation2 + $0x139] sm:$0xff]
    %v3684 = vld [vmem:[#allocation2 + $0x141] sm:$0xff]
    %v3685 = vld [vmem:[#allocation2 + $0x151] sm:$0xff]
    %v3686 = vld [vmem:[#allocation2 + $0x159] sm:$0xff]
    %v3687 = vld [vmem:[#allocation2 + $0x169] sm:$0xff]
    %v3688 = vld [vmem:[#allocation2 + $0x171] sm:$0xff]
    %v3689 = vld [vmem:[#allocation2 + $0x1b1] sm:$0xff]
    %v3690 = vld [vmem:[#allocation2 + $0x1b9] sm:$0xff]
    %v3691 = vld [vmem:[#allocation2 + $0x1c9] sm:$0xff]
    %v3692 = vld [vmem:[#allocation2 + $0x1d1] sm:$0xff]
    %v3693 = vld [vmem:[#allocation2 + $0x1e1] sm:$0xff]
    %v3694 = vld [vmem:[#allocation2 + $0x1e9] sm:$0xff]
    %v3695 = vld [vmem:[#allocation2 + $0x1f9] sm:$0xff]
    %v3696 = vld [vmem:[#allocation2 + $0x201] sm:$0xff]
    %v3697 = vld [vmem:[#allocation2 + $0x211] sm:$0xff]
    %v3698 = vld [vmem:[#allocation2 + $0x219] sm:$0xff]
    %v3699 = vld [vmem:[#allocation2 + $0x229] sm:$0xff]
    %v3700 = vld [vmem:[#allocation2 + $0x231] sm:$0xff]
    %v3701 = vld [vmem:[#allocation2 + $0x241] sm:$0xff]
    %v3702 = vld [vmem:[#allocation2 + $0x249] sm:$0xff]
    %v3703 = vld [vmem:[#allocation2 + $0x259] sm:$0xff]
    %v3704 = vld [vmem:[#allocation2 + $0x261] sm:$0xff]
    %v3705 = vld [vmem:[#allocation2 + $0x271] sm:$0xff]
    %v3706 = vld [vmem:[#allocation2 + $0x279] sm:$0xff]
    %v3707 = vld [vmem:[#allocation2 + $0x289] sm:$0xff]
    %v3708 = vld [vmem:[#allocation2 + $0x291] sm:$0xff]
    %v3709 = vld [vmem:[#allocation2 + $0x2a1] sm:$0xff]
    %v3710 = vld [vmem:[#allocation2 + $0x2a9] sm:$0xff]
    %v3711 = vld [vmem:[#allocation2 + $0x2b9] sm:$0xff]
    %v3712 = vld [vmem:[#allocation2 + $0x2c1] sm:$0xff]
    %v3713 = vld [vmem:[#allocation2 + $0x2d1] sm:$0xff]
    %v3714 = vld [vmem:[#allocation2 + $0x2d9] sm:$0xff]
    %v3715 = vld [vmem:[#allocation2 + $0x2e9] sm:$0xff]
    %v3716 = vld [vmem:[#allocation2 + $0x2f1] sm:$0xff]
    %v3717 = vld [vmem:[#allocation2 + $0x301] sm:$0xff]
    %v3718 = vld [vmem:[#allocation2 + $0x309] sm:$0xff]
    %v3719 = vld [vmem:[#allocation2 + $0x319] sm:$0xff]
    %v3720 = vld [vmem:[#allocation2 + $0x321] sm:$0xff]
    %v3721 = vpack.c.bf16 %v3658, %v3657
    %v3722 = vpack.c.bf16 %v3660, %v3659
    %v3723 = vpack.c.bf16 %v3662, %v3661
    %v3724 = vpack.c.bf16 %v3664, %v3663
    %v3725 = vpack.c.bf16 %v3666, %v3665
    %v3726 = vpack.c.bf16 %v3668, %v3667
    %v3727 = vpack.c.bf16 %v3670, %v3669
    %v3728 = vpack.c.bf16 %v3672, %v3671
    %v3729 = vpack.c.bf16 %v3674, %v3673
    %v3730 = vpack.c.bf16 %v3676, %v3675
    %v3731 = vpack.c.bf16 %v3678, %v3677
    %v3732 = vpack.c.bf16 %v3680, %v3679
    %v3733 = vpack.c.bf16 %v3682, %v3681
    %v3734 = vpack.c.bf16 %v3684, %v3683
    %v3735 = vpack.c.bf16 %v3686, %v3685
    %v3736 = vpack.c.bf16 %v3688, %v3687
    %v3737 = vpack.c.bf16 %v3690, %v3689
    %v3738 = vpack.c.bf16 %v3692, %v3691
    %v3739 = vpack.c.bf16 %v3694, %v3693
    %v3740 = vpack.c.bf16 %v3696, %v3695
    %v3741 = vpack.c.bf16 %v3698, %v3697
    %v3742 = vpack.c.bf16 %v3700, %v3699
    %v3743 = vpack.c.bf16 %v3702, %v3701
    %v3744 = vpack.c.bf16 %v3704, %v3703
    %v3745 = vpack.c.bf16 %v3706, %v3705
    %v3746 = vpack.c.bf16 %v3708, %v3707
    %v3747 = vpack.c.bf16 %v3710, %v3709
    %v3748 = vpack.c.bf16 %v3712, %v3711
    %v3749 = vpack.c.bf16 %v3714, %v3713
    %v3750 = vpack.c.bf16 %v3716, %v3715
    %v3751 = vpack.c.bf16 %v3718, %v3717
    %v3752 = vpack.c.bf16 %v3720, %v3719
    %v3753 = vld [vmem:[#allocation2 + $0x2] sm:$0xff]
    %v3754 = vld [vmem:[#allocation2 + $0xa] sm:$0xff]
    %v3755 = vld [vmem:[#allocation2 + $0x1a] sm:$0xff]
    %v3756 = vld [vmem:[#allocation2 + $0x22] sm:$0xff]
    %v3757 = vld [vmem:[#allocation2 + $0x32] sm:$0xff]
    %v3758 = vld [vmem:[#allocation2 + $0x3a] sm:$0xff]
    %v3759 = vld [vmem:[#allocation2 + $0x4a] sm:$0xff]
    %v3760 = vld [vmem:[#allocation2 + $0x52] sm:$0xff]
    %v3761 = vld [vmem:[#allocation2 + $0x62] sm:$0xff]
    %v3762 = vld [vmem:[#allocation2 + $0x6a] sm:$0xff]
    %v3763 = vld [vmem:[#allocation2 + $0x7a] sm:$0xff]
    %v3764 = vld [vmem:[#allocation2 + $0x82] sm:$0xff]
    %v3765 = vld [vmem:[#allocation2 + $0x92] sm:$0xff]
    %v3766 = vld [vmem:[#allocation2 + $0x9a] sm:$0xff]
    %v3767 = vld [vmem:[#allocation2 + $0xaa] sm:$0xff]
    %v3768 = vld [vmem:[#allocation2 + $0xb2] sm:$0xff]
    %v3769 = vld [vmem:[#allocation2 + $0xc2] sm:$0xff]
    %v3770 = vld [vmem:[#allocation2 + $0xca] sm:$0xff]
    %v3771 = vld [vmem:[#allocation2 + $0xda] sm:$0xff]
    %v3772 = vld [vmem:[#allocation2 + $0xe2] sm:$0xff]
    %v3773 = vld [vmem:[#allocation2 + $0xf2] sm:$0xff]
    %v3774 = vld [vmem:[#allocation2 + $0xfa] sm:$0xff]
    %v3775 = vld [vmem:[#allocation2 + $0x10a] sm:$0xff]
    %v3776 = vld [vmem:[#allocation2 + $0x112] sm:$0xff]
    %v3777 = vld [vmem:[#allocation2 + $0x122] sm:$0xff]
    %v3778 = vld [vmem:[#allocation2 + $0x12a] sm:$0xff]
    %v3779 = vld [vmem:[#allocation2 + $0x13a] sm:$0xff]
    %v3780 = vld [vmem:[#allocation2 + $0x142] sm:$0xff]
    %v3781 = vld [vmem:[#allocation2 + $0x152] sm:$0xff]
    %v3782 = vld [vmem:[#allocation2 + $0x15a] sm:$0xff]
    %v3783 = vld [vmem:[#allocation2 + $0x16a] sm:$0xff]
    %v3784 = vld [vmem:[#allocation2 + $0x172] sm:$0xff]
    %v3785 = vld [vmem:[#allocation2 + $0x1b2] sm:$0xff]
    %v3786 = vld [vmem:[#allocation2 + $0x1ba] sm:$0xff]
    %v3787 = vld [vmem:[#allocation2 + $0x1ca] sm:$0xff]
    %v3788 = vld [vmem:[#allocation2 + $0x1d2] sm:$0xff]
    %v3789 = vld [vmem:[#allocation2 + $0x1e2] sm:$0xff]
    %v3790 = vld [vmem:[#allocation2 + $0x1ea] sm:$0xff]
    %v3791 = vld [vmem:[#allocation2 + $0x1fa] sm:$0xff]
    %v3792 = vld [vmem:[#allocation2 + $0x202] sm:$0xff]
    %v3793 = vld [vmem:[#allocation2 + $0x212] sm:$0xff]
    %v3794 = vld [vmem:[#allocation2 + $0x21a] sm:$0xff]
    %v3795 = vld [vmem:[#allocation2 + $0x22a] sm:$0xff]
    %v3796 = vld [vmem:[#allocation2 + $0x232] sm:$0xff]
    %v3797 = vld [vmem:[#allocation2 + $0x242] sm:$0xff]
    %v3798 = vld [vmem:[#allocation2 + $0x24a] sm:$0xff]
    %v3799 = vld [vmem:[#allocation2 + $0x25a] sm:$0xff]
    %v3800 = vld [vmem:[#allocation2 + $0x262] sm:$0xff]
    %v3801 = vld [vmem:[#allocation2 + $0x272] sm:$0xff]
    %v3802 = vld [vmem:[#allocation2 + $0x27a] sm:$0xff]
    %v3803 = vld [vmem:[#allocation2 + $0x28a] sm:$0xff]
    %v3804 = vld [vmem:[#allocation2 + $0x292] sm:$0xff]
    %v3805 = vld [vmem:[#allocation2 + $0x2a2] sm:$0xff]
    %v3806 = vld [vmem:[#allocation2 + $0x2aa] sm:$0xff]
    %v3807 = vld [vmem:[#allocation2 + $0x2ba] sm:$0xff]
    %v3808 = vld [vmem:[#allocation2 + $0x2c2] sm:$0xff]
    %v3809 = vld [vmem:[#allocation2 + $0x2d2] sm:$0xff]
    %v3810 = vld [vmem:[#allocation2 + $0x2da] sm:$0xff]
    %v3811 = vld [vmem:[#allocation2 + $0x2ea] sm:$0xff]
    %v3812 = vld [vmem:[#allocation2 + $0x2f2] sm:$0xff]
    %v3813 = vld [vmem:[#allocation2 + $0x302] sm:$0xff]
    %v3814 = vld [vmem:[#allocation2 + $0x30a] sm:$0xff]
    %v3815 = vld [vmem:[#allocation2 + $0x31a] sm:$0xff]
    %v3816 = vld [vmem:[#allocation2 + $0x322] sm:$0xff]
    %v3817 = vpack.c.bf16 %v3754, %v3753
    %v3818 = vpack.c.bf16 %v3756, %v3755
    %v3819 = vpack.c.bf16 %v3758, %v3757
    %v3820 = vpack.c.bf16 %v3760, %v3759
    %v3821 = vpack.c.bf16 %v3762, %v3761
    %v3822 = vpack.c.bf16 %v3764, %v3763
    %v3823 = vpack.c.bf16 %v3766, %v3765
    %v3824 = vpack.c.bf16 %v3768, %v3767
    %v3825 = vpack.c.bf16 %v3770, %v3769
    %v3826 = vpack.c.bf16 %v3772, %v3771
    %v3827 = vpack.c.bf16 %v3774, %v3773
    %v3828 = vpack.c.bf16 %v3776, %v3775
    %v3829 = vpack.c.bf16 %v3778, %v3777
    %v3830 = vpack.c.bf16 %v3780, %v3779
    %v3831 = vpack.c.bf16 %v3782, %v3781
    %v3832 = vpack.c.bf16 %v3784, %v3783
    %v3833 = vpack.c.bf16 %v3786, %v3785
    %v3834 = vpack.c.bf16 %v3788, %v3787
    %v3835 = vpack.c.bf16 %v3790, %v3789
    %v3836 = vpack.c.bf16 %v3792, %v3791
    %v3837 = vpack.c.bf16 %v3794, %v3793
    %v3838 = vpack.c.bf16 %v3796, %v3795
    %v3839 = vpack.c.bf16 %v3798, %v3797
    %v3840 = vpack.c.bf16 %v3800, %v3799
    %v3841 = vpack.c.bf16 %v3802, %v3801
    %v3842 = vpack.c.bf16 %v3804, %v3803
    %v3843 = vpack.c.bf16 %v3806, %v3805
    %v3844 = vpack.c.bf16 %v3808, %v3807
    %v3845 = vpack.c.bf16 %v3810, %v3809
    %v3846 = vpack.c.bf16 %v3812, %v3811
    %v3847 = vpack.c.bf16 %v3814, %v3813
    %v3848 = vpack.c.bf16 %v3816, %v3815
    %v3849 = vld [vmem:[%s3432] sm:$0xff]
    %v3850 = vld [vmem:[%s3432 + $0x8] sm:$0xff]
    %v3851 = vld [vmem:[%s3432 + $0x18] sm:$0xff]
    %v3852 = vld [vmem:[%s3432 + $0x20] sm:$0xff]
    %v3853 = vld [vmem:[%s3432 + $0x30] sm:$0xff]
    %v3854 = vld [vmem:[%s3432 + $0x38] sm:$0xff]
    %v3855 = vld [vmem:[%s3432 + $0x48] sm:$0xff]
    %v3856 = vld [vmem:[%s3432 + $0x50] sm:$0xff]
    %v3857 = vld [vmem:[%s3432 + $0x60] sm:$0xff]
    %v3858 = vld [vmem:[%s3432 + $0x68] sm:$0xff]
    %v3859 = vld [vmem:[%s3432 + $0x78] sm:$0xff]
    %v3860 = vld [vmem:[%s3432 + $0x80] sm:$0xff]
    %v3861 = vld [vmem:[%s3432 + $0x90] sm:$0xff]
    %v3862 = vld [vmem:[%s3432 + $0x98] sm:$0xff]
    %v3863 = vld [vmem:[%s3432 + $0xa8] sm:$0xff]
    %v3864 = vld [vmem:[%s3432 + $0xb0] sm:$0xff]
    %v3865 = vld [vmem:[%s3432 + $0xc0] sm:$0xff]
    %v3866 = vld [vmem:[%s3432 + $0xc8] sm:$0xff]
    %v3867 = vld [vmem:[%s3432 + $0xd8] sm:$0xff]
    %v3868 = vld [vmem:[%s3432 + $0xe0] sm:$0xff]
    %v3869 = vld [vmem:[%s3432 + $0xf0] sm:$0xff]
    %v3870 = vld [vmem:[%s3432 + $0xf8] sm:$0xff]
    %v3871 = vld [vmem:[%s3432 + $0x108] sm:$0xff]
    %v3872 = vld [vmem:[%s3432 + $0x110] sm:$0xff]
    %v3873 = vld [vmem:[%s3432 + $0x120] sm:$0xff]
    %v3874 = vld [vmem:[%s3432 + $0x128] sm:$0xff]
    %v3875 = vld [vmem:[%s3432 + $0x138] sm:$0xff]
    %v3876 = vld [vmem:[%s3432 + $0x140] sm:$0xff]
    %v3877 = vld [vmem:[%s3432 + $0x150] sm:$0xff]
    %v3878 = vld [vmem:[%s3432 + $0x158] sm:$0xff]
    %v3879 = vld [vmem:[%s3432 + $0x168] sm:$0xff]
    %v3880 = vld [vmem:[%s3432 + $0x170] sm:$0xff]
    %v3881 = vld [vmem:[%s3432 + $0x1b0] sm:$0xff]
    %v3882 = vld [vmem:[%s3432 + $0x1b8] sm:$0xff]
    %v3883 = vld [vmem:[%s3432 + $0x1c8] sm:$0xff]
    %v3884 = vld [vmem:[%s3432 + $0x1d0] sm:$0xff]
    %v3885 = vld [vmem:[%s3432 + $0x1e0] sm:$0xff]
    %v3886 = vld [vmem:[%s3432 + $0x1e8] sm:$0xff]
    %v3887 = vld [vmem:[%s3432 + $0x1f8] sm:$0xff]
    %v3888 = vld [vmem:[%s3432 + $0x200] sm:$0xff]
    %v3889 = vld [vmem:[%s3432 + $0x210] sm:$0xff]
    %v3890 = vld [vmem:[%s3432 + $0x218] sm:$0xff]
    %v3891 = vld [vmem:[%s3432 + $0x228] sm:$0xff]
    %v3892 = vld [vmem:[%s3432 + $0x230] sm:$0xff]
    %v3893 = vld [vmem:[%s3432 + $0x240] sm:$0xff]
    %v3894 = vld [vmem:[%s3432 + $0x248] sm:$0xff]
    %v3895 = vld [vmem:[%s3432 + $0x258] sm:$0xff]
    %v3896 = vld [vmem:[%s3432 + $0x260] sm:$0xff]
    %v3897 = vld [vmem:[%s3432 + $0x270] sm:$0xff]
    %v3898 = vld [vmem:[%s3432 + $0x278] sm:$0xff]
    %v3899 = vld [vmem:[%s3432 + $0x288] sm:$0xff]
    %v3900 = vld [vmem:[%s3432 + $0x290] sm:$0xff]
    %v3901 = vld [vmem:[%s3432 + $0x2a0] sm:$0xff]
    %v3902 = vld [vmem:[%s3432 + $0x2a8] sm:$0xff]
    %v3903 = vld [vmem:[%s3432 + $0x2b8] sm:$0xff]
    %v3904 = vld [vmem:[%s3432 + $0x2c0] sm:$0xff]
    %v3905 = vld [vmem:[%s3432 + $0x2d0] sm:$0xff]
    %v3906 = vld [vmem:[%s3432 + $0x2d8] sm:$0xff]
    %v3907 = vld [vmem:[%s3432 + $0x2e8] sm:$0xff]
    %v3908 = vld [vmem:[%s3432 + $0x2f0] sm:$0xff]
    %v3909 = vld [vmem:[%s3432 + $0x300] sm:$0xff]
    %v3910 = vld [vmem:[%s3432 + $0x308] sm:$0xff]
    %v3911 = vld [vmem:[%s3432 + $0x318] sm:$0xff]
    %v3912 = vld [vmem:[%s3432 + $0x320] sm:$0xff]
    %v3913 = vpack.c.bf16 %v3850, %v3849
    %v3914 = vpack.c.bf16 %v3852, %v3851
    %v3915 = vpack.c.bf16 %v3854, %v3853
    %v3916 = vpack.c.bf16 %v3856, %v3855
    %v3917 = vpack.c.bf16 %v3858, %v3857
    %v3918 = vpack.c.bf16 %v3860, %v3859
    %v3919 = vpack.c.bf16 %v3862, %v3861
    %v3920 = vpack.c.bf16 %v3864, %v3863
    %v3921 = vpack.c.bf16 %v3866, %v3865
    %v3922 = vpack.c.bf16 %v3868, %v3867
    %v3923 = vpack.c.bf16 %v3870, %v3869
    %v3924 = vpack.c.bf16 %v3872, %v3871
    %v3925 = vpack.c.bf16 %v3874, %v3873
    %v3926 = vpack.c.bf16 %v3876, %v3875
    %v3927 = vpack.c.bf16 %v3878, %v3877
    %v3928 = vpack.c.bf16 %v3880, %v3879
    %v3929 = vpack.c.bf16 %v3882, %v3881
    %v3930 = vpack.c.bf16 %v3884, %v3883
    %v3931 = vpack.c.bf16 %v3886, %v3885
    %v3932 = vpack.c.bf16 %v3888, %v3887
    %v3933 = vpack.c.bf16 %v3890, %v3889
    %v3934 = vpack.c.bf16 %v3892, %v3891
    %v3935 = vpack.c.bf16 %v3894, %v3893
    %v3936 = vpack.c.bf16 %v3896, %v3895
    %v3937 = vpack.c.bf16 %v3898, %v3897
    %v3938 = vpack.c.bf16 %v3900, %v3899
    %v3939 = vpack.c.bf16 %v3902, %v3901
    %v3940 = vpack.c.bf16 %v3904, %v3903
    %v3941 = vpack.c.bf16 %v3906, %v3905
    %v3942 = vpack.c.bf16 %v3908, %v3907
    %v3943 = vpack.c.bf16 %v3910, %v3909
    %v3944 = vpack.c.bf16 %v3912, %v3911
    %v3945 = vld [vmem:[%s3432 + $0x1] sm:$0xff]
    %v3946 = vld [vmem:[%s3432 + $0x9] sm:$0xff]
    %v3947 = vld [vmem:[%s3432 + $0x19] sm:$0xff]
    %v3948 = vld [vmem:[%s3432 + $0x21] sm:$0xff]
    %v3949 = vld [vmem:[%s3432 + $0x31] sm:$0xff]
    %v3950 = vld [vmem:[%s3432 + $0x39] sm:$0xff]
    %v3951 = vld [vmem:[%s3432 + $0x49] sm:$0xff]
    %v3952 = vld [vmem:[%s3432 + $0x51] sm:$0xff]
    %v3953 = vld [vmem:[%s3432 + $0x61] sm:$0xff]
    %v3954 = vld [vmem:[%s3432 + $0x69] sm:$0xff]
    %v3955 = vld [vmem:[%s3432 + $0x79] sm:$0xff]
    %v3956 = vld [vmem:[%s3432 + $0x81] sm:$0xff]
    %v3957 = vld [vmem:[%s3432 + $0x91] sm:$0xff]
    %v3958 = vld [vmem:[%s3432 + $0x99] sm:$0xff]
    %v3959 = vld [vmem:[%s3432 + $0xa9] sm:$0xff]
    %v3960 = vld [vmem:[%s3432 + $0xb1] sm:$0xff]
    %v3961 = vld [vmem:[%s3432 + $0xc1] sm:$0xff]
    %v3962 = vld [vmem:[%s3432 + $0xc9] sm:$0xff]
    %v3963 = vld [vmem:[%s3432 + $0xd9] sm:$0xff]
    %v3964 = vld [vmem:[%s3432 + $0xe1] sm:$0xff]
    %v3965 = vld [vmem:[%s3432 + $0xf1] sm:$0xff]
    %v3966 = vld [vmem:[%s3432 + $0xf9] sm:$0xff]
    %v3967 = vld [vmem:[%s3432 + $0x109] sm:$0xff]
    %v3968 = vld [vmem:[%s3432 + $0x111] sm:$0xff]
    %v3969 = vld [vmem:[%s3432 + $0x121] sm:$0xff]
    %v3970 = vld [vmem:[%s3432 + $0x129] sm:$0xff]
    %v3971 = vld [vmem:[%s3432 + $0x139] sm:$0xff]
    %v3972 = vld [vmem:[%s3432 + $0x141] sm:$0xff]
    %v3973 = vld [vmem:[%s3432 + $0x151] sm:$0xff]
    %v3974 = vld [vmem:[%s3432 + $0x159] sm:$0xff]
    %v3975 = vld [vmem:[%s3432 + $0x169] sm:$0xff]
    %v3976 = vld [vmem:[%s3432 + $0x171] sm:$0xff]
    %v3977 = vld [vmem:[%s3432 + $0x1b1] sm:$0xff]
    %v3978 = vld [vmem:[%s3432 + $0x1b9] sm:$0xff]
    %v3979 = vld [vmem:[%s3432 + $0x1c9] sm:$0xff]
    %v3980 = vld [vmem:[%s3432 + $0x1d1] sm:$0xff]
    %v3981 = vld [vmem:[%s3432 + $0x1e1] sm:$0xff]
    %v3982 = vld [vmem:[%s3432 + $0x1e9] sm:$0xff]
    %v3983 = vld [vmem:[%s3432 + $0x1f9] sm:$0xff]
    %v3984 = vld [vmem:[%s3432 + $0x201] sm:$0xff]
    %v3985 = vld [vmem:[%s3432 + $0x211] sm:$0xff]
    %v3986 = vld [vmem:[%s3432 + $0x219] sm:$0xff]
    %v3987 = vld [vmem:[%s3432 + $0x229] sm:$0xff]
    %v3988 = vld [vmem:[%s3432 + $0x231] sm:$0xff]
    %v3989 = vld [vmem:[%s3432 + $0x241] sm:$0xff]
    %v3990 = vld [vmem:[%s3432 + $0x249] sm:$0xff]
    %v3991 = vld [vmem:[%s3432 + $0x259] sm:$0xff]
    %v3992 = vld [vmem:[%s3432 + $0x261] sm:$0xff]
    %v3993 = vld [vmem:[%s3432 + $0x271] sm:$0xff]
    %v3994 = vld [vmem:[%s3432 + $0x279] sm:$0xff]
    %v3995 = vld [vmem:[%s3432 + $0x289] sm:$0xff]
    %v3996 = vld [vmem:[%s3432 + $0x291] sm:$0xff]
    %v3997 = vld [vmem:[%s3432 + $0x2a1] sm:$0xff]
    %v3998 = vld [vmem:[%s3432 + $0x2a9] sm:$0xff]
    %v3999 = vld [vmem:[%s3432 + $0x2b9] sm:$0xff]
    %v4000 = vld [vmem:[%s3432 + $0x2c1] sm:$0xff]
    %v4001 = vld [vmem:[%s3432 + $0x2d1] sm:$0xff]
    %v4002 = vld [vmem:[%s3432 + $0x2d9] sm:$0xff]
    %v4003 = vld [vmem:[%s3432 + $0x2e9] sm:$0xff]
    %v4004 = vld [vmem:[%s3432 + $0x2f1] sm:$0xff]
    %v4005 = vld [vmem:[%s3432 + $0x301] sm:$0xff]
    %v4006 = vld [vmem:[%s3432 + $0x309] sm:$0xff]
    %v4007 = vld [vmem:[%s3432 + $0x319] sm:$0xff]
    %v4008 = vld [vmem:[%s3432 + $0x321] sm:$0xff]
    %v4009 = vpack.c.bf16 %v3946, %v3945
    %v4010 = vpack.c.bf16 %v3948, %v3947
    %v4011 = vpack.c.bf16 %v3950, %v3949
    %v4012 = vpack.c.bf16 %v3952, %v3951
    %v4013 = vpack.c.bf16 %v3954, %v3953
    %v4014 = vpack.c.bf16 %v3956, %v3955
    %v4015 = vpack.c.bf16 %v3958, %v3957
    %v4016 = vpack.c.bf16 %v3960, %v3959
    %v4017 = vpack.c.bf16 %v3962, %v3961
    %v4018 = vpack.c.bf16 %v3964, %v3963
    %v4019 = vpack.c.bf16 %v3966, %v3965
    %v4020 = vpack.c.bf16 %v3968, %v3967
    %v4021 = vpack.c.bf16 %v3970, %v3969
    %v4022 = vpack.c.bf16 %v3972, %v3971
    %v4023 = vpack.c.bf16 %v3974, %v3973
    %v4024 = vpack.c.bf16 %v3976, %v3975
    %v4025 = vpack.c.bf16 %v3978, %v3977
    %v4026 = vpack.c.bf16 %v3980, %v3979
    %v4027 = vpack.c.bf16 %v3982, %v3981
    %v4028 = vpack.c.bf16 %v3984, %v3983
    %v4029 = vpack.c.bf16 %v3986, %v3985
    %v4030 = vpack.c.bf16 %v3988, %v3987
    %v4031 = vpack.c.bf16 %v3990, %v3989
    %v4032 = vpack.c.bf16 %v3992, %v3991
    %v4033 = vpack.c.bf16 %v3994, %v3993
    %v4034 = vpack.c.bf16 %v3996, %v3995
    %v4035 = vpack.c.bf16 %v3998, %v3997
    %v4036 = vpack.c.bf16 %v4000, %v3999
    %v4037 = vpack.c.bf16 %v4002, %v4001
    %v4038 = vpack.c.bf16 %v4004, %v4003
    %v4039 = vpack.c.bf16 %v4006, %v4005
    %v4040 = vpack.c.bf16 %v4008, %v4007
    %v4041 = vld [vmem:[%s3432 + $0x2] sm:$0xff]
    %v4042 = vld [vmem:[%s3432 + $0xa] sm:$0xff]
    %v4043 = vld [vmem:[%s3432 + $0x1a] sm:$0xff]
    %v4044 = vld [vmem:[%s3432 + $0x22] sm:$0xff]
    %v4045 = vld [vmem:[%s3432 + $0x32] sm:$0xff]
    %v4046 = vld [vmem:[%s3432 + $0x3a] sm:$0xff]
    %v4047 = vld [vmem:[%s3432 + $0x4a] sm:$0xff]
    %v4048 = vld [vmem:[%s3432 + $0x52] sm:$0xff]
    %v4049 = vld [vmem:[%s3432 + $0x62] sm:$0xff]
    %v4050 = vld [vmem:[%s3432 + $0x6a] sm:$0xff]
    %v4051 = vld [vmem:[%s3432 + $0x7a] sm:$0xff]
    %v4052 = vld [vmem:[%s3432 + $0x82] sm:$0xff]
    %v4053 = vld [vmem:[%s3432 + $0x92] sm:$0xff]
    %v4054 = vld [vmem:[%s3432 + $0x9a] sm:$0xff]
    %v4055 = vld [vmem:[%s3432 + $0xaa] sm:$0xff]
    %v4056 = vld [vmem:[%s3432 + $0xb2] sm:$0xff]
    %v4057 = vld [vmem:[%s3432 + $0xc2] sm:$0xff]
    %v4058 = vld [vmem:[%s3432 + $0xca] sm:$0xff]
    %v4059 = vld [vmem:[%s3432 + $0xda] sm:$0xff]
    %v4060 = vld [vmem:[%s3432 + $0xe2] sm:$0xff]
    %v4061 = vld [vmem:[%s3432 + $0xf2] sm:$0xff]
    %v4062 = vld [vmem:[%s3432 + $0xfa] sm:$0xff]
    %v4063 = vld [vmem:[%s3432 + $0x10a] sm:$0xff]
    %v4064 = vld [vmem:[%s3432 + $0x112] sm:$0xff]
    %v4065 = vld [vmem:[%s3432 + $0x122] sm:$0xff]
    %v4066 = vld [vmem:[%s3432 + $0x12a] sm:$0xff]
    %v4067 = vld [vmem:[%s3432 + $0x13a] sm:$0xff]
    %v4068 = vld [vmem:[%s3432 + $0x142] sm:$0xff]
    %v4069 = vld [vmem:[%s3432 + $0x152] sm:$0xff]
    %v4070 = vld [vmem:[%s3432 + $0x15a] sm:$0xff]
    %v4071 = vld [vmem:[%s3432 + $0x16a] sm:$0xff]
    %v4072 = vld [vmem:[%s3432 + $0x172] sm:$0xff]
    %v4073 = vld [vmem:[%s3432 + $0x1b2] sm:$0xff]
    %v4074 = vld [vmem:[%s3432 + $0x1ba] sm:$0xff]
    %v4075 = vld [vmem:[%s3432 + $0x1ca] sm:$0xff]
    %v4076 = vld [vmem:[%s3432 + $0x1d2] sm:$0xff]
    %v4077 = vld [vmem:[%s3432 + $0x1e2] sm:$0xff]
    %v4078 = vld [vmem:[%s3432 + $0x1ea] sm:$0xff]
    %v4079 = vld [vmem:[%s3432 + $0x1fa] sm:$0xff]
    %v4080 = vld [vmem:[%s3432 + $0x202] sm:$0xff]
    %v4081 = vld [vmem:[%s3432 + $0x212] sm:$0xff]
    %v4082 = vld [vmem:[%s3432 + $0x21a] sm:$0xff]
    %v4083 = vld [vmem:[%s3432 + $0x22a] sm:$0xff]
    %v4084 = vld [vmem:[%s3432 + $0x232] sm:$0xff]
    %v4085 = vld [vmem:[%s3432 + $0x242] sm:$0xff]
    %v4086 = vld [vmem:[%s3432 + $0x24a] sm:$0xff]
    %v4087 = vld [vmem:[%s3432 + $0x25a] sm:$0xff]
    %v4088 = vld [vmem:[%s3432 + $0x262] sm:$0xff]
    %v4089 = vld [vmem:[%s3432 + $0x272] sm:$0xff]
    %v4090 = vld [vmem:[%s3432 + $0x27a] sm:$0xff]
    %v4091 = vld [vmem:[%s3432 + $0x28a] sm:$0xff]
    %v4092 = vld [vmem:[%s3432 + $0x292] sm:$0xff]
    %v4093 = vld [vmem:[%s3432 + $0x2a2] sm:$0xff]
    %v4094 = vld [vmem:[%s3432 + $0x2aa] sm:$0xff]
    %v4095 = vld [vmem:[%s3432 + $0x2ba] sm:$0xff]
    %v4096 = vld [vmem:[%s3432 + $0x2c2] sm:$0xff]
    %v4097 = vld [vmem:[%s3432 + $0x2d2] sm:$0xff]
    %v4098 = vld [vmem:[%s3432 + $0x2da] sm:$0xff]
    %v4099 = vld [vmem:[%s3432 + $0x2ea] sm:$0xff]
    %v4100 = vld [vmem:[%s3432 + $0x2f2] sm:$0xff]
    %v4101 = vld [vmem:[%s3432 + $0x302] sm:$0xff]
    %v4102 = vld [vmem:[%s3432 + $0x30a] sm:$0xff]
    %v4103 = vld [vmem:[%s3432 + $0x31a] sm:$0xff]
    %v4104 = vld [vmem:[%s3432 + $0x322] sm:$0xff]
    %v4105 = vpack.c.bf16 %v4042, %v4041
    %v4106 = vpack.c.bf16 %v4044, %v4043
    %v4107 = vpack.c.bf16 %v4046, %v4045
    %v4108 = vpack.c.bf16 %v4048, %v4047
    %v4109 = vpack.c.bf16 %v4050, %v4049
    %v4110 = vpack.c.bf16 %v4052, %v4051
    %v4111 = vpack.c.bf16 %v4054, %v4053
    %v4112 = vpack.c.bf16 %v4056, %v4055
    %v4113 = vpack.c.bf16 %v4058, %v4057
    %v4114 = vpack.c.bf16 %v4060, %v4059
    %v4115 = vpack.c.bf16 %v4062, %v4061
    %v4116 = vpack.c.bf16 %v4064, %v4063
    %v4117 = vpack.c.bf16 %v4066, %v4065
    %v4118 = vpack.c.bf16 %v4068, %v4067
    %v4119 = vpack.c.bf16 %v4070, %v4069
    %v4120 = vpack.c.bf16 %v4072, %v4071
    %v4121 = vpack.c.bf16 %v4074, %v4073
    %v4122 = vpack.c.bf16 %v4076, %v4075
    %v4123 = vpack.c.bf16 %v4078, %v4077
    %v4124 = vpack.c.bf16 %v4080, %v4079
    %v4125 = vpack.c.bf16 %v4082, %v4081
    %v4126 = vpack.c.bf16 %v4084, %v4083
    %v4127 = vpack.c.bf16 %v4086, %v4085
    %v4128 = vpack.c.bf16 %v4088, %v4087
    %v4129 = vpack.c.bf16 %v4090, %v4089
    %v4130 = vpack.c.bf16 %v4092, %v4091
    %v4131 = vpack.c.bf16 %v4094, %v4093
    %v4132 = vpack.c.bf16 %v4096, %v4095
    %v4133 = vpack.c.bf16 %v4098, %v4097
    %v4134 = vpack.c.bf16 %v4100, %v4099
    %v4135 = vpack.c.bf16 %v4102, %v4101
    %v4136 = vpack.c.bf16 %v4104, %v4103
    %s4137 = scalar_lea.vmem [#allocation2], 48
    %v4138 = vld [vmem:[%s4137] sm:$0xff]
    %v4139 = vld [vmem:[%s4137 + $0x8] sm:$0xff]
    %v4140 = vld [vmem:[%s4137 + $0x18] sm:$0xff]
    %v4141 = vld [vmem:[%s4137 + $0x20] sm:$0xff]
    %v4142 = vld [vmem:[%s4137 + $0x30] sm:$0xff]
    %v4143 = vld [vmem:[%s4137 + $0x38] sm:$0xff]
    %v4144 = vld [vmem:[%s4137 + $0x48] sm:$0xff]
    %v4145 = vld [vmem:[%s4137 + $0x50] sm:$0xff]
    %v4146 = vld [vmem:[%s4137 + $0x60] sm:$0xff]
    %v4147 = vld [vmem:[%s4137 + $0x68] sm:$0xff]
    %v4148 = vld [vmem:[%s4137 + $0x78] sm:$0xff]
    %v4149 = vld [vmem:[%s4137 + $0x80] sm:$0xff]
    %v4150 = vld [vmem:[%s4137 + $0x90] sm:$0xff]
    %v4151 = vld [vmem:[%s4137 + $0x98] sm:$0xff]
    %v4152 = vld [vmem:[%s4137 + $0xa8] sm:$0xff]
    %v4153 = vld [vmem:[%s4137 + $0xb0] sm:$0xff]
    %v4154 = vld [vmem:[%s4137 + $0xc0] sm:$0xff]
    %v4155 = vld [vmem:[%s4137 + $0xc8] sm:$0xff]
    %v4156 = vld [vmem:[%s4137 + $0xd8] sm:$0xff]
    %v4157 = vld [vmem:[%s4137 + $0xe0] sm:$0xff]
    %v4158 = vld [vmem:[%s4137 + $0xf0] sm:$0xff]
    %v4159 = vld [vmem:[%s4137 + $0xf8] sm:$0xff]
    %v4160 = vld [vmem:[%s4137 + $0x108] sm:$0xff]
    %v4161 = vld [vmem:[%s4137 + $0x110] sm:$0xff]
    %v4162 = vld [vmem:[%s4137 + $0x120] sm:$0xff]
    %v4163 = vld [vmem:[%s4137 + $0x128] sm:$0xff]
    %v4164 = vld [vmem:[%s4137 + $0x138] sm:$0xff]
    %v4165 = vld [vmem:[%s4137 + $0x140] sm:$0xff]
    %v4166 = vld [vmem:[%s4137 + $0x150] sm:$0xff]
    %v4167 = vld [vmem:[%s4137 + $0x158] sm:$0xff]
    %v4168 = vld [vmem:[%s4137 + $0x168] sm:$0xff]
    %v4169 = vld [vmem:[%s4137 + $0x170] sm:$0xff]
    %v4170 = vld [vmem:[%s4137 + $0x1b0] sm:$0xff]
    %v4171 = vld [vmem:[%s4137 + $0x1b8] sm:$0xff]
    %v4172 = vld [vmem:[%s4137 + $0x1c8] sm:$0xff]
    %v4173 = vld [vmem:[%s4137 + $0x1d0] sm:$0xff]
    %v4174 = vld [vmem:[%s4137 + $0x1e0] sm:$0xff]
    %v4175 = vld [vmem:[%s4137 + $0x1e8] sm:$0xff]
    %v4176 = vld [vmem:[%s4137 + $0x1f8] sm:$0xff]
    %v4177 = vld [vmem:[%s4137 + $0x200] sm:$0xff]
    %v4178 = vld [vmem:[%s4137 + $0x210] sm:$0xff]
    %v4179 = vld [vmem:[%s4137 + $0x218] sm:$0xff]
    %v4180 = vld [vmem:[%s4137 + $0x228] sm:$0xff]
    %v4181 = vld [vmem:[%s4137 + $0x230] sm:$0xff]
    %v4182 = vld [vmem:[%s4137 + $0x240] sm:$0xff]
    %v4183 = vld [vmem:[%s4137 + $0x248] sm:$0xff]
    %v4184 = vld [vmem:[%s4137 + $0x258] sm:$0xff]
    %v4185 = vld [vmem:[%s4137 + $0x260] sm:$0xff]
    %v4186 = vld [vmem:[%s4137 + $0x270] sm:$0xff]
    %v4187 = vld [vmem:[%s4137 + $0x278] sm:$0xff]
    %v4188 = vld [vmem:[%s4137 + $0x288] sm:$0xff]
    %v4189 = vld [vmem:[%s4137 + $0x290] sm:$0xff]
    %v4190 = vld [vmem:[%s4137 + $0x2a0] sm:$0xff]
    %v4191 = vld [vmem:[%s4137 + $0x2a8] sm:$0xff]
    %v4192 = vld [vmem:[%s4137 + $0x2b8] sm:$0xff]
    %v4193 = vld [vmem:[%s4137 + $0x2c0] sm:$0xff]
    %v4194 = vld [vmem:[%s4137 + $0x2d0] sm:$0xff]
    %v4195 = vld [vmem:[%s4137 + $0x2d8] sm:$0xff]
    %v4196 = vld [vmem:[%s4137 + $0x2e8] sm:$0xff]
    %v4197 = vld [vmem:[%s4137 + $0x2f0] sm:$0xff]
    %v4198 = vld [vmem:[%s4137 + $0x300] sm:$0xff]
    %v4199 = vld [vmem:[%s4137 + $0x308] sm:$0xff]
    %v4200 = vld [vmem:[%s4137 + $0x318] sm:$0xff]
    %v4201 = vld [vmem:[%s4137 + $0x320] sm:$0xff]
    %v4202 = vpack.c.bf16 %v4139, %v4138
    %v4203 = vpack.c.bf16 %v4141, %v4140
    %v4204 = vpack.c.bf16 %v4143, %v4142
    %v4205 = vpack.c.bf16 %v4145, %v4144
    %v4206 = vpack.c.bf16 %v4147, %v4146
    %v4207 = vpack.c.bf16 %v4149, %v4148
    %v4208 = vpack.c.bf16 %v4151, %v4150
    %v4209 = vpack.c.bf16 %v4153, %v4152
    %v4210 = vpack.c.bf16 %v4155, %v4154
    %v4211 = vpack.c.bf16 %v4157, %v4156
    %v4212 = vpack.c.bf16 %v4159, %v4158
    %v4213 = vpack.c.bf16 %v4161, %v4160
    %v4214 = vpack.c.bf16 %v4163, %v4162
    %v4215 = vpack.c.bf16 %v4165, %v4164
    %v4216 = vpack.c.bf16 %v4167, %v4166
    %v4217 = vpack.c.bf16 %v4169, %v4168
    %v4218 = vpack.c.bf16 %v4171, %v4170
    %v4219 = vpack.c.bf16 %v4173, %v4172
    %v4220 = vpack.c.bf16 %v4175, %v4174
    %v4221 = vpack.c.bf16 %v4177, %v4176
    %v4222 = vpack.c.bf16 %v4179, %v4178
    %v4223 = vpack.c.bf16 %v4181, %v4180
    %v4224 = vpack.c.bf16 %v4183, %v4182
    %v4225 = vpack.c.bf16 %v4185, %v4184
    %v4226 = vpack.c.bf16 %v4187, %v4186
    %v4227 = vpack.c.bf16 %v4189, %v4188
    %v4228 = vpack.c.bf16 %v4191, %v4190
    %v4229 = vpack.c.bf16 %v4193, %v4192
    %v4230 = vpack.c.bf16 %v4195, %v4194
    %v4231 = vpack.c.bf16 %v4197, %v4196
    %v4232 = vpack.c.bf16 %v4199, %v4198
    %v4233 = vpack.c.bf16 %v4201, %v4200
    %v4234 = vld [vmem:[%s4137 + $0x1] sm:$0xff]
    %v4235 = vld [vmem:[%s4137 + $0x9] sm:$0xff]
    %v4236 = vld [vmem:[%s4137 + $0x19] sm:$0xff]
    %v4237 = vld [vmem:[%s4137 + $0x21] sm:$0xff]
    %v4238 = vld [vmem:[%s4137 + $0x31] sm:$0xff]
    %v4239 = vld [vmem:[%s4137 + $0x39] sm:$0xff]
    %v4240 = vld [vmem:[%s4137 + $0x49] sm:$0xff]
    %v4241 = vld [vmem:[%s4137 + $0x51] sm:$0xff]
    %v4242 = vld [vmem:[%s4137 + $0x61] sm:$0xff]
    %v4243 = vld [vmem:[%s4137 + $0x69] sm:$0xff]
    %v4244 = vld [vmem:[%s4137 + $0x79] sm:$0xff]
    %v4245 = vld [vmem:[%s4137 + $0x81] sm:$0xff]
    %v4246 = vld [vmem:[%s4137 + $0x91] sm:$0xff]
    %v4247 = vld [vmem:[%s4137 + $0x99] sm:$0xff]
    %v4248 = vld [vmem:[%s4137 + $0xa9] sm:$0xff]
    %v4249 = vld [vmem:[%s4137 + $0xb1] sm:$0xff]
    %v4250 = vld [vmem:[%s4137 + $0xc1] sm:$0xff]
    %v4251 = vld [vmem:[%s4137 + $0xc9] sm:$0xff]
    %v4252 = vld [vmem:[%s4137 + $0xd9] sm:$0xff]
    %v4253 = vld [vmem:[%s4137 + $0xe1] sm:$0xff]
    %v4254 = vld [vmem:[%s4137 + $0xf1] sm:$0xff]
    %v4255 = vld [vmem:[%s4137 + $0xf9] sm:$0xff]
    %v4256 = vld [vmem:[%s4137 + $0x109] sm:$0xff]
    %v4257 = vld [vmem:[%s4137 + $0x111] sm:$0xff]
    %v4258 = vld [vmem:[%s4137 + $0x121] sm:$0xff]
    %v4259 = vld [vmem:[%s4137 + $0x129] sm:$0xff]
    %v4260 = vld [vmem:[%s4137 + $0x139] sm:$0xff]
    %v4261 = vld [vmem:[%s4137 + $0x141] sm:$0xff]
    %v4262 = vld [vmem:[%s4137 + $0x151] sm:$0xff]
    %v4263 = vld [vmem:[%s4137 + $0x159] sm:$0xff]
    %v4264 = vld [vmem:[%s4137 + $0x169] sm:$0xff]
    %v4265 = vld [vmem:[%s4137 + $0x171] sm:$0xff]
    %v4266 = vld [vmem:[%s4137 + $0x1b1] sm:$0xff]
    %v4267 = vld [vmem:[%s4137 + $0x1b9] sm:$0xff]
    %v4268 = vld [vmem:[%s4137 + $0x1c9] sm:$0xff]
    %v4269 = vld [vmem:[%s4137 + $0x1d1] sm:$0xff]
    %v4270 = vld [vmem:[%s4137 + $0x1e1] sm:$0xff]
    %v4271 = vld [vmem:[%s4137 + $0x1e9] sm:$0xff]
    %v4272 = vld [vmem:[%s4137 + $0x1f9] sm:$0xff]
    %v4273 = vld [vmem:[%s4137 + $0x201] sm:$0xff]
    %v4274 = vld [vmem:[%s4137 + $0x211] sm:$0xff]
    %v4275 = vld [vmem:[%s4137 + $0x219] sm:$0xff]
    %v4276 = vld [vmem:[%s4137 + $0x229] sm:$0xff]
    %v4277 = vld [vmem:[%s4137 + $0x231] sm:$0xff]
    %v4278 = vld [vmem:[%s4137 + $0x241] sm:$0xff]
    %v4279 = vld [vmem:[%s4137 + $0x249] sm:$0xff]
    %v4280 = vld [vmem:[%s4137 + $0x259] sm:$0xff]
    %v4281 = vld [vmem:[%s4137 + $0x261] sm:$0xff]
    %v4282 = vld [vmem:[%s4137 + $0x271] sm:$0xff]
    %v4283 = vld [vmem:[%s4137 + $0x279] sm:$0xff]
    %v4284 = vld [vmem:[%s4137 + $0x289] sm:$0xff]
    %v4285 = vld [vmem:[%s4137 + $0x291] sm:$0xff]
    %v4286 = vld [vmem:[%s4137 + $0x2a1] sm:$0xff]
    %v4287 = vld [vmem:[%s4137 + $0x2a9] sm:$0xff]
    %v4288 = vld [vmem:[%s4137 + $0x2b9] sm:$0xff]
    %v4289 = vld [vmem:[%s4137 + $0x2c1] sm:$0xff]
    %v4290 = vld [vmem:[%s4137 + $0x2d1] sm:$0xff]
    %v4291 = vld [vmem:[%s4137 + $0x2d9] sm:$0xff]
    %v4292 = vld [vmem:[%s4137 + $0x2e9] sm:$0xff]
    %v4293 = vld [vmem:[%s4137 + $0x2f1] sm:$0xff]
    %v4294 = vld [vmem:[%s4137 + $0x301] sm:$0xff]
    %v4295 = vld [vmem:[%s4137 + $0x309] sm:$0xff]
    %v4296 = vld [vmem:[%s4137 + $0x319] sm:$0xff]
    %v4297 = vld [vmem:[%s4137 + $0x321] sm:$0xff]
    %v4298 = vpack.c.bf16 %v4235, %v4234
    %v4299 = vpack.c.bf16 %v4237, %v4236
    %v4300 = vpack.c.bf16 %v4239, %v4238
    %v4301 = vpack.c.bf16 %v4241, %v4240
    %v4302 = vpack.c.bf16 %v4243, %v4242
    %v4303 = vpack.c.bf16 %v4245, %v4244
    %v4304 = vpack.c.bf16 %v4247, %v4246
    %v4305 = vpack.c.bf16 %v4249, %v4248
    %v4306 = vpack.c.bf16 %v4251, %v4250
    %v4307 = vpack.c.bf16 %v4253, %v4252
    %v4308 = vpack.c.bf16 %v4255, %v4254
    %v4309 = vpack.c.bf16 %v4257, %v4256
    %v4310 = vpack.c.bf16 %v4259, %v4258
    %v4311 = vpack.c.bf16 %v4261, %v4260
    %v4312 = vpack.c.bf16 %v4263, %v4262
    %v4313 = vpack.c.bf16 %v4265, %v4264
    %v4314 = vpack.c.bf16 %v4267, %v4266
    %v4315 = vpack.c.bf16 %v4269, %v4268
    %v4316 = vpack.c.bf16 %v4271, %v4270
    %v4317 = vpack.c.bf16 %v4273, %v4272
    %v4318 = vpack.c.bf16 %v4275, %v4274
    %v4319 = vpack.c.bf16 %v4277, %v4276
    %v4320 = vpack.c.bf16 %v4279, %v4278
    %v4321 = vpack.c.bf16 %v4281, %v4280
    %v4322 = vpack.c.bf16 %v4283, %v4282
    %v4323 = vpack.c.bf16 %v4285, %v4284
    %v4324 = vpack.c.bf16 %v4287, %v4286
    %v4325 = vpack.c.bf16 %v4289, %v4288
    %v4326 = vpack.c.bf16 %v4291, %v4290
    %v4327 = vpack.c.bf16 %v4293, %v4292
    %v4328 = vpack.c.bf16 %v4295, %v4294
    %v4329 = vpack.c.bf16 %v4297, %v4296
    %v4330 = vld [vmem:[%s4137 + $0x2] sm:$0xff]
    %v4331 = vld [vmem:[%s4137 + $0xa] sm:$0xff]
    %v4332 = vld [vmem:[%s4137 + $0x1a] sm:$0xff]
    %v4333 = vld [vmem:[%s4137 + $0x22] sm:$0xff]
    %v4334 = vld [vmem:[%s4137 + $0x32] sm:$0xff]
    %v4335 = vld [vmem:[%s4137 + $0x3a] sm:$0xff]
    %v4336 = vld [vmem:[%s4137 + $0x4a] sm:$0xff]
    %v4337 = vld [vmem:[%s4137 + $0x52] sm:$0xff]
    %v4338 = vld [vmem:[%s4137 + $0x62] sm:$0xff]
    %v4339 = vld [vmem:[%s4137 + $0x6a] sm:$0xff]
    %v4340 = vld [vmem:[%s4137 + $0x7a] sm:$0xff]
    %v4341 = vld [vmem:[%s4137 + $0x82] sm:$0xff]
    %v4342 = vld [vmem:[%s4137 + $0x92] sm:$0xff]
    %v4343 = vld [vmem:[%s4137 + $0x9a] sm:$0xff]
    %v4344 = vld [vmem:[%s4137 + $0xaa] sm:$0xff]
    %v4345 = vld [vmem:[%s4137 + $0xb2] sm:$0xff]
    %v4346 = vld [vmem:[%s4137 + $0xc2] sm:$0xff]
    %v4347 = vld [vmem:[%s4137 + $0xca] sm:$0xff]
    %v4348 = vld [vmem:[%s4137 + $0xda] sm:$0xff]
    %v4349 = vld [vmem:[%s4137 + $0xe2] sm:$0xff]
    %v4350 = vld [vmem:[%s4137 + $0xf2] sm:$0xff]
    %v4351 = vld [vmem:[%s4137 + $0xfa] sm:$0xff]
    %v4352 = vld [vmem:[%s4137 + $0x10a] sm:$0xff]
    %v4353 = vld [vmem:[%s4137 + $0x112] sm:$0xff]
    %v4354 = vld [vmem:[%s4137 + $0x122] sm:$0xff]
    %v4355 = vld [vmem:[%s4137 + $0x12a] sm:$0xff]
    %v4356 = vld [vmem:[%s4137 + $0x13a] sm:$0xff]
    %v4357 = vld [vmem:[%s4137 + $0x142] sm:$0xff]
    %v4358 = vld [vmem:[%s4137 + $0x152] sm:$0xff]
    %v4359 = vld [vmem:[%s4137 + $0x15a] sm:$0xff]
    %v4360 = vld [vmem:[%s4137 + $0x16a] sm:$0xff]
    %v4361 = vld [vmem:[%s4137 + $0x172] sm:$0xff]
    %v4362 = vld [vmem:[%s4137 + $0x1b2] sm:$0xff]
    %v4363 = vld [vmem:[%s4137 + $0x1ba] sm:$0xff]
    %v4364 = vld [vmem:[%s4137 + $0x1ca] sm:$0xff]
    %v4365 = vld [vmem:[%s4137 + $0x1d2] sm:$0xff]
    %v4366 = vld [vmem:[%s4137 + $0x1e2] sm:$0xff]
    %v4367 = vld [vmem:[%s4137 + $0x1ea] sm:$0xff]
    %v4368 = vld [vmem:[%s4137 + $0x1fa] sm:$0xff]
    %v4369 = vld [vmem:[%s4137 + $0x202] sm:$0xff]
    %v4370 = vld [vmem:[%s4137 + $0x212] sm:$0xff]
    %v4371 = vld [vmem:[%s4137 + $0x21a] sm:$0xff]
    %v4372 = vld [vmem:[%s4137 + $0x22a] sm:$0xff]
    %v4373 = vld [vmem:[%s4137 + $0x232] sm:$0xff]
    %v4374 = vld [vmem:[%s4137 + $0x242] sm:$0xff]
    %v4375 = vld [vmem:[%s4137 + $0x24a] sm:$0xff]
    %v4376 = vld [vmem:[%s4137 + $0x25a] sm:$0xff]
    %v4377 = vld [vmem:[%s4137 + $0x262] sm:$0xff]
    %v4378 = vld [vmem:[%s4137 + $0x272] sm:$0xff]
    %v4379 = vld [vmem:[%s4137 + $0x27a] sm:$0xff]
    %v4380 = vld [vmem:[%s4137 + $0x28a] sm:$0xff]
    %v4381 = vld [vmem:[%s4137 + $0x292] sm:$0xff]
    %v4382 = vld [vmem:[%s4137 + $0x2a2] sm:$0xff]
    %v4383 = vld [vmem:[%s4137 + $0x2aa] sm:$0xff]
    %v4384 = vld [vmem:[%s4137 + $0x2ba] sm:$0xff]
    %v4385 = vld [vmem:[%s4137 + $0x2c2] sm:$0xff]
    %v4386 = vld [vmem:[%s4137 + $0x2d2] sm:$0xff]
    %v4387 = vld [vmem:[%s4137 + $0x2da] sm:$0xff]
    %v4388 = vld [vmem:[%s4137 + $0x2ea] sm:$0xff]
    %v4389 = vld [vmem:[%s4137 + $0x2f2] sm:$0xff]
    %v4390 = vld [vmem:[%s4137 + $0x302] sm:$0xff]
    %v4391 = vld [vmem:[%s4137 + $0x30a] sm:$0xff]
    %v4392 = vld [vmem:[%s4137 + $0x31a] sm:$0xff]
    %v4393 = vld [vmem:[%s4137 + $0x322] sm:$0xff]
    %v4394 = vpack.c.bf16 %v4331, %v4330
    %v4395 = vpack.c.bf16 %v4333, %v4332
    %v4396 = vpack.c.bf16 %v4335, %v4334
    %v4397 = vpack.c.bf16 %v4337, %v4336
    %v4398 = vpack.c.bf16 %v4339, %v4338
    %v4399 = vpack.c.bf16 %v4341, %v4340
    %v4400 = vpack.c.bf16 %v4343, %v4342
    %v4401 = vpack.c.bf16 %v4345, %v4344
    %v4402 = vpack.c.bf16 %v4347, %v4346
    %v4403 = vpack.c.bf16 %v4349, %v4348
    %v4404 = vpack.c.bf16 %v4351, %v4350
    %v4405 = vpack.c.bf16 %v4353, %v4352
    %v4406 = vpack.c.bf16 %v4355, %v4354
    %v4407 = vpack.c.bf16 %v4357, %v4356
    %v4408 = vpack.c.bf16 %v4359, %v4358
    %v4409 = vpack.c.bf16 %v4361, %v4360
    %v4410 = vpack.c.bf16 %v4363, %v4362
    %v4411 = vpack.c.bf16 %v4365, %v4364
    %v4412 = vpack.c.bf16 %v4367, %v4366
    %v4413 = vpack.c.bf16 %v4369, %v4368
    %v4414 = vpack.c.bf16 %v4371, %v4370
    %v4415 = vpack.c.bf16 %v4373, %v4372
    %v4416 = vpack.c.bf16 %v4375, %v4374
    %v4417 = vpack.c.bf16 %v4377, %v4376
    %v4418 = vpack.c.bf16 %v4379, %v4378
    %v4419 = vpack.c.bf16 %v4381, %v4380
    %v4420 = vpack.c.bf16 %v4383, %v4382
    %v4421 = vpack.c.bf16 %v4385, %v4384
    %v4422 = vpack.c.bf16 %v4387, %v4386
    %v4423 = vpack.c.bf16 %v4389, %v4388
    %v4424 = vpack.c.bf16 %v4391, %v4390
    %v4425 = vpack.c.bf16 %v4393, %v4392
    %v4426 = vld [vmem:[#allocation11] sm:$0xf]
    %v4427 = vld [vmem:[#allocation11 + $0x4] sm:$0xf]
    %v4428 = vld [vmem:[#allocation11 + $0x8] sm:$0xf]
    %v4429 = vld [vmem:[#allocation11 + $0xc] sm:$0xf]
    %v4430 = vld [vmem:[#allocation11 + $0x10] sm:$0xf]
    %v4431 = vld [vmem:[#allocation11 + $0x14] sm:$0xf]
    %v4432 = vld [vmem:[#allocation11 + $0x18] sm:$0xf]
    %v4433 = vld [vmem:[#allocation11 + $0x1c] sm:$0xf]
    %v4434 = vld [vmem:[#allocation11 + $0x20] sm:$0xf]
    %v4435 = vld [vmem:[#allocation11 + $0x24] sm:$0xf]
    %v4436 = vld [vmem:[#allocation11 + $0x28] sm:$0xf]
    %v4437 = vld [vmem:[#allocation11 + $0x2c] sm:$0xf]
    %v4438 = vld [vmem:[#allocation11 + $0x30] sm:$0xf]
    %v4439 = vld [vmem:[#allocation11 + $0x34] sm:$0xf]
    %v4440 = vld [vmem:[#allocation11 + $0x38] sm:$0xf]
    %v4441 = vld [vmem:[#allocation11 + $0x3c] sm:$0xf]
    %v4442 = vld [vmem:[#allocation11 + $0x40] sm:$0xf]
    %v4443 = vld [vmem:[#allocation11 + $0x44] sm:$0xf]
    %v4444 = vld [vmem:[#allocation11 + $0x48] sm:$0xf]
    %v4445 = vld [vmem:[#allocation11 + $0x4c] sm:$0xf]
    %v4446 = vld [vmem:[#allocation11 + $0x50] sm:$0xf]
    %v4447 = vld [vmem:[#allocation11 + $0x54] sm:$0xf]
    %v4448 = vld [vmem:[#allocation11 + $0x58] sm:$0xf]
    %v4449 = vld [vmem:[#allocation11 + $0x5c] sm:$0xf]
    %v4450 = vld [vmem:[#allocation11 + $0x60] sm:$0xf]
    %v4451 = vld [vmem:[#allocation11 + $0x64] sm:$0xf]
    %v4452 = vld [vmem:[#allocation11 + $0x68] sm:$0xf]
    %v4453 = vld [vmem:[#allocation11 + $0x6c] sm:$0xf]
    %v4454 = vld [vmem:[#allocation11 + $0x70] sm:$0xf]
    %v4455 = vld [vmem:[#allocation11 + $0x74] sm:$0xf]
    %v4456 = vld [vmem:[#allocation11 + $0x78] sm:$0xf]
    %v4457 = vld [vmem:[#allocation11 + $0x7c] sm:$0xf]
    %v4458 = vld [vmem:[#allocation11 + $0x80] sm:$0xf]
    %v4459 = vld [vmem:[#allocation11 + $0x84] sm:$0xf]
    %v4460 = vld [vmem:[#allocation11 + $0x88] sm:$0xf]
    %v4461 = vld [vmem:[#allocation11 + $0x8c] sm:$0xf]
    %v4462 = vld [vmem:[#allocation11 + $0x90] sm:$0xf]
    %v4463 = vld [vmem:[#allocation11 + $0x94] sm:$0xf]
    %v4464 = vld [vmem:[#allocation11 + $0x98] sm:$0xf]
    %v4465 = vld [vmem:[#allocation11 + $0x9c] sm:$0xf]
    %v4466 = vld [vmem:[#allocation11 + $0xa0] sm:$0xf]
    %v4467 = vld [vmem:[#allocation11 + $0xa4] sm:$0xf]
    %v4468 = vld [vmem:[#allocation11 + $0xa8] sm:$0xf]
    %v4469 = vld [vmem:[#allocation11 + $0xac] sm:$0xf]
    %v4470 = vld [vmem:[#allocation11 + $0xb0] sm:$0xf]
    %v4471 = vld [vmem:[#allocation11 + $0xb4] sm:$0xf]
    %v4472 = vld [vmem:[#allocation11 + $0xb8] sm:$0xf]
    %v4473 = vld [vmem:[#allocation11 + $0xbc] sm:$0xf]
    %v4474 = vld [vmem:[#allocation11 + $0xc0] sm:$0xf]
    %v4475 = vld [vmem:[#allocation11 + $0xc4] sm:$0xf]
    %v4476 = vld [vmem:[#allocation11 + $0xc8] sm:$0xf]
    %v4477 = vld [vmem:[#allocation11 + $0xcc] sm:$0xf]
    %v4478 = vld [vmem:[#allocation11 + $0xd0] sm:$0xf]
    %v4479 = vld [vmem:[#allocation11 + $0xd4] sm:$0xf]
    %v4480 = vld [vmem:[#allocation11 + $0xd8] sm:$0xf]
    %v4481 = vld [vmem:[#allocation11 + $0xdc] sm:$0xf]
    %v4482 = vld [vmem:[#allocation11 + $0xe0] sm:$0xf]
    %v4483 = vld [vmem:[#allocation11 + $0xe4] sm:$0xf]
    %v4484 = vld [vmem:[#allocation11 + $0xe8] sm:$0xf]
    %v4485 = vld [vmem:[#allocation11 + $0xec] sm:$0xf]
    %v4486 = vld [vmem:[#allocation11 + $0xf0] sm:$0xf]
    %v4487 = vld [vmem:[#allocation11 + $0xf4] sm:$0xf]
    %v4488 = vld [vmem:[#allocation11 + $0xf8] sm:$0xf]
    %v4489 = vld [vmem:[#allocation11 + $0xfc] sm:$0xf]
    %v4490 = vld [vmem:[#allocation11 + $0x100] sm:$0xf]
    %v4491 = vld [vmem:[#allocation11 + $0x104] sm:$0xf]
    %v4492 = vld [vmem:[#allocation11 + $0x108] sm:$0xf]
    %v4493 = vld [vmem:[#allocation11 + $0x10c] sm:$0xf]
    %v4494 = vld [vmem:[#allocation11 + $0x110] sm:$0xf]
    %v4495 = vld [vmem:[#allocation11 + $0x114] sm:$0xf]
    %v4496 = vld [vmem:[#allocation11 + $0x118] sm:$0xf]
    %v4497 = vld [vmem:[#allocation11 + $0x11c] sm:$0xf]
    %v4498 = vld [vmem:[#allocation11 + $0x120] sm:$0xf]
    %v4499 = vld [vmem:[#allocation11 + $0x124] sm:$0xf]
    %v4500 = vld [vmem:[#allocation11 + $0x128] sm:$0xf]
    %v4501 = vld [vmem:[#allocation11 + $0x12c] sm:$0xf]
    %v4502 = vld [vmem:[#allocation11 + $0x130] sm:$0xf]
    %v4503 = vld [vmem:[#allocation11 + $0x134] sm:$0xf]
    %v4504 = vld [vmem:[#allocation11 + $0x138] sm:$0xf]
    %v4505 = vld [vmem:[#allocation11 + $0x13c] sm:$0xf]
    %v4506 = vld [vmem:[#allocation11 + $0x140] sm:$0xf]
    %v4507 = vld [vmem:[#allocation11 + $0x144] sm:$0xf]
    %v4508 = vld [vmem:[#allocation11 + $0x148] sm:$0xf]
    %v4509 = vld [vmem:[#allocation11 + $0x14c] sm:$0xf]
    %v4510 = vld [vmem:[#allocation11 + $0x150] sm:$0xf]
    %v4511 = vld [vmem:[#allocation11 + $0x154] sm:$0xf]
    %v4512 = vld [vmem:[#allocation11 + $0x158] sm:$0xf]
    %v4513 = vld [vmem:[#allocation11 + $0x15c] sm:$0xf]
    %v4514 = vld [vmem:[#allocation11 + $0x160] sm:$0xf]
    %v4515 = vld [vmem:[#allocation11 + $0x164] sm:$0xf]
    %v4516 = vld [vmem:[#allocation11 + $0x168] sm:$0xf]
    %v4517 = vld [vmem:[#allocation11 + $0x16c] sm:$0xf]
    %v4518 = vld [vmem:[#allocation11 + $0x170] sm:$0xf]
    %v4519 = vld [vmem:[#allocation11 + $0x174] sm:$0xf]
    %v4520 = vld [vmem:[#allocation11 + $0x178] sm:$0xf]
    %v4521 = vld [vmem:[#allocation11 + $0x17c] sm:$0xf]
    %v4522 = vld [vmem:[#allocation11 + $0x180] sm:$0xf]
    %v4523 = vld [vmem:[#allocation11 + $0x184] sm:$0xf]
    %v4524 = vld [vmem:[#allocation11 + $0x188] sm:$0xf]
    %v4525 = vld [vmem:[#allocation11 + $0x18c] sm:$0xf]
    %v4526 = vld [vmem:[#allocation11 + $0x190] sm:$0xf]
    %v4527 = vld [vmem:[#allocation11 + $0x194] sm:$0xf]
    %v4528 = vld [vmem:[#allocation11 + $0x198] sm:$0xf]
    %v4529 = vld [vmem:[#allocation11 + $0x19c] sm:$0xf]
    %v4530 = vld [vmem:[#allocation11 + $0x1a0] sm:$0xf]
    %v4531 = vld [vmem:[#allocation11 + $0x1a4] sm:$0xf]
    %v4532 = vld [vmem:[#allocation11 + $0x1a8] sm:$0xf]
    %v4533 = vld [vmem:[#allocation11 + $0x1ac] sm:$0xf]
    %v4534 = vld [vmem:[#allocation11 + $0x1b0] sm:$0xf]
    %v4535 = vld [vmem:[#allocation11 + $0x1b4] sm:$0xf]
    %v4536 = vld [vmem:[#allocation11 + $0x1b8] sm:$0xf]
    %v4537 = vld [vmem:[#allocation11 + $0x1bc] sm:$0xf]
    %v4538 = vld [vmem:[#allocation11 + $0x1c0] sm:$0xf]
    %v4539 = vld [vmem:[#allocation11 + $0x1c4] sm:$0xf]
    %v4540 = vld [vmem:[#allocation11 + $0x1c8] sm:$0xf]
    %v4541 = vld [vmem:[#allocation11 + $0x1cc] sm:$0xf]
    %v4542 = vld [vmem:[#allocation11 + $0x1d0] sm:$0xf]
    %v4543 = vld [vmem:[#allocation11 + $0x1d4] sm:$0xf]
    %v4544 = vld [vmem:[#allocation11 + $0x1d8] sm:$0xf]
    %v4545 = vld [vmem:[#allocation11 + $0x1dc] sm:$0xf]
    %v4546 = vld [vmem:[#allocation11 + $0x1e0] sm:$0xf]
    %v4547 = vld [vmem:[#allocation11 + $0x1e4] sm:$0xf]
    %v4548 = vld [vmem:[#allocation11 + $0x1e8] sm:$0xf]
    %v4549 = vld [vmem:[#allocation11 + $0x1ec] sm:$0xf]
    %v4550 = vld [vmem:[#allocation11 + $0x1f0] sm:$0xf]
    %v4551 = vld [vmem:[#allocation11 + $0x1f4] sm:$0xf]
    %v4552 = vld [vmem:[#allocation11 + $0x1f8] sm:$0xf]
    %v4553 = vld [vmem:[#allocation11 + $0x1fc] sm:$0xf]
    %v4554 = vld [vmem:[#allocation11 + $0x200] sm:$0xf]
    %v4555 = vld [vmem:[#allocation11 + $0x204] sm:$0xf]
    %v4556 = vld [vmem:[#allocation11 + $0x208] sm:$0xf]
    %v4557 = vld [vmem:[#allocation11 + $0x20c] sm:$0xf]
    %v4558 = vld [vmem:[#allocation11 + $0x210] sm:$0xf]
    %v4559 = vld [vmem:[#allocation11 + $0x214] sm:$0xf]
    %v4560 = vld [vmem:[#allocation11 + $0x218] sm:$0xf]
    %v4561 = vld [vmem:[#allocation11 + $0x21c] sm:$0xf]
    %v4562 = vld [vmem:[#allocation11 + $0x220] sm:$0xf]
    %v4563 = vld [vmem:[#allocation11 + $0x224] sm:$0xf]
    %v4564 = vld [vmem:[#allocation11 + $0x228] sm:$0xf]
    %v4565 = vld [vmem:[#allocation11 + $0x22c] sm:$0xf]
    %v4566 = vld [vmem:[#allocation11 + $0x230] sm:$0xf]
    %v4567 = vld [vmem:[#allocation11 + $0x234] sm:$0xf]
    %v4568 = vld [vmem:[#allocation11 + $0x238] sm:$0xf]
    %v4569 = vld [vmem:[#allocation11 + $0x23c] sm:$0xf]
    %v4714 = vunpack.c.l.b16 %v4426
    %v4715 = vunpack.c.l.b16 %v4427
    %v4716 = vunpack.c.l.b16 %v4428
    %v4717 = vunpack.c.l.b16 %v4429
    %v4718 = vunpack.c.l.b16 %v4430
    %v4719 = vunpack.c.l.b16 %v4431
    %v4720 = vunpack.c.l.b16 %v4432
    %v4721 = vunpack.c.l.b16 %v4433
    %v4722 = vunpack.c.l.b16 %v4434
    %v4723 = vunpack.c.l.b16 %v4435
    %v4724 = vunpack.c.l.b16 %v4436
    %v4725 = vunpack.c.l.b16 %v4437
    %v4726 = vunpack.c.l.b16 %v4438
    %v4727 = vunpack.c.l.b16 %v4439
    %v4728 = vunpack.c.l.b16 %v4440
    %v4729 = vunpack.c.l.b16 %v4441
    %v4730 = vunpack.c.l.b16 %v4442
    %v4731 = vunpack.c.l.b16 %v4443
    %v4732 = vunpack.c.l.b16 %v4444
    %v4733 = vunpack.c.l.b16 %v4445
    %v4734 = vunpack.c.l.b16 %v4446
    %v4735 = vunpack.c.l.b16 %v4447
    %v4736 = vunpack.c.l.b16 %v4448
    %v4737 = vunpack.c.l.b16 %v4449
    %v4738 = vunpack.c.l.b16 %v4450
    %v4739 = vunpack.c.l.b16 %v4451
    %v4740 = vunpack.c.l.b16 %v4452
    %v4741 = vunpack.c.l.b16 %v4453
    %v4742 = vunpack.c.l.b16 %v4454
    %v4743 = vunpack.c.l.b16 %v4455
    %v4744 = vunpack.c.l.b16 %v4456
    %v4745 = vunpack.c.l.b16 %v4457
    %v4746 = vunpack.c.l.b16 %v4458
    %v4747 = vunpack.c.l.b16 %v4459
    %v4748 = vunpack.c.l.b16 %v4460
    %v4749 = vunpack.c.l.b16 %v4461
    %v4750 = vunpack.c.l.b16 %v4462
    %v4751 = vunpack.c.l.b16 %v4463
    %v4752 = vunpack.c.l.b16 %v4464
    %v4753 = vunpack.c.l.b16 %v4465
    %v4754 = vunpack.c.l.b16 %v4466
    %v4755 = vunpack.c.l.b16 %v4467
    %v4756 = vunpack.c.l.b16 %v4468
    %v4757 = vunpack.c.l.b16 %v4469
    %v4758 = vunpack.c.l.b16 %v4470
    %v4759 = vunpack.c.l.b16 %v4471
    %v4760 = vunpack.c.l.b16 %v4472
    %v4761 = vunpack.c.l.b16 %v4473
    %v4762 = vunpack.c.l.b16 %v4474
    %v4763 = vunpack.c.l.b16 %v4475
    %v4764 = vunpack.c.l.b16 %v4476
    %v4765 = vunpack.c.l.b16 %v4477
    %v4766 = vunpack.c.l.b16 %v4478
    %v4767 = vunpack.c.l.b16 %v4479
    %v4768 = vunpack.c.l.b16 %v4480
    %v4769 = vunpack.c.l.b16 %v4481
    %v4770 = vunpack.c.l.b16 %v4482
    %v4771 = vunpack.c.l.b16 %v4483
    %v4772 = vunpack.c.l.b16 %v4484
    %v4773 = vunpack.c.l.b16 %v4485
    %v4774 = vunpack.c.l.b16 %v4486
    %v4775 = vunpack.c.l.b16 %v4487
    %v4776 = vunpack.c.l.b16 %v4488
    %v4777 = vunpack.c.l.b16 %v4489
    %v4778 = vunpack.c.l.b16 %v4490
    %v4779 = vunpack.c.l.b16 %v4491
    %v4780 = vunpack.c.l.b16 %v4492
    %v4781 = vunpack.c.l.b16 %v4493
    %v4782 = vunpack.c.l.b16 %v4494
    %v4783 = vunpack.c.l.b16 %v4495
    %v4784 = vunpack.c.l.b16 %v4496
    %v4785 = vunpack.c.l.b16 %v4497
    %v4786 = vunpack.c.l.b16 %v4498
    %v4787 = vunpack.c.l.b16 %v4499
    %v4788 = vunpack.c.l.b16 %v4500
    %v4789 = vunpack.c.l.b16 %v4501
    %v4790 = vunpack.c.l.b16 %v4502
    %v4791 = vunpack.c.l.b16 %v4503
    %v4792 = vunpack.c.l.b16 %v4504
    %v4793 = vunpack.c.l.b16 %v4505
    %v4794 = vunpack.c.l.b16 %v4506
    %v4795 = vunpack.c.l.b16 %v4507
    %v4796 = vunpack.c.l.b16 %v4508
    %v4797 = vunpack.c.l.b16 %v4509
    %v4798 = vunpack.c.l.b16 %v4510
    %v4799 = vunpack.c.l.b16 %v4511
    %v4800 = vunpack.c.l.b16 %v4512
    %v4801 = vunpack.c.l.b16 %v4513
    %v4802 = vunpack.c.l.b16 %v4514
    %v4803 = vunpack.c.l.b16 %v4515
    %v4804 = vunpack.c.l.b16 %v4516
    %v4805 = vunpack.c.l.b16 %v4517
    %v4806 = vunpack.c.l.b16 %v4518
    %v4807 = vunpack.c.l.b16 %v4519
    %v4808 = vunpack.c.l.b16 %v4520
    %v4809 = vunpack.c.l.b16 %v4521
    %v4810 = vunpack.c.l.b16 %v4522
    %v4811 = vunpack.c.l.b16 %v4523
    %v4812 = vunpack.c.l.b16 %v4524
    %v4813 = vunpack.c.l.b16 %v4525
    %v4814 = vunpack.c.l.b16 %v4526
    %v4815 = vunpack.c.l.b16 %v4527
    %v4816 = vunpack.c.l.b16 %v4528
    %v4817 = vunpack.c.l.b16 %v4529
    %v4818 = vunpack.c.l.b16 %v4530
    %v4819 = vunpack.c.l.b16 %v4531
    %v4820 = vunpack.c.l.b16 %v4532
    %v4821 = vunpack.c.l.b16 %v4533
    %v4822 = vunpack.c.l.b16 %v4534
    %v4823 = vunpack.c.l.b16 %v4535
    %v4824 = vunpack.c.l.b16 %v4536
    %v4825 = vunpack.c.l.b16 %v4537
    %v4826 = vunpack.c.l.b16 %v4538
    %v4827 = vunpack.c.l.b16 %v4539
    %v4828 = vunpack.c.l.b16 %v4540
    %v4829 = vunpack.c.l.b16 %v4541
    %v4830 = vunpack.c.l.b16 %v4542
    %v4831 = vunpack.c.l.b16 %v4543
    %v4832 = vunpack.c.l.b16 %v4544
    %v4833 = vunpack.c.l.b16 %v4545
    %v4834 = vunpack.c.l.b16 %v4546
    %v4835 = vunpack.c.l.b16 %v4547
    %v4836 = vunpack.c.l.b16 %v4548
    %v4837 = vunpack.c.l.b16 %v4549
    %v4838 = vunpack.c.l.b16 %v4550
    %v4839 = vunpack.c.l.b16 %v4551
    %v4840 = vunpack.c.l.b16 %v4552
    %v4841 = vunpack.c.l.b16 %v4553
    %v4842 = vunpack.c.l.b16 %v4554
    %v4843 = vunpack.c.l.b16 %v4555
    %v4844 = vunpack.c.l.b16 %v4556
    %v4845 = vunpack.c.l.b16 %v4557
    %v4846 = vunpack.c.l.b16 %v4558
    %v4847 = vunpack.c.l.b16 %v4559
    %v4848 = vunpack.c.l.b16 %v4560
    %v4849 = vunpack.c.l.b16 %v4561
    %v4850 = vunpack.c.l.b16 %v4562
    %v4851 = vunpack.c.l.b16 %v4563
    %v4852 = vunpack.c.l.b16 %v4564
    %v4853 = vunpack.c.l.b16 %v4565
    %v4854 = vunpack.c.l.b16 %v4566
    %v4855 = vunpack.c.l.b16 %v4567
    %v4856 = vunpack.c.l.b16 %v4568
    %v4857 = vunpack.c.l.b16 %v4569
    %v4858 = vpack.c.b16 %v4715, %v4714
    %v4859 = vpack.c.b16 %v4717, %v4716
    %v4860 = vpack.c.b16 %v4719, %v4718
    %v4861 = vpack.c.b16 %v4721, %v4720
    %v4862 = vpack.c.b16 %v4723, %v4722
    %v4863 = vpack.c.b16 %v4725, %v4724
    %v4864 = vpack.c.b16 %v4727, %v4726
    %v4865 = vpack.c.b16 %v4729, %v4728
    %v4866 = vpack.c.b16 %v4731, %v4730
    %v4867 = vpack.c.b16 %v4733, %v4732
    %v4868 = vpack.c.b16 %v4735, %v4734
    %v4869 = vpack.c.b16 %v4737, %v4736
    %v4870 = vpack.c.b16 %v4739, %v4738
    %v4871 = vpack.c.b16 %v4741, %v4740
    %v4872 = vpack.c.b16 %v4743, %v4742
    %v4873 = vpack.c.b16 %v4745, %v4744
    %v4874 = vpack.c.b16 %v4747, %v4746
    %v4875 = vpack.c.b16 %v4749, %v4748
    %v4876 = vpack.c.b16 %v4751, %v4750
    %v4877 = vpack.c.b16 %v4753, %v4752
    %v4878 = vpack.c.b16 %v4755, %v4754
    %v4879 = vpack.c.b16 %v4757, %v4756
    %v4880 = vpack.c.b16 %v4759, %v4758
    %v4881 = vpack.c.b16 %v4761, %v4760
    %v4882 = vpack.c.b16 %v4763, %v4762
    %v4883 = vpack.c.b16 %v4765, %v4764
    %v4884 = vpack.c.b16 %v4767, %v4766
    %v4885 = vpack.c.b16 %v4769, %v4768
    %v4886 = vpack.c.b16 %v4771, %v4770
    %v4887 = vpack.c.b16 %v4773, %v4772
    %v4888 = vpack.c.b16 %v4775, %v4774
    %v4889 = vpack.c.b16 %v4777, %v4776
    %v4890 = vpack.c.b16 %v4779, %v4778
    %v4891 = vpack.c.b16 %v4781, %v4780
    %v4892 = vpack.c.b16 %v4783, %v4782
    %v4893 = vpack.c.b16 %v4785, %v4784
    %v4894 = vpack.c.b16 %v4787, %v4786
    %v4895 = vpack.c.b16 %v4789, %v4788
    %v4896 = vpack.c.b16 %v4791, %v4790
    %v4897 = vpack.c.b16 %v4793, %v4792
    %v4898 = vpack.c.b16 %v4795, %v4794
    %v4899 = vpack.c.b16 %v4797, %v4796
    %v4900 = vpack.c.b16 %v4799, %v4798
    %v4901 = vpack.c.b16 %v4801, %v4800
    %v4902 = vpack.c.b16 %v4803, %v4802
    %v4903 = vpack.c.b16 %v4805, %v4804
    %v4904 = vpack.c.b16 %v4807, %v4806
    %v4905 = vpack.c.b16 %v4809, %v4808
    %v4906 = vpack.c.b16 %v4811, %v4810
    %v4907 = vpack.c.b16 %v4813, %v4812
    %v4908 = vpack.c.b16 %v4815, %v4814
    %v4909 = vpack.c.b16 %v4817, %v4816
    %v4910 = vpack.c.b16 %v4819, %v4818
    %v4911 = vpack.c.b16 %v4821, %v4820
    %v4912 = vpack.c.b16 %v4823, %v4822
    %v4913 = vpack.c.b16 %v4825, %v4824
    %v4914 = vpack.c.b16 %v4827, %v4826
    %v4915 = vpack.c.b16 %v4829, %v4828
    %v4916 = vpack.c.b16 %v4831, %v4830
    %v4917 = vpack.c.b16 %v4833, %v4832
    %v4918 = vpack.c.b16 %v4835, %v4834
    %v4919 = vpack.c.b16 %v4837, %v4836
    %v4920 = vpack.c.b16 %v4839, %v4838
    %v4921 = vpack.c.b16 %v4841, %v4840
    %v4922 = vpack.c.b16 %v4843, %v4842
    %v4923 = vpack.c.b16 %v4845, %v4844
    %v4924 = vpack.c.b16 %v4847, %v4846
    %v4925 = vpack.c.b16 %v4849, %v4848
    %v4926 = vpack.c.b16 %v4851, %v4850
    %v4927 = vpack.c.b16 %v4853, %v4852
    %v4928 = vpack.c.b16 %v4855, %v4854
    %v4929 = vpack.c.b16 %v4857, %v4856
    %5002 = vmatprep.subr.bf16.mxu0 0
    %5003 = vmatpush1.bf16.msra.mxu0 %v4858
    %5004 = vmatprep.subr.bf16.mxu0 0
    %5005 = vmatpush1.bf16.msra.mxu0 %v4859
    %5006 = vmatprep.subr.bf16.mxu0 0
    %5007 = vmatpush1.bf16.msra.mxu0 %v4860
    %5008 = vmatprep.subr.bf16.mxu0 0
    %5009 = vmatpush1.bf16.msra.mxu0 %v4861
    %5010 = vmatprep.subr.bf16.mxu0 0
    %5011 = vmatpush1.bf16.msra.mxu0 %v4862
    %5012 = vmatprep.subr.bf16.mxu0 0
    %5013 = vmatpush1.bf16.msra.mxu0 %v4863
    %5014 = vmatprep.subr.bf16.mxu0 0
    %5015 = vmatpush1.bf16.msra.mxu0 %v4864
    %5016 = vmatprep.subr.bf16.mxu0 0
    %5017 = vmatpush1.bf16.msra.mxu0 %v4865
    %5018 = vmatprep.subr.bf16.mxu0 0
    %5019 = vmatpush1.bf16.msra.mxu0 %v4866
    %5020 = vmatprep.subr.bf16.mxu0 0
    %5021 = vmatpush1.bf16.msra.mxu0 %v4867
    %5022 = vmatprep.subr.bf16.mxu0 0
    %5023 = vmatpush1.bf16.msra.mxu0 %v4868
    %5024 = vmatprep.subr.bf16.mxu0 0
    %5025 = vmatpush1.bf16.msra.mxu0 %v4869
    %5026 = vmatprep.subr.bf16.mxu0 0
    %5027 = vmatpush1.bf16.msra.mxu0 %v4870
    %5028 = vmatprep.subr.bf16.mxu0 0
    %5029 = vmatpush1.bf16.msra.mxu0 %v4871
    %5030 = vmatprep.subr.bf16.mxu0 0
    %5031 = vmatpush1.bf16.msra.mxu0 %v4872
    %5032 = vmatprep.subr.bf16.mxu0 0
    %5033 = vmatpush1.bf16.msra.mxu0 %v4873
    %5034 = vmatprep.mubr.bf16.mxu0 %v3721
    %5035 = vmatmul.mubr.bf16.gmra.mrb[0].mxu0 %v3625
    %v5036 = vpop.f32.mrb[0].mxu0
    %v5037 = vadd.f32 0.0, %v5036
    %v5038 = vpop.f32.mrb[0].mxu0
    %v5039 = vpop.f32.mrb[0].mxu0
    %v5040 = vadd.f32 0.0, %v5039
    %v5041 = vpop.f32.mrb[0].mxu0
    %5042 = vmatprep.mubr.bf16.mxu0 %v3722
    %5043 = vmatmul.mubr.bf16.gmra.mrb[0].mxu0 %v3626
    %v5044 = vpop.f32.mrb[0].mxu0
    %v5045 = vadd.f32 0.0, %v5044
    %v5046 = vpop.f32.mrb[0].mxu0
    %v5047 = vpop.f32.mrb[0].mxu0
    %v5048 = vadd.f32 0.0, %v5047
    %v5049 = vpop.f32.mrb[0].mxu0
    %5050 = vmatprep.mubr.bf16.mxu0 %v3723
    %5051 = vmatmul.mubr.bf16.gmra.mrb[0].mxu0 %v3627
    %v5052 = vpop.f32.mrb[0].mxu0
    %v5053 = vadd.f32 0.0, %v5052
    %v5054 = vpop.f32.mrb[0].mxu0
    %v5055 = vpop.f32.mrb[0].mxu0
    %v5056 = vadd.f32 0.0, %v5055
    %v5057 = vpop.f32.mrb[0].mxu0
    %5058 = vmatprep.mubr.bf16.mxu0 %v3724
    %5059 = vmatmul.mubr.bf16.gmra.mrb[0].mxu0 %v3628
    %v5060 = vpop.f32.mrb[0].mxu0
    %v5061 = vadd.f32 0.0, %v5060
    %v5062 = vpop.f32.mrb[0].mxu0
    %v5063 = vpop.f32.mrb[0].mxu0
    %v5064 = vadd.f32 0.0, %v5063
    %v5065 = vpop.f32.mrb[0].mxu0
    %5066 = vmatprep.mubr.bf16.mxu0 %v3725
    %5067 = vmatmul.mubr.bf16.gmra.mrb[0].mxu0 %v3629
    %v5068 = vpop.f32.mrb[0].mxu0
    %v5069 = vadd.f32 0.0, %v5068
    %v5070 = vpop.f32.mrb[0].mxu0
    %v5071 = vpop.f32.mrb[0].mxu0
    %v5072 = vadd.f32 0.0, %v5071
    %v5073 = vpop.f32.mrb[0].mxu0
    %5074 = vmatprep.mubr.bf16.mxu0 %v3726
    %5075 = vmatmul.mubr.bf16.gmra.mrb[0].mxu0 %v3630
    %v5076 = vpop.f32.mrb[0].mxu0
    %v5077 = vadd.f32 0.0, %v5076
    %v5078 = vpop.f32.mrb[0].mxu0
    %v5079 = vpop.f32.mrb[0].mxu0
    %v5080 = vadd.f32 0.0, %v5079
    %v5081 = vpop.f32.mrb[0].mxu0
    %5082 = vmatprep.mubr.bf16.mxu0 %v3727
    %5083 = vmatmul.mubr.bf16.gmra.mrb[0].mxu0 %v3631
    %v5084 = vpop.f32.mrb[0].mxu0
    %v5085 = vadd.f32 0.0, %v5084
    %v5086 = vpop.f32.mrb[0].mxu0
    %v5087 = vpop.f32.mrb[0].mxu0
    %v5088 = vadd.f32 0.0, %v5087
    %v5089 = vpop.f32.mrb[0].mxu0
    %5090 = vmatprep.mubr.bf16.mxu0 %v3728
    %5091 = vmatmul.mubr.bf16.gmra.mrb[0].mxu0 %v3632
    %v5092 = vpop.f32.mrb[0].mxu0
    %v5093 = vadd.f32 0.0, %v5092
    %v5094 = vpop.f32.mrb[0].mxu0
    %v5095 = vpop.f32.mrb[0].mxu0
    %v5096 = vadd.f32 0.0, %v5095
    %v5097 = vpop.f32.mrb[0].mxu0
    %5098 = vmatprep.mubr.bf16.mxu0 %v3729
    %5099 = vmatmul.mubr.bf16.gmra.mrb[0].mxu0 %v3633
    %v5100 = vpop.f32.mrb[0].mxu0
    %v5101 = vadd.f32 0.0, %v5100
    %v5102 = vpop.f32.mrb[0].mxu0
    %v5103 = vpop.f32.mrb[0].mxu0
    %v5104 = vadd.f32 0.0, %v5103
    %v5105 = vpop.f32.mrb[0].mxu0
    %5106 = vmatprep.mubr.bf16.mxu0 %v3730
    %5107 = vmatmul.mubr.bf16.gmra.mrb[0].mxu0 %v3634
    %v5108 = vpop.f32.mrb[0].mxu0
    %v5109 = vadd.f32 0.0, %v5108
    %v5110 = vpop.f32.mrb[0].mxu0
    %v5111 = vpop.f32.mrb[0].mxu0
    %v5112 = vadd.f32 0.0, %v5111
    %v5113 = vpop.f32.mrb[0].mxu0
    %5114 = vmatprep.mubr.bf16.mxu0 %v3731
    %5115 = vmatmul.mubr.bf16.gmra.mrb[0].mxu0 %v3635
    %v5116 = vpop.f32.mrb[0].mxu0
    %v5117 = vadd.f32 0.0, %v5116
    %v5118 = vpop.f32.mrb[0].mxu0
    %v5119 = vpop.f32.mrb[0].mxu0
    %v5120 = vadd.f32 0.0, %v5119
    %v5121 = vpop.f32.mrb[0].mxu0
    %5122 = vmatprep.mubr.bf16.mxu0 %v3732
    %5123 = vmatmul.mubr.bf16.gmra.mrb[0].mxu0 %v3636
    %v5124 = vpop.f32.mrb[0].mxu0
    %v5125 = vadd.f32 0.0, %v5124
    %v5126 = vpop.f32.mrb[0].mxu0
    %v5127 = vpop.f32.mrb[0].mxu0
    %v5128 = vadd.f32 0.0, %v5127
    %v5129 = vpop.f32.mrb[0].mxu0
    %5130 = vmatprep.mubr.bf16.mxu0 %v3733
    %5131 = vmatmul.mubr.bf16.gmra.mrb[0].mxu0 %v3637
    %v5132 = vpop.f32.mrb[0].mxu0
    %v5133 = vadd.f32 0.0, %v5132
    %v5134 = vpop.f32.mrb[0].mxu0
    %v5135 = vpop.f32.mrb[0].mxu0
    %v5136 = vadd.f32 0.0, %v5135
    %v5137 = vpop.f32.mrb[0].mxu0
    %5138 = vmatprep.mubr.bf16.mxu0 %v3734
    %5139 = vmatmul.mubr.bf16.gmra.mrb[0].mxu0 %v3638
    %v5140 = vpop.f32.mrb[0].mxu0
    %v5141 = vadd.f32 0.0, %v5140
    %v5142 = vpop.f32.mrb[0].mxu0
    %v5143 = vpop.f32.mrb[0].mxu0
    %v5144 = vadd.f32 0.0, %v5143
    %v5145 = vpop.f32.mrb[0].mxu0
    %5146 = vmatprep.mubr.bf16.mxu0 %v3735
    %5147 = vmatmul.mubr.bf16.gmra.mrb[0].mxu0 %v3639
    %v5148 = vpop.f32.mrb[0].mxu0
    %v5149 = vadd.f32 0.0, %v5148
    %v5150 = vpop.f32.mrb[0].mxu0
    %v5151 = vpop.f32.mrb[0].mxu0
    %v5152 = vadd.f32 0.0, %v5151
    %v5153 = vpop.f32.mrb[0].mxu0
    %5154 = vmatprep.mubr.bf16.mxu0 %v3736
    %5155 = vmatmul.mubr.bf16.gmra.mrb[0].mxu0 %v3640
    %v5156 = vpop.f32.mrb[0].mxu0
    %v5157 = vadd.f32 0.0, %v5156
    %v5158 = vpop.f32.mrb[0].mxu0
    %v5159 = vpop.f32.mrb[0].mxu0
    %v5160 = vadd.f32 0.0, %v5159
    %v5161 = vpop.f32.mrb[0].mxu0
    %5162 = vmatprep.mubr.bf16.mxu0 %v3737
    %5163 = vmatmul.mubr.bf16.gmra.mrb[0].mxu0 %v3641
    %v5164 = vpop.f32.mrb[0].mxu0
    %v5165 = vadd.f32 0.0, %v5164
    %v5166 = vpop.f32.mrb[0].mxu0
    %v5167 = vpop.f32.mrb[0].mxu0
    %v5168 = vadd.f32 0.0, %v5167
    %v5169 = vpop.f32.mrb[0].mxu0
    %5170 = vmatprep.mubr.bf16.mxu0 %v3738
    %5171 = vmatmul.mubr.bf16.gmra.mrb[0].mxu0 %v3642
    %v5172 = vpop.f32.mrb[0].mxu0
    %v5173 = vadd.f32 0.0, %v5172
    %v5174 = vpop.f32.mrb[0].mxu0
    %v5175 = vpop.f32.mrb[0].mxu0
    %v5176 = vadd.f32 0.0, %v5175
    %v5177 = vpop.f32.mrb[0].mxu0
    %5178 = vmatprep.mubr.bf16.mxu0 %v3739
    %5179 = vmatmul.mubr.bf16.gmra.mrb[0].mxu0 %v3643
    %v5180 = vpop.f32.mrb[0].mxu0
    %v5181 = vadd.f32 0.0, %v5180
    %v5182 = vpop.f32.mrb[0].mxu0
    %v5183 = vpop.f32.mrb[0].mxu0
    %v5184 = vadd.f32 0.0, %v5183
    %v5185 = vpop.f32.mrb[0].mxu0
    %5186 = vmatprep.mubr.bf16.mxu0 %v3740
    %5187 = vmatmul.mubr.bf16.gmra.mrb[0].mxu0 %v3644
    %v5188 = vpop.f32.mrb[0].mxu0
    %v5189 = vadd.f32 0.0, %v5188
    %v5190 = vpop.f32.mrb[0].mxu0
    %v5191 = vpop.f32.mrb[0].mxu0
    %v5192 = vadd.f32 0.0, %v5191
    %v5193 = vpop.f32.mrb[0].mxu0
    %5194 = vmatprep.mubr.bf16.mxu0 %v3741
    %5195 = vmatmul.mubr.bf16.gmra.mrb[0].mxu0 %v3645
    %v5196 = vpop.f32.mrb[0].mxu0
    %v5197 = vadd.f32 0.0, %v5196
    %v5198 = vpop.f32.mrb[0].mxu0
    %v5199 = vpop.f32.mrb[0].mxu0
    %v5200 = vadd.f32 0.0, %v5199
    %v5201 = vpop.f32.mrb[0].mxu0
    %5202 = vmatprep.mubr.bf16.mxu0 %v3742
    %5203 = vmatmul.mubr.bf16.gmra.mrb[0].mxu0 %v3646
    %v5204 = vpop.f32.mrb[0].mxu0
    %v5205 = vadd.f32 0.0, %v5204
    %v5206 = vpop.f32.mrb[0].mxu0
    %v5207 = vpop.f32.mrb[0].mxu0
    %v5208 = vadd.f32 0.0, %v5207
    %v5209 = vpop.f32.mrb[0].mxu0
    %5210 = vmatprep.mubr.bf16.mxu0 %v3743
    %5211 = vmatmul.mubr.bf16.gmra.mrb[0].mxu0 %v3647
    %v5212 = vpop.f32.mrb[0].mxu0
    %v5213 = vadd.f32 0.0, %v5212
    %v5214 = vpop.f32.mrb[0].mxu0
    %v5215 = vpop.f32.mrb[0].mxu0
    %v5216 = vadd.f32 0.0, %v5215
    %v5217 = vpop.f32.mrb[0].mxu0
    %5218 = vmatprep.mubr.bf16.mxu0 %v3744
    %5219 = vmatmul.mubr.bf16.gmra.mrb[0].mxu0 %v3648
    %v5220 = vpop.f32.mrb[0].mxu0
    %v5221 = vadd.f32 0.0, %v5220
    %v5222 = vpop.f32.mrb[0].mxu0
    %v5223 = vpop.f32.mrb[0].mxu0
    %v5224 = vadd.f32 0.0, %v5223
    %v5225 = vpop.f32.mrb[0].mxu0
    %5226 = vmatprep.mubr.bf16.mxu0 %v3745
    %5227 = vmatmul.mubr.bf16.gmra.mrb[0].mxu0 %v3649
    %v5228 = vpop.f32.mrb[0].mxu0
    %v5229 = vadd.f32 0.0, %v5228
    %v5230 = vpop.f32.mrb[0].mxu0
    %v5231 = vpop.f32.mrb[0].mxu0
    %v5232 = vadd.f32 0.0, %v5231
    %v5233 = vpop.f32.mrb[0].mxu0
    %5234 = vmatprep.mubr.bf16.mxu0 %v3746
    %5235 = vmatmul.mubr.bf16.gmra.mrb[0].mxu0 %v3650
    %v5236 = vpop.f32.mrb[0].mxu0
    %v5237 = vadd.f32 0.0, %v5236
    %v5238 = vpop.f32.mrb[0].mxu0
    %v5239 = vpop.f32.mrb[0].mxu0
    %v5240 = vadd.f32 0.0, %v5239
    %v5241 = vpop.f32.mrb[0].mxu0
    %5242 = vmatprep.mubr.bf16.mxu0 %v3747
    %5243 = vmatmul.mubr.bf16.gmra.mrb[0].mxu0 %v3651
    %v5244 = vpop.f32.mrb[0].mxu0
    %v5245 = vadd.f32 0.0, %v5244
    %v5246 = vpop.f32.mrb[0].mxu0
    %v5247 = vpop.f32.mrb[0].mxu0
    %v5248 = vadd.f32 0.0, %v5247
    %v5249 = vpop.f32.mrb[0].mxu0
    %5250 = vmatprep.mubr.bf16.mxu0 %v3748
    %5251 = vmatmul.mubr.bf16.gmra.mrb[0].mxu0 %v3652
    %v5252 = vpop.f32.mrb[0].mxu0
    %v5253 = vadd.f32 0.0, %v5252
    %v5254 = vpop.f32.mrb[0].mxu0
    %v5255 = vpop.f32.mrb[0].mxu0
    %v5256 = vadd.f32 0.0, %v5255
    %v5257 = vpop.f32.mrb[0].mxu0
    %5258 = vmatprep.mubr.bf16.mxu0 %v3749
    %5259 = vmatmul.mubr.bf16.gmra.mrb[0].mxu0 %v3653
    %v5260 = vpop.f32.mrb[0].mxu0
    %v5261 = vadd.f32 0.0, %v5260
    %v5262 = vpop.f32.mrb[0].mxu0
    %v5263 = vpop.f32.mrb[0].mxu0
    %v5264 = vadd.f32 0.0, %v5263
    %v5265 = vpop.f32.mrb[0].mxu0
    %5266 = vmatprep.mubr.bf16.mxu0 %v3750
    %5267 = vmatmul.mubr.bf16.gmra.mrb[0].mxu0 %v3654
    %v5268 = vpop.f32.mrb[0].mxu0
    %v5269 = vadd.f32 0.0, %v5268
    %v5270 = vpop.f32.mrb[0].mxu0
    %v5271 = vpop.f32.mrb[0].mxu0
    %v5272 = vadd.f32 0.0, %v5271
    %v5273 = vpop.f32.mrb[0].mxu0
    %5274 = vmatprep.mubr.bf16.mxu0 %v3751
    %5275 = vmatmul.mubr.bf16.gmra.mrb[0].mxu0 %v3655
    %v5276 = vpop.f32.mrb[0].mxu0
    %v5277 = vadd.f32 0.0, %v5276
    %v5278 = vpop.f32.mrb[0].mxu0
    %v5279 = vpop.f32.mrb[0].mxu0
    %v5280 = vadd.f32 0.0, %v5279
    %v5281 = vpop.f32.mrb[0].mxu0
    %5282 = vmatprep.mubr.bf16.mxu0 %v3752
    %5283 = vmatmul.mubr.bf16.gmra.mrb[0].mxu0 %v3656
    %v5284 = vpop.f32.mrb[0].mxu0
    %v5285 = vadd.f32 0.0, %v5284
    %v5286 = vpop.f32.mrb[0].mxu0
    %v5287 = vpop.f32.mrb[0].mxu0
    %v5288 = vadd.f32 0.0, %v5287
    %v5289 = vpop.f32.mrb[0].mxu0
    %5290 = vdwg.mxu0
    %5291 = vmatprep.subr.bf16.mxu0 0
    %5292 = vmatpush1.bf16.msra.mxu0 %v4874
    %5293 = vmatprep.subr.bf16.mxu0 0
    %5294 = vmatpush1.bf16.msra.mxu0 %v4875
    %5295 = vmatprep.subr.bf16.mxu0 0
    %5296 = vmatpush1.bf16.msra.mxu0 %v4876
    %5297 = vmatprep.subr.bf16.mxu0 0
    %5298 = vmatpush1.bf16.msra.mxu0 %v4877
    %5299 = vmatprep.subr.bf16.mxu0 0
    %5300 = vmatpush1.bf16.msra.mxu0 %v4878
    %5301 = vmatprep.subr.bf16.mxu0 0
    %5302 = vmatpush1.bf16.msra.mxu0 %v4879
    %5303 = vmatprep.subr.bf16.mxu0 0
    %5304 = vmatpush1.bf16.msra.mxu0 %v4880
    %5305 = vmatprep.subr.bf16.mxu0 0
    %5306 = vmatpush1.bf16.msra.mxu0 %v4881
    %5307 = vmatprep.subr.bf16.mxu0 0
    %5308 = vmatpush1.bf16.msra.mxu0 %v4882
    %5309 = vmatprep.subr.bf16.mxu0 0
    %5310 = vmatpush1.bf16.msra.mxu0 %v4883
    %5311 = vmatprep.subr.bf16.mxu0 0
    %5312 = vmatpush1.bf16.msra.mxu0 %v4884
    %5313 = vmatprep.subr.bf16.mxu0 0
    %5314 = vmatpush1.bf16.msra.mxu0 %v4885
    %5315 = vmatprep.subr.bf16.mxu0 0
    %5316 = vmatpush1.bf16.msra.mxu0 %v4886
    %5317 = vmatprep.subr.bf16.mxu0 0
    %5318 = vmatpush1.bf16.msra.mxu0 %v4887
    %5319 = vmatprep.subr.bf16.mxu0 0
    %5320 = vmatpush1.bf16.msra.mxu0 %v4888
    %5321 = vmatprep.subr.bf16.mxu0 0
    %5322 = vmatpush1.bf16.msra.mxu0 %v4889
    %5323 = vmatprep.mubr.bf16.mxu0 %v3913
    %5324 = vmatmul.mubr.bf16.gmra.mrb[0].mxu0 %v3817
    %v5325 = vpop.f32.mrb[0].mxu0
    %v5326 = vadd.f32 %v5037, %v5325
    %v5327 = vpop.f32.mrb[0].mxu0
    %v5328 = vpop.f32.mrb[0].mxu0
    %v5329 = vadd.f32 %v5040, %v5328
    %v5330 = vpop.f32.mrb[0].mxu0
    %5331 = vmatprep.mubr.bf16.mxu0 %v3914
    %5332 = vmatmul.mubr.bf16.gmra.mrb[0].mxu0 %v3818
    %v5333 = vpop.f32.mrb[0].mxu0
    %v5334 = vadd.f32 %v5045, %v5333
    %v5335 = vpop.f32.mrb[0].mxu0
    %v5336 = vpop.f32.mrb[0].mxu0
    %v5337 = vadd.f32 %v5048, %v5336
    %v5338 = vpop.f32.mrb[0].mxu0
    %5339 = vmatprep.mubr.bf16.mxu0 %v3915
    %5340 = vmatmul.mubr.bf16.gmra.mrb[0].mxu0 %v3819
    %v5341 = vpop.f32.mrb[0].mxu0
    %v5342 = vadd.f32 %v5053, %v5341
    %v5343 = vpop.f32.mrb[0].mxu0
    %v5344 = vpop.f32.mrb[0].mxu0
    %v5345 = vadd.f32 %v5056, %v5344
    %v5346 = vpop.f32.mrb[0].mxu0
    %5347 = vmatprep.mubr.bf16.mxu0 %v3916
    %5348 = vmatmul.mubr.bf16.gmra.mrb[0].mxu0 %v3820
    %v5349 = vpop.f32.mrb[0].mxu0
    %v5350 = vadd.f32 %v5061, %v5349
    %v5351 = vpop.f32.mrb[0].mxu0
    %v5352 = vpop.f32.mrb[0].mxu0
    %v5353 = vadd.f32 %v5064, %v5352
    %v5354 = vpop.f32.mrb[0].mxu0
    %5355 = vmatprep.mubr.bf16.mxu0 %v3917
    %5356 = vmatmul.mubr.bf16.gmra.mrb[0].mxu0 %v3821
    %v5357 = vpop.f32.mrb[0].mxu0
    %v5358 = vadd.f32 %v5069, %v5357
    %v5359 = vpop.f32.mrb[0].mxu0
    %v5360 = vpop.f32.mrb[0].mxu0
    %v5361 = vadd.f32 %v5072, %v5360
    %v5362 = vpop.f32.mrb[0].mxu0
    %5363 = vmatprep.mubr.bf16.mxu0 %v3918
    %5364 = vmatmul.mubr.bf16.gmra.mrb[0].mxu0 %v3822
    %v5365 = vpop.f32.mrb[0].mxu0
    %v5366 = vadd.f32 %v5077, %v5365
    %v5367 = vpop.f32.mrb[0].mxu0
    %v5368 = vpop.f32.mrb[0].mxu0
    %v5369 = vadd.f32 %v5080, %v5368
    %v5370 = vpop.f32.mrb[0].mxu0
    %5371 = vmatprep.mubr.bf16.mxu0 %v3919
    %5372 = vmatmul.mubr.bf16.gmra.mrb[0].mxu0 %v3823
    %v5373 = vpop.f32.mrb[0].mxu0
    %v5374 = vadd.f32 %v5085, %v5373
    %v5375 = vpop.f32.mrb[0].mxu0
    %v5376 = vpop.f32.mrb[0].mxu0
    %v5377 = vadd.f32 %v5088, %v5376
    %v5378 = vpop.f32.mrb[0].mxu0
    %5379 = vmatprep.mubr.bf16.mxu0 %v3920
    %5380 = vmatmul.mubr.bf16.gmra.mrb[0].mxu0 %v3824
    %v5381 = vpop.f32.mrb[0].mxu0
    %v5382 = vadd.f32 %v5093, %v5381
    %v5383 = vpop.f32.mrb[0].mxu0
    %v5384 = vpop.f32.mrb[0].mxu0
    %v5385 = vadd.f32 %v5096, %v5384
    %v5386 = vpop.f32.mrb[0].mxu0
    %5387 = vmatprep.mubr.bf16.mxu0 %v3921
    %5388 = vmatmul.mubr.bf16.gmra.mrb[0].mxu0 %v3825
    %v5389 = vpop.f32.mrb[0].mxu0
    %v5390 = vadd.f32 %v5101, %v5389
    %v5391 = vpop.f32.mrb[0].mxu0
    %v5392 = vpop.f32.mrb[0].mxu0
    %v5393 = vadd.f32 %v5104, %v5392
    %v5394 = vpop.f32.mrb[0].mxu0
    %5395 = vmatprep.mubr.bf16.mxu0 %v3922
    %5396 = vmatmul.mubr.bf16.gmra.mrb[0].mxu0 %v3826
    %v5397 = vpop.f32.mrb[0].mxu0
    %v5398 = vadd.f32 %v5109, %v5397
    %v5399 = vpop.f32.mrb[0].mxu0
    %v5400 = vpop.f32.mrb[0].mxu0
    %v5401 = vadd.f32 %v5112, %v5400
    %v5402 = vpop.f32.mrb[0].mxu0
    %5403 = vmatprep.mubr.bf16.mxu0 %v3923
    %5404 = vmatmul.mubr.bf16.gmra.mrb[0].mxu0 %v3827
    %v5405 = vpop.f32.mrb[0].mxu0
    %v5406 = vadd.f32 %v5117, %v5405
    %v5407 = vpop.f32.mrb[0].mxu0
    %v5408 = vpop.f32.mrb[0].mxu0
    %v5409 = vadd.f32 %v5120, %v5408
    %v5410 = vpop.f32.mrb[0].mxu0
    %5411 = vmatprep.mubr.bf16.mxu0 %v3924
    %5412 = vmatmul.mubr.bf16.gmra.mrb[0].mxu0 %v3828
    %v5413 = vpop.f32.mrb[0].mxu0
    %v5414 = vadd.f32 %v5125, %v5413
    %v5415 = vpop.f32.mrb[0].mxu0
    %v5416 = vpop.f32.mrb[0].mxu0
    %v5417 = vadd.f32 %v5128, %v5416
    %v5418 = vpop.f32.mrb[0].mxu0
    %5419 = vmatprep.mubr.bf16.mxu0 %v3925
    %5420 = vmatmul.mubr.bf16.gmra.mrb[0].mxu0 %v3829
    %v5421 = vpop.f32.mrb[0].mxu0
    %v5422 = vadd.f32 %v5133, %v5421
    %v5423 = vpop.f32.mrb[0].mxu0
    %v5424 = vpop.f32.mrb[0].mxu0
    %v5425 = vadd.f32 %v5136, %v5424
    %v5426 = vpop.f32.mrb[0].mxu0
    %5427 = vmatprep.mubr.bf16.mxu0 %v3926
    %5428 = vmatmul.mubr.bf16.gmra.mrb[0].mxu0 %v3830
    %v5429 = vpop.f32.mrb[0].mxu0
    %v5430 = vadd.f32 %v5141, %v5429
    %v5431 = vpop.f32.mrb[0].mxu0
    %v5432 = vpop.f32.mrb[0].mxu0
    %v5433 = vadd.f32 %v5144, %v5432
    %v5434 = vpop.f32.mrb[0].mxu0
    %5435 = vmatprep.mubr.bf16.mxu0 %v3927
    %5436 = vmatmul.mubr.bf16.gmra.mrb[0].mxu0 %v3831
    %v5437 = vpop.f32.mrb[0].mxu0
    %v5438 = vadd.f32 %v5149, %v5437
    %v5439 = vpop.f32.mrb[0].mxu0
    %v5440 = vpop.f32.mrb[0].mxu0
    %v5441 = vadd.f32 %v5152, %v5440
    %v5442 = vpop.f32.mrb[0].mxu0
    %5443 = vmatprep.mubr.bf16.mxu0 %v3928
    %5444 = vmatmul.mubr.bf16.gmra.mrb[0].mxu0 %v3832
    %v5445 = vpop.f32.mrb[0].mxu0
    %v5446 = vadd.f32 %v5157, %v5445
    %v5447 = vpop.f32.mrb[0].mxu0
    %v5448 = vpop.f32.mrb[0].mxu0
    %v5449 = vadd.f32 %v5160, %v5448
    %v5450 = vpop.f32.mrb[0].mxu0
    %5451 = vmatprep.mubr.bf16.mxu0 %v3929
    %5452 = vmatmul.mubr.bf16.gmra.mrb[0].mxu0 %v3833
    %v5453 = vpop.f32.mrb[0].mxu0
    %v5454 = vadd.f32 %v5165, %v5453
    %v5455 = vpop.f32.mrb[0].mxu0
    %v5456 = vpop.f32.mrb[0].mxu0
    %v5457 = vadd.f32 %v5168, %v5456
    %v5458 = vpop.f32.mrb[0].mxu0
    %5459 = vmatprep.mubr.bf16.mxu0 %v3930
    %5460 = vmatmul.mubr.bf16.gmra.mrb[0].mxu0 %v3834
    %v5461 = vpop.f32.mrb[0].mxu0
    %v5462 = vadd.f32 %v5173, %v5461
    %v5463 = vpop.f32.mrb[0].mxu0
    %v5464 = vpop.f32.mrb[0].mxu0
    %v5465 = vadd.f32 %v5176, %v5464
    %v5466 = vpop.f32.mrb[0].mxu0
    %5467 = vmatprep.mubr.bf16.mxu0 %v3931
    %5468 = vmatmul.mubr.bf16.gmra.mrb[0].mxu0 %v3835
    %v5469 = vpop.f32.mrb[0].mxu0
    %v5470 = vadd.f32 %v5181, %v5469
    %v5471 = vpop.f32.mrb[0].mxu0
    %v5472 = vpop.f32.mrb[0].mxu0
    %v5473 = vadd.f32 %v5184, %v5472
    %v5474 = vpop.f32.mrb[0].mxu0
    %5475 = vmatprep.mubr.bf16.mxu0 %v3932
    %5476 = vmatmul.mubr.bf16.gmra.mrb[0].mxu0 %v3836
    %v5477 = vpop.f32.mrb[0].mxu0
    %v5478 = vadd.f32 %v5189, %v5477
    %v5479 = vpop.f32.mrb[0].mxu0
    %v5480 = vpop.f32.mrb[0].mxu0
    %v5481 = vadd.f32 %v5192, %v5480
    %v5482 = vpop.f32.mrb[0].mxu0
    %5483 = vmatprep.mubr.bf16.mxu0 %v3933
    %5484 = vmatmul.mubr.bf16.gmra.mrb[0].mxu0 %v3837
    %v5485 = vpop.f32.mrb[0].mxu0
    %v5486 = vadd.f32 %v5197, %v5485
    %v5487 = vpop.f32.mrb[0].mxu0
    %v5488 = vpop.f32.mrb[0].mxu0
    %v5489 = vadd.f32 %v5200, %v5488
    %v5490 = vpop.f32.mrb[0].mxu0
    %5491 = vmatprep.mubr.bf16.mxu0 %v3934
    %5492 = vmatmul.mubr.bf16.gmra.mrb[0].mxu0 %v3838
    %v5493 = vpop.f32.mrb[0].mxu0
    %v5494 = vadd.f32 %v5205, %v5493
    %v5495 = vpop.f32.mrb[0].mxu0
    %v5496 = vpop.f32.mrb[0].mxu0
    %v5497 = vadd.f32 %v5208, %v5496
    %v5498 = vpop.f32.mrb[0].mxu0
    %5499 = vmatprep.mubr.bf16.mxu0 %v3935
    %5500 = vmatmul.mubr.bf16.gmra.mrb[0].mxu0 %v3839
    %v5501 = vpop.f32.mrb[0].mxu0
    %v5502 = vadd.f32 %v5213, %v5501
    %v5503 = vpop.f32.mrb[0].mxu0
    %v5504 = vpop.f32.mrb[0].mxu0
    %v5505 = vadd.f32 %v5216, %v5504
    %v5506 = vpop.f32.mrb[0].mxu0
    %5507 = vmatprep.mubr.bf16.mxu0 %v3936
    %5508 = vmatmul.mubr.bf16.gmra.mrb[0].mxu0 %v3840
    %v5509 = vpop.f32.mrb[0].mxu0
    %v5510 = vadd.f32 %v5221, %v5509
    %v5511 = vpop.f32.mrb[0].mxu0
    %v5512 = vpop.f32.mrb[0].mxu0
    %v5513 = vadd.f32 %v5224, %v5512
    %v5514 = vpop.f32.mrb[0].mxu0
    %5515 = vmatprep.mubr.bf16.mxu0 %v3937
    %5516 = vmatmul.mubr.bf16.gmra.mrb[0].mxu0 %v3841
    %v5517 = vpop.f32.mrb[0].mxu0
    %v5518 = vadd.f32 %v5229, %v5517
    %v5519 = vpop.f32.mrb[0].mxu0
    %v5520 = vpop.f32.mrb[0].mxu0
    %v5521 = vadd.f32 %v5232, %v5520
    %v5522 = vpop.f32.mrb[0].mxu0
    %5523 = vmatprep.mubr.bf16.mxu0 %v3938
    %5524 = vmatmul.mubr.bf16.gmra.mrb[0].mxu0 %v3842
    %v5525 = vpop.f32.mrb[0].mxu0
    %v5526 = vadd.f32 %v5237, %v5525
    %v5527 = vpop.f32.mrb[0].mxu0
    %v5528 = vpop.f32.mrb[0].mxu0
    %v5529 = vadd.f32 %v5240, %v5528
    %v5530 = vpop.f32.mrb[0].mxu0
    %5531 = vmatprep.mubr.bf16.mxu0 %v3939
    %5532 = vmatmul.mubr.bf16.gmra.mrb[0].mxu0 %v3843
    %v5533 = vpop.f32.mrb[0].mxu0
    %v5534 = vadd.f32 %v5245, %v5533
    %v5535 = vpop.f32.mrb[0].mxu0
    %v5536 = vpop.f32.mrb[0].mxu0
    %v5537 = vadd.f32 %v5248, %v5536
    %v5538 = vpop.f32.mrb[0].mxu0
    %5539 = vmatprep.mubr.bf16.mxu0 %v3940
    %5540 = vmatmul.mubr.bf16.gmra.mrb[0].mxu0 %v3844
    %v5541 = vpop.f32.mrb[0].mxu0
    %v5542 = vadd.f32 %v5253, %v5541
    %v5543 = vpop.f32.mrb[0].mxu0
    %v5544 = vpop.f32.mrb[0].mxu0
    %v5545 = vadd.f32 %v5256, %v5544
    %v5546 = vpop.f32.mrb[0].mxu0
    %5547 = vmatprep.mubr.bf16.mxu0 %v3941
    %5548 = vmatmul.mubr.bf16.gmra.mrb[0].mxu0 %v3845
    %v5549 = vpop.f32.mrb[0].mxu0
    %v5550 = vadd.f32 %v5261, %v5549
    %v5551 = vpop.f32.mrb[0].mxu0
    %v5552 = vpop.f32.mrb[0].mxu0
    %v5553 = vadd.f32 %v5264, %v5552
    %v5554 = vpop.f32.mrb[0].mxu0
    %5555 = vmatprep.mubr.bf16.mxu0 %v3942
    %5556 = vmatmul.mubr.bf16.gmra.mrb[0].mxu0 %v3846
    %v5557 = vpop.f32.mrb[0].mxu0
    %v5558 = vadd.f32 %v5269, %v5557
    %v5559 = vpop.f32.mrb[0].mxu0
    %v5560 = vpop.f32.mrb[0].mxu0
    %v5561 = vadd.f32 %v5272, %v5560
    %v5562 = vpop.f32.mrb[0].mxu0
    %5563 = vmatprep.mubr.bf16.mxu0 %v3943
    %5564 = vmatmul.mubr.bf16.gmra.mrb[0].mxu0 %v3847
    %v5565 = vpop.f32.mrb[0].mxu0
    %v5566 = vadd.f32 %v5277, %v5565
    %v5567 = vpop.f32.mrb[0].mxu0
    %v5568 = vpop.f32.mrb[0].mxu0
    %v5569 = vadd.f32 %v5280, %v5568
    %v5570 = vpop.f32.mrb[0].mxu0
    %5571 = vmatprep.mubr.bf16.mxu0 %v3944
    %5572 = vmatmul.mubr.bf16.gmra.mrb[0].mxu0 %v3848
    %v5573 = vpop.f32.mrb[0].mxu0
    %v5574 = vadd.f32 %v5285, %v5573
    %v5575 = vpop.f32.mrb[0].mxu0
    %v5576 = vpop.f32.mrb[0].mxu0
    %v5577 = vadd.f32 %v5288, %v5576
    %v5578 = vpop.f32.mrb[0].mxu0
    %5579 = vdwg.mxu0
    %5580 = vmatprep.subr.bf16.mxu0 0
    %5581 = vmatpush1.bf16.msra.mxu0 %v4890
    %5582 = vmatprep.subr.bf16.mxu0 0
    %5583 = vmatpush1.bf16.msra.mxu0 %v4891
    %5584 = vmatprep.subr.bf16.mxu0 0
    %5585 = vmatpush1.bf16.msra.mxu0 %v4892
    %5586 = vmatprep.subr.bf16.mxu0 0
    %5587 = vmatpush1.bf16.msra.mxu0 %v4893
    %5588 = vmatprep.subr.bf16.mxu0 0
    %5589 = vmatpush1.bf16.msra.mxu0 %v4894
    %5590 = vmatprep.subr.bf16.mxu0 0
    %5591 = vmatpush1.bf16.msra.mxu0 %v4895
    %5592 = vmatprep.subr.bf16.mxu0 0
    %5593 = vmatpush1.bf16.msra.mxu0 %v4896
    %5594 = vmatprep.subr.bf16.mxu0 0
    %5595 = vmatpush1.bf16.msra.mxu0 %v4897
    %5596 = vmatprep.subr.bf16.mxu0 0
    %5597 = vmatpush1.bf16.msra.mxu0 %v4898
    %5598 = vmatprep.subr.bf16.mxu0 0
    %5599 = vmatpush1.bf16.msra.mxu0 %v4899
    %5600 = vmatprep.subr.bf16.mxu0 0
    %5601 = vmatpush1.bf16.msra.mxu0 %v4900
    %5602 = vmatprep.subr.bf16.mxu0 0
    %5603 = vmatpush1.bf16.msra.mxu0 %v4901
    %5604 = vmatprep.subr.bf16.mxu0 0
    %5605 = vmatpush1.bf16.msra.mxu0 %v4902
    %5606 = vmatprep.subr.bf16.mxu0 0
    %5607 = vmatpush1.bf16.msra.mxu0 %v4903
    %5608 = vmatprep.subr.bf16.mxu0 0
    %5609 = vmatpush1.bf16.msra.mxu0 %v4904
    %5610 = vmatprep.subr.bf16.mxu0 0
    %5611 = vmatpush1.bf16.msra.mxu0 %v4905
    %5612 = vmatprep.mubr.bf16.mxu0 %v4105
    %5613 = vmatmul.mubr.bf16.gmra.mrb[0].mxu0 %v4009
    %v5614 = vpop.f32.mrb[0].mxu0
    %v5615 = vadd.f32 %v5326, %v5614
    %v5616 = vpop.f32.mrb[0].mxu0
    %v5617 = vpop.f32.mrb[0].mxu0
    %v5618 = vadd.f32 %v5329, %v5617
    %v5619 = vpop.f32.mrb[0].mxu0
    %5620 = vmatprep.mubr.bf16.mxu0 %v4106
    %5621 = vmatmul.mubr.bf16.gmra.mrb[0].mxu0 %v4010
    %v5622 = vpop.f32.mrb[0].mxu0
    %v5623 = vadd.f32 %v5334, %v5622
    %v5624 = vpop.f32.mrb[0].mxu0
    %v5625 = vpop.f32.mrb[0].mxu0
    %v5626 = vadd.f32 %v5337, %v5625
    %v5627 = vpop.f32.mrb[0].mxu0
    %5628 = vmatprep.mubr.bf16.mxu0 %v4107
    %5629 = vmatmul.mubr.bf16.gmra.mrb[0].mxu0 %v4011
    %v5630 = vpop.f32.mrb[0].mxu0
    %v5631 = vadd.f32 %v5342, %v5630
    %v5632 = vpop.f32.mrb[0].mxu0
    %v5633 = vpop.f32.mrb[0].mxu0
    %v5634 = vadd.f32 %v5345, %v5633
    %v5635 = vpop.f32.mrb[0].mxu0
    %5636 = vmatprep.mubr.bf16.mxu0 %v4108
    %5637 = vmatmul.mubr.bf16.gmra.mrb[0].mxu0 %v4012
    %v5638 = vpop.f32.mrb[0].mxu0
    %v5639 = vadd.f32 %v5350, %v5638
    %v5640 = vpop.f32.mrb[0].mxu0
    %v5641 = vpop.f32.mrb[0].mxu0
    %v5642 = vadd.f32 %v5353, %v5641
    %v5643 = vpop.f32.mrb[0].mxu0
    %5644 = vmatprep.mubr.bf16.mxu0 %v4109
    %5645 = vmatmul.mubr.bf16.gmra.mrb[0].mxu0 %v4013
    %v5646 = vpop.f32.mrb[0].mxu0
    %v5647 = vadd.f32 %v5358, %v5646
    %v5648 = vpop.f32.mrb[0].mxu0
    %v5649 = vpop.f32.mrb[0].mxu0
    %v5650 = vadd.f32 %v5361, %v5649
    %v5651 = vpop.f32.mrb[0].mxu0
    %5652 = vmatprep.mubr.bf16.mxu0 %v4110
    %5653 = vmatmul.mubr.bf16.gmra.mrb[0].mxu0 %v4014
    %v5654 = vpop.f32.mrb[0].mxu0
    %v5655 = vadd.f32 %v5366, %v5654
    %v5656 = vpop.f32.mrb[0].mxu0
    %v5657 = vpop.f32.mrb[0].mxu0
    %v5658 = vadd.f32 %v5369, %v5657
    %v5659 = vpop.f32.mrb[0].mxu0
    %5660 = vmatprep.mubr.bf16.mxu0 %v4111
    %5661 = vmatmul.mubr.bf16.gmra.mrb[0].mxu0 %v4015
    %v5662 = vpop.f32.mrb[0].mxu0
    %v5663 = vadd.f32 %v5374, %v5662
    %v5664 = vpop.f32.mrb[0].mxu0
    %v5665 = vpop.f32.mrb[0].mxu0
    %v5666 = vadd.f32 %v5377, %v5665
    %v5667 = vpop.f32.mrb[0].mxu0
    %5668 = vmatprep.mubr.bf16.mxu0 %v4112
    %5669 = vmatmul.mubr.bf16.gmra.mrb[0].mxu0 %v4016
    %v5670 = vpop.f32.mrb[0].mxu0
    %v5671 = vadd.f32 %v5382, %v5670
    %v5672 = vpop.f32.mrb[0].mxu0
    %v5673 = vpop.f32.mrb[0].mxu0
    %v5674 = vadd.f32 %v5385, %v5673
    %v5675 = vpop.f32.mrb[0].mxu0
    %5676 = vmatprep.mubr.bf16.mxu0 %v4113
    %5677 = vmatmul.mubr.bf16.gmra.mrb[0].mxu0 %v4017
    %v5678 = vpop.f32.mrb[0].mxu0
    %v5679 = vadd.f32 %v5390, %v5678
    %v5680 = vpop.f32.mrb[0].mxu0
    %v5681 = vpop.f32.mrb[0].mxu0
    %v5682 = vadd.f32 %v5393, %v5681
    %v5683 = vpop.f32.mrb[0].mxu0
    %5684 = vmatprep.mubr.bf16.mxu0 %v4114
    %5685 = vmatmul.mubr.bf16.gmra.mrb[0].mxu0 %v4018
    %v5686 = vpop.f32.mrb[0].mxu0
    %v5687 = vadd.f32 %v5398, %v5686
    %v5688 = vpop.f32.mrb[0].mxu0
    %v5689 = vpop.f32.mrb[0].mxu0
    %v5690 = vadd.f32 %v5401, %v5689
    %v5691 = vpop.f32.mrb[0].mxu0
    %5692 = vmatprep.mubr.bf16.mxu0 %v4115
    %5693 = vmatmul.mubr.bf16.gmra.mrb[0].mxu0 %v4019
    %v5694 = vpop.f32.mrb[0].mxu0
    %v5695 = vadd.f32 %v5406, %v5694
    %v5696 = vpop.f32.mrb[0].mxu0
    %v5697 = vpop.f32.mrb[0].mxu0
    %v5698 = vadd.f32 %v5409, %v5697
    %v5699 = vpop.f32.mrb[0].mxu0
    %5700 = vmatprep.mubr.bf16.mxu0 %v4116
    %5701 = vmatmul.mubr.bf16.gmra.mrb[0].mxu0 %v4020
    %v5702 = vpop.f32.mrb[0].mxu0
    %v5703 = vadd.f32 %v5414, %v5702
    %v5704 = vpop.f32.mrb[0].mxu0
    %v5705 = vpop.f32.mrb[0].mxu0
    %v5706 = vadd.f32 %v5417, %v5705
    %v5707 = vpop.f32.mrb[0].mxu0
    %5708 = vmatprep.mubr.bf16.mxu0 %v4117
    %5709 = vmatmul.mubr.bf16.gmra.mrb[0].mxu0 %v4021
    %v5710 = vpop.f32.mrb[0].mxu0
    %v5711 = vadd.f32 %v5422, %v5710
    %v5712 = vpop.f32.mrb[0].mxu0
    %v5713 = vpop.f32.mrb[0].mxu0
    %v5714 = vadd.f32 %v5425, %v5713
    %v5715 = vpop.f32.mrb[0].mxu0
    %5716 = vmatprep.mubr.bf16.mxu0 %v4118
    %5717 = vmatmul.mubr.bf16.gmra.mrb[0].mxu0 %v4022
    %v5718 = vpop.f32.mrb[0].mxu0
    %v5719 = vadd.f32 %v5430, %v5718
    %v5720 = vpop.f32.mrb[0].mxu0
    %v5721 = vpop.f32.mrb[0].mxu0
    %v5722 = vadd.f32 %v5433, %v5721
    %v5723 = vpop.f32.mrb[0].mxu0
    %5724 = vmatprep.mubr.bf16.mxu0 %v4119
    %5725 = vmatmul.mubr.bf16.gmra.mrb[0].mxu0 %v4023
    %v5726 = vpop.f32.mrb[0].mxu0
    %v5727 = vadd.f32 %v5438, %v5726
    %v5728 = vpop.f32.mrb[0].mxu0
    %v5729 = vpop.f32.mrb[0].mxu0
    %v5730 = vadd.f32 %v5441, %v5729
    %v5731 = vpop.f32.mrb[0].mxu0
    %5732 = vmatprep.mubr.bf16.mxu0 %v4120
    %5733 = vmatmul.mubr.bf16.gmra.mrb[0].mxu0 %v4024
    %v5734 = vpop.f32.mrb[0].mxu0
    %v5735 = vadd.f32 %v5446, %v5734
    %v5736 = vpop.f32.mrb[0].mxu0
    %v5737 = vpop.f32.mrb[0].mxu0
    %v5738 = vadd.f32 %v5449, %v5737
    %v5739 = vpop.f32.mrb[0].mxu0
    %5740 = vmatprep.mubr.bf16.mxu0 %v4121
    %5741 = vmatmul.mubr.bf16.gmra.mrb[0].mxu0 %v4025
    %v5742 = vpop.f32.mrb[0].mxu0
    %v5743 = vadd.f32 %v5454, %v5742
    %v5744 = vpop.f32.mrb[0].mxu0
    %v5745 = vpop.f32.mrb[0].mxu0
    %v5746 = vadd.f32 %v5457, %v5745
    %v5747 = vpop.f32.mrb[0].mxu0
    %5748 = vmatprep.mubr.bf16.mxu0 %v4122
    %5749 = vmatmul.mubr.bf16.gmra.mrb[0].mxu0 %v4026
    %v5750 = vpop.f32.mrb[0].mxu0
    %v5751 = vadd.f32 %v5462, %v5750
    %v5752 = vpop.f32.mrb[0].mxu0
    %v5753 = vpop.f32.mrb[0].mxu0
    %v5754 = vadd.f32 %v5465, %v5753
    %v5755 = vpop.f32.mrb[0].mxu0
    %5756 = vmatprep.mubr.bf16.mxu0 %v4123
    %5757 = vmatmul.mubr.bf16.gmra.mrb[0].mxu0 %v4027
    %v5758 = vpop.f32.mrb[0].mxu0
    %v5759 = vadd.f32 %v5470, %v5758
    %v5760 = vpop.f32.mrb[0].mxu0
    %v5761 = vpop.f32.mrb[0].mxu0
    %v5762 = vadd.f32 %v5473, %v5761
    %v5763 = vpop.f32.mrb[0].mxu0
    %5764 = vmatprep.mubr.bf16.mxu0 %v4124
    %5765 = vmatmul.mubr.bf16.gmra.mrb[0].mxu0 %v4028
    %v5766 = vpop.f32.mrb[0].mxu0
    %v5767 = vadd.f32 %v5478, %v5766
    %v5768 = vpop.f32.mrb[0].mxu0
    %v5769 = vpop.f32.mrb[0].mxu0
    %v5770 = vadd.f32 %v5481, %v5769
    %v5771 = vpop.f32.mrb[0].mxu0
    %5772 = vmatprep.mubr.bf16.mxu0 %v4125
    %5773 = vmatmul.mubr.bf16.gmra.mrb[0].mxu0 %v4029
    %v5774 = vpop.f32.mrb[0].mxu0
    %v5775 = vadd.f32 %v5486, %v5774
    %v5776 = vpop.f32.mrb[0].mxu0
    %v5777 = vpop.f32.mrb[0].mxu0
    %v5778 = vadd.f32 %v5489, %v5777
    %v5779 = vpop.f32.mrb[0].mxu0
    %5780 = vmatprep.mubr.bf16.mxu0 %v4126
    %5781 = vmatmul.mubr.bf16.gmra.mrb[0].mxu0 %v4030
    %v5782 = vpop.f32.mrb[0].mxu0
    %v5783 = vadd.f32 %v5494, %v5782
    %v5784 = vpop.f32.mrb[0].mxu0
    %v5785 = vpop.f32.mrb[0].mxu0
    %v5786 = vadd.f32 %v5497, %v5785
    %v5787 = vpop.f32.mrb[0].mxu0
    %5788 = vmatprep.mubr.bf16.mxu0 %v4127
    %5789 = vmatmul.mubr.bf16.gmra.mrb[0].mxu0 %v4031
    %v5790 = vpop.f32.mrb[0].mxu0
    %v5791 = vadd.f32 %v5502, %v5790
    %v5792 = vpop.f32.mrb[0].mxu0
    %v5793 = vpop.f32.mrb[0].mxu0
    %v5794 = vadd.f32 %v5505, %v5793
    %v5795 = vpop.f32.mrb[0].mxu0
    %5796 = vmatprep.mubr.bf16.mxu0 %v4128
    %5797 = vmatmul.mubr.bf16.gmra.mrb[0].mxu0 %v4032
    %v5798 = vpop.f32.mrb[0].mxu0
    %v5799 = vadd.f32 %v5510, %v5798
    %v5800 = vpop.f32.mrb[0].mxu0
    %v5801 = vpop.f32.mrb[0].mxu0
    %v5802 = vadd.f32 %v5513, %v5801
    %v5803 = vpop.f32.mrb[0].mxu0
    %5804 = vmatprep.mubr.bf16.mxu0 %v4129
    %5805 = vmatmul.mubr.bf16.gmra.mrb[0].mxu0 %v4033
    %v5806 = vpop.f32.mrb[0].mxu0
    %v5807 = vadd.f32 %v5518, %v5806
    %v5808 = vpop.f32.mrb[0].mxu0
    %v5809 = vpop.f32.mrb[0].mxu0
    %v5810 = vadd.f32 %v5521, %v5809
    %v5811 = vpop.f32.mrb[0].mxu0
    %5812 = vmatprep.mubr.bf16.mxu0 %v4130
    %5813 = vmatmul.mubr.bf16.gmra.mrb[0].mxu0 %v4034
    %v5814 = vpop.f32.mrb[0].mxu0
    %v5815 = vadd.f32 %v5526, %v5814
    %v5816 = vpop.f32.mrb[0].mxu0
    %v5817 = vpop.f32.mrb[0].mxu0
    %v5818 = vadd.f32 %v5529, %v5817
    %v5819 = vpop.f32.mrb[0].mxu0
    %5820 = vmatprep.mubr.bf16.mxu0 %v4131
    %5821 = vmatmul.mubr.bf16.gmra.mrb[0].mxu0 %v4035
    %v5822 = vpop.f32.mrb[0].mxu0
    %v5823 = vadd.f32 %v5534, %v5822
    %v5824 = vpop.f32.mrb[0].mxu0
    %v5825 = vpop.f32.mrb[0].mxu0
    %v5826 = vadd.f32 %v5537, %v5825
    %v5827 = vpop.f32.mrb[0].mxu0
    %5828 = vmatprep.mubr.bf16.mxu0 %v4132
    %5829 = vmatmul.mubr.bf16.gmra.mrb[0].mxu0 %v4036
    %v5830 = vpop.f32.mrb[0].mxu0
    %v5831 = vadd.f32 %v5542, %v5830
    %v5832 = vpop.f32.mrb[0].mxu0
    %v5833 = vpop.f32.mrb[0].mxu0
    %v5834 = vadd.f32 %v5545, %v5833
    %v5835 = vpop.f32.mrb[0].mxu0
    %5836 = vmatprep.mubr.bf16.mxu0 %v4133
    %5837 = vmatmul.mubr.bf16.gmra.mrb[0].mxu0 %v4037
    %v5838 = vpop.f32.mrb[0].mxu0
    %v5839 = vadd.f32 %v5550, %v5838
    %v5840 = vpop.f32.mrb[0].mxu0
    %v5841 = vpop.f32.mrb[0].mxu0
    %v5842 = vadd.f32 %v5553, %v5841
    %v5843 = vpop.f32.mrb[0].mxu0
    %5844 = vmatprep.mubr.bf16.mxu0 %v4134
    %5845 = vmatmul.mubr.bf16.gmra.mrb[0].mxu0 %v4038
    %v5846 = vpop.f32.mrb[0].mxu0
    %v5847 = vadd.f32 %v5558, %v5846
    %v5848 = vpop.f32.mrb[0].mxu0
    %v5849 = vpop.f32.mrb[0].mxu0
    %v5850 = vadd.f32 %v5561, %v5849
    %v5851 = vpop.f32.mrb[0].mxu0
    %5852 = vmatprep.mubr.bf16.mxu0 %v4135
    %5853 = vmatmul.mubr.bf16.gmra.mrb[0].mxu0 %v4039
    %v5854 = vpop.f32.mrb[0].mxu0
    %v5855 = vadd.f32 %v5566, %v5854
    %v5856 = vpop.f32.mrb[0].mxu0
    %v5857 = vpop.f32.mrb[0].mxu0
    %v5858 = vadd.f32 %v5569, %v5857
    %v5859 = vpop.f32.mrb[0].mxu0
    %5860 = vmatprep.mubr.bf16.mxu0 %v4136
    %5861 = vmatmul.mubr.bf16.gmra.mrb[0].mxu0 %v4040
    %v5862 = vpop.f32.mrb[0].mxu0
    %v5863 = vadd.f32 %v5574, %v5862
    %v5864 = vpop.f32.mrb[0].mxu0
    %v5865 = vpop.f32.mrb[0].mxu0
    %v5866 = vadd.f32 %v5577, %v5865
    %v5867 = vpop.f32.mrb[0].mxu0
    %5868 = vdwg.mxu0
    %5869 = vmatprep.subr.bf16.mxu0 0
    %5870 = vmatpush1.bf16.msra.mxu0 %v4906
    %5871 = vmatprep.subr.bf16.mxu0 0
    %5872 = vmatpush1.bf16.msra.mxu0 %v4907
    %5873 = vmatprep.subr.bf16.mxu0 0
    %5874 = vmatpush1.bf16.msra.mxu0 %v4908
    %5875 = vmatprep.subr.bf16.mxu0 0
    %5876 = vmatpush1.bf16.msra.mxu0 %v4909
    %5877 = vmatprep.subr.bf16.mxu0 0
    %5878 = vmatpush1.bf16.msra.mxu0 %v4910
    %5879 = vmatprep.subr.bf16.mxu0 0
    %5880 = vmatpush1.bf16.msra.mxu0 %v4911
    %5881 = vmatprep.subr.bf16.mxu0 0
    %5882 = vmatpush1.bf16.msra.mxu0 %v4912
    %5883 = vmatprep.subr.bf16.mxu0 0
    %5884 = vmatpush1.bf16.msra.mxu0 %v4913
    %5885 = vmatprep.subr.bf16.mxu0 0
    %5886 = vmatpush1.bf16.msra.mxu0 %v4914
    %5887 = vmatprep.subr.bf16.mxu0 0
    %5888 = vmatpush1.bf16.msra.mxu0 %v4915
    %5889 = vmatprep.subr.bf16.mxu0 0
    %5890 = vmatpush1.bf16.msra.mxu0 %v4916
    %5891 = vmatprep.subr.bf16.mxu0 0
    %5892 = vmatpush1.bf16.msra.mxu0 %v4917
    %5893 = vmatprep.subr.bf16.mxu0 0
    %5894 = vmatpush1.bf16.msra.mxu0 %v4918
    %5895 = vmatprep.subr.bf16.mxu0 0
    %5896 = vmatpush1.bf16.msra.mxu0 %v4919
    %5897 = vmatprep.subr.bf16.mxu0 0
    %5898 = vmatpush1.bf16.msra.mxu0 %v4920
    %5899 = vmatprep.subr.bf16.mxu0 0
    %5900 = vmatpush1.bf16.msra.mxu0 %v4921
    %5901 = vmatprep.mubr.bf16.mxu0 %v4298
    %5902 = vmatmul.mubr.bf16.gmra.mrb[0].mxu0 %v4202
    %v5903 = vpop.f32.mrb[0].mxu0
    %v5904 = vadd.f32 %v5615, %v5903
    %v5905 = vpop.f32.mrb[0].mxu0
    %v5906 = vpop.f32.mrb[0].mxu0
    %v5907 = vadd.f32 %v5618, %v5906
    %v5908 = vpop.f32.mrb[0].mxu0
    %5909 = vmatprep.mubr.bf16.mxu0 %v4299
    %5910 = vmatmul.mubr.bf16.gmra.mrb[0].mxu0 %v4203
    %v5911 = vpop.f32.mrb[0].mxu0
    %v5912 = vadd.f32 %v5623, %v5911
    %v5913 = vpop.f32.mrb[0].mxu0
    %v5914 = vpop.f32.mrb[0].mxu0
    %v5915 = vadd.f32 %v5626, %v5914
    %v5916 = vpop.f32.mrb[0].mxu0
    %5917 = vmatprep.mubr.bf16.mxu0 %v4300
    %5918 = vmatmul.mubr.bf16.gmra.mrb[0].mxu0 %v4204
    %v5919 = vpop.f32.mrb[0].mxu0
    %v5920 = vadd.f32 %v5631, %v5919
    %v5921 = vpop.f32.mrb[0].mxu0
    %v5922 = vpop.f32.mrb[0].mxu0
    %v5923 = vadd.f32 %v5634, %v5922
    %v5924 = vpop.f32.mrb[0].mxu0
    %5925 = vmatprep.mubr.bf16.mxu0 %v4301
    %5926 = vmatmul.mubr.bf16.gmra.mrb[0].mxu0 %v4205
    %v5927 = vpop.f32.mrb[0].mxu0
    %v5928 = vadd.f32 %v5639, %v5927
    %v5929 = vpop.f32.mrb[0].mxu0
    %v5930 = vpop.f32.mrb[0].mxu0
    %v5931 = vadd.f32 %v5642, %v5930
    %v5932 = vpop.f32.mrb[0].mxu0
    %5933 = vmatprep.mubr.bf16.mxu0 %v4302
    %5934 = vmatmul.mubr.bf16.gmra.mrb[0].mxu0 %v4206
    %v5935 = vpop.f32.mrb[0].mxu0
    %v5936 = vadd.f32 %v5647, %v5935
    %v5937 = vpop.f32.mrb[0].mxu0
    %v5938 = vpop.f32.mrb[0].mxu0
    %v5939 = vadd.f32 %v5650, %v5938
    %v5940 = vpop.f32.mrb[0].mxu0
    %5941 = vmatprep.mubr.bf16.mxu0 %v4303
    %5942 = vmatmul.mubr.bf16.gmra.mrb[0].mxu0 %v4207
    %v5943 = vpop.f32.mrb[0].mxu0
    %v5944 = vadd.f32 %v5655, %v5943
    %v5945 = vpop.f32.mrb[0].mxu0
    %v5946 = vpop.f32.mrb[0].mxu0
    %v5947 = vadd.f32 %v5658, %v5946
    %v5948 = vpop.f32.mrb[0].mxu0
    %5949 = vmatprep.mubr.bf16.mxu0 %v4304
    %5950 = vmatmul.mubr.bf16.gmra.mrb[0].mxu0 %v4208
    %v5951 = vpop.f32.mrb[0].mxu0
    %v5952 = vadd.f32 %v5663, %v5951
    %v5953 = vpop.f32.mrb[0].mxu0
    %v5954 = vpop.f32.mrb[0].mxu0
    %v5955 = vadd.f32 %v5666, %v5954
    %v5956 = vpop.f32.mrb[0].mxu0
    %5957 = vmatprep.mubr.bf16.mxu0 %v4305
    %5958 = vmatmul.mubr.bf16.gmra.mrb[0].mxu0 %v4209
    %v5959 = vpop.f32.mrb[0].mxu0
    %v5960 = vadd.f32 %v5671, %v5959
    %v5961 = vpop.f32.mrb[0].mxu0
    %v5962 = vpop.f32.mrb[0].mxu0
    %v5963 = vadd.f32 %v5674, %v5962
    %v5964 = vpop.f32.mrb[0].mxu0
    %5965 = vmatprep.mubr.bf16.mxu0 %v4306
    %5966 = vmatmul.mubr.bf16.gmra.mrb[0].mxu0 %v4210
    %v5967 = vpop.f32.mrb[0].mxu0
    %v5968 = vadd.f32 %v5679, %v5967
    %v5969 = vpop.f32.mrb[0].mxu0
    %v5970 = vpop.f32.mrb[0].mxu0
    %v5971 = vadd.f32 %v5682, %v5970
    %v5972 = vpop.f32.mrb[0].mxu0
    %5973 = vmatprep.mubr.bf16.mxu0 %v4307
    %5974 = vmatmul.mubr.bf16.gmra.mrb[0].mxu0 %v4211
    %v5975 = vpop.f32.mrb[0].mxu0
    %v5976 = vadd.f32 %v5687, %v5975
    %v5977 = vpop.f32.mrb[0].mxu0
    %v5978 = vpop.f32.mrb[0].mxu0
    %v5979 = vadd.f32 %v5690, %v5978
    %v5980 = vpop.f32.mrb[0].mxu0
    %5981 = vmatprep.mubr.bf16.mxu0 %v4308
    %5982 = vmatmul.mubr.bf16.gmra.mrb[0].mxu0 %v4212
    %v5983 = vpop.f32.mrb[0].mxu0
    %v5984 = vadd.f32 %v5695, %v5983
    %v5985 = vpop.f32.mrb[0].mxu0
    %v5986 = vpop.f32.mrb[0].mxu0
    %v5987 = vadd.f32 %v5698, %v5986
    %v5988 = vpop.f32.mrb[0].mxu0
    %5989 = vmatprep.mubr.bf16.mxu0 %v4309
    %5990 = vmatmul.mubr.bf16.gmra.mrb[0].mxu0 %v4213
    %v5991 = vpop.f32.mrb[0].mxu0
    %v5992 = vadd.f32 %v5703, %v5991
    %v5993 = vpop.f32.mrb[0].mxu0
    %v5994 = vpop.f32.mrb[0].mxu0
    %v5995 = vadd.f32 %v5706, %v5994
    %v5996 = vpop.f32.mrb[0].mxu0
    %5997 = vmatprep.mubr.bf16.mxu0 %v4310
    %5998 = vmatmul.mubr.bf16.gmra.mrb[0].mxu0 %v4214
    %v5999 = vpop.f32.mrb[0].mxu0
    %v6000 = vadd.f32 %v5711, %v5999
    %v6001 = vpop.f32.mrb[0].mxu0
    %v6002 = vpop.f32.mrb[0].mxu0
    %v6003 = vadd.f32 %v5714, %v6002
    %v6004 = vpop.f32.mrb[0].mxu0
    %6005 = vmatprep.mubr.bf16.mxu0 %v4311
    %6006 = vmatmul.mubr.bf16.gmra.mrb[0].mxu0 %v4215
    %v6007 = vpop.f32.mrb[0].mxu0
    %v6008 = vadd.f32 %v5719, %v6007
    %v6009 = vpop.f32.mrb[0].mxu0
    %v6010 = vpop.f32.mrb[0].mxu0
    %v6011 = vadd.f32 %v5722, %v6010
    %v6012 = vpop.f32.mrb[0].mxu0
    %6013 = vmatprep.mubr.bf16.mxu0 %v4312
    %6014 = vmatmul.mubr.bf16.gmra.mrb[0].mxu0 %v4216
    %v6015 = vpop.f32.mrb[0].mxu0
    %v6016 = vadd.f32 %v5727, %v6015
    %v6017 = vpop.f32.mrb[0].mxu0
    %v6018 = vpop.f32.mrb[0].mxu0
    %v6019 = vadd.f32 %v5730, %v6018
    %v6020 = vpop.f32.mrb[0].mxu0
    %6021 = vmatprep.mubr.bf16.mxu0 %v4313
    %6022 = vmatmul.mubr.bf16.gmra.mrb[0].mxu0 %v4217
    %v6023 = vpop.f32.mrb[0].mxu0
    %v6024 = vadd.f32 %v5735, %v6023
    %v6025 = vpop.f32.mrb[0].mxu0
    %v6026 = vpop.f32.mrb[0].mxu0
    %v6027 = vadd.f32 %v5738, %v6026
    %v6028 = vpop.f32.mrb[0].mxu0
    %6029 = vmatprep.mubr.bf16.mxu0 %v4314
    %6030 = vmatmul.mubr.bf16.gmra.mrb[0].mxu0 %v4218
    %v6031 = vpop.f32.mrb[0].mxu0
    %v6032 = vadd.f32 %v5743, %v6031
    %v6033 = vpop.f32.mrb[0].mxu0
    %v6034 = vpop.f32.mrb[0].mxu0
    %v6035 = vadd.f32 %v5746, %v6034
    %v6036 = vpop.f32.mrb[0].mxu0
    %6037 = vmatprep.mubr.bf16.mxu0 %v4315
    %6038 = vmatmul.mubr.bf16.gmra.mrb[0].mxu0 %v4219
    %v6039 = vpop.f32.mrb[0].mxu0
    %v6040 = vadd.f32 %v5751, %v6039
    %v6041 = vpop.f32.mrb[0].mxu0
    %v6042 = vpop.f32.mrb[0].mxu0
    %v6043 = vadd.f32 %v5754, %v6042
    %v6044 = vpop.f32.mrb[0].mxu0
    %6045 = vmatprep.mubr.bf16.mxu0 %v4316
    %6046 = vmatmul.mubr.bf16.gmra.mrb[0].mxu0 %v4220
    %v6047 = vpop.f32.mrb[0].mxu0
    %v6048 = vadd.f32 %v5759, %v6047
    %v6049 = vpop.f32.mrb[0].mxu0
    %v6050 = vpop.f32.mrb[0].mxu0
    %v6051 = vadd.f32 %v5762, %v6050
    %v6052 = vpop.f32.mrb[0].mxu0
    %6053 = vmatprep.mubr.bf16.mxu0 %v4317
    %6054 = vmatmul.mubr.bf16.gmra.mrb[0].mxu0 %v4221
    %v6055 = vpop.f32.mrb[0].mxu0
    %v6056 = vadd.f32 %v5767, %v6055
    %v6057 = vpop.f32.mrb[0].mxu0
    %v6058 = vpop.f32.mrb[0].mxu0
    %v6059 = vadd.f32 %v5770, %v6058
    %v6060 = vpop.f32.mrb[0].mxu0
    %6061 = vmatprep.mubr.bf16.mxu0 %v4318
    %6062 = vmatmul.mubr.bf16.gmra.mrb[0].mxu0 %v4222
    %v6063 = vpop.f32.mrb[0].mxu0
    %v6064 = vadd.f32 %v5775, %v6063
    %v6065 = vpop.f32.mrb[0].mxu0
    %v6066 = vpop.f32.mrb[0].mxu0
    %v6067 = vadd.f32 %v5778, %v6066
    %v6068 = vpop.f32.mrb[0].mxu0
    %6069 = vmatprep.mubr.bf16.mxu0 %v4319
    %6070 = vmatmul.mubr.bf16.gmra.mrb[0].mxu0 %v4223
    %v6071 = vpop.f32.mrb[0].mxu0
    %v6072 = vadd.f32 %v5783, %v6071
    %v6073 = vpop.f32.mrb[0].mxu0
    %v6074 = vpop.f32.mrb[0].mxu0
    %v6075 = vadd.f32 %v5786, %v6074
    %v6076 = vpop.f32.mrb[0].mxu0
    %6077 = vmatprep.mubr.bf16.mxu0 %v4320
    %6078 = vmatmul.mubr.bf16.gmra.mrb[0].mxu0 %v4224
    %v6079 = vpop.f32.mrb[0].mxu0
    %v6080 = vadd.f32 %v5791, %v6079
    %v6081 = vpop.f32.mrb[0].mxu0
    %v6082 = vpop.f32.mrb[0].mxu0
    %v6083 = vadd.f32 %v5794, %v6082
    %v6084 = vpop.f32.mrb[0].mxu0
    %6085 = vmatprep.mubr.bf16.mxu0 %v4321
    %6086 = vmatmul.mubr.bf16.gmra.mrb[0].mxu0 %v4225
    %v6087 = vpop.f32.mrb[0].mxu0
    %v6088 = vadd.f32 %v5799, %v6087
    %v6089 = vpop.f32.mrb[0].mxu0
    %v6090 = vpop.f32.mrb[0].mxu0
    %v6091 = vadd.f32 %v5802, %v6090
    %v6092 = vpop.f32.mrb[0].mxu0
    %6093 = vmatprep.mubr.bf16.mxu0 %v4322
    %6094 = vmatmul.mubr.bf16.gmra.mrb[0].mxu0 %v4226
    %v6095 = vpop.f32.mrb[0].mxu0
    %v6096 = vadd.f32 %v5807, %v6095
    %v6097 = vpop.f32.mrb[0].mxu0
    %v6098 = vpop.f32.mrb[0].mxu0
    %v6099 = vadd.f32 %v5810, %v6098
    %v6100 = vpop.f32.mrb[0].mxu0
    %6101 = vmatprep.mubr.bf16.mxu0 %v4323
    %6102 = vmatmul.mubr.bf16.gmra.mrb[0].mxu0 %v4227
    %v6103 = vpop.f32.mrb[0].mxu0
    %v6104 = vadd.f32 %v5815, %v6103
    %v6105 = vpop.f32.mrb[0].mxu0
    %v6106 = vpop.f32.mrb[0].mxu0
    %v6107 = vadd.f32 %v5818, %v6106
    %v6108 = vpop.f32.mrb[0].mxu0
    %6109 = vmatprep.mubr.bf16.mxu0 %v4324
    %6110 = vmatmul.mubr.bf16.gmra.mrb[0].mxu0 %v4228
    %v6111 = vpop.f32.mrb[0].mxu0
    %v6112 = vadd.f32 %v5823, %v6111
    %v6113 = vpop.f32.mrb[0].mxu0
    %v6114 = vpop.f32.mrb[0].mxu0
    %v6115 = vadd.f32 %v5826, %v6114
    %v6116 = vpop.f32.mrb[0].mxu0
    %6117 = vmatprep.mubr.bf16.mxu0 %v4325
    %6118 = vmatmul.mubr.bf16.gmra.mrb[0].mxu0 %v4229
    %v6119 = vpop.f32.mrb[0].mxu0
    %v6120 = vadd.f32 %v5831, %v6119
    %v6121 = vpop.f32.mrb[0].mxu0
    %v6122 = vpop.f32.mrb[0].mxu0
    %v6123 = vadd.f32 %v5834, %v6122
    %v6124 = vpop.f32.mrb[0].mxu0
    %6125 = vmatprep.mubr.bf16.mxu0 %v4326
    %6126 = vmatmul.mubr.bf16.gmra.mrb[0].mxu0 %v4230
    %v6127 = vpop.f32.mrb[0].mxu0
    %v6128 = vadd.f32 %v5839, %v6127
    %v6129 = vpop.f32.mrb[0].mxu0
    %v6130 = vpop.f32.mrb[0].mxu0
    %v6131 = vadd.f32 %v5842, %v6130
    %v6132 = vpop.f32.mrb[0].mxu0
    %6133 = vmatprep.mubr.bf16.mxu0 %v4327
    %6134 = vmatmul.mubr.bf16.gmra.mrb[0].mxu0 %v4231
    %v6135 = vpop.f32.mrb[0].mxu0
    %v6136 = vadd.f32 %v5847, %v6135
    %v6137 = vpop.f32.mrb[0].mxu0
    %v6138 = vpop.f32.mrb[0].mxu0
    %v6139 = vadd.f32 %v5850, %v6138
    %v6140 = vpop.f32.mrb[0].mxu0
    %6141 = vmatprep.mubr.bf16.mxu0 %v4328
    %6142 = vmatmul.mubr.bf16.gmra.mrb[0].mxu0 %v4232
    %v6143 = vpop.f32.mrb[0].mxu0
    %v6144 = vadd.f32 %v5855, %v6143
    %v6145 = vpop.f32.mrb[0].mxu0
    %v6146 = vpop.f32.mrb[0].mxu0
    %v6147 = vadd.f32 %v5858, %v6146
    %v6148 = vpop.f32.mrb[0].mxu0
    %6149 = vmatprep.mubr.bf16.mxu0 %v4329
    %6150 = vmatmul.mubr.bf16.gmra.mrb[0].mxu0 %v4233
    %v6151 = vpop.f32.mrb[0].mxu0
    %v6152 = vadd.f32 %v5863, %v6151
    %v6153 = vpop.f32.mrb[0].mxu0
    %v6154 = vpop.f32.mrb[0].mxu0
    %v6155 = vadd.f32 %v5866, %v6154
    %v6156 = vpop.f32.mrb[0].mxu0
    %6157 = vdwg.mxu0
    %6158 = vmatprep.subr.bf16.mxu0 0
    %6159 = vmatpush1.bf16.msra.mxu0 %v4922
    %6160 = vmatprep.subr.bf16.mxu0 0
    %6161 = vmatpush1.bf16.msra.mxu0 %v4923
    %6162 = vmatprep.subr.bf16.mxu0 0
    %6163 = vmatpush1.bf16.msra.mxu0 %v4924
    %6164 = vmatprep.subr.bf16.mxu0 0
    %6165 = vmatpush1.bf16.msra.mxu0 %v4925
    %6166 = vmatprep.subr.bf16.mxu0 0
    %6167 = vmatpush1.bf16.msra.mxu0 %v4926
    %6168 = vmatprep.subr.bf16.mxu0 0
    %6169 = vmatpush1.bf16.msra.mxu0 %v4927
    %6170 = vmatprep.subr.bf16.mxu0 0
    %6171 = vmatpush1.bf16.msra.mxu0 %v4928
    %6172 = vmatprep.subr.bf16.mxu0 0
    %6173 = vmatpush1.bf16.msra.mxu0 %v4929
    %6174 = vmatprep.subr.bf16.mxu0 0
    %6175 = vmatpush1.bf16.msra.mxu0 0
    %6176 = vmatprep.subr.bf16.mxu0 0
    %6177 = vmatpush1.bf16.msra.mxu0 0
    %6178 = vmatprep.subr.bf16.mxu0 0
    %6179 = vmatpush1.bf16.msra.mxu0 0
    %6180 = vmatprep.subr.bf16.mxu0 0
    %6181 = vmatpush1.bf16.msra.mxu0 0
    %6182 = vmatprep.subr.bf16.mxu0 0
    %6183 = vmatpush1.bf16.msra.mxu0 0
    %6184 = vmatprep.subr.bf16.mxu0 0
    %6185 = vmatpush1.bf16.msra.mxu0 0
    %6186 = vmatprep.subr.bf16.mxu0 0
    %6187 = vmatpush1.bf16.msra.mxu0 0
    %6188 = vmatprep.subr.bf16.mxu0 0
    %6189 = vmatpush1.bf16.msra.mxu0 0
    %6190 = vmatprep.mubr.bf16.mxu0 0
    %6191 = vmatmul.mubr.bf16.gmra.mrb[0].mxu0 %v4394
    %v6192 = vpop.f32.mrb[0].mxu0
    %v6193 = vadd.f32 %v5904, %v6192
    %v6194 = vpop.f32.mrb[0].mxu0
    %v6195 = vpop.f32.mrb[0].mxu0
    %v6196 = vadd.f32 %v5907, %v6195
    %v6197 = vpop.f32.mrb[0].mxu0
    %6198 = vmatprep.mubr.bf16.mxu0 0
    %6199 = vmatmul.mubr.bf16.gmra.mrb[0].mxu0 %v4395
    %v6200 = vpop.f32.mrb[0].mxu0
    %v6201 = vadd.f32 %v5912, %v6200
    %v6202 = vpop.f32.mrb[0].mxu0
    %v6203 = vpop.f32.mrb[0].mxu0
    %v6204 = vadd.f32 %v5915, %v6203
    %v6205 = vpop.f32.mrb[0].mxu0
    %6206 = vmatprep.mubr.bf16.mxu0 0
    %6207 = vmatmul.mubr.bf16.gmra.mrb[0].mxu0 %v4396
    %v6208 = vpop.f32.mrb[0].mxu0
    %v6209 = vadd.f32 %v5920, %v6208
    %v6210 = vpop.f32.mrb[0].mxu0
    %v6211 = vpop.f32.mrb[0].mxu0
    %v6212 = vadd.f32 %v5923, %v6211
    %v6213 = vpop.f32.mrb[0].mxu0
    %6214 = vmatprep.mubr.bf16.mxu0 0
    %6215 = vmatmul.mubr.bf16.gmra.mrb[0].mxu0 %v4397
    %v6216 = vpop.f32.mrb[0].mxu0
    %v6217 = vadd.f32 %v5928, %v6216
    %v6218 = vpop.f32.mrb[0].mxu0
    %v6219 = vpop.f32.mrb[0].mxu0
    %v6220 = vadd.f32 %v5931, %v6219
    %v6221 = vpop.f32.mrb[0].mxu0
    %6222 = vmatprep.mubr.bf16.mxu0 0
    %6223 = vmatmul.mubr.bf16.gmra.mrb[0].mxu0 %v4398
    %v6224 = vpop.f32.mrb[0].mxu0
    %v6225 = vadd.f32 %v5936, %v6224
    %v6226 = vpop.f32.mrb[0].mxu0
    %v6227 = vpop.f32.mrb[0].mxu0
    %v6228 = vadd.f32 %v5939, %v6227
    %v6229 = vpop.f32.mrb[0].mxu0
    %6230 = vmatprep.mubr.bf16.mxu0 0
    %6231 = vmatmul.mubr.bf16.gmra.mrb[0].mxu0 %v4399
    %v6232 = vpop.f32.mrb[0].mxu0
    %v6233 = vadd.f32 %v5944, %v6232
    %v6234 = vpop.f32.mrb[0].mxu0
    %v6235 = vpop.f32.mrb[0].mxu0
    %v6236 = vadd.f32 %v5947, %v6235
    %v6237 = vpop.f32.mrb[0].mxu0
    %6238 = vmatprep.mubr.bf16.mxu0 0
    %6239 = vmatmul.mubr.bf16.gmra.mrb[0].mxu0 %v4400
    %v6240 = vpop.f32.mrb[0].mxu0
    %v6241 = vadd.f32 %v5952, %v6240
    %v6242 = vpop.f32.mrb[0].mxu0
    %v6243 = vpop.f32.mrb[0].mxu0
    %v6244 = vadd.f32 %v5955, %v6243
    %v6245 = vpop.f32.mrb[0].mxu0
    %6246 = vmatprep.mubr.bf16.mxu0 0
    %6247 = vmatmul.mubr.bf16.gmra.mrb[0].mxu0 %v4401
    %v6248 = vpop.f32.mrb[0].mxu0
    %v6249 = vadd.f32 %v5960, %v6248
    %v6250 = vpop.f32.mrb[0].mxu0
    %v6251 = vpop.f32.mrb[0].mxu0
    %v6252 = vadd.f32 %v5963, %v6251
    %v6253 = vpop.f32.mrb[0].mxu0
    %6254 = vmatprep.mubr.bf16.mxu0 0
    %6255 = vmatmul.mubr.bf16.gmra.mrb[0].mxu0 %v4402
    %v6256 = vpop.f32.mrb[0].mxu0
    %v6257 = vadd.f32 %v5968, %v6256
    %v6258 = vpop.f32.mrb[0].mxu0
    %v6259 = vpop.f32.mrb[0].mxu0
    %v6260 = vadd.f32 %v5971, %v6259
    %v6261 = vpop.f32.mrb[0].mxu0
    %6262 = vmatprep.mubr.bf16.mxu0 0
    %6263 = vmatmul.mubr.bf16.gmra.mrb[0].mxu0 %v4403
    %v6264 = vpop.f32.mrb[0].mxu0
    %v6265 = vadd.f32 %v5976, %v6264
    %v6266 = vpop.f32.mrb[0].mxu0
    %v6267 = vpop.f32.mrb[0].mxu0
    %v6268 = vadd.f32 %v5979, %v6267
    %v6269 = vpop.f32.mrb[0].mxu0
    %6270 = vmatprep.mubr.bf16.mxu0 0
    %6271 = vmatmul.mubr.bf16.gmra.mrb[0].mxu0 %v4404
    %v6272 = vpop.f32.mrb[0].mxu0
    %v6273 = vadd.f32 %v5984, %v6272
    %v6274 = vpop.f32.mrb[0].mxu0
    %v6275 = vpop.f32.mrb[0].mxu0
    %v6276 = vadd.f32 %v5987, %v6275
    %v6277 = vpop.f32.mrb[0].mxu0
    %6278 = vmatprep.mubr.bf16.mxu0 0
    %6279 = vmatmul.mubr.bf16.gmra.mrb[0].mxu0 %v4405
    %v6280 = vpop.f32.mrb[0].mxu0
    %v6281 = vadd.f32 %v5992, %v6280
    %v6282 = vpop.f32.mrb[0].mxu0
    %v6283 = vpop.f32.mrb[0].mxu0
    %v6284 = vadd.f32 %v5995, %v6283
    %v6285 = vpop.f32.mrb[0].mxu0
    %6286 = vmatprep.mubr.bf16.mxu0 0
    %6287 = vmatmul.mubr.bf16.gmra.mrb[0].mxu0 %v4406
    %v6288 = vpop.f32.mrb[0].mxu0
    %v6289 = vadd.f32 %v6000, %v6288
    %v6290 = vpop.f32.mrb[0].mxu0
    %v6291 = vpop.f32.mrb[0].mxu0
    %v6292 = vadd.f32 %v6003, %v6291
    %v6293 = vpop.f32.mrb[0].mxu0
    %6294 = vmatprep.mubr.bf16.mxu0 0
    %6295 = vmatmul.mubr.bf16.gmra.mrb[0].mxu0 %v4407
    %v6296 = vpop.f32.mrb[0].mxu0
    %v6297 = vadd.f32 %v6008, %v6296
    %v6298 = vpop.f32.mrb[0].mxu0
    %v6299 = vpop.f32.mrb[0].mxu0
    %v6300 = vadd.f32 %v6011, %v6299
    %v6301 = vpop.f32.mrb[0].mxu0
    %6302 = vmatprep.mubr.bf16.mxu0 0
    %6303 = vmatmul.mubr.bf16.gmra.mrb[0].mxu0 %v4408
    %v6304 = vpop.f32.mrb[0].mxu0
    %v6305 = vadd.f32 %v6016, %v6304
    %v6306 = vpop.f32.mrb[0].mxu0
    %v6307 = vpop.f32.mrb[0].mxu0
    %v6308 = vadd.f32 %v6019, %v6307
    %v6309 = vpop.f32.mrb[0].mxu0
    %6310 = vmatprep.mubr.bf16.mxu0 0
    %6311 = vmatmul.mubr.bf16.gmra.mrb[0].mxu0 %v4409
    %v6312 = vpop.f32.mrb[0].mxu0
    %v6313 = vadd.f32 %v6024, %v6312
    %v6314 = vpop.f32.mrb[0].mxu0
    %v6315 = vpop.f32.mrb[0].mxu0
    %v6316 = vadd.f32 %v6027, %v6315
    %v6317 = vpop.f32.mrb[0].mxu0
    %6318 = vmatprep.mubr.bf16.mxu0 0
    %6319 = vmatmul.mubr.bf16.gmra.mrb[0].mxu0 %v4410
    %v6320 = vpop.f32.mrb[0].mxu0
    %v6321 = vadd.f32 %v6032, %v6320
    %v6322 = vpop.f32.mrb[0].mxu0
    %v6323 = vpop.f32.mrb[0].mxu0
    %v6324 = vadd.f32 %v6035, %v6323
    %v6325 = vpop.f32.mrb[0].mxu0
    %6326 = vmatprep.mubr.bf16.mxu0 0
    %6327 = vmatmul.mubr.bf16.gmra.mrb[0].mxu0 %v4411
    %v6328 = vpop.f32.mrb[0].mxu0
    %v6329 = vadd.f32 %v6040, %v6328
    %v6330 = vpop.f32.mrb[0].mxu0
    %v6331 = vpop.f32.mrb[0].mxu0
    %v6332 = vadd.f32 %v6043, %v6331
    %v6333 = vpop.f32.mrb[0].mxu0
    %6334 = vmatprep.mubr.bf16.mxu0 0
    %6335 = vmatmul.mubr.bf16.gmra.mrb[0].mxu0 %v4412
    %v6336 = vpop.f32.mrb[0].mxu0
    %v6337 = vadd.f32 %v6048, %v6336
    %v6338 = vpop.f32.mrb[0].mxu0
    %v6339 = vpop.f32.mrb[0].mxu0
    %v6340 = vadd.f32 %v6051, %v6339
    %v6341 = vpop.f32.mrb[0].mxu0
    %6342 = vmatprep.mubr.bf16.mxu0 0
    %6343 = vmatmul.mubr.bf16.gmra.mrb[0].mxu0 %v4413
    %v6344 = vpop.f32.mrb[0].mxu0
    %v6345 = vadd.f32 %v6056, %v6344
    %v6346 = vpop.f32.mrb[0].mxu0
    %v6347 = vpop.f32.mrb[0].mxu0
    %v6348 = vadd.f32 %v6059, %v6347
    %v6349 = vpop.f32.mrb[0].mxu0
    %6350 = vmatprep.mubr.bf16.mxu0 0
    %6351 = vmatmul.mubr.bf16.gmra.mrb[0].mxu0 %v4414
    %v6352 = vpop.f32.mrb[0].mxu0
    %v6353 = vadd.f32 %v6064, %v6352
    %v6354 = vpop.f32.mrb[0].mxu0
    %v6355 = vpop.f32.mrb[0].mxu0
    %v6356 = vadd.f32 %v6067, %v6355
    %v6357 = vpop.f32.mrb[0].mxu0
    %6358 = vmatprep.mubr.bf16.mxu0 0
    %6359 = vmatmul.mubr.bf16.gmra.mrb[0].mxu0 %v4415
    %v6360 = vpop.f32.mrb[0].mxu0
    %v6361 = vadd.f32 %v6072, %v6360
    %v6362 = vpop.f32.mrb[0].mxu0
    %v6363 = vpop.f32.mrb[0].mxu0
    %v6364 = vadd.f32 %v6075, %v6363
    %v6365 = vpop.f32.mrb[0].mxu0
    %6366 = vmatprep.mubr.bf16.mxu0 0
    %6367 = vmatmul.mubr.bf16.gmra.mrb[0].mxu0 %v4416
    %v6368 = vpop.f32.mrb[0].mxu0
    %v6369 = vadd.f32 %v6080, %v6368
    %v6370 = vpop.f32.mrb[0].mxu0
    %v6371 = vpop.f32.mrb[0].mxu0
    %v6372 = vadd.f32 %v6083, %v6371
    %v6373 = vpop.f32.mrb[0].mxu0
    %6374 = vmatprep.mubr.bf16.mxu0 0
    %6375 = vmatmul.mubr.bf16.gmra.mrb[0].mxu0 %v4417
    %v6376 = vpop.f32.mrb[0].mxu0
    %v6377 = vadd.f32 %v6088, %v6376
    %v6378 = vpop.f32.mrb[0].mxu0
    %v6379 = vpop.f32.mrb[0].mxu0
    %v6380 = vadd.f32 %v6091, %v6379
    %v6381 = vpop.f32.mrb[0].mxu0
    %6382 = vmatprep.mubr.bf16.mxu0 0
    %6383 = vmatmul.mubr.bf16.gmra.mrb[0].mxu0 %v4418
    %v6384 = vpop.f32.mrb[0].mxu0
    %v6385 = vadd.f32 %v6096, %v6384
    %v6386 = vpop.f32.mrb[0].mxu0
    %v6387 = vpop.f32.mrb[0].mxu0
    %v6388 = vadd.f32 %v6099, %v6387
    %v6389 = vpop.f32.mrb[0].mxu0
    %6390 = vmatprep.mubr.bf16.mxu0 0
    %6391 = vmatmul.mubr.bf16.gmra.mrb[0].mxu0 %v4419
    %v6392 = vpop.f32.mrb[0].mxu0
    %v6393 = vadd.f32 %v6104, %v6392
    %v6394 = vpop.f32.mrb[0].mxu0
    %v6395 = vpop.f32.mrb[0].mxu0
    %v6396 = vadd.f32 %v6107, %v6395
    %v6397 = vpop.f32.mrb[0].mxu0
    %6398 = vmatprep.mubr.bf16.mxu0 0
    %6399 = vmatmul.mubr.bf16.gmra.mrb[0].mxu0 %v4420
    %v6400 = vpop.f32.mrb[0].mxu0
    %v6401 = vadd.f32 %v6112, %v6400
    %v6402 = vpop.f32.mrb[0].mxu0
    %v6403 = vpop.f32.mrb[0].mxu0
    %v6404 = vadd.f32 %v6115, %v6403
    %v6405 = vpop.f32.mrb[0].mxu0
    %6406 = vmatprep.mubr.bf16.mxu0 0
    %6407 = vmatmul.mubr.bf16.gmra.mrb[0].mxu0 %v4421
    %v6408 = vpop.f32.mrb[0].mxu0
    %v6409 = vadd.f32 %v6120, %v6408
    %v6410 = vpop.f32.mrb[0].mxu0
    %v6411 = vpop.f32.mrb[0].mxu0
    %v6412 = vadd.f32 %v6123, %v6411
    %v6413 = vpop.f32.mrb[0].mxu0
    %6414 = vmatprep.mubr.bf16.mxu0 0
    %6415 = vmatmul.mubr.bf16.gmra.mrb[0].mxu0 %v4422
    %v6416 = vpop.f32.mrb[0].mxu0
    %v6417 = vadd.f32 %v6128, %v6416
    %v6418 = vpop.f32.mrb[0].mxu0
    %v6419 = vpop.f32.mrb[0].mxu0
    %v6420 = vadd.f32 %v6131, %v6419
    %v6421 = vpop.f32.mrb[0].mxu0
    %6422 = vmatprep.mubr.bf16.mxu0 0
    %6423 = vmatmul.mubr.bf16.gmra.mrb[0].mxu0 %v4423
    %v6424 = vpop.f32.mrb[0].mxu0
    %v6425 = vadd.f32 %v6136, %v6424
    %v6426 = vpop.f32.mrb[0].mxu0
    %v6427 = vpop.f32.mrb[0].mxu0
    %v6428 = vadd.f32 %v6139, %v6427
    %v6429 = vpop.f32.mrb[0].mxu0
    %6430 = vmatprep.mubr.bf16.mxu0 0
    %6431 = vmatmul.mubr.bf16.gmra.mrb[0].mxu0 %v4424
    %v6432 = vpop.f32.mrb[0].mxu0
    %v6433 = vadd.f32 %v6144, %v6432
    %v6434 = vpop.f32.mrb[0].mxu0
    %v6435 = vpop.f32.mrb[0].mxu0
    %v6436 = vadd.f32 %v6147, %v6435
    %v6437 = vpop.f32.mrb[0].mxu0
    %6438 = vmatprep.mubr.bf16.mxu0 0
    %6439 = vmatmul.mubr.bf16.gmra.mrb[0].mxu0 %v4425
    %v6440 = vpop.f32.mrb[0].mxu0
    %v6441 = vadd.f32 %v6152, %v6440
    %v6442 = vpop.f32.mrb[0].mxu0
    %v6443 = vpop.f32.mrb[0].mxu0
    %v6444 = vadd.f32 %v6155, %v6443
    %v6445 = vpop.f32.mrb[0].mxu0
    %6446 = vdwg.mxu0
    %v6447 = vld [vmem:[#allocation12] sm:$0x1]
    %v6448 = vld [vmem:[#allocation14] sm:$0x1]
    %v6449 = vadd.f32 %v6193, %v6196
    %v6450 = vadd.f32 %v6449, %v6201
    %v6451 = vadd.f32 %v6450, %v6204
    %v6452 = vadd.f32 %v6451, %v6209
    %v6453 = vadd.f32 %v6452, %v6212
    %v6454 = vadd.f32 %v6453, %v6217
    %v6455 = vadd.f32 %v6454, %v6220
    %v6456 = vadd.f32 %v6455, %v6225
    %v6457 = vadd.f32 %v6456, %v6228
    %v6458 = vadd.f32 %v6457, %v6233
    %v6459 = vadd.f32 %v6458, %v6236
    %v6460 = vadd.f32 %v6459, %v6241
    %v6461 = vadd.f32 %v6460, %v6244
    %v6462 = vadd.f32 %v6461, %v6249
    %v6463 = vadd.f32 %v6462, %v6252
    %v6464 = vadd.f32 %v6463, %v6257
    %v6465 = vadd.f32 %v6464, %v6260
    %v6466 = vadd.f32 %v6465, %v6265
    %v6467 = vadd.f32 %v6466, %v6268
    %v6468 = vadd.f32 %v6467, %v6273
    %v6469 = vadd.f32 %v6468, %v6276
    %v6470 = vadd.f32 %v6469, %v6281
    %v6471 = vadd.f32 %v6470, %v6284
    %v6472 = vadd.f32 %v6471, %v6289
    %v6473 = vadd.f32 %v6472, %v6292
    %v6474 = vadd.f32 %v6473, %v6297
    %v6475 = vadd.f32 %v6474, %v6300
    %v6476 = vadd.f32 %v6475, %v6305
    %v6477 = vadd.f32 %v6476, %v6308
    %v6478 = vadd.f32 %v6477, %v6313
    %v6479 = vadd.f32 %v6478, %v6316
    %v6480 = vadd.f32 %v6479, %v6321
    %v6481 = vadd.f32 %v6480, %v6324
    %v6482 = vadd.f32 %v6481, %v6329
    %v6483 = vadd.f32 %v6482, %v6332
    %v6484 = vadd.f32 %v6483, %v6337
    %v6485 = vadd.f32 %v6484, %v6340
    %v6486 = vadd.f32 %v6485, %v6345
    %v6487 = vadd.f32 %v6486, %v6348
    %v6488 = vadd.f32 %v6487, %v6353
    %v6489 = vadd.f32 %v6488, %v6356
    %v6490 = vadd.f32 %v6489, %v6361
    %v6491 = vadd.f32 %v6490, %v6364
    %v6492 = vadd.f32 %v6491, %v6369
    %v6493 = vadd.f32 %v6492, %v6372
    %v6494 = vadd.f32 %v6493, %v6377
    %v6495 = vadd.f32 %v6494, %v6380
    %v6496 = vadd.f32 %v6495, %v6385
    %v6497 = vadd.f32 %v6496, %v6388
    %v6498 = vadd.f32 %v6497, %v6393
    %v6499 = vadd.f32 %v6498, %v6396
    %v6500 = vadd.f32 %v6499, %v6401
    %v6501 = vadd.f32 %v6500, %v6404
    %v6502 = vadd.f32 %v6501, %v6409
    %v6503 = vadd.f32 %v6502, %v6412
    %v6504 = vadd.f32 %v6503, %v6417
    %v6505 = vadd.f32 %v6504, %v6420
    %v6506 = vadd.f32 %v6505, %v6425
    %v6507 = vadd.f32 %v6506, %v6428
    %v6508 = vadd.f32 %v6507, %v6433
    %v6509 = vadd.f32 %v6508, %v6436
    %v6510 = vadd.f32 %v6509, %v6441
    %v6511 = vadd.f32 %v6510, %v6444
    %v6512 = vrot.slane %v6511, 4
    %v6513 = vadd.f32 %v6511, %v6512
    %v6514 = vrot.slane %v6513, 2
    %v6515 = vadd.f32 %v6513, %v6514
    %v6516 = vrot.slane %v6515, 1
    %v6517 = vadd.f32 %v6515, %v6516
    %v6518 = vmul.f32 %v6193, %v6193
    %v6519 = vmul.f32 %v6196, %v6196
    %v6520 = vmul.f32 %v6201, %v6201
    %v6521 = vmul.f32 %v6204, %v6204
    %v6522 = vmul.f32 %v6209, %v6209
    %v6523 = vmul.f32 %v6212, %v6212
    %v6524 = vmul.f32 %v6217, %v6217
    %v6525 = vmul.f32 %v6220, %v6220
    %v6526 = vmul.f32 %v6225, %v6225
    %v6527 = vmul.f32 %v6228, %v6228
    %v6528 = vmul.f32 %v6233, %v6233
    %v6529 = vmul.f32 %v6236, %v6236
    %v6530 = vmul.f32 %v6241, %v6241
    %v6531 = vmul.f32 %v6244, %v6244
    %v6532 = vmul.f32 %v6249, %v6249
    %v6533 = vmul.f32 %v6252, %v6252
    %v6534 = vmul.f32 %v6257, %v6257
    %v6535 = vmul.f32 %v6260, %v6260
    %v6536 = vmul.f32 %v6265, %v6265
    %v6537 = vmul.f32 %v6268, %v6268
    %v6538 = vmul.f32 %v6273, %v6273
    %v6539 = vmul.f32 %v6276, %v6276
    %v6540 = vmul.f32 %v6281, %v6281
    %v6541 = vmul.f32 %v6284, %v6284
    %v6542 = vmul.f32 %v6289, %v6289
    %v6543 = vmul.f32 %v6292, %v6292
    %v6544 = vmul.f32 %v6297, %v6297
    %v6545 = vmul.f32 %v6300, %v6300
    %v6546 = vmul.f32 %v6305, %v6305
    %v6547 = vmul.f32 %v6308, %v6308
    %v6548 = vmul.f32 %v6313, %v6313
    %v6549 = vmul.f32 %v6316, %v6316
    %v6550 = vmul.f32 %v6321, %v6321
    %v6551 = vmul.f32 %v6324, %v6324
    %v6552 = vmul.f32 %v6329, %v6329
    %v6553 = vmul.f32 %v6332, %v6332
    %v6554 = vmul.f32 %v6337, %v6337
    %v6555 = vmul.f32 %v6340, %v6340
    %v6556 = vmul.f32 %v6345, %v6345
    %v6557 = vmul.f32 %v6348, %v6348
    %v6558 = vmul.f32 %v6353, %v6353
    %v6559 = vmul.f32 %v6356, %v6356
    %v6560 = vmul.f32 %v6361, %v6361
    %v6561 = vmul.f32 %v6364, %v6364
    %v6562 = vmul.f32 %v6369, %v6369
    %v6563 = vmul.f32 %v6372, %v6372
    %v6564 = vmul.f32 %v6377, %v6377
    %v6565 = vmul.f32 %v6380, %v6380
    %v6566 = vmul.f32 %v6385, %v6385
    %v6567 = vmul.f32 %v6388, %v6388
    %v6568 = vmul.f32 %v6393, %v6393
    %v6569 = vmul.f32 %v6396, %v6396
    %v6570 = vmul.f32 %v6401, %v6401
    %v6571 = vmul.f32 %v6404, %v6404
    %v6572 = vmul.f32 %v6409, %v6409
    %v6573 = vmul.f32 %v6412, %v6412
    %v6574 = vmul.f32 %v6417, %v6417
    %v6575 = vmul.f32 %v6420, %v6420
    %v6576 = vmul.f32 %v6425, %v6425
    %v6577 = vmul.f32 %v6428, %v6428
    %v6578 = vmul.f32 %v6433, %v6433
    %v6579 = vmul.f32 %v6436, %v6436
    %v6580 = vmul.f32 %v6441, %v6441
    %v6581 = vmul.f32 %v6444, %v6444
    %v6582 = vadd.f32 %v6518, %v6519
    %v6583 = vadd.f32 %v6582, %v6520
    %v6584 = vadd.f32 %v6583, %v6521
    %v6585 = vadd.f32 %v6584, %v6522
    %v6586 = vadd.f32 %v6585, %v6523
    %v6587 = vadd.f32 %v6586, %v6524
    %v6588 = vadd.f32 %v6587, %v6525
    %v6589 = vadd.f32 %v6588, %v6526
    %v6590 = vadd.f32 %v6589, %v6527
    %v6591 = vadd.f32 %v6590, %v6528
    %v6592 = vadd.f32 %v6591, %v6529
    %v6593 = vadd.f32 %v6592, %v6530
    %v6594 = vadd.f32 %v6593, %v6531
    %v6595 = vadd.f32 %v6594, %v6532
    %v6596 = vadd.f32 %v6595, %v6533
    %v6597 = vadd.f32 %v6596, %v6534
    %v6598 = vadd.f32 %v6597, %v6535
    %v6599 = vadd.f32 %v6598, %v6536
    %v6600 = vadd.f32 %v6599, %v6537
    %v6601 = vadd.f32 %v6600, %v6538
    %v6602 = vadd.f32 %v6601, %v6539
    %v6603 = vadd.f32 %v6602, %v6540
    %v6604 = vadd.f32 %v6603, %v6541
    %v6605 = vadd.f32 %v6604, %v6542
    %v6606 = vadd.f32 %v6605, %v6543
    %v6607 = vadd.f32 %v6606, %v6544
    %v6608 = vadd.f32 %v6607, %v6545
    %v6609 = vadd.f32 %v6608, %v6546
    %v6610 = vadd.f32 %v6609, %v6547
    %v6611 = vadd.f32 %v6610, %v6548
    %v6612 = vadd.f32 %v6611, %v6549
    %v6613 = vadd.f32 %v6612, %v6550
    %v6614 = vadd.f32 %v6613, %v6551
    %v6615 = vadd.f32 %v6614, %v6552
    %v6616 = vadd.f32 %v6615, %v6553
    %v6617 = vadd.f32 %v6616, %v6554
    %v6618 = vadd.f32 %v6617, %v6555
    %v6619 = vadd.f32 %v6618, %v6556
    %v6620 = vadd.f32 %v6619, %v6557
    %v6621 = vadd.f32 %v6620, %v6558
    %v6622 = vadd.f32 %v6621, %v6559
    %v6623 = vadd.f32 %v6622, %v6560
    %v6624 = vadd.f32 %v6623, %v6561
    %v6625 = vadd.f32 %v6624, %v6562
    %v6626 = vadd.f32 %v6625, %v6563
    %v6627 = vadd.f32 %v6626, %v6564
    %v6628 = vadd.f32 %v6627, %v6565
    %v6629 = vadd.f32 %v6628, %v6566
    %v6630 = vadd.f32 %v6629, %v6567
    %v6631 = vadd.f32 %v6630, %v6568
    %v6632 = vadd.f32 %v6631, %v6569
    %v6633 = vadd.f32 %v6632, %v6570
    %v6634 = vadd.f32 %v6633, %v6571
    %v6635 = vadd.f32 %v6634, %v6572
    %v6636 = vadd.f32 %v6635, %v6573
    %v6637 = vadd.f32 %v6636, %v6574
    %v6638 = vadd.f32 %v6637, %v6575
    %v6639 = vadd.f32 %v6638, %v6576
    %v6640 = vadd.f32 %v6639, %v6577
    %v6641 = vadd.f32 %v6640, %v6578
    %v6642 = vadd.f32 %v6641, %v6579
    %v6643 = vadd.f32 %v6642, %v6580
    %v6644 = vadd.f32 %v6643, %v6581
    %v6645 = vrot.slane %v6644, 4
    %v6646 = vadd.f32 %v6644, %v6645
    %v6647 = vrot.slane %v6646, 2
    %v6648 = vadd.f32 %v6646, %v6647
    %v6649 = vrot.slane %v6648, 1
    %v6650 = vadd.f32 %v6648, %v6649
    %v6651 = vmul.f32 %v6517, 0.001953125
    %v6652 = vmul.f32 %v6650, 0.001953125
    %v6653 = vmul.f32 %v6651, %v6651
    %v6654 = vsub.f32 %v6652, %v6653
    %v6655 = vadd.f32 %v6654, 1e-05
    %v6656 = vrsqrt.pop %v6655
    %v6657 = vmul.f32 %v6447, %v6656
    %v6658 = vmul.f32 %v6651, %v6657
    %v6659 = vsub.f32 %v6448, %v6658
    %v6661 = vlaneseq
    %v6662 = vshrl.u32 %v6661, 7
    %v6663 = vsub.s32 0, %v6662
    %v6664 = vrot.slane %v6657, %v6663
    %v6666 = vmul.f32 %v6193, %v6664
    %v6667 = vmul.f32 %v6196, %v6664
    %v6668 = vmul.f32 %v6201, %v6664
    %v6669 = vmul.f32 %v6204, %v6664
    %v6670 = vmul.f32 %v6209, %v6664
    %v6671 = vmul.f32 %v6212, %v6664
    %v6672 = vmul.f32 %v6217, %v6664
    %v6673 = vmul.f32 %v6220, %v6664
    %v6674 = vmul.f32 %v6225, %v6664
    %v6675 = vmul.f32 %v6228, %v6664
    %v6676 = vmul.f32 %v6233, %v6664
    %v6677 = vmul.f32 %v6236, %v6664
    %v6678 = vmul.f32 %v6241, %v6664
    %v6679 = vmul.f32 %v6244, %v6664
    %v6680 = vmul.f32 %v6249, %v6664
    %v6681 = vmul.f32 %v6252, %v6664
    %v6682 = vmul.f32 %v6257, %v6664
    %v6683 = vmul.f32 %v6260, %v6664
    %v6684 = vmul.f32 %v6265, %v6664
    %v6685 = vmul.f32 %v6268, %v6664
    %v6686 = vmul.f32 %v6273, %v6664
    %v6687 = vmul.f32 %v6276, %v6664
    %v6688 = vmul.f32 %v6281, %v6664
    %v6689 = vmul.f32 %v6284, %v6664
    %v6690 = vmul.f32 %v6289, %v6664
    %v6691 = vmul.f32 %v6292, %v6664
    %v6692 = vmul.f32 %v6297, %v6664
    %v6693 = vmul.f32 %v6300, %v6664
    %v6694 = vmul.f32 %v6305, %v6664
    %v6695 = vmul.f32 %v6308, %v6664
    %v6696 = vmul.f32 %v6313, %v6664
    %v6697 = vmul.f32 %v6316, %v6664
    %v6698 = vmul.f32 %v6321, %v6664
    %v6699 = vmul.f32 %v6324, %v6664
    %v6700 = vmul.f32 %v6329, %v6664
    %v6701 = vmul.f32 %v6332, %v6664
    %v6702 = vmul.f32 %v6337, %v6664
    %v6703 = vmul.f32 %v6340, %v6664
    %v6704 = vmul.f32 %v6345, %v6664
    %v6705 = vmul.f32 %v6348, %v6664
    %v6706 = vmul.f32 %v6353, %v6664
    %v6707 = vmul.f32 %v6356, %v6664
    %v6708 = vmul.f32 %v6361, %v6664
    %v6709 = vmul.f32 %v6364, %v6664
    %v6710 = vmul.f32 %v6369, %v6664
    %v6711 = vmul.f32 %v6372, %v6664
    %v6712 = vmul.f32 %v6377, %v6664
    %v6713 = vmul.f32 %v6380, %v6664
    %v6714 = vmul.f32 %v6385, %v6664
    %v6715 = vmul.f32 %v6388, %v6664
    %v6716 = vmul.f32 %v6393, %v6664
    %v6717 = vmul.f32 %v6396, %v6664
    %v6718 = vmul.f32 %v6401, %v6664
    %v6719 = vmul.f32 %v6404, %v6664
    %v6720 = vmul.f32 %v6409, %v6664
    %v6721 = vmul.f32 %v6412, %v6664
    %v6722 = vmul.f32 %v6417, %v6664
    %v6723 = vmul.f32 %v6420, %v6664
    %v6724 = vmul.f32 %v6425, %v6664
    %v6725 = vmul.f32 %v6428, %v6664
    %v6726 = vmul.f32 %v6433, %v6664
    %v6727 = vmul.f32 %v6436, %v6664
    %v6728 = vmul.f32 %v6441, %v6664
    %v6729 = vmul.f32 %v6444, %v6664
    %v6731 = vlaneseq
    %v6732 = vshrl.u32 %v6731, 7
    %v6733 = vsub.s32 0, %v6732
    %v6734 = vrot.slane %v6659, %v6733
    %v6736 = vadd.f32 %v6666, %v6734
    %v6737 = vadd.f32 %v6667, %v6734
    %v6738 = vadd.f32 %v6668, %v6734
    %v6739 = vadd.f32 %v6669, %v6734
    %v6740 = vadd.f32 %v6670, %v6734
    %v6741 = vadd.f32 %v6671, %v6734
    %v6742 = vadd.f32 %v6672, %v6734
    %v6743 = vadd.f32 %v6673, %v6734
    %v6744 = vadd.f32 %v6674, %v6734
    %v6745 = vadd.f32 %v6675, %v6734
    %v6746 = vadd.f32 %v6676, %v6734
    %v6747 = vadd.f32 %v6677, %v6734
    %v6748 = vadd.f32 %v6678, %v6734
    %v6749 = vadd.f32 %v6679, %v6734
    %v6750 = vadd.f32 %v6680, %v6734
    %v6751 = vadd.f32 %v6681, %v6734
    %v6752 = vadd.f32 %v6682, %v6734
    %v6753 = vadd.f32 %v6683, %v6734
    %v6754 = vadd.f32 %v6684, %v6734
    %v6755 = vadd.f32 %v6685, %v6734
    %v6756 = vadd.f32 %v6686, %v6734
    %v6757 = vadd.f32 %v6687, %v6734
    %v6758 = vadd.f32 %v6688, %v6734
    %v6759 = vadd.f32 %v6689, %v6734
    %v6760 = vadd.f32 %v6690, %v6734
    %v6761 = vadd.f32 %v6691, %v6734
    %v6762 = vadd.f32 %v6692, %v6734
    %v6763 = vadd.f32 %v6693, %v6734
    %v6764 = vadd.f32 %v6694, %v6734
    %v6765 = vadd.f32 %v6695, %v6734
    %v6766 = vadd.f32 %v6696, %v6734
    %v6767 = vadd.f32 %v6697, %v6734
    %v6768 = vadd.f32 %v6698, %v6734
    %v6769 = vadd.f32 %v6699, %v6734
    %v6770 = vadd.f32 %v6700, %v6734
    %v6771 = vadd.f32 %v6701, %v6734
    %v6772 = vadd.f32 %v6702, %v6734
    %v6773 = vadd.f32 %v6703, %v6734
    %v6774 = vadd.f32 %v6704, %v6734
    %v6775 = vadd.f32 %v6705, %v6734
    %v6776 = vadd.f32 %v6706, %v6734
    %v6777 = vadd.f32 %v6707, %v6734
    %v6778 = vadd.f32 %v6708, %v6734
    %v6779 = vadd.f32 %v6709, %v6734
    %v6780 = vadd.f32 %v6710, %v6734
    %v6781 = vadd.f32 %v6711, %v6734
    %v6782 = vadd.f32 %v6712, %v6734
    %v6783 = vadd.f32 %v6713, %v6734
    %v6784 = vadd.f32 %v6714, %v6734
    %v6785 = vadd.f32 %v6715, %v6734
    %v6786 = vadd.f32 %v6716, %v6734
    %v6787 = vadd.f32 %v6717, %v6734
    %v6788 = vadd.f32 %v6718, %v6734
    %v6789 = vadd.f32 %v6719, %v6734
    %v6790 = vadd.f32 %v6720, %v6734
    %v6791 = vadd.f32 %v6721, %v6734
    %v6792 = vadd.f32 %v6722, %v6734
    %v6793 = vadd.f32 %v6723, %v6734
    %v6794 = vadd.f32 %v6724, %v6734
    %v6795 = vadd.f32 %v6725, %v6734
    %v6796 = vadd.f32 %v6726, %v6734
    %v6797 = vadd.f32 %v6727, %v6734
    %v6798 = vadd.f32 %v6728, %v6734
    %v6799 = vadd.f32 %v6729, %v6734
    %v6800 = vld [vmem:[%s403 + $0x1] sm:$0xff]
    %v6801 = vld [vmem:[%s403 + $0x9] sm:$0xff]
    %v6802 = vld [vmem:[%s403 + $0x19] sm:$0xff]
    %v6803 = vld [vmem:[%s403 + $0x21] sm:$0xff]
    %v6804 = vld [vmem:[%s403 + $0x31] sm:$0xff]
    %v6805 = vld [vmem:[%s403 + $0x39] sm:$0xff]
    %v6806 = vld [vmem:[%s403 + $0x49] sm:$0xff]
    %v6807 = vld [vmem:[%s403 + $0x51] sm:$0xff]
    %v6808 = vld [vmem:[%s403 + $0x61] sm:$0xff]
    %v6809 = vld [vmem:[%s403 + $0x69] sm:$0xff]
    %v6810 = vld [vmem:[%s403 + $0x79] sm:$0xff]
    %v6811 = vld [vmem:[%s403 + $0x81] sm:$0xff]
    %v6812 = vld [vmem:[%s403 + $0x91] sm:$0xff]
    %v6813 = vld [vmem:[%s403 + $0x99] sm:$0xff]
    %v6814 = vld [vmem:[%s403 + $0xa9] sm:$0xff]
    %v6815 = vld [vmem:[%s403 + $0xb1] sm:$0xff]
    %v6816 = vld [vmem:[%s403 + $0xc1] sm:$0xff]
    %v6817 = vld [vmem:[%s403 + $0xc9] sm:$0xff]
    %v6818 = vld [vmem:[%s403 + $0xd9] sm:$0xff]
    %v6819 = vld [vmem:[%s403 + $0xe1] sm:$0xff]
    %v6820 = vld [vmem:[%s403 + $0xf1] sm:$0xff]
    %v6821 = vld [vmem:[%s403 + $0xf9] sm:$0xff]
    %v6822 = vld [vmem:[%s403 + $0x109] sm:$0xff]
    %v6823 = vld [vmem:[%s403 + $0x111] sm:$0xff]
    %v6824 = vld [vmem:[%s403 + $0x121] sm:$0xff]
    %v6825 = vld [vmem:[%s403 + $0x129] sm:$0xff]
    %v6826 = vld [vmem:[%s403 + $0x139] sm:$0xff]
    %v6827 = vld [vmem:[%s403 + $0x141] sm:$0xff]
    %v6828 = vld [vmem:[%s403 + $0x151] sm:$0xff]
    %v6829 = vld [vmem:[%s403 + $0x159] sm:$0xff]
    %v6830 = vld [vmem:[%s403 + $0x169] sm:$0xff]
    %v6831 = vld [vmem:[%s403 + $0x171] sm:$0xff]
    %v6832 = vld [vmem:[%s403 + $0x1b1] sm:$0xff]
    %v6833 = vld [vmem:[%s403 + $0x1b9] sm:$0xff]
    %v6834 = vld [vmem:[%s403 + $0x1c9] sm:$0xff]
    %v6835 = vld [vmem:[%s403 + $0x1d1] sm:$0xff]
    %v6836 = vld [vmem:[%s403 + $0x1e1] sm:$0xff]
    %v6837 = vld [vmem:[%s403 + $0x1e9] sm:$0xff]
    %v6838 = vld [vmem:[%s403 + $0x1f9] sm:$0xff]
    %v6839 = vld [vmem:[%s403 + $0x201] sm:$0xff]
    %v6840 = vld [vmem:[%s403 + $0x211] sm:$0xff]
    %v6841 = vld [vmem:[%s403 + $0x219] sm:$0xff]
    %v6842 = vld [vmem:[%s403 + $0x229] sm:$0xff]
    %v6843 = vld [vmem:[%s403 + $0x231] sm:$0xff]
    %v6844 = vld [vmem:[%s403 + $0x241] sm:$0xff]
    %v6845 = vld [vmem:[%s403 + $0x249] sm:$0xff]
    %v6846 = vld [vmem:[%s403 + $0x259] sm:$0xff]
    %v6847 = vld [vmem:[%s403 + $0x261] sm:$0xff]
    %v6848 = vld [vmem:[%s403 + $0x271] sm:$0xff]
    %v6849 = vld [vmem:[%s403 + $0x279] sm:$0xff]
    %v6850 = vld [vmem:[%s403 + $0x289] sm:$0xff]
    %v6851 = vld [vmem:[%s403 + $0x291] sm:$0xff]
    %v6852 = vld [vmem:[%s403 + $0x2a1] sm:$0xff]
    %v6853 = vld [vmem:[%s403 + $0x2a9] sm:$0xff]
    %v6854 = vld [vmem:[%s403 + $0x2b9] sm:$0xff]
    %v6855 = vld [vmem:[%s403 + $0x2c1] sm:$0xff]
    %v6856 = vld [vmem:[%s403 + $0x2d1] sm:$0xff]
    %v6857 = vld [vmem:[%s403 + $0x2d9] sm:$0xff]
    %v6858 = vld [vmem:[%s403 + $0x2e9] sm:$0xff]
    %v6859 = vld [vmem:[%s403 + $0x2f1] sm:$0xff]
    %v6860 = vld [vmem:[%s403 + $0x301] sm:$0xff]
    %v6861 = vld [vmem:[%s403 + $0x309] sm:$0xff]
    %v6862 = vld [vmem:[%s403 + $0x319] sm:$0xff]
    %v6863 = vld [vmem:[%s403 + $0x321] sm:$0xff]
    %v6864 = vadd.f32 %v6736, %v6800
    %v6865 = vadd.f32 %v6737, %v6801
    %v6866 = vadd.f32 %v6738, %v6802
    %v6867 = vadd.f32 %v6739, %v6803
    %v6868 = vadd.f32 %v6740, %v6804
    %v6869 = vadd.f32 %v6741, %v6805
    %v6870 = vadd.f32 %v6742, %v6806
    %v6871 = vadd.f32 %v6743, %v6807
    %v6872 = vadd.f32 %v6744, %v6808
    %v6873 = vadd.f32 %v6745, %v6809
    %v6874 = vadd.f32 %v6746, %v6810
    %v6875 = vadd.f32 %v6747, %v6811
    %v6876 = vadd.f32 %v6748, %v6812
    %v6877 = vadd.f32 %v6749, %v6813
    %v6878 = vadd.f32 %v6750, %v6814
    %v6879 = vadd.f32 %v6751, %v6815
    %v6880 = vadd.f32 %v6752, %v6816
    %v6881 = vadd.f32 %v6753, %v6817
    %v6882 = vadd.f32 %v6754, %v6818
    %v6883 = vadd.f32 %v6755, %v6819
    %v6884 = vadd.f32 %v6756, %v6820
    %v6885 = vadd.f32 %v6757, %v6821
    %v6886 = vadd.f32 %v6758, %v6822
    %v6887 = vadd.f32 %v6759, %v6823
    %v6888 = vadd.f32 %v6760, %v6824
    %v6889 = vadd.f32 %v6761, %v6825
    %v6890 = vadd.f32 %v6762, %v6826
    %v6891 = vadd.f32 %v6763, %v6827
    %v6892 = vadd.f32 %v6764, %v6828
    %v6893 = vadd.f32 %v6765, %v6829
    %v6894 = vadd.f32 %v6766, %v6830
    %v6895 = vadd.f32 %v6767, %v6831
    %v6896 = vadd.f32 %v6768, %v6832
    %v6897 = vadd.f32 %v6769, %v6833
    %v6898 = vadd.f32 %v6770, %v6834
    %v6899 = vadd.f32 %v6771, %v6835
    %v6900 = vadd.f32 %v6772, %v6836
    %v6901 = vadd.f32 %v6773, %v6837
    %v6902 = vadd.f32 %v6774, %v6838
    %v6903 = vadd.f32 %v6775, %v6839
    %v6904 = vadd.f32 %v6776, %v6840
    %v6905 = vadd.f32 %v6777, %v6841
    %v6906 = vadd.f32 %v6778, %v6842
    %v6907 = vadd.f32 %v6779, %v6843
    %v6908 = vadd.f32 %v6780, %v6844
    %v6909 = vadd.f32 %v6781, %v6845
    %v6910 = vadd.f32 %v6782, %v6846
    %v6911 = vadd.f32 %v6783, %v6847
    %v6912 = vadd.f32 %v6784, %v6848
    %v6913 = vadd.f32 %v6785, %v6849
    %v6914 = vadd.f32 %v6786, %v6850
    %v6915 = vadd.f32 %v6787, %v6851
    %v6916 = vadd.f32 %v6788, %v6852
    %v6917 = vadd.f32 %v6789, %v6853
    %v6918 = vadd.f32 %v6790, %v6854
    %v6919 = vadd.f32 %v6791, %v6855
    %v6920 = vadd.f32 %v6792, %v6856
    %v6921 = vadd.f32 %v6793, %v6857
    %v6922 = vadd.f32 %v6794, %v6858
    %v6923 = vadd.f32 %v6795, %v6859
    %v6924 = vadd.f32 %v6796, %v6860
    %v6925 = vadd.f32 %v6797, %v6861
    %v6926 = vadd.f32 %v6798, %v6862
    %v6927 = vadd.f32 %v6799, %v6863
    %v6928 = vmax.f32 %v6864, 0.0
    %v6929 = vmax.f32 %v6865, 0.0
    %v6930 = vmax.f32 %v6866, 0.0
    %v6931 = vmax.f32 %v6867, 0.0
    %v6932 = vmax.f32 %v6868, 0.0
    %v6933 = vmax.f32 %v6869, 0.0
    %v6934 = vmax.f32 %v6870, 0.0
    %v6935 = vmax.f32 %v6871, 0.0
    %v6936 = vmax.f32 %v6872, 0.0
    %v6937 = vmax.f32 %v6873, 0.0
    %v6938 = vmax.f32 %v6874, 0.0
    %v6939 = vmax.f32 %v6875, 0.0
    %v6940 = vmax.f32 %v6876, 0.0
    %v6941 = vmax.f32 %v6877, 0.0
    %v6942 = vmax.f32 %v6878, 0.0
    %v6943 = vmax.f32 %v6879, 0.0
    %v6944 = vmax.f32 %v6880, 0.0
    %v6945 = vmax.f32 %v6881, 0.0
    %v6946 = vmax.f32 %v6882, 0.0
    %v6947 = vmax.f32 %v6883, 0.0
    %v6948 = vmax.f32 %v6884, 0.0
    %v6949 = vmax.f32 %v6885, 0.0
    %v6950 = vmax.f32 %v6886, 0.0
    %v6951 = vmax.f32 %v6887, 0.0
    %v6952 = vmax.f32 %v6888, 0.0
    %v6953 = vmax.f32 %v6889, 0.0
    %v6954 = vmax.f32 %v6890, 0.0
    %v6955 = vmax.f32 %v6891, 0.0
    %v6956 = vmax.f32 %v6892, 0.0
    %v6957 = vmax.f32 %v6893, 0.0
    %v6958 = vmax.f32 %v6894, 0.0
    %v6959 = vmax.f32 %v6895, 0.0
    %v6960 = vmax.f32 %v6896, 0.0
    %v6961 = vmax.f32 %v6897, 0.0
    %v6962 = vmax.f32 %v6898, 0.0
    %v6963 = vmax.f32 %v6899, 0.0
    %v6964 = vmax.f32 %v6900, 0.0
    %v6965 = vmax.f32 %v6901, 0.0
    %v6966 = vmax.f32 %v6902, 0.0
    %v6967 = vmax.f32 %v6903, 0.0
    %v6968 = vmax.f32 %v6904, 0.0
    %v6969 = vmax.f32 %v6905, 0.0
    %v6970 = vmax.f32 %v6906, 0.0
    %v6971 = vmax.f32 %v6907, 0.0
    %v6972 = vmax.f32 %v6908, 0.0
    %v6973 = vmax.f32 %v6909, 0.0
    %v6974 = vmax.f32 %v6910, 0.0
    %v6975 = vmax.f32 %v6911, 0.0
    %v6976 = vmax.f32 %v6912, 0.0
    %v6977 = vmax.f32 %v6913, 0.0
    %v6978 = vmax.f32 %v6914, 0.0
    %v6979 = vmax.f32 %v6915, 0.0
    %v6980 = vmax.f32 %v6916, 0.0
    %v6981 = vmax.f32 %v6917, 0.0
    %v6982 = vmax.f32 %v6918, 0.0
    %v6983 = vmax.f32 %v6919, 0.0
    %v6984 = vmax.f32 %v6920, 0.0
    %v6985 = vmax.f32 %v6921, 0.0
    %v6986 = vmax.f32 %v6922, 0.0
    %v6987 = vmax.f32 %v6923, 0.0
    %v6988 = vmax.f32 %v6924, 0.0
    %v6989 = vmax.f32 %v6925, 0.0
    %v6990 = vmax.f32 %v6926, 0.0
    %v6991 = vmax.f32 %v6927, 0.0
    %6992 = vst [vmem:[#allocation15] sm:$0xff] %v6928
    %6993 = vst [vmem:[#allocation15 + $0x8] sm:$0xff] %v6929
    %6994 = vst [vmem:[#allocation15 + $0x10] sm:$0xff] %v6930
    %6995 = vst [vmem:[#allocation15 + $0x18] sm:$0xff] %v6931
    %6996 = vst [vmem:[#allocation15 + $0x20] sm:$0xff] %v6932
    %6997 = vst [vmem:[#allocation15 + $0x28] sm:$0xff] %v6933
    %6998 = vst [vmem:[#allocation15 + $0x30] sm:$0xff] %v6934
    %6999 = vst [vmem:[#allocation15 + $0x38] sm:$0xff] %v6935
    %7000 = vst [vmem:[#allocation15 + $0x40] sm:$0xff] %v6936
    %7001 = vst [vmem:[#allocation15 + $0x48] sm:$0xff] %v6937
    %7002 = vst [vmem:[#allocation15 + $0x50] sm:$0xff] %v6938
    %7003 = vst [vmem:[#allocation15 + $0x58] sm:$0xff] %v6939
    %7004 = vst [vmem:[#allocation15 + $0x60] sm:$0xff] %v6940
    %7005 = vst [vmem:[#allocation15 + $0x68] sm:$0xff] %v6941
    %7006 = vst [vmem:[#allocation15 + $0x70] sm:$0xff] %v6942
    %7007 = vst [vmem:[#allocation15 + $0x78] sm:$0xff] %v6943
    %7008 = vst [vmem:[#allocation15 + $0x80] sm:$0xff] %v6944
    %7009 = vst [vmem:[#allocation15 + $0x88] sm:$0xff] %v6945
    %7010 = vst [vmem:[#allocation15 + $0x90] sm:$0xff] %v6946
    %7011 = vst [vmem:[#allocation15 + $0x98] sm:$0xff] %v6947
    %7012 = vst [vmem:[#allocation15 + $0xa0] sm:$0xff] %v6948
    %7013 = vst [vmem:[#allocation15 + $0xa8] sm:$0xff] %v6949
    %7014 = vst [vmem:[#allocation15 + $0xb0] sm:$0xff] %v6950
    %7015 = vst [vmem:[#allocation15 + $0xb8] sm:$0xff] %v6951
    %7016 = vst [vmem:[#allocation15 + $0xc0] sm:$0xff] %v6952
    %7017 = vst [vmem:[#allocation15 + $0xc8] sm:$0xff] %v6953
    %7018 = vst [vmem:[#allocation15 + $0xd0] sm:$0xff] %v6954
    %7019 = vst [vmem:[#allocation15 + $0xd8] sm:$0xff] %v6955
    %7020 = vst [vmem:[#allocation15 + $0xe0] sm:$0xff] %v6956
    %7021 = vst [vmem:[#allocation15 + $0xe8] sm:$0xff] %v6957
    %7022 = vst [vmem:[#allocation15 + $0xf0] sm:$0xff] %v6958
    %7023 = vst [vmem:[#allocation15 + $0xf8] sm:$0xff] %v6959
    %7024 = vst [vmem:[#allocation15 + $0x100] sm:$0xff] %v6960
    %7025 = vst [vmem:[#allocation15 + $0x108] sm:$0xff] %v6961
    %7026 = vst [vmem:[#allocation15 + $0x110] sm:$0xff] %v6962
    %7027 = vst [vmem:[#allocation15 + $0x118] sm:$0xff] %v6963
    %7028 = vst [vmem:[#allocation15 + $0x120] sm:$0xff] %v6964
    %7029 = vst [vmem:[#allocation15 + $0x128] sm:$0xff] %v6965
    %7030 = vst [vmem:[#allocation15 + $0x130] sm:$0xff] %v6966
    %7031 = vst [vmem:[#allocation15 + $0x138] sm:$0xff] %v6967
    %7032 = vst [vmem:[#allocation15 + $0x140] sm:$0xff] %v6968
    %7033 = vst [vmem:[#allocation15 + $0x148] sm:$0xff] %v6969
    %7034 = vst [vmem:[#allocation15 + $0x150] sm:$0xff] %v6970
    %7035 = vst [vmem:[#allocation15 + $0x158] sm:$0xff] %v6971
    %7036 = vst [vmem:[#allocation15 + $0x160] sm:$0xff] %v6972
    %7037 = vst [vmem:[#allocation15 + $0x168] sm:$0xff] %v6973
    %7038 = vst [vmem:[#allocation15 + $0x170] sm:$0xff] %v6974
    %7039 = vst [vmem:[#allocation15 + $0x178] sm:$0xff] %v6975
    %7040 = vst [vmem:[#allocation15 + $0x180] sm:$0xff] %v6976
    %7041 = vst [vmem:[#allocation15 + $0x188] sm:$0xff] %v6977
    %7042 = vst [vmem:[#allocation15 + $0x190] sm:$0xff] %v6978
    %7043 = vst [vmem:[#allocation15 + $0x198] sm:$0xff] %v6979
    %7044 = vst [vmem:[#allocation15 + $0x1a0] sm:$0xff] %v6980
    %7045 = vst [vmem:[#allocation15 + $0x1a8] sm:$0xff] %v6981
    %7046 = vst [vmem:[#allocation15 + $0x1b0] sm:$0xff] %v6982
    %7047 = vst [vmem:[#allocation15 + $0x1b8] sm:$0xff] %v6983
    %7048 = vst [vmem:[#allocation15 + $0x1c0] sm:$0xff] %v6984
    %7049 = vst [vmem:[#allocation15 + $0x1c8] sm:$0xff] %v6985
    %7050 = vst [vmem:[#allocation15 + $0x1d0] sm:$0xff] %v6986
    %7051 = vst [vmem:[#allocation15 + $0x1d8] sm:$0xff] %v6987
    %7052 = vst [vmem:[#allocation15 + $0x1e0] sm:$0xff] %v6988
    %7053 = vst [vmem:[#allocation15 + $0x1e8] sm:$0xff] %v6989
    %7054 = vst [vmem:[#allocation15 + $0x1f0] sm:$0xff] %v6990
    %7055 = vst [vmem:[#allocation15 + $0x1f8] sm:$0xff] %v6991
    // Predicated region
    $region58: #{resblock_pallas.1} parent=1 // pred_check
      _
    $region59: #{resblock_pallas.1} parent=1 // pred_check_branch
      %7057 = sbr.rel (0) target = $region61
    $region60: #{resblock_pallas.1} parent=1 // pred_region
      %s7059 = ssub.s32 8192, 8192
      %7060 = vsyncadd [#allocation5], %s7059
      %s7061 = sshll.u32 [#allocation15], 4
      %s7062 = int_to_ptr.vmem [resolvable:$true] %s7061
      %7067 = dma.vmem_to_hbm [thread:$0]  %s7062, 8192, %s7, [#allocation5], 128, 128, 8
    $region61: #{resblock_pallas.1} parent=1 // pred_fallthru
      _
    // Predicated region
    $region62: #{resblock_pallas.1} parent=1 // pred_check
      _
    $region63: #{resblock_pallas.1} parent=1 // pred_check_branch
      %7069 = sbr.rel (0) target = $region65
    $region64: #{resblock_pallas.1} parent=1 // pred_region
      %7070 = dma.done [#allocation5], 8192
    $region65: #{resblock_pallas.1} parent=1 // pred_fallthru
      _
    %7071 = vsyncpa [#allocation4], 1
    %7072 = vsyncpa [#allocation7], 1
    %7073 = vsyncpa [#allocation10], 1
    %7074 = vsyncpa [#allocation13], 1
    %7075 = vsyncpa [#allocation5], 1

</llo_original>
